<compile_context>
chip_gen: v7x
topology: tpu7x:2x2x1
jax: 0.10.0
libtpu: 0.0.40
codegen_flags: <defaults>
</compile_context>

<pallas_src>
import functools

import jax
import jax.numpy as jnp
import numpy as np
from jax.experimental import pallas as pl
from jax.experimental.pallas import tpu as pltpu  # noqa: F401  (TPU backend)


# ----------------------------------------------------------------------------
# Pallas kernel: the entire forward pass in one call
# ----------------------------------------------------------------------------
def _silu(x):
    return x * jax.nn.sigmoid(x)


def fused_model_kernel(
    n_layers, H,
    # ---- inputs -------------------------------------------------------------
    h_in_ref, w_in_ref, b_in_ref, coord_ref,
    expa_ref, expb_ref, redd_ref,
    ctx_row_ref, ctx_col_ref, ctx_rowT_ref, ctx_inv_ref,
    att_row_ref, att_col_ref, att_rowT_ref, att_inv_ref,
    wf_ref, ew2_ref, eb2_ref, ccw_ref, ccb_ref, cme_ref,
    nw1_ref, nb1_ref, nw2_ref, nb2_ref,
    bias_ctx_ref, bias_att_ref,
    w_out_ref, b_out_ref,
    # ---- outputs ------------------------------------------------------------
    h_out_ref, coord_out_ref,
):
    f32 = jnp.float32

    # --- prologue: linear_in with eval-mode BN + dropout doubling folded in ---
    h = jnp.dot(h_in_ref[...], w_in_ref[...],
                preferred_element_type=f32) + b_in_ref[...]
    coord = coord_ref[...]

    expa = expa_ref[...]
    expb = expb_ref[...]
    redd = redd_ref[...]

    # Packed working slab: h / coord stay VMEM-resident across all blocks.
    hc = jnp.concatenate([h, coord], axis=1)                       # [N, H+CD]

    for b in range(2 * n_layers):                                  # static loop
        if b % 2 == 0:   # intra block -> ctx edges
            row1h = ctx_row_ref[...]
            col1h = ctx_col_ref[...]
            rowT = ctx_rowT_ref[...]
            invc = ctx_inv_ref[...]
            bias_full = bias_ctx_ref[b // 2]                       # [E, 3H]
        else:            # inter block -> att edges
            row1h = att_row_ref[...]
            col1h = att_col_ref[...]
            rowT = att_rowT_ref[...]
            invc = att_inv_ref[...]
            bias_full = bias_att_ref[b // 2]

        h = hc[:, :H]
        coord = hc[:, H:]

        # -- fused gather of [h | coord] for both edge endpoints (f32 MXU) ----
        row_g = jnp.dot(row1h, hc, preferred_element_type=f32)     # [E, H+CD]
        col_g = jnp.dot(col1h, hc, preferred_element_type=f32)
        h_row, c_row = row_g[:, :H], row_g[:, H:]
        h_col, c_col = col_g[:, :H], col_g[:, H:]
        cd = c_row - c_col                                         # [E, C*D]

        # -- coord2radial: radial[e, a*C+b] = <cd[e,a,:], cd[e,b,:]> ----------
        prod = (jnp.dot(cd, expa, preferred_element_type=f32) *
                jnp.dot(cd, expb, preferred_element_type=f32))     # [E, C*C*D]
        radial = jnp.dot(prod, redd, preferred_element_type=f32)   # [E, C*C]
        nrm = jnp.sqrt(jnp.sum(radial * radial, axis=0, keepdims=True))
        radial = radial / jnp.maximum(nrm, 1e-12)                  # F.normalize(dim=0)

        # -- fused first layers (row/col edge gates + coord_pls l1). hsv/hse /
        #    biases are pre-folded into bias_full at trace time. --------------
        er_in = jnp.concatenate([h_row, h_col, radial], axis=1)    # [E, 2H+CC]
        packed = jnp.dot(er_in, wf_ref[b],
                         preferred_element_type=f32) + bias_full   # [E, 3H]
        g = _silu(packed[:, :2 * H])
        r_h = _silu(packed[:, 2 * H:])

        # -- edge gates: block-diagonal second layer ---------------------------
        g2 = jnp.dot(g, ew2_ref[b], preferred_element_type=f32) + eb2_ref[b]
        edge_feat = (h_col * jax.nn.sigmoid(g2[:, :H]) +
                     h_row * jax.nn.sigmoid(g2[:, H:]))            # [E, H]

        # -- coord branch: (cp_w2 @ cm_w1) and (cm_w2 @ expc) folded ----------
        cm = _silu(jnp.dot(r_h, ccw_ref[b],
                           preferred_element_type=f32) + ccb_ref[b])
        trans = cd * jnp.dot(cm, cme_ref[b], preferred_element_type=f32)  # [E, CD]

        # -- fused scatter of [edge_feat | trans] onto the row nodes ----------
        scat = jnp.concatenate([edge_feat, trans], axis=1)         # [E, H+CD]
        agg = jnp.dot(rowT, scat, preferred_element_type=f32)      # [N, H+CD]
        agg_e = agg[:, :H]                                         # segment sum
        coord_new = coord + agg[:, H:] * invc                      # segment mean

        # -- node MLP with residual -------------------------------------------
        nin = jnp.concatenate([h, agg_e], axis=1)                  # [N, 2H]
        nh = _silu(jnp.dot(nin, nw1_ref[b],
                           preferred_element_type=f32) + nb1_ref[b])
        h_new = h + jnp.dot(nh, nw2_ref[b],
                            preferred_element_type=f32) + nb2_ref[b]

        hc = jnp.concatenate([h_new, coord_new], axis=1)

    # --- epilogue: linear_out; single HBM write of the final results ---------
    h_out_ref[...] = (jnp.dot(hc[:, :H], w_out_ref[...],
                              preferred_element_type=f32) + b_out_ref[...])
    coord_out_ref[...] = hc[:, H:]


# ----------------------------------------------------------------------------
# Trace-time preprocessing (constants, edge matrices, weight folding)
# ----------------------------------------------------------------------------
def radial_constants(C, D):
    """Constant 0/1 expansion/reduction matrices for radial & trans."""
    CD, CC, CCD = C * D, C * C, C * C * D
    exp_a = np.zeros((CD, CCD), np.float32)
    exp_b = np.zeros((CD, CCD), np.float32)
    red_d = np.zeros((CCD, CC), np.float32)
    for a in range(C):
        for b in range(C):
            k = a * C + b
            for d in range(D):
                exp_a[a * D + d, k * D + d] = 1.0
                exp_b[b * D + d, k * D + d] = 1.0
                red_d[k * D + d, k] = 1.0
    exp_c = np.zeros((C, CD), np.float32)
    for c in range(C):
        for d in range(D):
            exp_c[c, c * D + d] = 1.0
    return (jnp.asarray(exp_a), jnp.asarray(exp_b),
            jnp.asarray(red_d), jnp.asarray(exp_c))


def edge_data(edges, num_nodes):
    """f32 one-hot gather/scatter matrices + precomputed inverse in-degree."""
    row, col = edges[0], edges[1]
    r1 = jax.nn.one_hot(row, num_nodes, dtype=jnp.float32)   # [E, N]
    c1 = jax.nn.one_hot(col, num_nodes, dtype=jnp.float32)   # [E, N]
    rT = jnp.transpose(r1)                                    # [N, E]
    cnt = jnp.sum(r1, axis=0).reshape(num_nodes, 1)           # in-degree
    inv = 1.0 / jnp.maximum(cnt, 1.0)
    return r1, c1, rT, inv


def fuse_block_params(p, hsv_row, hsv_col, h_se, H, CC, expc):
    """Fold one CGMLP's weights + its layer-invariant edge features."""
    (er_w1, er_b1, er_w2, er_b2,
     ec_w1, ec_b1, ec_w2, ec_b2,
     cp_w1, cp_b1, cp_w2, cp_b2,
     cm_w1, cm_b1, cm_w2,
     nm_w1, nm_b1, nm_w2, nm_b2) = p

    E = h_se.shape[0]
    W1 = jnp.concatenate([er_w1, ec_w1], axis=1)               # [5H, 2H]
    b1 = jnp.concatenate([er_b1, ec_b1], axis=1)               # [1, 2H]
    # hsv_row/hsv_col/h_se never change across layers -> fold into a bias.
    edge_bias = (hsv_row @ W1[2 * H:3 * H] + hsv_col @ W1[3 * H:4 * H]
                 + h_se @ W1[4 * H:5 * H] + b1)                # [E, 2H]
    bias_full = jnp.concatenate(
        [edge_bias, jnp.broadcast_to(cp_b1, (E, H))], axis=1)  # [E, 3H]

    # Fused first layers: [h_row|h_col|radial] @ Wf -> [edge-gate(2H) | coord_pls(H)]
    left = jnp.concatenate([W1[:2 * H], jnp.zeros((CC, 2 * H), jnp.float32)],
                           axis=0)                             # [2H+CC, 2H]
    Wf = jnp.concatenate([left, cp_w1], axis=1)                # [2H+CC, 3H]

    z = jnp.zeros((H, H), jnp.float32)
    ew2 = jnp.concatenate([jnp.concatenate([er_w2, z], axis=1),
                           jnp.concatenate([z, ec_w2], axis=1)], axis=0)  # [2H,2H]
    eb2 = jnp.concatenate([er_b2, ec_b2], axis=1)              # [1, 2H]

    ccw = cp_w2 @ cm_w1                                        # [H, H]
    ccb = cp_b2 @ cm_w1 + cm_b1                                # [1, H]
    cme = cm_w2 @ expc                                         # [H, C*D]

    return dict(Wf=Wf, bias_full=bias_full, ew2=ew2, eb2=eb2,
                ccw=ccw, ccb=ccb, cme=cme,
                nw1=nm_w1, nb1=nm_b1, nw2=nm_w2, nb2=nm_b2)


@functools.partial(jax.jit, static_argnums=(8, 9, 10))
def model_forward(params, h, x, ctx_edges, att_edges, H_sv, ctx_H_se, int_H_se,
                  n_channel, space_dim, n_layers):
    N = h.shape[0]
    H = params["W_in"].shape[1]
    CD = n_channel * space_dim
    CC = n_channel * n_channel
    out_nf = params["W_out"].shape[1]

    # Fold eval-mode BatchNorm and the `h + dropout(h)` doubling into linear_in.
    scale = params["bn_gamma"] * (1.0 / jnp.sqrt(params["bn_var"] + 1e-5))
    W_in_eff = params["W_in"] * (2.0 * scale)
    b_in_eff = (2.0 * params["b_in"] - params["bn_mean"]) * scale + params["bn_beta"]

    coord0 = x.reshape(N, CD)
    expa, expb, redd, expc = radial_constants(n_channel, space_dim)

    ctx_r1, ctx_c1, ctx_rT, ctx_inv = edge_data(ctx_edges, N)
    att_r1, att_c1, att_rT, att_inv = edge_data(att_edges, N)

    # Layer-invariant H_sv gathers (exact, done once at trace time).
    ctx_hsv_r, ctx_hsv_c = H_sv[ctx_edges[0]], H_sv[ctx_edges[1]]
    att_hsv_r, att_hsv_c = H_sv[att_edges[0]], H_sv[att_edges[1]]

    blocks, bias_ctx_list, bias_att_list = [], [], []
    for i in range(n_layers):
        bp = fuse_block_params(params["intra"][i], ctx_hsv_r, ctx_hsv_c,
                               ctx_H_se, H, CC, expc)
        blocks.append(bp)
        bias_ctx_list.append(bp["bias_full"])
        bp = fuse_block_params(params["inter"][i], att_hsv_r, att_hsv_c,
                               int_H_se, H, CC, expc)
        blocks.append(bp)
        bias_att_list.append(bp["bias_full"])

    def stack(name):
        return jnp.stack([bp[name] for bp in blocks], axis=0)

    Wf_all, ew2_all, eb2_all = stack("Wf"), stack("ew2"), stack("eb2")
    ccw_all, ccb_all, cme_all = stack("ccw"), stack("ccb"), stack("cme")
    nw1_all, nb1_all = stack("nw1"), stack("nb1")
    nw2_all, nb2_all = stack("nw2"), stack("nb2")
    bias_ctx = jnp.stack(bias_ctx_list, axis=0)      # [L, E_ctx, 3H]
    bias_att = jnp.stack(bias_att_list, axis=0)      # [L, E_att, 3H]

    kernel = functools.partial(fused_model_kernel, n_layers, H)
    h_out, coord_out = pl.pallas_call(
        kernel,
        out_shape=(jax.ShapeDtypeStruct((N, out_nf), jnp.float32),
                   jax.ShapeDtypeStruct((N, CD), jnp.float32)),
    )(h, W_in_eff, b_in_eff, coord0,
      expa, expb, redd,
      ctx_r1, ctx_c1, ctx_rT, ctx_inv,
      att_r1, att_c1, att_rT, att_inv,
      Wf_all, ew2_all, eb2_all, ccw_all, ccb_all, cme_all,
      nw1_all, nb1_all, nw2_all, nb2_all,
      bias_ctx, bias_att,
      params["W_out"], params["b_out"])

    return h_out, coord_out.reshape(N, n_channel, space_dim)


# ----------------------------------------------------------------------------
# Parameter construction (deterministic, synthetic)
# ----------------------------------------------------------------------------
def dense_init(key, fan_in, fan_out, scale=None):
    if scale is None:
        scale = 1.0 / float(np.sqrt(fan_in))
    kw, kb = jax.random.split(key)
    w = jax.random.uniform(kw, (fan_in, fan_out), jnp.float32, -scale, scale)
    b = jax.random.uniform(kb, (1, fan_out), jnp.float32, -scale, scale)
    return w, b


def make_cgmlp_params(key, H, C):
    ks = jax.random.split(key, 10)
    er_w1, er_b1 = dense_init(ks[0], 5 * H, H)
    er_w2, er_b2 = dense_init(ks[1], H, H)
    ec_w1, ec_b1 = dense_init(ks[2], 5 * H, H)
    ec_w2, ec_b2 = dense_init(ks[3], H, H)
    cp_w1, cp_b1 = dense_init(ks[4], 2 * H + C * C, H)
    cp_w2, cp_b2 = dense_init(ks[5], H, H)
    cm_w1, cm_b1 = dense_init(ks[6], H, H)
    cm_w2 = jax.random.uniform(ks[7], (H, C), jnp.float32, -0.001, 0.001)  # xavier gain=0.001
    nm_w1, nm_b1 = dense_init(ks[8], 2 * H, H)
    nm_w2, nm_b2 = dense_init(ks[9], H, H)
    return (er_w1, er_b1, er_w2, er_b2,
            ec_w1, ec_b1, ec_w2, ec_b2,
            cp_w1, cp_b1, cp_w2, cp_b2,
            cm_w1, cm_b1, cm_w2,
            nm_w1, nm_b1, nm_w2, nm_b2)


def make_model_params(key, in_nf, H, out_nf, C, n_layers):
    ks = jax.random.split(key, 2 * n_layers + 2)
    params = {}
    params["W_in"], params["b_in"] = dense_init(ks[0], in_nf, H)
    params["W_out"], params["b_out"] = dense_init(ks[1], H, out_nf)
    params["bn_gamma"] = jnp.ones((1, H), jnp.float32)
    params["bn_beta"] = jnp.zeros((1, H), jnp.float32)
    params["bn_mean"] = jnp.zeros((1, H), jnp.float32)
    params["bn_var"] = jnp.ones((1, H), jnp.float32)
    params["intra"] = [make_cgmlp_params(ks[2 + i], H, C) for i in range(n_layers)]
    params["inter"] = [make_cgmlp_params(ks[2 + n_layers + i], H, C) for i in range(n_layers)]
    return params


# ----------------------------------------------------------------------------
# Pure-JAX reference (mirrors the PyTorch forward, eval mode) for validation
# ----------------------------------------------------------------------------
def _mlp2_ref(x, w1, b1, w2, b2):
    y = x @ w1 + b1
    y = y * jax.nn.sigmoid(y)
    return y @ w2 + b2


def cgmlp_ref(p, h, edges, coord, h_sv, h_se):
    row, col = edges
    N = h.shape[0]
    cd = coord[row] - coord[col]                                   # [E, C, D]
    radial = jnp.einsum("eci,edi->ecd", cd, cd)                    # bmm
    nrm = jnp.sqrt(jnp.sum(radial ** 2, axis=0, keepdims=True))
    radial = radial / jnp.maximum(nrm, 1e-12)                      # F.normalize(dim=0)
    out = jnp.concatenate([h[row], h[col], h_sv[row], h_sv[col], h_se], axis=1)
    row_out = _mlp2_ref(out, p[0], p[1], p[2], p[3])
    col_out = _mlp2_ref(out, p[4], p[5], p[6], p[7])
    edge_feat = h[col] * jax.nn.sigmoid(row_out) + h[row] * jax.nn.sigmoid(col_out)
    radial_f = radial.reshape(radial.shape[0], -1)
    r_in = jnp.concatenate([h[row], h[col], radial_f], axis=1)
    r_out = _mlp2_ref(r_in, p[8], p[9], p[10], p[11])
    cm = r_out @ p[12] + p[13]
    cm = cm * jax.nn.sigmoid(cm)
    cw = cm @ p[14]                                                # [E, C]
    trans = cd * cw[:, :, None]
    agg = jax.ops.segment_sum(trans, row, num_segments=N)
    cnt = jax.ops.segment_sum(jnp.ones((row.shape[0],), jnp.float32), row, num_segments=N)
    coord = coord + agg / jnp.maximum(cnt, 1.0)[:, None, None]
    agg_e = jax.ops.segment_sum(edge_feat, row, num_segments=N)
    nin = jnp.concatenate([h, agg_e], axis=1)
    h = h + _mlp2_ref(nin, p[15], p[16], p[17], p[18])
    return h, coord


def model_ref(params, h, x, ctx_edges, att_edges, H_sv, ctx_H_se, int_H_se, n_layers):
    h = h @ params["W_in"] + params["b_in"]
    y = h + h
    h = ((y - params["bn_mean"]) / jnp.sqrt(params["bn_var"] + 1e-5)
         * params["bn_gamma"] + params["bn_beta"])
    for i in range(n_layers):
        h, x = cgmlp_ref(params["intra"][i], h, ctx_edges, x, H_sv, ctx_H_se)
        h, x = cgmlp_ref(params["inter"][i], h, att_edges, x, H_sv, int_H_se)
    h = h @ params["W_out"] + params["b_out"]
    return h, x


# ----------------------------------------------------------------------------
if __name__ == "__main__":
    in_node_nf, hidden_nf, out_node_nf = 8, 32, 8
    n_channel, space_dim = 4, 3
    n_layers = 2
    N, E_ctx, E_att = 16, 32, 24

    key = jax.random.PRNGKey(0)
    k_h, k_x, k_e1, k_e2, k_sv, k_se1, k_se2, k_p = jax.random.split(key, 8)

    h = jax.random.normal(k_h, (N, in_node_nf), jnp.float32)
    x = jax.random.normal(k_x, (N, n_channel, space_dim), jnp.float32)
    ctx_edges = jax.random.randint(k_e1, (2, E_ctx), 0, N, jnp.int32)
    att_edges = jax.random.randint(k_e2, (2, E_att), 0, N, jnp.int32)
    H_sv = jax.random.normal(k_sv, (N, hidden_nf), jnp.float32)
    ctx_H_se = jax.random.normal(k_se1, (E_ctx, hidden_nf), jnp.float32)
    int_H_se = jax.random.normal(k_se2, (E_att, hidden_nf), jnp.float32)

    params = make_model_params(k_p, in_node_nf, hidden_nf, out_node_nf, n_channel, n_layers)

    h_out, x_out = model_forward(params, h, x, ctx_edges, att_edges,
                                 H_sv, ctx_H_se, int_H_se,
                                 n_channel, space_dim, n_layers)
    h_out = jax.block_until_ready(h_out)
    x_out = jax.block_until_ready(x_out)

    h_ref, x_ref = model_ref(params, h, x, ctx_edges, att_edges,
                             H_sv, ctx_H_se, int_H_se, n_layers)

    np.testing.assert_allclose(np.asarray(h_out), np.asarray(h_ref), rtol=5e-3, atol=5e-3)
    np.testing.assert_allclose(np.asarray(x_out), np.asarray(x_ref), rtol=5e-3, atol=5e-3)

    print("KERNEL_OK")
</pallas_src>

<mosaic_0001>
module attributes {stable_mosaic.version = 11 : i64} {
  func.func @fused_model_kernel(%arg0: memref<16x8xf32, #tpu.memory_space<vmem>>, %arg1: memref<8x32xf32, #tpu.memory_space<vmem>>, %arg2: memref<1x32xf32, #tpu.memory_space<vmem>>, %arg3: memref<16x12xf32, #tpu.memory_space<vmem>>, %arg4: memref<12x48xf32, #tpu.memory_space<vmem>>, %arg5: memref<12x48xf32, #tpu.memory_space<vmem>>, %arg6: memref<48x16xf32, #tpu.memory_space<vmem>>, %arg7: memref<32x16xf32, #tpu.memory_space<vmem>>, %arg8: memref<32x16xf32, #tpu.memory_space<vmem>>, %arg9: memref<16x32xf32, #tpu.memory_space<vmem>>, %arg10: memref<16x1xf32, #tpu.memory_space<vmem>>, %arg11: memref<24x16xf32, #tpu.memory_space<vmem>>, %arg12: memref<24x16xf32, #tpu.memory_space<vmem>>, %arg13: memref<16x24xf32, #tpu.memory_space<vmem>>, %arg14: memref<16x1xf32, #tpu.memory_space<vmem>>, %arg15: memref<4x80x96xf32, #tpu.memory_space<vmem>>, %arg16: memref<4x64x64xf32, #tpu.memory_space<vmem>>, %arg17: memref<4x1x64xf32, #tpu.memory_space<vmem>>, %arg18: memref<4x32x32xf32, #tpu.memory_space<vmem>>, %arg19: memref<4x1x32xf32, #tpu.memory_space<vmem>>, %arg20: memref<4x32x12xf32, #tpu.memory_space<vmem>>, %arg21: memref<4x64x32xf32, #tpu.memory_space<vmem>>, %arg22: memref<4x1x32xf32, #tpu.memory_space<vmem>>, %arg23: memref<4x32x32xf32, #tpu.memory_space<vmem>>, %arg24: memref<4x1x32xf32, #tpu.memory_space<vmem>>, %arg25: memref<2x32x96xf32, #tpu.memory_space<vmem>>, %arg26: memref<2x24x96xf32, #tpu.memory_space<vmem>>, %arg27: memref<32x8xf32, #tpu.memory_space<vmem>>, %arg28: memref<1x8xf32, #tpu.memory_space<vmem>>, %arg29: memref<16x8xf32, #tpu.memory_space<vmem>>, %arg30: memref<16x12xf32, #tpu.memory_space<vmem>>) attributes {dimension_semantics = [], scalar_prefetch = 0 : i64, scratch_operands = 0 : i64, tpu.core_type = #tpu.core_type<tc>} {
    %c0 = arith.constant 0 : index
    %c0_0 = arith.constant 0 : index
    %0 = vector.load %arg0[%c0, %c0_0] : memref<16x8xf32, #tpu.memory_space<vmem>>, vector<16x8xf32>
    %c0_1 = arith.constant 0 : index
    %c0_2 = arith.constant 0 : index
    %1 = vector.load %arg1[%c0_1, %c0_2] : memref<8x32xf32, #tpu.memory_space<vmem>>, vector<8x32xf32>
    %cst = arith.constant dense<0.000000e+00> : vector<16x32xf32>
    %2 = tpu.matmul %0, %1, %cst {dimension_numbers = #tpu.dot_dimension_numbers<[1], [0], [0], [1], [0, 0, 1, 1], [], []>} : vector<16x8xf32>, vector<8x32xf32>, vector<16x32xf32> -> vector<16x32xf32>
    %c0_3 = arith.constant 0 : index
    %c0_4 = arith.constant 0 : index
    %3 = vector.load %arg2[%c0_3, %c0_4] : memref<1x32xf32, #tpu.memory_space<vmem>>, vector<1x32xf32>
    %4 = vector.broadcast %3 : vector<1x32xf32> to vector<16x32xf32>
    %5 = arith.addf %2, %4 : vector<16x32xf32>
    %c0_5 = arith.constant 0 : index
    %c0_6 = arith.constant 0 : index
    %6 = vector.load %arg3[%c0_5, %c0_6] : memref<16x12xf32, #tpu.memory_space<vmem>>, vector<16x12xf32>
    %c0_7 = arith.constant 0 : index
    %c0_8 = arith.constant 0 : index
    %7 = vector.load %arg4[%c0_7, %c0_8] : memref<12x48xf32, #tpu.memory_space<vmem>>, vector<12x48xf32>
    %c0_9 = arith.constant 0 : index
    %c0_10 = arith.constant 0 : index
    %8 = vector.load %arg5[%c0_9, %c0_10] : memref<12x48xf32, #tpu.memory_space<vmem>>, vector<12x48xf32>
    %c0_11 = arith.constant 0 : index
    %c0_12 = arith.constant 0 : index
    %9 = vector.load %arg6[%c0_11, %c0_12] : memref<48x16xf32, #tpu.memory_space<vmem>>, vector<48x16xf32>
    %10 = tpu.concatenate %5, %6 in 1 : vector<16x32xf32>, vector<16x12xf32> -> vector<16x44xf32>
    %c0_13 = arith.constant 0 : index
    %c0_14 = arith.constant 0 : index
    %11 = vector.load %arg7[%c0_13, %c0_14] : memref<32x16xf32, #tpu.memory_space<vmem>>, vector<32x16xf32>
    %c0_15 = arith.constant 0 : index
    %c0_16 = arith.constant 0 : index
    %12 = vector.load %arg8[%c0_15, %c0_16] : memref<32x16xf32, #tpu.memory_space<vmem>>, vector<32x16xf32>
    %c0_17 = arith.constant 0 : index
    %c0_18 = arith.constant 0 : index
    %13 = vector.load %arg9[%c0_17, %c0_18] : memref<16x32xf32, #tpu.memory_space<vmem>>, vector<16x32xf32>
    %c0_19 = arith.constant 0 : index
    %c0_20 = arith.constant 0 : index
    %14 = vector.load %arg10[%c0_19, %c0_20] : memref<16x1xf32, #tpu.memory_space<vmem>>, vector<16x1xf32>
    %c0_21 = arith.constant 0 : index
    %c0_22 = arith.constant 0 : index
    %c0_23 = arith.constant 0 : index
    %15 = vector.load %arg25[%c0_21, %c0_22, %c0_23] : memref<2x32x96xf32, #tpu.memory_space<vmem>>, vector<1x32x96xf32>
    %16 = vector.shape_cast %15 : vector<1x32x96xf32> to vector<32x96xf32>
    %17 = vector.extract_strided_slice %10 {offsets = [0, 0], sizes = [16, 32], strides = [1, 1]} : vector<16x44xf32> to vector<16x32xf32>
    %18 = vector.extract_strided_slice %10 {offsets = [0, 32], sizes = [16, 12], strides = [1, 1]} : vector<16x44xf32> to vector<16x12xf32>
    %cst_24 = arith.constant dense<0.000000e+00> : vector<32x44xf32>
    %19 = tpu.matmul %11, %10, %cst_24 {dimension_numbers = #tpu.dot_dimension_numbers<[1], [0], [0], [1], [0, 0, 1, 1], [], []>} : vector<32x16xf32>, vector<16x44xf32>, vector<32x44xf32> -> vector<32x44xf32>
    %cst_25 = arith.constant dense<0.000000e+00> : vector<32x44xf32>
    %20 = tpu.matmul %12, %10, %cst_25 {dimension_numbers = #tpu.dot_dimension_numbers<[1], [0], [0], [1], [0, 0, 1, 1], [], []>} : vector<32x16xf32>, vector<16x44xf32>, vector<32x44xf32> -> vector<32x44xf32>
    %21 = vector.extract_strided_slice %19 {offsets = [0, 0], sizes = [32, 32], strides = [1, 1]} : vector<32x44xf32> to vector<32x32xf32>
    %22 = vector.extract_strided_slice %19 {offsets = [0, 32], sizes = [32, 12], strides = [1, 1]} : vector<32x44xf32> to vector<32x12xf32>
    %23 = vector.extract_strided_slice %20 {offsets = [0, 0], sizes = [32, 32], strides = [1, 1]} : vector<32x44xf32> to vector<32x32xf32>
    %24 = vector.extract_strided_slice %20 {offsets = [0, 32], sizes = [32, 12], strides = [1, 1]} : vector<32x44xf32> to vector<32x12xf32>
    %25 = arith.subf %22, %24 : vector<32x12xf32>
    %cst_26 = arith.constant dense<0.000000e+00> : vector<32x48xf32>
    %26 = tpu.matmul %25, %7, %cst_26 {dimension_numbers = #tpu.dot_dimension_numbers<[1], [0], [0], [1], [0, 0, 1, 1], [], []>} : vector<32x12xf32>, vector<12x48xf32>, vector<32x48xf32> -> vector<32x48xf32>
    %cst_27 = arith.constant dense<0.000000e+00> : vector<32x48xf32>
    %27 = tpu.matmul %25, %8, %cst_27 {dimension_numbers = #tpu.dot_dimension_numbers<[1], [0], [0], [1], [0, 0, 1, 1], [], []>} : vector<32x12xf32>, vector<12x48xf32>, vector<32x48xf32> -> vector<32x48xf32>
    %28 = arith.mulf %26, %27 : vector<32x48xf32>
    %cst_28 = arith.constant dense<0.000000e+00> : vector<32x16xf32>
    %29 = tpu.matmul %28, %9, %cst_28 {dimension_numbers = #tpu.dot_dimension_numbers<[1], [0], [0], [1], [0, 0, 1, 1], [], []>} : vector<32x48xf32>, vector<48x16xf32>, vector<32x16xf32> -> vector<32x16xf32>
    %30 = arith.mulf %29, %29 : vector<32x16xf32>
    %cst_29 = arith.constant dense<0.000000e+00> : vector<16xf32>
    %31 = vector.multi_reduction <add>, %30, %cst_29 [0] : vector<32x16xf32> to vector<16xf32>
    %32 = vector.shape_cast %31 : vector<16xf32> to vector<1x16xf32>
    %33 = math.sqrt %32 : vector<1x16xf32>
    %cst_30 = arith.constant 9.99999996E-13 : f32
    %34 = vector.broadcast %cst_30 : f32 to vector<1x16xf32>
    %35 = arith.maximumf %33, %34 : vector<1x16xf32>
    %36 = vector.broadcast %35 : vector<1x16xf32> to vector<32x16xf32>
    %37 = arith.divf %29, %36 : vector<32x16xf32>
    %38 = tpu.concatenate %21, %23, %37 in 1 : vector<32x32xf32>, vector<32x32xf32>, vector<32x16xf32> -> vector<32x80xf32>
    %c0_31 = arith.constant 0 : index
    %c0_32 = arith.constant 0 : index
    %c0_33 = arith.constant 0 : index
    %39 = vector.load %arg15[%c0_31, %c0_32, %c0_33] : memref<4x80x96xf32, #tpu.memory_space<vmem>>, vector<1x80x96xf32>
    %40 = vector.shape_cast %39 : vector<1x80x96xf32> to vector<80x96xf32>
    %cst_34 = arith.constant dense<0.000000e+00> : vector<32x96xf32>
    %41 = tpu.matmul %38, %40, %cst_34 {dimension_numbers = #tpu.dot_dimension_numbers<[1], [0], [0], [1], [0, 0, 1, 1], [], []>} : vector<32x80xf32>, vector<80x96xf32>, vector<32x96xf32> -> vector<32x96xf32>
    %42 = arith.addf %41, %16 : vector<32x96xf32>
    %43 = vector.extract_strided_slice %42 {offsets = [0, 0], sizes = [32, 64], strides = [1, 1]} : vector<32x96xf32> to vector<32x64xf32>
    %44 = arith.negf %43 : vector<32x64xf32>
    %45 = math.exp %44 : vector<32x64xf32>
    %cst_35 = arith.constant 1.000000e+00 : f32
    %46 = vector.broadcast %cst_35 : f32 to vector<32x64xf32>
    %47 = arith.addf %46, %45 : vector<32x64xf32>
    %48 = arith.divf %46, %47 : vector<32x64xf32>
    %49 = arith.mulf %43, %48 : vector<32x64xf32>
    %50 = vector.extract_strided_slice %42 {offsets = [0, 64], sizes = [32, 32], strides = [1, 1]} : vector<32x96xf32> to vector<32x32xf32>
    %51 = arith.negf %50 : vector<32x32xf32>
    %52 = math.exp %51 : vector<32x32xf32>
    %cst_36 = arith.constant 1.000000e+00 : f32
    %53 = vector.broadcast %cst_36 : f32 to vector<32x32xf32>
    %54 = arith.addf %53, %52 : vector<32x32xf32>
    %55 = arith.divf %53, %54 : vector<32x32xf32>
    %56 = arith.mulf %50, %55 : vector<32x32xf32>
    %c0_37 = arith.constant 0 : index
    %c0_38 = arith.constant 0 : index
    %c0_39 = arith.constant 0 : index
    %57 = vector.load %arg16[%c0_37, %c0_38, %c0_39] : memref<4x64x64xf32, #tpu.memory_space<vmem>>, vector<1x64x64xf32>
    %58 = vector.shape_cast %57 : vector<1x64x64xf32> to vector<64x64xf32>
    %cst_40 = arith.constant dense<0.000000e+00> : vector<32x64xf32>
    %59 = tpu.matmul %49, %58, %cst_40 {dimension_numbers = #tpu.dot_dimension_numbers<[1], [0], [0], [1], [0, 0, 1, 1], [], []>} : vector<32x64xf32>, vector<64x64xf32>, vector<32x64xf32> -> vector<32x64xf32>
    %c0_41 = arith.constant 0 : index
    %c0_42 = arith.constant 0 : index
    %c0_43 = arith.constant 0 : index
    %60 = vector.load %arg17[%c0_41, %c0_42, %c0_43] : memref<4x1x64xf32, #tpu.memory_space<vmem>>, vector<1x1x64xf32>
    %61 = vector.shape_cast %60 : vector<1x1x64xf32> to vector<1x64xf32>
    %62 = vector.broadcast %61 : vector<1x64xf32> to vector<32x64xf32>
    %63 = arith.addf %59, %62 : vector<32x64xf32>
    %64 = vector.extract_strided_slice %63 {offsets = [0, 0], sizes = [32, 32], strides = [1, 1]} : vector<32x64xf32> to vector<32x32xf32>
    %65 = arith.negf %64 : vector<32x32xf32>
    %66 = math.exp %65 : vector<32x32xf32>
    %cst_44 = arith.constant 1.000000e+00 : f32
    %67 = vector.broadcast %cst_44 : f32 to vector<32x32xf32>
    %68 = arith.addf %67, %66 : vector<32x32xf32>
    %69 = arith.divf %67, %68 : vector<32x32xf32>
    %70 = arith.mulf %23, %69 : vector<32x32xf32>
    %71 = vector.extract_strided_slice %63 {offsets = [0, 32], sizes = [32, 32], strides = [1, 1]} : vector<32x64xf32> to vector<32x32xf32>
    %72 = arith.negf %71 : vector<32x32xf32>
    %73 = math.exp %72 : vector<32x32xf32>
    %cst_45 = arith.constant 1.000000e+00 : f32
    %74 = vector.broadcast %cst_45 : f32 to vector<32x32xf32>
    %75 = arith.addf %74, %73 : vector<32x32xf32>
    %76 = arith.divf %74, %75 : vector<32x32xf32>
    %77 = arith.mulf %21, %76 : vector<32x32xf32>
    %78 = arith.addf %70, %77 : vector<32x32xf32>
    %c0_46 = arith.constant 0 : index
    %c0_47 = arith.constant 0 : index
    %c0_48 = arith.constant 0 : index
    %79 = vector.load %arg18[%c0_46, %c0_47, %c0_48] : memref<4x32x32xf32, #tpu.memory_space<vmem>>, vector<1x32x32xf32>
    %80 = vector.shape_cast %79 : vector<1x32x32xf32> to vector<32x32xf32>
    %cst_49 = arith.constant dense<0.000000e+00> : vector<32x32xf32>
    %81 = tpu.matmul %56, %80, %cst_49 {dimension_numbers = #tpu.dot_dimension_numbers<[1], [0], [0], [1], [0, 0, 1, 1], [], []>} : vector<32x32xf32>, vector<32x32xf32>, vector<32x32xf32> -> vector<32x32xf32>
    %c0_50 = arith.constant 0 : index
    %c0_51 = arith.constant 0 : index
    %c0_52 = arith.constant 0 : index
    %82 = vector.load %arg19[%c0_50, %c0_51, %c0_52] : memref<4x1x32xf32, #tpu.memory_space<vmem>>, vector<1x1x32xf32>
    %83 = vector.shape_cast %82 : vector<1x1x32xf32> to vector<1x32xf32>
    %84 = vector.broadcast %83 : vector<1x32xf32> to vector<32x32xf32>
    %85 = arith.addf %81, %84 : vector<32x32xf32>
    %86 = arith.negf %85 : vector<32x32xf32>
    %87 = math.exp %86 : vector<32x32xf32>
    %cst_53 = arith.constant 1.000000e+00 : f32
    %88 = vector.broadcast %cst_53 : f32 to vector<32x32xf32>
    %89 = arith.addf %88, %87 : vector<32x32xf32>
    %90 = arith.divf %88, %89 : vector<32x32xf32>
    %91 = arith.mulf %85, %90 : vector<32x32xf32>
    %c0_54 = arith.constant 0 : index
    %c0_55 = arith.constant 0 : index
    %c0_56 = arith.constant 0 : index
    %92 = vector.load %arg20[%c0_54, %c0_55, %c0_56] : memref<4x32x12xf32, #tpu.memory_space<vmem>>, vector<1x32x12xf32>
    %93 = vector.shape_cast %92 : vector<1x32x12xf32> to vector<32x12xf32>
    %cst_57 = arith.constant dense<0.000000e+00> : vector<32x12xf32>
    %94 = tpu.matmul %91, %93, %cst_57 {dimension_numbers = #tpu.dot_dimension_numbers<[1], [0], [0], [1], [0, 0, 1, 1], [], []>} : vector<32x32xf32>, vector<32x12xf32>, vector<32x12xf32> -> vector<32x12xf32>
    %95 = arith.mulf %25, %94 : vector<32x12xf32>
    %96 = tpu.concatenate %78, %95 in 1 : vector<32x32xf32>, vector<32x12xf32> -> vector<32x44xf32>
    %cst_58 = arith.constant dense<0.000000e+00> : vector<16x44xf32>
    %97 = tpu.matmul %13, %96, %cst_58 {dimension_numbers = #tpu.dot_dimension_numbers<[1], [0], [0], [1], [0, 0, 1, 1], [], []>} : vector<16x32xf32>, vector<32x44xf32>, vector<16x44xf32> -> vector<16x44xf32>
    %98 = vector.extract_strided_slice %97 {offsets = [0, 0], sizes = [16, 32], strides = [1, 1]} : vector<16x44xf32> to vector<16x32xf32>
    %99 = vector.extract_strided_slice %97 {offsets = [0, 32], sizes = [16, 12], strides = [1, 1]} : vector<16x44xf32> to vector<16x12xf32>
    %100 = vector.broadcast %14 : vector<16x1xf32> to vector<16x12xf32>
    %101 = arith.mulf %99, %100 : vector<16x12xf32>
    %102 = arith.addf %18, %101 : vector<16x12xf32>
    %103 = tpu.concatenate %17, %98 in 1 : vector<16x32xf32>, vector<16x32xf32> -> vector<16x64xf32>
    %c0_59 = arith.constant 0 : index
    %c0_60 = arith.constant 0 : index
    %c0_61 = arith.constant 0 : index
    %104 = vector.load %arg21[%c0_59, %c0_60, %c0_61] : memref<4x64x32xf32, #tpu.memory_space<vmem>>, vector<1x64x32xf32>
    %105 = vector.shape_cast %104 : vector<1x64x32xf32> to vector<64x32xf32>
    %cst_62 = arith.constant dense<0.000000e+00> : vector<16x32xf32>
    %106 = tpu.matmul %103, %105, %cst_62 {dimension_numbers = #tpu.dot_dimension_numbers<[1], [0], [0], [1], [0, 0, 1, 1], [], []>} : vector<16x64xf32>, vector<64x32xf32>, vector<16x32xf32> -> vector<16x32xf32>
    %c0_63 = arith.constant 0 : index
    %c0_64 = arith.constant 0 : index
    %c0_65 = arith.constant 0 : index
    %107 = vector.load %arg22[%c0_63, %c0_64, %c0_65] : memref<4x1x32xf32, #tpu.memory_space<vmem>>, vector<1x1x32xf32>
    %108 = vector.shape_cast %107 : vector<1x1x32xf32> to vector<1x32xf32>
    %109 = vector.broadcast %108 : vector<1x32xf32> to vector<16x32xf32>
    %110 = arith.addf %106, %109 : vector<16x32xf32>
    %111 = arith.negf %110 : vector<16x32xf32>
    %112 = math.exp %111 : vector<16x32xf32>
    %cst_66 = arith.constant 1.000000e+00 : f32
    %113 = vector.broadcast %cst_66 : f32 to vector<16x32xf32>
    %114 = arith.addf %113, %112 : vector<16x32xf32>
    %115 = arith.divf %113, %114 : vector<16x32xf32>
    %116 = arith.mulf %110, %115 : vector<16x32xf32>
    %c0_67 = arith.constant 0 : index
    %c0_68 = arith.constant 0 : index
    %c0_69 = arith.constant 0 : index
    %117 = vector.load %arg23[%c0_67, %c0_68, %c0_69] : memref<4x32x32xf32, #tpu.memory_space<vmem>>, vector<1x32x32xf32>
    %118 = vector.shape_cast %117 : vector<1x32x32xf32> to vector<32x32xf32>
    %cst_70 = arith.constant dense<0.000000e+00> : vector<16x32xf32>
    %119 = tpu.matmul %116, %118, %cst_70 {dimension_numbers = #tpu.dot_dimension_numbers<[1], [0], [0], [1], [0, 0, 1, 1], [], []>} : vector<16x32xf32>, vector<32x32xf32>, vector<16x32xf32> -> vector<16x32xf32>
    %120 = arith.addf %17, %119 : vector<16x32xf32>
    %c0_71 = arith.constant 0 : index
    %c0_72 = arith.constant 0 : index
    %c0_73 = arith.constant 0 : index
    %121 = vector.load %arg24[%c0_71, %c0_72, %c0_73] : memref<4x1x32xf32, #tpu.memory_space<vmem>>, vector<1x1x32xf32>
    %122 = vector.shape_cast %121 : vector<1x1x32xf32> to vector<1x32xf32>
    %123 = vector.broadcast %122 : vector<1x32xf32> to vector<16x32xf32>
    %124 = arith.addf %120, %123 : vector<16x32xf32>
    %125 = tpu.concatenate %124, %102 in 1 : vector<16x32xf32>, vector<16x12xf32> -> vector<16x44xf32>
    %c0_74 = arith.constant 0 : index
    %c0_75 = arith.constant 0 : index
    %126 = vector.load %arg11[%c0_74, %c0_75] : memref<24x16xf32, #tpu.memory_space<vmem>>, vector<24x16xf32>
    %c0_76 = arith.constant 0 : index
    %c0_77 = arith.constant 0 : index
    %127 = vector.load %arg12[%c0_76, %c0_77] : memref<24x16xf32, #tpu.memory_space<vmem>>, vector<24x16xf32>
    %c0_78 = arith.constant 0 : index
    %c0_79 = arith.constant 0 : index
    %128 = vector.load %arg13[%c0_78, %c0_79] : memref<16x24xf32, #tpu.memory_space<vmem>>, vector<16x24xf32>
    %c0_80 = arith.constant 0 : index
    %c0_81 = arith.constant 0 : index
    %129 = vector.load %arg14[%c0_80, %c0_81] : memref<16x1xf32, #tpu.memory_space<vmem>>, vector<16x1xf32>
    %c0_82 = arith.constant 0 : index
    %c0_83 = arith.constant 0 : index
    %c0_84 = arith.constant 0 : index
    %130 = vector.load %arg26[%c0_82, %c0_83, %c0_84] : memref<2x24x96xf32, #tpu.memory_space<vmem>>, vector<1x24x96xf32>
    %131 = vector.shape_cast %130 : vector<1x24x96xf32> to vector<24x96xf32>
    %132 = vector.extract_strided_slice %125 {offsets = [0, 0], sizes = [16, 32], strides = [1, 1]} : vector<16x44xf32> to vector<16x32xf32>
    %133 = vector.extract_strided_slice %125 {offsets = [0, 32], sizes = [16, 12], strides = [1, 1]} : vector<16x44xf32> to vector<16x12xf32>
    %cst_85 = arith.constant dense<0.000000e+00> : vector<24x44xf32>
    %134 = tpu.matmul %126, %125, %cst_85 {dimension_numbers = #tpu.dot_dimension_numbers<[1], [0], [0], [1], [0, 0, 1, 1], [], []>} : vector<24x16xf32>, vector<16x44xf32>, vector<24x44xf32> -> vector<24x44xf32>
    %cst_86 = arith.constant dense<0.000000e+00> : vector<24x44xf32>
    %135 = tpu.matmul %127, %125, %cst_86 {dimension_numbers = #tpu.dot_dimension_numbers<[1], [0], [0], [1], [0, 0, 1, 1], [], []>} : vector<24x16xf32>, vector<16x44xf32>, vector<24x44xf32> -> vector<24x44xf32>
    %136 = vector.extract_strided_slice %134 {offsets = [0, 0], sizes = [24, 32], strides = [1, 1]} : vector<24x44xf32> to vector<24x32xf32>
    %137 = vector.extract_strided_slice %134 {offsets = [0, 32], sizes = [24, 12], strides = [1, 1]} : vector<24x44xf32> to vector<24x12xf32>
    %138 = vector.extract_strided_slice %135 {offsets = [0, 0], sizes = [24, 32], strides = [1, 1]} : vector<24x44xf32> to vector<24x32xf32>
    %139 = vector.extract_strided_slice %135 {offsets = [0, 32], sizes = [24, 12], strides = [1, 1]} : vector<24x44xf32> to vector<24x12xf32>
    %140 = arith.subf %137, %139 : vector<24x12xf32>
    %cst_87 = arith.constant dense<0.000000e+00> : vector<24x48xf32>
    %141 = tpu.matmul %140, %7, %cst_87 {dimension_numbers = #tpu.dot_dimension_numbers<[1], [0], [0], [1], [0, 0, 1, 1], [], []>} : vector<24x12xf32>, vector<12x48xf32>, vector<24x48xf32> -> vector<24x48xf32>
    %cst_88 = arith.constant dense<0.000000e+00> : vector<24x48xf32>
    %142 = tpu.matmul %140, %8, %cst_88 {dimension_numbers = #tpu.dot_dimension_numbers<[1], [0], [0], [1], [0, 0, 1, 1], [], []>} : vector<24x12xf32>, vector<12x48xf32>, vector<24x48xf32> -> vector<24x48xf32>
    %143 = arith.mulf %141, %142 : vector<24x48xf32>
    %cst_89 = arith.constant dense<0.000000e+00> : vector<24x16xf32>
    %144 = tpu.matmul %143, %9, %cst_89 {dimension_numbers = #tpu.dot_dimension_numbers<[1], [0], [0], [1], [0, 0, 1, 1], [], []>} : vector<24x48xf32>, vector<48x16xf32>, vector<24x16xf32> -> vector<24x16xf32>
    %145 = arith.mulf %144, %144 : vector<24x16xf32>
    %cst_90 = arith.constant dense<0.000000e+00> : vector<16xf32>
    %146 = vector.multi_reduction <add>, %145, %cst_90 [0] : vector<24x16xf32> to vector<16xf32>
    %147 = vector.shape_cast %146 : vector<16xf32> to vector<1x16xf32>
    %148 = math.sqrt %147 : vector<1x16xf32>
    %cst_91 = arith.constant 9.99999996E-13 : f32
    %149 = vector.broadcast %cst_91 : f32 to vector<1x16xf32>
    %150 = arith.maximumf %148, %149 : vector<1x16xf32>
    %151 = vector.broadcast %150 : vector<1x16xf32> to vector<24x16xf32>
    %152 = arith.divf %144, %151 : vector<24x16xf32>
    %153 = tpu.concatenate %136, %138, %152 in 1 : vector<24x32xf32>, vector<24x32xf32>, vector<24x16xf32> -> vector<24x80xf32>
    %c1 = arith.constant 1 : index
    %c0_92 = arith.constant 0 : index
    %c0_93 = arith.constant 0 : index
    %154 = vector.load %arg15[%c1, %c0_92, %c0_93] : memref<4x80x96xf32, #tpu.memory_space<vmem>>, vector<1x80x96xf32>
    %155 = vector.shape_cast %154 : vector<1x80x96xf32> to vector<80x96xf32>
    %cst_94 = arith.constant dense<0.000000e+00> : vector<24x96xf32>
    %156 = tpu.matmul %153, %155, %cst_94 {dimension_numbers = #tpu.dot_dimension_numbers<[1], [0], [0], [1], [0, 0, 1, 1], [], []>} : vector<24x80xf32>, vector<80x96xf32>, vector<24x96xf32> -> vector<24x96xf32>
    %157 = arith.addf %156, %131 : vector<24x96xf32>
    %158 = vector.extract_strided_slice %157 {offsets = [0, 0], sizes = [24, 64], strides = [1, 1]} : vector<24x96xf32> to vector<24x64xf32>
    %159 = arith.negf %158 : vector<24x64xf32>
    %160 = math.exp %159 : vector<24x64xf32>
    %cst_95 = arith.constant 1.000000e+00 : f32
    %161 = vector.broadcast %cst_95 : f32 to vector<24x64xf32>
    %162 = arith.addf %161, %160 : vector<24x64xf32>
    %163 = arith.divf %161, %162 : vector<24x64xf32>
    %164 = arith.mulf %158, %163 : vector<24x64xf32>
    %165 = vector.extract_strided_slice %157 {offsets = [0, 64], sizes = [24, 32], strides = [1, 1]} : vector<24x96xf32> to vector<24x32xf32>
    %166 = arith.negf %165 : vector<24x32xf32>
    %167 = math.exp %166 : vector<24x32xf32>
    %cst_96 = arith.constant 1.000000e+00 : f32
    %168 = vector.broadcast %cst_96 : f32 to vector<24x32xf32>
    %169 = arith.addf %168, %167 : vector<24x32xf32>
    %170 = arith.divf %168, %169 : vector<24x32xf32>
    %171 = arith.mulf %165, %170 : vector<24x32xf32>
    %c1_97 = arith.constant 1 : index
    %c0_98 = arith.constant 0 : index
    %c0_99 = arith.constant 0 : index
    %172 = vector.load %arg16[%c1_97, %c0_98, %c0_99] : memref<4x64x64xf32, #tpu.memory_space<vmem>>, vector<1x64x64xf32>
    %173 = vector.shape_cast %172 : vector<1x64x64xf32> to vector<64x64xf32>
    %cst_100 = arith.constant dense<0.000000e+00> : vector<24x64xf32>
    %174 = tpu.matmul %164, %173, %cst_100 {dimension_numbers = #tpu.dot_dimension_numbers<[1], [0], [0], [1], [0, 0, 1, 1], [], []>} : vector<24x64xf32>, vector<64x64xf32>, vector<24x64xf32> -> vector<24x64xf32>
    %c1_101 = arith.constant 1 : index
    %c0_102 = arith.constant 0 : index
    %c0_103 = arith.constant 0 : index
    %175 = vector.load %arg17[%c1_101, %c0_102, %c0_103] : memref<4x1x64xf32, #tpu.memory_space<vmem>>, vector<1x1x64xf32>
    %176 = vector.shape_cast %175 : vector<1x1x64xf32> to vector<1x64xf32>
    %177 = vector.broadcast %176 : vector<1x64xf32> to vector<24x64xf32>
    %178 = arith.addf %174, %177 : vector<24x64xf32>
    %179 = vector.extract_strided_slice %178 {offsets = [0, 0], sizes = [24, 32], strides = [1, 1]} : vector<24x64xf32> to vector<24x32xf32>
    %180 = arith.negf %179 : vector<24x32xf32>
    %181 = math.exp %180 : vector<24x32xf32>
    %cst_104 = arith.constant 1.000000e+00 : f32
    %182 = vector.broadcast %cst_104 : f32 to vector<24x32xf32>
    %183 = arith.addf %182, %181 : vector<24x32xf32>
    %184 = arith.divf %182, %183 : vector<24x32xf32>
    %185 = arith.mulf %138, %184 : vector<24x32xf32>
    %186 = vector.extract_strided_slice %178 {offsets = [0, 32], sizes = [24, 32], strides = [1, 1]} : vector<24x64xf32> to vector<24x32xf32>
    %187 = arith.negf %186 : vector<24x32xf32>
    %188 = math.exp %187 : vector<24x32xf32>
    %cst_105 = arith.constant 1.000000e+00 : f32
    %189 = vector.broadcast %cst_105 : f32 to vector<24x32xf32>
    %190 = arith.addf %189, %188 : vector<24x32xf32>
    %191 = arith.divf %189, %190 : vector<24x32xf32>
    %192 = arith.mulf %136, %191 : vector<24x32xf32>
    %193 = arith.addf %185, %192 : vector<24x32xf32>
    %c1_106 = arith.constant 1 : index
    %c0_107 = arith.constant 0 : index
    %c0_108 = arith.constant 0 : index
    %194 = vector.load %arg18[%c1_106, %c0_107, %c0_108] : memref<4x32x32xf32, #tpu.memory_space<vmem>>, vector<1x32x32xf32>
    %195 = vector.shape_cast %194 : vector<1x32x32xf32> to vector<32x32xf32>
    %cst_109 = arith.constant dense<0.000000e+00> : vector<24x32xf32>
    %196 = tpu.matmul %171, %195, %cst_109 {dimension_numbers = #tpu.dot_dimension_numbers<[1], [0], [0], [1], [0, 0, 1, 1], [], []>} : vector<24x32xf32>, vector<32x32xf32>, vector<24x32xf32> -> vector<24x32xf32>
    %c1_110 = arith.constant 1 : index
    %c0_111 = arith.constant 0 : index
    %c0_112 = arith.constant 0 : index
    %197 = vector.load %arg19[%c1_110, %c0_111, %c0_112] : memref<4x1x32xf32, #tpu.memory_space<vmem>>, vector<1x1x32xf32>
    %198 = vector.shape_cast %197 : vector<1x1x32xf32> to vector<1x32xf32>
    %199 = vector.broadcast %198 : vector<1x32xf32> to vector<24x32xf32>
    %200 = arith.addf %196, %199 : vector<24x32xf32>
    %201 = arith.negf %200 : vector<24x32xf32>
    %202 = math.exp %201 : vector<24x32xf32>
    %cst_113 = arith.constant 1.000000e+00 : f32
    %203 = vector.broadcast %cst_113 : f32 to vector<24x32xf32>
    %204 = arith.addf %203, %202 : vector<24x32xf32>
    %205 = arith.divf %203, %204 : vector<24x32xf32>
    %206 = arith.mulf %200, %205 : vector<24x32xf32>
    %c1_114 = arith.constant 1 : index
    %c0_115 = arith.constant 0 : index
    %c0_116 = arith.constant 0 : index
    %207 = vector.load %arg20[%c1_114, %c0_115, %c0_116] : memref<4x32x12xf32, #tpu.memory_space<vmem>>, vector<1x32x12xf32>
    %208 = vector.shape_cast %207 : vector<1x32x12xf32> to vector<32x12xf32>
    %cst_117 = arith.constant dense<0.000000e+00> : vector<24x12xf32>
    %209 = tpu.matmul %206, %208, %cst_117 {dimension_numbers = #tpu.dot_dimension_numbers<[1], [0], [0], [1], [0, 0, 1, 1], [], []>} : vector<24x32xf32>, vector<32x12xf32>, vector<24x12xf32> -> vector<24x12xf32>
    %210 = arith.mulf %140, %209 : vector<24x12xf32>
    %211 = tpu.concatenate %193, %210 in 1 : vector<24x32xf32>, vector<24x12xf32> -> vector<24x44xf32>
    %cst_118 = arith.constant dense<0.000000e+00> : vector<16x44xf32>
    %212 = tpu.matmul %128, %211, %cst_118 {dimension_numbers = #tpu.dot_dimension_numbers<[1], [0], [0], [1], [0, 0, 1, 1], [], []>} : vector<16x24xf32>, vector<24x44xf32>, vector<16x44xf32> -> vector<16x44xf32>
    %213 = vector.extract_strided_slice %212 {offsets = [0, 0], sizes = [16, 32], strides = [1, 1]} : vector<16x44xf32> to vector<16x32xf32>
    %214 = vector.extract_strided_slice %212 {offsets = [0, 32], sizes = [16, 12], strides = [1, 1]} : vector<16x44xf32> to vector<16x12xf32>
    %215 = vector.broadcast %129 : vector<16x1xf32> to vector<16x12xf32>
    %216 = arith.mulf %214, %215 : vector<16x12xf32>
    %217 = arith.addf %133, %216 : vector<16x12xf32>
    %218 = tpu.concatenate %132, %213 in 1 : vector<16x32xf32>, vector<16x32xf32> -> vector<16x64xf32>
    %c1_119 = arith.constant 1 : index
    %c0_120 = arith.constant 0 : index
    %c0_121 = arith.constant 0 : index
    %219 = vector.load %arg21[%c1_119, %c0_120, %c0_121] : memref<4x64x32xf32, #tpu.memory_space<vmem>>, vector<1x64x32xf32>
    %220 = vector.shape_cast %219 : vector<1x64x32xf32> to vector<64x32xf32>
    %cst_122 = arith.constant dense<0.000000e+00> : vector<16x32xf32>
    %221 = tpu.matmul %218, %220, %cst_122 {dimension_numbers = #tpu.dot_dimension_numbers<[1], [0], [0], [1], [0, 0, 1, 1], [], []>} : vector<16x64xf32>, vector<64x32xf32>, vector<16x32xf32> -> vector<16x32xf32>
    %c1_123 = arith.constant 1 : index
    %c0_124 = arith.constant 0 : index
    %c0_125 = arith.constant 0 : index
    %222 = vector.load %arg22[%c1_123, %c0_124, %c0_125] : memref<4x1x32xf32, #tpu.memory_space<vmem>>, vector<1x1x32xf32>
    %223 = vector.shape_cast %222 : vector<1x1x32xf32> to vector<1x32xf32>
    %224 = vector.broadcast %223 : vector<1x32xf32> to vector<16x32xf32>
    %225 = arith.addf %221, %224 : vector<16x32xf32>
    %226 = arith.negf %225 : vector<16x32xf32>
    %227 = math.exp %226 : vector<16x32xf32>
    %cst_126 = arith.constant 1.000000e+00 : f32
    %228 = vector.broadcast %cst_126 : f32 to vector<16x32xf32>
    %229 = arith.addf %228, %227 : vector<16x32xf32>
    %230 = arith.divf %228, %229 : vector<16x32xf32>
    %231 = arith.mulf %225, %230 : vector<16x32xf32>
    %c1_127 = arith.constant 1 : index
    %c0_128 = arith.constant 0 : index
    %c0_129 = arith.constant 0 : index
    %232 = vector.load %arg23[%c1_127, %c0_128, %c0_129] : memref<4x32x32xf32, #tpu.memory_space<vmem>>, vector<1x32x32xf32>
    %233 = vector.shape_cast %232 : vector<1x32x32xf32> to vector<32x32xf32>
    %cst_130 = arith.constant dense<0.000000e+00> : vector<16x32xf32>
    %234 = tpu.matmul %231, %233, %cst_130 {dimension_numbers = #tpu.dot_dimension_numbers<[1], [0], [0], [1], [0, 0, 1, 1], [], []>} : vector<16x32xf32>, vector<32x32xf32>, vector<16x32xf32> -> vector<16x32xf32>
    %235 = arith.addf %132, %234 : vector<16x32xf32>
    %c1_131 = arith.constant 1 : index
    %c0_132 = arith.constant 0 : index
    %c0_133 = arith.constant 0 : index
    %236 = vector.load %arg24[%c1_131, %c0_132, %c0_133] : memref<4x1x32xf32, #tpu.memory_space<vmem>>, vector<1x1x32xf32>
    %237 = vector.shape_cast %236 : vector<1x1x32xf32> to vector<1x32xf32>
    %238 = vector.broadcast %237 : vector<1x32xf32> to vector<16x32xf32>
    %239 = arith.addf %235, %238 : vector<16x32xf32>
    %240 = tpu.concatenate %239, %217 in 1 : vector<16x32xf32>, vector<16x12xf32> -> vector<16x44xf32>
    %c0_134 = arith.constant 0 : index
    %c0_135 = arith.constant 0 : index
    %241 = vector.load %arg7[%c0_134, %c0_135] : memref<32x16xf32, #tpu.memory_space<vmem>>, vector<32x16xf32>
    %c0_136 = arith.constant 0 : index
    %c0_137 = arith.constant 0 : index
    %242 = vector.load %arg8[%c0_136, %c0_137] : memref<32x16xf32, #tpu.memory_space<vmem>>, vector<32x16xf32>
    %c0_138 = arith.constant 0 : index
    %c0_139 = arith.constant 0 : index
    %243 = vector.load %arg9[%c0_138, %c0_139] : memref<16x32xf32, #tpu.memory_space<vmem>>, vector<16x32xf32>
    %c0_140 = arith.constant 0 : index
    %c0_141 = arith.constant 0 : index
    %244 = vector.load %arg10[%c0_140, %c0_141] : memref<16x1xf32, #tpu.memory_space<vmem>>, vector<16x1xf32>
    %c1_142 = arith.constant 1 : index
    %c0_143 = arith.constant 0 : index
    %c0_144 = arith.constant 0 : index
    %245 = vector.load %arg25[%c1_142, %c0_143, %c0_144] : memref<2x32x96xf32, #tpu.memory_space<vmem>>, vector<1x32x96xf32>
    %246 = vector.shape_cast %245 : vector<1x32x96xf32> to vector<32x96xf32>
    %247 = vector.extract_strided_slice %240 {offsets = [0, 0], sizes = [16, 32], strides = [1, 1]} : vector<16x44xf32> to vector<16x32xf32>
    %248 = vector.extract_strided_slice %240 {offsets = [0, 32], sizes = [16, 12], strides = [1, 1]} : vector<16x44xf32> to vector<16x12xf32>
    %cst_145 = arith.constant dense<0.000000e+00> : vector<32x44xf32>
    %249 = tpu.matmul %241, %240, %cst_145 {dimension_numbers = #tpu.dot_dimension_numbers<[1], [0], [0], [1], [0, 0, 1, 1], [], []>} : vector<32x16xf32>, vector<16x44xf32>, vector<32x44xf32> -> vector<32x44xf32>
    %cst_146 = arith.constant dense<0.000000e+00> : vector<32x44xf32>
    %250 = tpu.matmul %242, %240, %cst_146 {dimension_numbers = #tpu.dot_dimension_numbers<[1], [0], [0], [1], [0, 0, 1, 1], [], []>} : vector<32x16xf32>, vector<16x44xf32>, vector<32x44xf32> -> vector<32x44xf32>
    %251 = vector.extract_strided_slice %249 {offsets = [0, 0], sizes = [32, 32], strides = [1, 1]} : vector<32x44xf32> to vector<32x32xf32>
    %252 = vector.extract_strided_slice %249 {offsets = [0, 32], sizes = [32, 12], strides = [1, 1]} : vector<32x44xf32> to vector<32x12xf32>
    %253 = vector.extract_strided_slice %250 {offsets = [0, 0], sizes = [32, 32], strides = [1, 1]} : vector<32x44xf32> to vector<32x32xf32>
    %254 = vector.extract_strided_slice %250 {offsets = [0, 32], sizes = [32, 12], strides = [1, 1]} : vector<32x44xf32> to vector<32x12xf32>
    %255 = arith.subf %252, %254 : vector<32x12xf32>
    %cst_147 = arith.constant dense<0.000000e+00> : vector<32x48xf32>
    %256 = tpu.matmul %255, %7, %cst_147 {dimension_numbers = #tpu.dot_dimension_numbers<[1], [0], [0], [1], [0, 0, 1, 1], [], []>} : vector<32x12xf32>, vector<12x48xf32>, vector<32x48xf32> -> vector<32x48xf32>
    %cst_148 = arith.constant dense<0.000000e+00> : vector<32x48xf32>
    %257 = tpu.matmul %255, %8, %cst_148 {dimension_numbers = #tpu.dot_dimension_numbers<[1], [0], [0], [1], [0, 0, 1, 1], [], []>} : vector<32x12xf32>, vector<12x48xf32>, vector<32x48xf32> -> vector<32x48xf32>
    %258 = arith.mulf %256, %257 : vector<32x48xf32>
    %cst_149 = arith.constant dense<0.000000e+00> : vector<32x16xf32>
    %259 = tpu.matmul %258, %9, %cst_149 {dimension_numbers = #tpu.dot_dimension_numbers<[1], [0], [0], [1], [0, 0, 1, 1], [], []>} : vector<32x48xf32>, vector<48x16xf32>, vector<32x16xf32> -> vector<32x16xf32>
    %260 = arith.mulf %259, %259 : vector<32x16xf32>
    %cst_150 = arith.constant dense<0.000000e+00> : vector<16xf32>
    %261 = vector.multi_reduction <add>, %260, %cst_150 [0] : vector<32x16xf32> to vector<16xf32>
    %262 = vector.shape_cast %261 : vector<16xf32> to vector<1x16xf32>
    %263 = math.sqrt %262 : vector<1x16xf32>
    %cst_151 = arith.constant 9.99999996E-13 : f32
    %264 = vector.broadcast %cst_151 : f32 to vector<1x16xf32>
    %265 = arith.maximumf %263, %264 : vector<1x16xf32>
    %266 = vector.broadcast %265 : vector<1x16xf32> to vector<32x16xf32>
    %267 = arith.divf %259, %266 : vector<32x16xf32>
    %268 = tpu.concatenate %251, %253, %267 in 1 : vector<32x32xf32>, vector<32x32xf32>, vector<32x16xf32> -> vector<32x80xf32>
    %c2 = arith.constant 2 : index
    %c0_152 = arith.constant 0 : index
    %c0_153 = arith.constant 0 : index
    %269 = vector.load %arg15[%c2, %c0_152, %c0_153] : memref<4x80x96xf32, #tpu.memory_space<vmem>>, vector<1x80x96xf32>
    %270 = vector.shape_cast %269 : vector<1x80x96xf32> to vector<80x96xf32>
    %cst_154 = arith.constant dense<0.000000e+00> : vector<32x96xf32>
    %271 = tpu.matmul %268, %270, %cst_154 {dimension_numbers = #tpu.dot_dimension_numbers<[1], [0], [0], [1], [0, 0, 1, 1], [], []>} : vector<32x80xf32>, vector<80x96xf32>, vector<32x96xf32> -> vector<32x96xf32>
    %272 = arith.addf %271, %246 : vector<32x96xf32>
    %273 = vector.extract_strided_slice %272 {offsets = [0, 0], sizes = [32, 64], strides = [1, 1]} : vector<32x96xf32> to vector<32x64xf32>
    %274 = arith.negf %273 : vector<32x64xf32>
    %275 = math.exp %274 : vector<32x64xf32>
    %cst_155 = arith.constant 1.000000e+00 : f32
    %276 = vector.broadcast %cst_155 : f32 to vector<32x64xf32>
    %277 = arith.addf %276, %275 : vector<32x64xf32>
    %278 = arith.divf %276, %277 : vector<32x64xf32>
    %279 = arith.mulf %273, %278 : vector<32x64xf32>
    %280 = vector.extract_strided_slice %272 {offsets = [0, 64], sizes = [32, 32], strides = [1, 1]} : vector<32x96xf32> to vector<32x32xf32>
    %281 = arith.negf %280 : vector<32x32xf32>
    %282 = math.exp %281 : vector<32x32xf32>
    %cst_156 = arith.constant 1.000000e+00 : f32
    %283 = vector.broadcast %cst_156 : f32 to vector<32x32xf32>
    %284 = arith.addf %283, %282 : vector<32x32xf32>
    %285 = arith.divf %283, %284 : vector<32x32xf32>
    %286 = arith.mulf %280, %285 : vector<32x32xf32>
    %c2_157 = arith.constant 2 : index
    %c0_158 = arith.constant 0 : index
    %c0_159 = arith.constant 0 : index
    %287 = vector.load %arg16[%c2_157, %c0_158, %c0_159] : memref<4x64x64xf32, #tpu.memory_space<vmem>>, vector<1x64x64xf32>
    %288 = vector.shape_cast %287 : vector<1x64x64xf32> to vector<64x64xf32>
    %cst_160 = arith.constant dense<0.000000e+00> : vector<32x64xf32>
    %289 = tpu.matmul %279, %288, %cst_160 {dimension_numbers = #tpu.dot_dimension_numbers<[1], [0], [0], [1], [0, 0, 1, 1], [], []>} : vector<32x64xf32>, vector<64x64xf32>, vector<32x64xf32> -> vector<32x64xf32>
    %c2_161 = arith.constant 2 : index
    %c0_162 = arith.constant 0 : index
    %c0_163 = arith.constant 0 : index
    %290 = vector.load %arg17[%c2_161, %c0_162, %c0_163] : memref<4x1x64xf32, #tpu.memory_space<vmem>>, vector<1x1x64xf32>
    %291 = vector.shape_cast %290 : vector<1x1x64xf32> to vector<1x64xf32>
    %292 = vector.broadcast %291 : vector<1x64xf32> to vector<32x64xf32>
    %293 = arith.addf %289, %292 : vector<32x64xf32>
    %294 = vector.extract_strided_slice %293 {offsets = [0, 0], sizes = [32, 32], strides = [1, 1]} : vector<32x64xf32> to vector<32x32xf32>
    %295 = arith.negf %294 : vector<32x32xf32>
    %296 = math.exp %295 : vector<32x32xf32>
    %cst_164 = arith.constant 1.000000e+00 : f32
    %297 = vector.broadcast %cst_164 : f32 to vector<32x32xf32>
    %298 = arith.addf %297, %296 : vector<32x32xf32>
    %299 = arith.divf %297, %298 : vector<32x32xf32>
    %300 = arith.mulf %253, %299 : vector<32x32xf32>
    %301 = vector.extract_strided_slice %293 {offsets = [0, 32], sizes = [32, 32], strides = [1, 1]} : vector<32x64xf32> to vector<32x32xf32>
    %302 = arith.negf %301 : vector<32x32xf32>
    %303 = math.exp %302 : vector<32x32xf32>
    %cst_165 = arith.constant 1.000000e+00 : f32
    %304 = vector.broadcast %cst_165 : f32 to vector<32x32xf32>
    %305 = arith.addf %304, %303 : vector<32x32xf32>
    %306 = arith.divf %304, %305 : vector<32x32xf32>
    %307 = arith.mulf %251, %306 : vector<32x32xf32>
    %308 = arith.addf %300, %307 : vector<32x32xf32>
    %c2_166 = arith.constant 2 : index
    %c0_167 = arith.constant 0 : index
    %c0_168 = arith.constant 0 : index
    %309 = vector.load %arg18[%c2_166, %c0_167, %c0_168] : memref<4x32x32xf32, #tpu.memory_space<vmem>>, vector<1x32x32xf32>
    %310 = vector.shape_cast %309 : vector<1x32x32xf32> to vector<32x32xf32>
    %cst_169 = arith.constant dense<0.000000e+00> : vector<32x32xf32>
    %311 = tpu.matmul %286, %310, %cst_169 {dimension_numbers = #tpu.dot_dimension_numbers<[1], [0], [0], [1], [0, 0, 1, 1], [], []>} : vector<32x32xf32>, vector<32x32xf32>, vector<32x32xf32> -> vector<32x32xf32>
    %c2_170 = arith.constant 2 : index
    %c0_171 = arith.constant 0 : index
    %c0_172 = arith.constant 0 : index
    %312 = vector.load %arg19[%c2_170, %c0_171, %c0_172] : memref<4x1x32xf32, #tpu.memory_space<vmem>>, vector<1x1x32xf32>
    %313 = vector.shape_cast %312 : vector<1x1x32xf32> to vector<1x32xf32>
    %314 = vector.broadcast %313 : vector<1x32xf32> to vector<32x32xf32>
    %315 = arith.addf %311, %314 : vector<32x32xf32>
    %316 = arith.negf %315 : vector<32x32xf32>
    %317 = math.exp %316 : vector<32x32xf32>
    %cst_173 = arith.constant 1.000000e+00 : f32
    %318 = vector.broadcast %cst_173 : f32 to vector<32x32xf32>
    %319 = arith.addf %318, %317 : vector<32x32xf32>
    %320 = arith.divf %318, %319 : vector<32x32xf32>
    %321 = arith.mulf %315, %320 : vector<32x32xf32>
    %c2_174 = arith.constant 2 : index
    %c0_175 = arith.constant 0 : index
    %c0_176 = arith.constant 0 : index
    %322 = vector.load %arg20[%c2_174, %c0_175, %c0_176] : memref<4x32x12xf32, #tpu.memory_space<vmem>>, vector<1x32x12xf32>
    %323 = vector.shape_cast %322 : vector<1x32x12xf32> to vector<32x12xf32>
    %cst_177 = arith.constant dense<0.000000e+00> : vector<32x12xf32>
    %324 = tpu.matmul %321, %323, %cst_177 {dimension_numbers = #tpu.dot_dimension_numbers<[1], [0], [0], [1], [0, 0, 1, 1], [], []>} : vector<32x32xf32>, vector<32x12xf32>, vector<32x12xf32> -> vector<32x12xf32>
    %325 = arith.mulf %255, %324 : vector<32x12xf32>
    %326 = tpu.concatenate %308, %325 in 1 : vector<32x32xf32>, vector<32x12xf32> -> vector<32x44xf32>
    %cst_178 = arith.constant dense<0.000000e+00> : vector<16x44xf32>
    %327 = tpu.matmul %243, %326, %cst_178 {dimension_numbers = #tpu.dot_dimension_numbers<[1], [0], [0], [1], [0, 0, 1, 1], [], []>} : vector<16x32xf32>, vector<32x44xf32>, vector<16x44xf32> -> vector<16x44xf32>
    %328 = vector.extract_strided_slice %327 {offsets = [0, 0], sizes = [16, 32], strides = [1, 1]} : vector<16x44xf32> to vector<16x32xf32>
    %329 = vector.extract_strided_slice %327 {offsets = [0, 32], sizes = [16, 12], strides = [1, 1]} : vector<16x44xf32> to vector<16x12xf32>
    %330 = vector.broadcast %244 : vector<16x1xf32> to vector<16x12xf32>
    %331 = arith.mulf %329, %330 : vector<16x12xf32>
    %332 = arith.addf %248, %331 : vector<16x12xf32>
    %333 = tpu.concatenate %247, %328 in 1 : vector<16x32xf32>, vector<16x32xf32> -> vector<16x64xf32>
    %c2_179 = arith.constant 2 : index
    %c0_180 = arith.constant 0 : index
    %c0_181 = arith.constant 0 : index
    %334 = vector.load %arg21[%c2_179, %c0_180, %c0_181] : memref<4x64x32xf32, #tpu.memory_space<vmem>>, vector<1x64x32xf32>
    %335 = vector.shape_cast %334 : vector<1x64x32xf32> to vector<64x32xf32>
    %cst_182 = arith.constant dense<0.000000e+00> : vector<16x32xf32>
    %336 = tpu.matmul %333, %335, %cst_182 {dimension_numbers = #tpu.dot_dimension_numbers<[1], [0], [0], [1], [0, 0, 1, 1], [], []>} : vector<16x64xf32>, vector<64x32xf32>, vector<16x32xf32> -> vector<16x32xf32>
    %c2_183 = arith.constant 2 : index
    %c0_184 = arith.constant 0 : index
    %c0_185 = arith.constant 0 : index
    %337 = vector.load %arg22[%c2_183, %c0_184, %c0_185] : memref<4x1x32xf32, #tpu.memory_space<vmem>>, vector<1x1x32xf32>
    %338 = vector.shape_cast %337 : vector<1x1x32xf32> to vector<1x32xf32>
    %339 = vector.broadcast %338 : vector<1x32xf32> to vector<16x32xf32>
    %340 = arith.addf %336, %339 : vector<16x32xf32>
    %341 = arith.negf %340 : vector<16x32xf32>
    %342 = math.exp %341 : vector<16x32xf32>
    %cst_186 = arith.constant 1.000000e+00 : f32
    %343 = vector.broadcast %cst_186 : f32 to vector<16x32xf32>
    %344 = arith.addf %343, %342 : vector<16x32xf32>
    %345 = arith.divf %343, %344 : vector<16x32xf32>
    %346 = arith.mulf %340, %345 : vector<16x32xf32>
    %c2_187 = arith.constant 2 : index
    %c0_188 = arith.constant 0 : index
    %c0_189 = arith.constant 0 : index
    %347 = vector.load %arg23[%c2_187, %c0_188, %c0_189] : memref<4x32x32xf32, #tpu.memory_space<vmem>>, vector<1x32x32xf32>
    %348 = vector.shape_cast %347 : vector<1x32x32xf32> to vector<32x32xf32>
    %cst_190 = arith.constant dense<0.000000e+00> : vector<16x32xf32>
    %349 = tpu.matmul %346, %348, %cst_190 {dimension_numbers = #tpu.dot_dimension_numbers<[1], [0], [0], [1], [0, 0, 1, 1], [], []>} : vector<16x32xf32>, vector<32x32xf32>, vector<16x32xf32> -> vector<16x32xf32>
    %350 = arith.addf %247, %349 : vector<16x32xf32>
    %c2_191 = arith.constant 2 : index
    %c0_192 = arith.constant 0 : index
    %c0_193 = arith.constant 0 : index
    %351 = vector.load %arg24[%c2_191, %c0_192, %c0_193] : memref<4x1x32xf32, #tpu.memory_space<vmem>>, vector<1x1x32xf32>
    %352 = vector.shape_cast %351 : vector<1x1x32xf32> to vector<1x32xf32>
    %353 = vector.broadcast %352 : vector<1x32xf32> to vector<16x32xf32>
    %354 = arith.addf %350, %353 : vector<16x32xf32>
    %355 = tpu.concatenate %354, %332 in 1 : vector<16x32xf32>, vector<16x12xf32> -> vector<16x44xf32>
    %c0_194 = arith.constant 0 : index
    %c0_195 = arith.constant 0 : index
    %356 = vector.load %arg11[%c0_194, %c0_195] : memref<24x16xf32, #tpu.memory_space<vmem>>, vector<24x16xf32>
    %c0_196 = arith.constant 0 : index
    %c0_197 = arith.constant 0 : index
    %357 = vector.load %arg12[%c0_196, %c0_197] : memref<24x16xf32, #tpu.memory_space<vmem>>, vector<24x16xf32>
    %c0_198 = arith.constant 0 : index
    %c0_199 = arith.constant 0 : index
    %358 = vector.load %arg13[%c0_198, %c0_199] : memref<16x24xf32, #tpu.memory_space<vmem>>, vector<16x24xf32>
    %c0_200 = arith.constant 0 : index
    %c0_201 = arith.constant 0 : index
    %359 = vector.load %arg14[%c0_200, %c0_201] : memref<16x1xf32, #tpu.memory_space<vmem>>, vector<16x1xf32>
    %c1_202 = arith.constant 1 : index
    %c0_203 = arith.constant 0 : index
    %c0_204 = arith.constant 0 : index
    %360 = vector.load %arg26[%c1_202, %c0_203, %c0_204] : memref<2x24x96xf32, #tpu.memory_space<vmem>>, vector<1x24x96xf32>
    %361 = vector.shape_cast %360 : vector<1x24x96xf32> to vector<24x96xf32>
    %362 = vector.extract_strided_slice %355 {offsets = [0, 0], sizes = [16, 32], strides = [1, 1]} : vector<16x44xf32> to vector<16x32xf32>
    %363 = vector.extract_strided_slice %355 {offsets = [0, 32], sizes = [16, 12], strides = [1, 1]} : vector<16x44xf32> to vector<16x12xf32>
    %cst_205 = arith.constant dense<0.000000e+00> : vector<24x44xf32>
    %364 = tpu.matmul %356, %355, %cst_205 {dimension_numbers = #tpu.dot_dimension_numbers<[1], [0], [0], [1], [0, 0, 1, 1], [], []>} : vector<24x16xf32>, vector<16x44xf32>, vector<24x44xf32> -> vector<24x44xf32>
    %cst_206 = arith.constant dense<0.000000e+00> : vector<24x44xf32>
    %365 = tpu.matmul %357, %355, %cst_206 {dimension_numbers = #tpu.dot_dimension_numbers<[1], [0], [0], [1], [0, 0, 1, 1], [], []>} : vector<24x16xf32>, vector<16x44xf32>, vector<24x44xf32> -> vector<24x44xf32>
    %366 = vector.extract_strided_slice %364 {offsets = [0, 0], sizes = [24, 32], strides = [1, 1]} : vector<24x44xf32> to vector<24x32xf32>
    %367 = vector.extract_strided_slice %364 {offsets = [0, 32], sizes = [24, 12], strides = [1, 1]} : vector<24x44xf32> to vector<24x12xf32>
    %368 = vector.extract_strided_slice %365 {offsets = [0, 0], sizes = [24, 32], strides = [1, 1]} : vector<24x44xf32> to vector<24x32xf32>
    %369 = vector.extract_strided_slice %365 {offsets = [0, 32], sizes = [24, 12], strides = [1, 1]} : vector<24x44xf32> to vector<24x12xf32>
    %370 = arith.subf %367, %369 : vector<24x12xf32>
    %cst_207 = arith.constant dense<0.000000e+00> : vector<24x48xf32>
    %371 = tpu.matmul %370, %7, %cst_207 {dimension_numbers = #tpu.dot_dimension_numbers<[1], [0], [0], [1], [0, 0, 1, 1], [], []>} : vector<24x12xf32>, vector<12x48xf32>, vector<24x48xf32> -> vector<24x48xf32>
    %cst_208 = arith.constant dense<0.000000e+00> : vector<24x48xf32>
    %372 = tpu.matmul %370, %8, %cst_208 {dimension_numbers = #tpu.dot_dimension_numbers<[1], [0], [0], [1], [0, 0, 1, 1], [], []>} : vector<24x12xf32>, vector<12x48xf32>, vector<24x48xf32> -> vector<24x48xf32>
    %373 = arith.mulf %371, %372 : vector<24x48xf32>
    %cst_209 = arith.constant dense<0.000000e+00> : vector<24x16xf32>
    %374 = tpu.matmul %373, %9, %cst_209 {dimension_numbers = #tpu.dot_dimension_numbers<[1], [0], [0], [1], [0, 0, 1, 1], [], []>} : vector<24x48xf32>, vector<48x16xf32>, vector<24x16xf32> -> vector<24x16xf32>
    %375 = arith.mulf %374, %374 : vector<24x16xf32>
    %cst_210 = arith.constant dense<0.000000e+00> : vector<16xf32>
    %376 = vector.multi_reduction <add>, %375, %cst_210 [0] : vector<24x16xf32> to vector<16xf32>
    %377 = vector.shape_cast %376 : vector<16xf32> to vector<1x16xf32>
    %378 = math.sqrt %377 : vector<1x16xf32>
    %cst_211 = arith.constant 9.99999996E-13 : f32
    %379 = vector.broadcast %cst_211 : f32 to vector<1x16xf32>
    %380 = arith.maximumf %378, %379 : vector<1x16xf32>
    %381 = vector.broadcast %380 : vector<1x16xf32> to vector<24x16xf32>
    %382 = arith.divf %374, %381 : vector<24x16xf32>
    %383 = tpu.concatenate %366, %368, %382 in 1 : vector<24x32xf32>, vector<24x32xf32>, vector<24x16xf32> -> vector<24x80xf32>
    %c3 = arith.constant 3 : index
    %c0_212 = arith.constant 0 : index
    %c0_213 = arith.constant 0 : index
    %384 = vector.load %arg15[%c3, %c0_212, %c0_213] : memref<4x80x96xf32, #tpu.memory_space<vmem>>, vector<1x80x96xf32>
    %385 = vector.shape_cast %384 : vector<1x80x96xf32> to vector<80x96xf32>
    %cst_214 = arith.constant dense<0.000000e+00> : vector<24x96xf32>
    %386 = tpu.matmul %383, %385, %cst_214 {dimension_numbers = #tpu.dot_dimension_numbers<[1], [0], [0], [1], [0, 0, 1, 1], [], []>} : vector<24x80xf32>, vector<80x96xf32>, vector<24x96xf32> -> vector<24x96xf32>
    %387 = arith.addf %386, %361 : vector<24x96xf32>
    %388 = vector.extract_strided_slice %387 {offsets = [0, 0], sizes = [24, 64], strides = [1, 1]} : vector<24x96xf32> to vector<24x64xf32>
    %389 = arith.negf %388 : vector<24x64xf32>
    %390 = math.exp %389 : vector<24x64xf32>
    %cst_215 = arith.constant 1.000000e+00 : f32
    %391 = vector.broadcast %cst_215 : f32 to vector<24x64xf32>
    %392 = arith.addf %391, %390 : vector<24x64xf32>
    %393 = arith.divf %391, %392 : vector<24x64xf32>
    %394 = arith.mulf %388, %393 : vector<24x64xf32>
    %395 = vector.extract_strided_slice %387 {offsets = [0, 64], sizes = [24, 32], strides = [1, 1]} : vector<24x96xf32> to vector<24x32xf32>
    %396 = arith.negf %395 : vector<24x32xf32>
    %397 = math.exp %396 : vector<24x32xf32>
    %cst_216 = arith.constant 1.000000e+00 : f32
    %398 = vector.broadcast %cst_216 : f32 to vector<24x32xf32>
    %399 = arith.addf %398, %397 : vector<24x32xf32>
    %400 = arith.divf %398, %399 : vector<24x32xf32>
    %401 = arith.mulf %395, %400 : vector<24x32xf32>
    %c3_217 = arith.constant 3 : index
    %c0_218 = arith.constant 0 : index
    %c0_219 = arith.constant 0 : index
    %402 = vector.load %arg16[%c3_217, %c0_218, %c0_219] : memref<4x64x64xf32, #tpu.memory_space<vmem>>, vector<1x64x64xf32>
    %403 = vector.shape_cast %402 : vector<1x64x64xf32> to vector<64x64xf32>
    %cst_220 = arith.constant dense<0.000000e+00> : vector<24x64xf32>
    %404 = tpu.matmul %394, %403, %cst_220 {dimension_numbers = #tpu.dot_dimension_numbers<[1], [0], [0], [1], [0, 0, 1, 1], [], []>} : vector<24x64xf32>, vector<64x64xf32>, vector<24x64xf32> -> vector<24x64xf32>
    %c3_221 = arith.constant 3 : index
    %c0_222 = arith.constant 0 : index
    %c0_223 = arith.constant 0 : index
    %405 = vector.load %arg17[%c3_221, %c0_222, %c0_223] : memref<4x1x64xf32, #tpu.memory_space<vmem>>, vector<1x1x64xf32>
    %406 = vector.shape_cast %405 : vector<1x1x64xf32> to vector<1x64xf32>
    %407 = vector.broadcast %406 : vector<1x64xf32> to vector<24x64xf32>
    %408 = arith.addf %404, %407 : vector<24x64xf32>
    %409 = vector.extract_strided_slice %408 {offsets = [0, 0], sizes = [24, 32], strides = [1, 1]} : vector<24x64xf32> to vector<24x32xf32>
    %410 = arith.negf %409 : vector<24x32xf32>
    %411 = math.exp %410 : vector<24x32xf32>
    %cst_224 = arith.constant 1.000000e+00 : f32
    %412 = vector.broadcast %cst_224 : f32 to vector<24x32xf32>
    %413 = arith.addf %412, %411 : vector<24x32xf32>
    %414 = arith.divf %412, %413 : vector<24x32xf32>
    %415 = arith.mulf %368, %414 : vector<24x32xf32>
    %416 = vector.extract_strided_slice %408 {offsets = [0, 32], sizes = [24, 32], strides = [1, 1]} : vector<24x64xf32> to vector<24x32xf32>
    %417 = arith.negf %416 : vector<24x32xf32>
    %418 = math.exp %417 : vector<24x32xf32>
    %cst_225 = arith.constant 1.000000e+00 : f32
    %419 = vector.broadcast %cst_225 : f32 to vector<24x32xf32>
    %420 = arith.addf %419, %418 : vector<24x32xf32>
    %421 = arith.divf %419, %420 : vector<24x32xf32>
    %422 = arith.mulf %366, %421 : vector<24x32xf32>
    %423 = arith.addf %415, %422 : vector<24x32xf32>
    %c3_226 = arith.constant 3 : index
    %c0_227 = arith.constant 0 : index
    %c0_228 = arith.constant 0 : index
    %424 = vector.load %arg18[%c3_226, %c0_227, %c0_228] : memref<4x32x32xf32, #tpu.memory_space<vmem>>, vector<1x32x32xf32>
    %425 = vector.shape_cast %424 : vector<1x32x32xf32> to vector<32x32xf32>
    %cst_229 = arith.constant dense<0.000000e+00> : vector<24x32xf32>
    %426 = tpu.matmul %401, %425, %cst_229 {dimension_numbers = #tpu.dot_dimension_numbers<[1], [0], [0], [1], [0, 0, 1, 1], [], []>} : vector<24x32xf32>, vector<32x32xf32>, vector<24x32xf32> -> vector<24x32xf32>
    %c3_230 = arith.constant 3 : index
    %c0_231 = arith.constant 0 : index
    %c0_232 = arith.constant 0 : index
    %427 = vector.load %arg19[%c3_230, %c0_231, %c0_232] : memref<4x1x32xf32, #tpu.memory_space<vmem>>, vector<1x1x32xf32>
    %428 = vector.shape_cast %427 : vector<1x1x32xf32> to vector<1x32xf32>
    %429 = vector.broadcast %428 : vector<1x32xf32> to vector<24x32xf32>
    %430 = arith.addf %426, %429 : vector<24x32xf32>
    %431 = arith.negf %430 : vector<24x32xf32>
    %432 = math.exp %431 : vector<24x32xf32>
    %cst_233 = arith.constant 1.000000e+00 : f32
    %433 = vector.broadcast %cst_233 : f32 to vector<24x32xf32>
    %434 = arith.addf %433, %432 : vector<24x32xf32>
    %435 = arith.divf %433, %434 : vector<24x32xf32>
    %436 = arith.mulf %430, %435 : vector<24x32xf32>
    %c3_234 = arith.constant 3 : index
    %c0_235 = arith.constant 0 : index
    %c0_236 = arith.constant 0 : index
    %437 = vector.load %arg20[%c3_234, %c0_235, %c0_236] : memref<4x32x12xf32, #tpu.memory_space<vmem>>, vector<1x32x12xf32>
    %438 = vector.shape_cast %437 : vector<1x32x12xf32> to vector<32x12xf32>
    %cst_237 = arith.constant dense<0.000000e+00> : vector<24x12xf32>
    %439 = tpu.matmul %436, %438, %cst_237 {dimension_numbers = #tpu.dot_dimension_numbers<[1], [0], [0], [1], [0, 0, 1, 1], [], []>} : vector<24x32xf32>, vector<32x12xf32>, vector<24x12xf32> -> vector<24x12xf32>
    %440 = arith.mulf %370, %439 : vector<24x12xf32>
    %441 = tpu.concatenate %423, %440 in 1 : vector<24x32xf32>, vector<24x12xf32> -> vector<24x44xf32>
    %cst_238 = arith.constant dense<0.000000e+00> : vector<16x44xf32>
    %442 = tpu.matmul %358, %441, %cst_238 {dimension_numbers = #tpu.dot_dimension_numbers<[1], [0], [0], [1], [0, 0, 1, 1], [], []>} : vector<16x24xf32>, vector<24x44xf32>, vector<16x44xf32> -> vector<16x44xf32>
    %443 = vector.extract_strided_slice %442 {offsets = [0, 0], sizes = [16, 32], strides = [1, 1]} : vector<16x44xf32> to vector<16x32xf32>
    %444 = vector.extract_strided_slice %442 {offsets = [0, 32], sizes = [16, 12], strides = [1, 1]} : vector<16x44xf32> to vector<16x12xf32>
    %445 = vector.broadcast %359 : vector<16x1xf32> to vector<16x12xf32>
    %446 = arith.mulf %444, %445 : vector<16x12xf32>
    %447 = arith.addf %363, %446 : vector<16x12xf32>
    %448 = tpu.concatenate %362, %443 in 1 : vector<16x32xf32>, vector<16x32xf32> -> vector<16x64xf32>
    %c3_239 = arith.constant 3 : index
    %c0_240 = arith.constant 0 : index
    %c0_241 = arith.constant 0 : index
    %449 = vector.load %arg21[%c3_239, %c0_240, %c0_241] : memref<4x64x32xf32, #tpu.memory_space<vmem>>, vector<1x64x32xf32>
    %450 = vector.shape_cast %449 : vector<1x64x32xf32> to vector<64x32xf32>
    %cst_242 = arith.constant dense<0.000000e+00> : vector<16x32xf32>
    %451 = tpu.matmul %448, %450, %cst_242 {dimension_numbers = #tpu.dot_dimension_numbers<[1], [0], [0], [1], [0, 0, 1, 1], [], []>} : vector<16x64xf32>, vector<64x32xf32>, vector<16x32xf32> -> vector<16x32xf32>
    %c3_243 = arith.constant 3 : index
    %c0_244 = arith.constant 0 : index
    %c0_245 = arith.constant 0 : index
    %452 = vector.load %arg22[%c3_243, %c0_244, %c0_245] : memref<4x1x32xf32, #tpu.memory_space<vmem>>, vector<1x1x32xf32>
    %453 = vector.shape_cast %452 : vector<1x1x32xf32> to vector<1x32xf32>
    %454 = vector.broadcast %453 : vector<1x32xf32> to vector<16x32xf32>
    %455 = arith.addf %451, %454 : vector<16x32xf32>
    %456 = arith.negf %455 : vector<16x32xf32>
    %457 = math.exp %456 : vector<16x32xf32>
    %cst_246 = arith.constant 1.000000e+00 : f32
    %458 = vector.broadcast %cst_246 : f32 to vector<16x32xf32>
    %459 = arith.addf %458, %457 : vector<16x32xf32>
    %460 = arith.divf %458, %459 : vector<16x32xf32>
    %461 = arith.mulf %455, %460 : vector<16x32xf32>
    %c3_247 = arith.constant 3 : index
    %c0_248 = arith.constant 0 : index
    %c0_249 = arith.constant 0 : index
    %462 = vector.load %arg23[%c3_247, %c0_248, %c0_249] : memref<4x32x32xf32, #tpu.memory_space<vmem>>, vector<1x32x32xf32>
    %463 = vector.shape_cast %462 : vector<1x32x32xf32> to vector<32x32xf32>
    %cst_250 = arith.constant dense<0.000000e+00> : vector<16x32xf32>
    %464 = tpu.matmul %461, %463, %cst_250 {dimension_numbers = #tpu.dot_dimension_numbers<[1], [0], [0], [1], [0, 0, 1, 1], [], []>} : vector<16x32xf32>, vector<32x32xf32>, vector<16x32xf32> -> vector<16x32xf32>
    %465 = arith.addf %362, %464 : vector<16x32xf32>
    %c3_251 = arith.constant 3 : index
    %c0_252 = arith.constant 0 : index
    %c0_253 = arith.constant 0 : index
    %466 = vector.load %arg24[%c3_251, %c0_252, %c0_253] : memref<4x1x32xf32, #tpu.memory_space<vmem>>, vector<1x1x32xf32>
    %467 = vector.shape_cast %466 : vector<1x1x32xf32> to vector<1x32xf32>
    %468 = vector.broadcast %467 : vector<1x32xf32> to vector<16x32xf32>
    %469 = arith.addf %465, %468 : vector<16x32xf32>
    %470 = tpu.concatenate %469, %447 in 1 : vector<16x32xf32>, vector<16x12xf32> -> vector<16x44xf32>
    %471 = vector.extract_strided_slice %470 {offsets = [0, 0], sizes = [16, 32], strides = [1, 1]} : vector<16x44xf32> to vector<16x32xf32>
    %c0_254 = arith.constant 0 : index
    %c0_255 = arith.constant 0 : index
    %472 = vector.load %arg27[%c0_254, %c0_255] : memref<32x8xf32, #tpu.memory_space<vmem>>, vector<32x8xf32>
    %cst_256 = arith.constant dense<0.000000e+00> : vector<16x8xf32>
    %473 = tpu.matmul %471, %472, %cst_256 {dimension_numbers = #tpu.dot_dimension_numbers<[1], [0], [0], [1], [0, 0, 1, 1], [], []>} : vector<16x32xf32>, vector<32x8xf32>, vector<16x8xf32> -> vector<16x8xf32>
    %c0_257 = arith.constant 0 : index
    %c0_258 = arith.constant 0 : index
    %474 = vector.load %arg28[%c0_257, %c0_258] : memref<1x8xf32, #tpu.memory_space<vmem>>, vector<1x8xf32>
    %475 = vector.broadcast %474 : vector<1x8xf32> to vector<16x8xf32>
    %476 = arith.addf %473, %475 : vector<16x8xf32>
    %c0_259 = arith.constant 0 : index
    %c0_260 = arith.constant 0 : index
    %477 = vector.load %arg29[%c0_259, %c0_260] : memref<16x8xf32, #tpu.memory_space<vmem>>, vector<16x8xf32>
    tpu.vector_store %arg29[%c0_259, %c0_260], %476 {strides = array<i32>} : memref<16x8xf32, #tpu.memory_space<vmem>>, vector<16x8xf32>,
    %478 = vector.extract_strided_slice %470 {offsets = [0, 32], sizes = [16, 12], strides = [1, 1]} : vector<16x44xf32> to vector<16x12xf32>
    %c0_261 = arith.constant 0 : index
    %c0_262 = arith.constant 0 : index
    %479 = vector.load %arg30[%c0_261, %c0_262] : memref<16x12xf32, #tpu.memory_space<vmem>>, vector<16x12xf32>
    tpu.vector_store %arg30[%c0_261, %c0_262], %478 {strides = array<i32>} : memref<16x12xf32, #tpu.memory_space<vmem>>, vector<16x12xf32>,
    return
  }
}

</mosaic_0001>

<llo_original>
// kernel: model_forward.1
$region0: #{model_forward.1}
  #allocation0 [shape = 'u32[]', space=smem, size = 0x4, offset = 0x4, fixed_abs, tag = 'smem constant byte address 0x4 - core index']
  #allocation1 [shape = 'u32[144,128]{1,0:T(1,128)}', space=vmem, size = 0x12000, scoped, tag = 'internal scratch']
  %s0 = inlined_call_operand.smem [shape: u32[31], index: -1, kind: input, shape index: {}]
  %s1 = sld [smem:[%s0]]
  %s2 = scalar_lea.smem %s0, 1
  %s3 = sld [smem:[%s2]]
  %s4 = scalar_lea.smem %s0, 2
  %s5 = sld [smem:[%s4]]
  %s6 = scalar_lea.smem %s0, 3
  %s7 = sld [smem:[%s6]]
  %s8 = scalar_lea.smem %s0, 4
  %s9 = sld [smem:[%s8]]
  %s10 = scalar_lea.smem %s0, 5
  %s11 = sld [smem:[%s10]]
  %s12 = scalar_lea.smem %s0, 6
  %s13 = sld [smem:[%s12]]
  %s14 = scalar_lea.smem %s0, 7
  %s15 = sld [smem:[%s14]]
  %s16 = scalar_lea.smem %s0, 8
  %s17 = sld [smem:[%s16]]
  %s18 = scalar_lea.smem %s0, 9
  %s19 = sld [smem:[%s18]]
  %s20 = scalar_lea.smem %s0, 10
  %s21 = sld [smem:[%s20]]
  %s22 = scalar_lea.smem %s0, 11
  %s23 = sld [smem:[%s22]]
  %s24 = scalar_lea.smem %s0, 12
  %s25 = sld [smem:[%s24]]
  %s26 = scalar_lea.smem %s0, 13
  %s27 = sld [smem:[%s26]]
  %s28 = scalar_lea.smem %s0, 14
  %s29 = sld [smem:[%s28]]
  %s30 = scalar_lea.smem %s0, 15
  %s31 = sld [smem:[%s30]]
  %s32 = scalar_lea.smem %s0, 16
  %s33 = sld [smem:[%s32]]
  %s34 = scalar_lea.smem %s0, 17
  %s35 = sld [smem:[%s34]]
  %s36 = scalar_lea.smem %s0, 18
  %s37 = sld [smem:[%s36]]
  %s38 = scalar_lea.smem %s0, 19
  %s39 = sld [smem:[%s38]]
  %s40 = scalar_lea.smem %s0, 20
  %s41 = sld [smem:[%s40]]
  %s42 = scalar_lea.smem %s0, 21
  %s43 = sld [smem:[%s42]]
  %s44 = scalar_lea.smem %s0, 22
  %s45 = sld [smem:[%s44]]
  %s46 = scalar_lea.smem %s0, 23
  %s47 = sld [smem:[%s46]]
  %s48 = scalar_lea.smem %s0, 24
  %s49 = sld [smem:[%s48]]
  %s50 = scalar_lea.smem %s0, 25
  %s51 = sld [smem:[%s50]]
  %s52 = scalar_lea.smem %s0, 26
  %s53 = sld [smem:[%s52]]
  %s54 = scalar_lea.smem %s0, 27
  %s55 = sld [smem:[%s54]]
  %s56 = scalar_lea.smem %s0, 28
  %s57 = sld [smem:[%s56]]
  %s58 = scalar_lea.smem %s0, 29
  %s59 = sld [smem:[%s58]]
  %s60 = scalar_lea.smem %s0, 30
  %s61 = sld [smem:[%s60]]
  %62 = xla_tuple %s59, %s61
  %s63 = sld [smem:[#allocation0]]
  $region134: #{model_forward.1} parent=0
    _
  %s65 = ssub.s32 1, %s63
  %s66 = scalar_select 0, %s65, %s63
  // Predicated region
  $region2: #{model_forward.1} parent=0 // pred_check
    _
  $region3: #{model_forward.1} parent=0 // pred_check_branch
    %68 = sbr.rel (0) target = $region5
  $region4: #{model_forward.1} parent=0 // pred_region
    _
  $region5: #{model_forward.1} parent=0 // pred_fallthru
    _
  // Predicated region
  $region6: #{model_forward.1} parent=0 // pred_check
    _
  $region7: #{model_forward.1} parent=0 // pred_check_branch
    %70 = sbr.rel (0) target = $region9
  $region8: #{model_forward.1} parent=0 // pred_region
    _
  $region9: #{model_forward.1} parent=0 // pred_fallthru
    _
  // Predicated region
  $region10: #{model_forward.1} parent=0 // pred_check
    _
  $region11: #{model_forward.1} parent=0 // pred_check_branch
    %72 = sbr.rel (0) target = $region13
  $region12: #{model_forward.1} parent=0 // pred_region
    _
  $region13: #{model_forward.1} parent=0 // pred_fallthru
    _
  // Predicated region
  $region14: #{model_forward.1} parent=0 // pred_check
    _
  $region15: #{model_forward.1} parent=0 // pred_check_branch
    %74 = sbr.rel (0) target = $region17
  $region16: #{model_forward.1} parent=0 // pred_region
    _
  $region17: #{model_forward.1} parent=0 // pred_fallthru
    _
  // Predicated region
  $region18: #{model_forward.1} parent=0 // pred_check
    _
  $region19: #{model_forward.1} parent=0 // pred_check_branch
    %76 = sbr.rel (0) target = $region21
  $region20: #{model_forward.1} parent=0 // pred_region
    _
  $region21: #{model_forward.1} parent=0 // pred_fallthru
    _
  // Predicated region
  $region22: #{model_forward.1} parent=0 // pred_check
    _
  $region23: #{model_forward.1} parent=0 // pred_check_branch
    %78 = sbr.rel (0) target = $region25
  $region24: #{model_forward.1} parent=0 // pred_region
    _
  $region25: #{model_forward.1} parent=0 // pred_fallthru
    _
  // Predicated region
  $region26: #{model_forward.1} parent=0 // pred_check
    _
  $region27: #{model_forward.1} parent=0 // pred_check_branch
    %80 = sbr.rel (0) target = $region29
  $region28: #{model_forward.1} parent=0 // pred_region
    _
  $region29: #{model_forward.1} parent=0 // pred_fallthru
    _
  // Predicated region
  $region30: #{model_forward.1} parent=0 // pred_check
    _
  $region31: #{model_forward.1} parent=0 // pred_check_branch
    %82 = sbr.rel (0) target = $region33
  $region32: #{model_forward.1} parent=0 // pred_region
    _
  $region33: #{model_forward.1} parent=0 // pred_fallthru
    _
  // Predicated region
  $region34: #{model_forward.1} parent=0 // pred_check
    _
  $region35: #{model_forward.1} parent=0 // pred_check_branch
    %84 = sbr.rel (0) target = $region37
  $region36: #{model_forward.1} parent=0 // pred_region
    _
  $region37: #{model_forward.1} parent=0 // pred_fallthru
    _
  // Predicated region
  $region38: #{model_forward.1} parent=0 // pred_check
    _
  $region39: #{model_forward.1} parent=0 // pred_check_branch
    %86 = sbr.rel (0) target = $region41
  $region40: #{model_forward.1} parent=0 // pred_region
    _
  $region41: #{model_forward.1} parent=0 // pred_fallthru
    _
  // Predicated region
  $region42: #{model_forward.1} parent=0 // pred_check
    _
  $region43: #{model_forward.1} parent=0 // pred_check_branch
    %88 = sbr.rel (0) target = $region45
  $region44: #{model_forward.1} parent=0 // pred_region
    _
  $region45: #{model_forward.1} parent=0 // pred_fallthru
    _
  // Predicated region
  $region46: #{model_forward.1} parent=0 // pred_check
    _
  $region47: #{model_forward.1} parent=0 // pred_check_branch
    %90 = sbr.rel (0) target = $region49
  $region48: #{model_forward.1} parent=0 // pred_region
    _
  $region49: #{model_forward.1} parent=0 // pred_fallthru
    _
  // Predicated region
  $region50: #{model_forward.1} parent=0 // pred_check
    _
  $region51: #{model_forward.1} parent=0 // pred_check_branch
    %92 = sbr.rel (0) target = $region53
  $region52: #{model_forward.1} parent=0 // pred_region
    _
  $region53: #{model_forward.1} parent=0 // pred_fallthru
    _
  // Predicated region
  $region54: #{model_forward.1} parent=0 // pred_check
    _
  $region55: #{model_forward.1} parent=0 // pred_check_branch
    %94 = sbr.rel (0) target = $region57
  $region56: #{model_forward.1} parent=0 // pred_region
    _
  $region57: #{model_forward.1} parent=0 // pred_fallthru
    _
  // Predicated region
  $region58: #{model_forward.1} parent=0 // pred_check
    _
  $region59: #{model_forward.1} parent=0 // pred_check_branch
    %96 = sbr.rel (0) target = $region61
  $region60: #{model_forward.1} parent=0 // pred_region
    _
  $region61: #{model_forward.1} parent=0 // pred_fallthru
    _
  // Predicated region
  $region62: #{model_forward.1} parent=0 // pred_check
    _
  $region63: #{model_forward.1} parent=0 // pred_check_branch
    %98 = sbr.rel (0) target = $region65
  $region64: #{model_forward.1} parent=0 // pred_region
    _
  $region65: #{model_forward.1} parent=0 // pred_fallthru
    _
  // Predicated region
  $region66: #{model_forward.1} parent=0 // pred_check
    _
  $region67: #{model_forward.1} parent=0 // pred_check_branch
    %100 = sbr.rel (0) target = $region69
  $region68: #{model_forward.1} parent=0 // pred_region
    _
  $region69: #{model_forward.1} parent=0 // pred_fallthru
    _
  // Predicated region
  $region70: #{model_forward.1} parent=0 // pred_check
    _
  $region71: #{model_forward.1} parent=0 // pred_check_branch
    %102 = sbr.rel (0) target = $region73
  $region72: #{model_forward.1} parent=0 // pred_region
    _
  $region73: #{model_forward.1} parent=0 // pred_fallthru
    _
  // Predicated region
  $region74: #{model_forward.1} parent=0 // pred_check
    _
  $region75: #{model_forward.1} parent=0 // pred_check_branch
    %104 = sbr.rel (0) target = $region77
  $region76: #{model_forward.1} parent=0 // pred_region
    _
  $region77: #{model_forward.1} parent=0 // pred_fallthru
    _
  // Predicated region
  $region78: #{model_forward.1} parent=0 // pred_check
    _
  $region79: #{model_forward.1} parent=0 // pred_check_branch
    %106 = sbr.rel (0) target = $region81
  $region80: #{model_forward.1} parent=0 // pred_region
    _
  $region81: #{model_forward.1} parent=0 // pred_fallthru
    _
  // Predicated region
  $region82: #{model_forward.1} parent=0 // pred_check
    _
  $region83: #{model_forward.1} parent=0 // pred_check_branch
    %108 = sbr.rel (0) target = $region85
  $region84: #{model_forward.1} parent=0 // pred_region
    _
  $region85: #{model_forward.1} parent=0 // pred_fallthru
    _
  // Predicated region
  $region86: #{model_forward.1} parent=0 // pred_check
    _
  $region87: #{model_forward.1} parent=0 // pred_check_branch
    %110 = sbr.rel (0) target = $region89
  $region88: #{model_forward.1} parent=0 // pred_region
    _
  $region89: #{model_forward.1} parent=0 // pred_fallthru
    _
  // Predicated region
  $region90: #{model_forward.1} parent=0 // pred_check
    _
  $region91: #{model_forward.1} parent=0 // pred_check_branch
    %112 = sbr.rel (0) target = $region93
  $region92: #{model_forward.1} parent=0 // pred_region
    _
  $region93: #{model_forward.1} parent=0 // pred_fallthru
    _
  // Predicated region
  $region94: #{model_forward.1} parent=0 // pred_check
    _
  $region95: #{model_forward.1} parent=0 // pred_check_branch
    %114 = sbr.rel (0) target = $region97
  $region96: #{model_forward.1} parent=0 // pred_region
    _
  $region97: #{model_forward.1} parent=0 // pred_fallthru
    _
  // Predicated region
  $region98: #{model_forward.1} parent=0 // pred_check
    _
  $region99: #{model_forward.1} parent=0 // pred_check_branch
    %116 = sbr.rel (0) target = $region101
  $region100: #{model_forward.1} parent=0 // pred_region
    _
  $region101: #{model_forward.1} parent=0 // pred_fallthru
    _
  // Predicated region
  $region102: #{model_forward.1} parent=0 // pred_check
    _
  $region103: #{model_forward.1} parent=0 // pred_check_branch
    %118 = sbr.rel (0) target = $region105
  $region104: #{model_forward.1} parent=0 // pred_region
    _
  $region105: #{model_forward.1} parent=0 // pred_fallthru
    _
  // Predicated region
  $region106: #{model_forward.1} parent=0 // pred_check
    _
  $region107: #{model_forward.1} parent=0 // pred_check_branch
    %120 = sbr.rel (0) target = $region109
  $region108: #{model_forward.1} parent=0 // pred_region
    _
  $region109: #{model_forward.1} parent=0 // pred_fallthru
    _
  // Predicated region
  $region110: #{model_forward.1} parent=0 // pred_check
    _
  $region111: #{model_forward.1} parent=0 // pred_check_branch
    %122 = sbr.rel (0) target = $region113
  $region112: #{model_forward.1} parent=0 // pred_region
    _
  $region113: #{model_forward.1} parent=0 // pred_fallthru
    _
  // Predicated region
  $region114: #{model_forward.1} parent=0 // pred_check
    _
  $region115: #{model_forward.1} parent=0 // pred_check_branch
    %124 = sbr.rel (0) target = $region117
  $region116: #{model_forward.1} parent=0 // pred_region
    _
  $region117: #{model_forward.1} parent=0 // pred_fallthru
    _
  %v125 = vld [vmem:[%s1] sm:$0xff]
  %v126 = vld [vmem:[%s1 + $0x8] sm:$0xff]
  %v127 = vld [vmem:[%s3] sm:$0xff]
  %v128 = vld [vmem:[%s5] sm:$0x1]
  %v130 = vlaneseq
  %v131 = vshrl.u32 %v130, 7
  %v132 = vsub.s32 0, %v131
  %v133 = vrot.slane %v128, %v132
  %vm135 = vcmask 64512
  %v137 = vsel %vm135, %v125, 0
  %v140 = vsel %vm135, %v126, 0
  %142 = vmatprep.subr.mxu0 0.0
  %143 = vmatpush1.msra.mxu0 %v127
  %144 = vmatprep.subr.mxu0 0.0
  %145 = vmatpush1.msra.mxu0 0.0
  %146 = vmatprep.subr.mxu0 0.0
  %147 = vmatpush1.msra.mxu0 0.0
  %148 = vmatprep.subr.mxu0 0.0
  %149 = vmatpush1.msra.mxu0 0.0
  %150 = vmatprep.subr.mxu0 0.0
  %151 = vmatpush1.msra.mxu0 0.0
  %152 = vmatprep.subr.mxu0 0.0
  %153 = vmatpush1.msra.mxu0 0.0
  %154 = vmatprep.subr.mxu0 0.0
  %155 = vmatpush1.msra.mxu0 0.0
  %156 = vmatprep.subr.mxu0 0.0
  %157 = vmatpush1.msra.mxu0 0.0
  %158 = vmatprep.subr.mxu0 0.0
  %159 = vmatpush1.msra.mxu0 0.0
  %160 = vmatprep.subr.mxu0 0.0
  %161 = vmatpush1.msra.mxu0 0.0
  %162 = vmatprep.subr.mxu0 0.0
  %163 = vmatpush1.msra.mxu0 0.0
  %164 = vmatprep.subr.mxu0 0.0
  %165 = vmatpush1.msra.mxu0 0.0
  %166 = vmatprep.subr.mxu0 0.0
  %167 = vmatpush1.msra.mxu0 0.0
  %168 = vmatprep.subr.mxu0 0.0
  %169 = vmatpush1.msra.mxu0 0.0
  %170 = vmatprep.subr.mxu0 0.0
  %171 = vmatpush1.msra.mxu0 0.0
  %172 = vmatprep.subr.mxu0 0.0
  %173 = vmatpush1.msra.mxu0 0.0
  %174 = vmatprep.subr.mxu0 0.0
  %175 = vmatpush1.msra.mxu0 0.0
  %176 = vmatprep.subr.mxu0 0.0
  %177 = vmatpush1.msra.mxu0 0.0
  %178 = vmatprep.subr.mxu0 0.0
  %179 = vmatpush1.msra.mxu0 0.0
  %180 = vmatprep.subr.mxu0 0.0
  %181 = vmatpush1.msra.mxu0 0.0
  %182 = vmatprep.subr.mxu0 0.0
  %183 = vmatpush1.msra.mxu0 0.0
  %184 = vmatprep.subr.mxu0 0.0
  %185 = vmatpush1.msra.mxu0 0.0
  %186 = vmatprep.subr.mxu0 0.0
  %187 = vmatpush1.msra.mxu0 0.0
  %188 = vmatprep.subr.mxu0 0.0
  %189 = vmatpush1.msra.mxu0 0.0
  %190 = vmatprep.subr.mxu0 0.0
  %191 = vmatpush1.msra.mxu0 0.0
  %192 = vmatprep.subr.mxu0 0.0
  %193 = vmatpush1.msra.mxu0 0.0
  %194 = vmatprep.subr.mxu0 0.0
  %195 = vmatpush1.msra.mxu0 0.0
  %196 = vmatprep.subr.mxu0 0.0
  %197 = vmatpush1.msra.mxu0 0.0
  %198 = vmatprep.subr.mxu0 0.0
  %199 = vmatpush1.msra.mxu0 0.0
  %200 = vmatprep.subr.mxu0 0.0
  %201 = vmatpush1.msra.mxu0 0.0
  %202 = vmatprep.subr.mxu0 0.0
  %203 = vmatpush1.msra.mxu0 0.0
  %204 = vmatprep.subr.mxu0 0.0
  %205 = vmatpush1.msra.mxu0 0.0
  %206 = vmatprep.mubr.f32.mxu0 0.0
  %207 = vmatmul.mubr.f32.gmra.mrb[0].mxu0 %v137
  %v208 = vpop.f32.mrb[0].mxu0
  %v209 = vadd.f32 %v133, %v208
  %v210 = vpop.f32.mrb[0].mxu0
  %211 = vmatprep.mubr.f32.mxu0 0.0
  %212 = vmatmul.mubr.f32.gmra.mrb[0].mxu0 %v140
  %v213 = vpop.f32.mrb[0].mxu0
  %v214 = vadd.f32 %v133, %v213
  %v215 = vpop.f32.mrb[0].mxu0
  %216 = vdwg.mxu0
  %v217 = vld [vmem:[%s7] sm:$0xff]
  %v218 = vld [vmem:[%s7 + $0x8] sm:$0xff]
  %v219 = vld [vmem:[%s9] sm:$0xff]
  %v220 = vld [vmem:[%s9 + $0x8] sm:$0xf]
  %v221 = vld [vmem:[%s11] sm:$0xff]
  %v222 = vld [vmem:[%s11 + $0x8] sm:$0xf]
  %v223 = vld [vmem:[%s13] sm:$0xff]
  %v224 = vld [vmem:[%s13 + $0x8] sm:$0xff]
  %v225 = vld [vmem:[%s13 + $0x10] sm:$0xff]
  %v226 = vld [vmem:[%s13 + $0x18] sm:$0xff]
  %v227 = vld [vmem:[%s13 + $0x20] sm:$0xff]
  %v228 = vld [vmem:[%s13 + $0x28] sm:$0xff]
  %231 = vrot.lane.b32.xlu0 %v217, 32
  %v232 = vpop.permute.xlu0 %231
  %233 = vrot.lane.b32.xlu0 %v218, 32
  %v234 = vpop.permute.xlu0 %233
  %vm237 = vcmask 261120
  %v238 = vsel %vm237, %v209, %v232
  %v239 = vsel %vm237, %v214, %v234
  %v240 = vld [vmem:[%s15] sm:$0xff]
  %v241 = vld [vmem:[%s15 + $0x8] sm:$0xff]
  %v242 = vld [vmem:[%s15 + $0x10] sm:$0xff]
  %v243 = vld [vmem:[%s15 + $0x18] sm:$0xff]
  %v244 = vld [vmem:[%s17] sm:$0xff]
  %v245 = vld [vmem:[%s17 + $0x8] sm:$0xff]
  %v246 = vld [vmem:[%s17 + $0x10] sm:$0xff]
  %v247 = vld [vmem:[%s17 + $0x18] sm:$0xff]
  %v248 = vld [vmem:[%s19] sm:$0xff]
  %v249 = vld [vmem:[%s19 + $0x8] sm:$0xff]
  %v250 = vld [vmem:[%s21] sm:$0xff]
  %v251 = vld [vmem:[%s21 + $0x8] sm:$0xff]
  %v252 = vld [vmem:[%s51] sm:$0xff]
  %v253 = vld [vmem:[%s51 + $0x8] sm:$0xff]
  %v254 = vld [vmem:[%s51 + $0x10] sm:$0xff]
  %v255 = vld [vmem:[%s51 + $0x18] sm:$0xff]
  %vm256 = vcmask 130048
  %v258 = vsel %vm256, %v240, 0
  %v261 = vsel %vm256, %v241, 0
  %v264 = vsel %vm256, %v242, 0
  %v267 = vsel %vm256, %v243, 0
  %269 = vmatprep.subr.mxu0 0.0
  %270 = vmatpush1.msra.mxu0 %v238
  %271 = vmatprep.subr.mxu0 0.0
  %272 = vmatpush1.msra.mxu0 %v239
  %273 = vmatprep.subr.mxu0 0.0
  %274 = vmatpush1.msra.mxu0 0.0
  %275 = vmatprep.subr.mxu0 0.0
  %276 = vmatpush1.msra.mxu0 0.0
  %277 = vmatprep.subr.mxu0 0.0
  %278 = vmatpush1.msra.mxu0 0.0
  %279 = vmatprep.subr.mxu0 0.0
  %280 = vmatpush1.msra.mxu0 0.0
  %281 = vmatprep.subr.mxu0 0.0
  %282 = vmatpush1.msra.mxu0 0.0
  %283 = vmatprep.subr.mxu0 0.0
  %284 = vmatpush1.msra.mxu0 0.0
  %285 = vmatprep.subr.mxu0 0.0
  %286 = vmatpush1.msra.mxu0 0.0
  %287 = vmatprep.subr.mxu0 0.0
  %288 = vmatpush1.msra.mxu0 0.0
  %289 = vmatprep.subr.mxu0 0.0
  %290 = vmatpush1.msra.mxu0 0.0
  %291 = vmatprep.subr.mxu0 0.0
  %292 = vmatpush1.msra.mxu0 0.0
  %293 = vmatprep.subr.mxu0 0.0
  %294 = vmatpush1.msra.mxu0 0.0
  %295 = vmatprep.subr.mxu0 0.0
  %296 = vmatpush1.msra.mxu0 0.0
  %297 = vmatprep.subr.mxu0 0.0
  %298 = vmatpush1.msra.mxu0 0.0
  %299 = vmatprep.subr.mxu0 0.0
  %300 = vmatpush1.msra.mxu0 0.0
  %301 = vmatprep.subr.mxu0 0.0
  %302 = vmatpush1.msra.mxu0 0.0
  %303 = vmatprep.subr.mxu0 0.0
  %304 = vmatpush1.msra.mxu0 0.0
  %305 = vmatprep.subr.mxu0 0.0
  %306 = vmatpush1.msra.mxu0 0.0
  %307 = vmatprep.subr.mxu0 0.0
  %308 = vmatpush1.msra.mxu0 0.0
  %309 = vmatprep.subr.mxu0 0.0
  %310 = vmatpush1.msra.mxu0 0.0
  %311 = vmatprep.subr.mxu0 0.0
  %312 = vmatpush1.msra.mxu0 0.0
  %313 = vmatprep.subr.mxu0 0.0
  %314 = vmatpush1.msra.mxu0 0.0
  %315 = vmatprep.subr.mxu0 0.0
  %316 = vmatpush1.msra.mxu0 0.0
  %317 = vmatprep.subr.mxu0 0.0
  %318 = vmatpush1.msra.mxu0 0.0
  %319 = vmatprep.subr.mxu0 0.0
  %320 = vmatpush1.msra.mxu0 0.0
  %321 = vmatprep.subr.mxu0 0.0
  %322 = vmatpush1.msra.mxu0 0.0
  %323 = vmatprep.subr.mxu0 0.0
  %324 = vmatpush1.msra.mxu0 0.0
  %325 = vmatprep.subr.mxu0 0.0
  %326 = vmatpush1.msra.mxu0 0.0
  %327 = vmatprep.subr.mxu0 0.0
  %328 = vmatpush1.msra.mxu0 0.0
  %329 = vmatprep.subr.mxu0 0.0
  %330 = vmatpush1.msra.mxu0 0.0
  %331 = vmatprep.subr.mxu0 0.0
  %332 = vmatpush1.msra.mxu0 0.0
  %333 = vmatprep.mubr.f32.mxu0 0.0
  %334 = vmatmul.mubr.f32.gmra.mrb[0].mxu0 %v258
  %v335 = vpop.f32.mrb[0].mxu0
  %v336 = vadd.f32 0.0, %v335
  %v337 = vpop.f32.mrb[0].mxu0
  %338 = vmatprep.mubr.f32.mxu0 0.0
  %339 = vmatmul.mubr.f32.gmra.mrb[0].mxu0 %v261
  %v340 = vpop.f32.mrb[0].mxu0
  %v341 = vadd.f32 0.0, %v340
  %v342 = vpop.f32.mrb[0].mxu0
  %343 = vmatprep.mubr.f32.mxu0 0.0
  %344 = vmatmul.mubr.f32.gmra.mrb[0].mxu0 %v264
  %v345 = vpop.f32.mrb[0].mxu0
  %v346 = vadd.f32 0.0, %v345
  %v347 = vpop.f32.mrb[0].mxu0
  %348 = vmatprep.mubr.f32.mxu0 0.0
  %349 = vmatmul.mubr.f32.gmra.mrb[0].mxu0 %v267
  %v350 = vpop.f32.mrb[0].mxu0
  %v351 = vadd.f32 0.0, %v350
  %v352 = vpop.f32.mrb[0].mxu0
  %353 = vdwg.mxu0
  %v355 = vsel %vm256, %v244, 0
  %v358 = vsel %vm256, %v245, 0
  %v361 = vsel %vm256, %v246, 0
  %v364 = vsel %vm256, %v247, 0
  %366 = vmatprep.subr.mxu0 0.0
  %367 = vmatpush1.msra.mxu0 %v238
  %368 = vmatprep.subr.mxu0 0.0
  %369 = vmatpush1.msra.mxu0 %v239
  %370 = vmatprep.subr.mxu0 0.0
  %371 = vmatpush1.msra.mxu0 0.0
  %372 = vmatprep.subr.mxu0 0.0
  %373 = vmatpush1.msra.mxu0 0.0
  %374 = vmatprep.subr.mxu0 0.0
  %375 = vmatpush1.msra.mxu0 0.0
  %376 = vmatprep.subr.mxu0 0.0
  %377 = vmatpush1.msra.mxu0 0.0
  %378 = vmatprep.subr.mxu0 0.0
  %379 = vmatpush1.msra.mxu0 0.0
  %380 = vmatprep.subr.mxu0 0.0
  %381 = vmatpush1.msra.mxu0 0.0
  %382 = vmatprep.subr.mxu0 0.0
  %383 = vmatpush1.msra.mxu0 0.0
  %384 = vmatprep.subr.mxu0 0.0
  %385 = vmatpush1.msra.mxu0 0.0
  %386 = vmatprep.subr.mxu0 0.0
  %387 = vmatpush1.msra.mxu0 0.0
  %388 = vmatprep.subr.mxu0 0.0
  %389 = vmatpush1.msra.mxu0 0.0
  %390 = vmatprep.subr.mxu0 0.0
  %391 = vmatpush1.msra.mxu0 0.0
  %392 = vmatprep.subr.mxu0 0.0
  %393 = vmatpush1.msra.mxu0 0.0
  %394 = vmatprep.subr.mxu0 0.0
  %395 = vmatpush1.msra.mxu0 0.0
  %396 = vmatprep.subr.mxu0 0.0
  %397 = vmatpush1.msra.mxu0 0.0
  %398 = vmatprep.subr.mxu0 0.0
  %399 = vmatpush1.msra.mxu0 0.0
  %400 = vmatprep.subr.mxu0 0.0
  %401 = vmatpush1.msra.mxu0 0.0
  %402 = vmatprep.subr.mxu0 0.0
  %403 = vmatpush1.msra.mxu0 0.0
  %404 = vmatprep.subr.mxu0 0.0
  %405 = vmatpush1.msra.mxu0 0.0
  %406 = vmatprep.subr.mxu0 0.0
  %407 = vmatpush1.msra.mxu0 0.0
  %408 = vmatprep.subr.mxu0 0.0
  %409 = vmatpush1.msra.mxu0 0.0
  %410 = vmatprep.subr.mxu0 0.0
  %411 = vmatpush1.msra.mxu0 0.0
  %412 = vmatprep.subr.mxu0 0.0
  %413 = vmatpush1.msra.mxu0 0.0
  %414 = vmatprep.subr.mxu0 0.0
  %415 = vmatpush1.msra.mxu0 0.0
  %416 = vmatprep.subr.mxu0 0.0
  %417 = vmatpush1.msra.mxu0 0.0
  %418 = vmatprep.subr.mxu0 0.0
  %419 = vmatpush1.msra.mxu0 0.0
  %420 = vmatprep.subr.mxu0 0.0
  %421 = vmatpush1.msra.mxu0 0.0
  %422 = vmatprep.subr.mxu0 0.0
  %423 = vmatpush1.msra.mxu0 0.0
  %424 = vmatprep.subr.mxu0 0.0
  %425 = vmatpush1.msra.mxu0 0.0
  %426 = vmatprep.subr.mxu0 0.0
  %427 = vmatpush1.msra.mxu0 0.0
  %428 = vmatprep.subr.mxu0 0.0
  %429 = vmatpush1.msra.mxu0 0.0
  %430 = vmatprep.mubr.f32.mxu0 0.0
  %431 = vmatmul.mubr.f32.gmra.mrb[0].mxu0 %v355
  %v432 = vpop.f32.mrb[0].mxu0
  %v433 = vadd.f32 0.0, %v432
  %v434 = vpop.f32.mrb[0].mxu0
  %435 = vmatprep.mubr.f32.mxu0 0.0
  %436 = vmatmul.mubr.f32.gmra.mrb[0].mxu0 %v358
  %v437 = vpop.f32.mrb[0].mxu0
  %v438 = vadd.f32 0.0, %v437
  %v439 = vpop.f32.mrb[0].mxu0
  %440 = vmatprep.mubr.f32.mxu0 0.0
  %441 = vmatmul.mubr.f32.gmra.mrb[0].mxu0 %v361
  %v442 = vpop.f32.mrb[0].mxu0
  %v443 = vadd.f32 0.0, %v442
  %v444 = vpop.f32.mrb[0].mxu0
  %445 = vmatprep.mubr.f32.mxu0 0.0
  %446 = vmatmul.mubr.f32.gmra.mrb[0].mxu0 %v364
  %v447 = vpop.f32.mrb[0].mxu0
  %v448 = vadd.f32 0.0, %v447
  %v449 = vpop.f32.mrb[0].mxu0
  %450 = vdwg.mxu0
  %v451 = vsub.f32 %v336, %v433
  %v452 = vsub.f32 %v341, %v438
  %v453 = vsub.f32 %v346, %v443
  %v454 = vsub.f32 %v351, %v448
  %459 = vrot.lane.b32.xlu0 %v451, 96
  %v460 = vpop.permute.xlu0 %459
  %461 = vrot.lane.b32.xlu0 %v452, 96
  %v462 = vpop.permute.xlu0 %461
  %463 = vrot.lane.b32.xlu0 %v453, 96
  %v464 = vpop.permute.xlu0 %463
  %465 = vrot.lane.b32.xlu0 %v454, 96
  %v466 = vpop.permute.xlu0 %465
  %vm467 = vcmask 97280
  %v468 = vsel %vm467, %v460, 0
  %v470 = vsel %vm467, %v462, 0
  %v472 = vsel %vm467, %v464, 0
  %v474 = vsel %vm467, %v466, 0
  %vm476 = vcmask 1043456
  %v478 = vsel %vm476, %v220, 0
  %480 = vmatprep.subr.mxu0 0.0
  %481 = vmatpush1.msra.mxu0 %v219
  %482 = vmatprep.subr.mxu0 0.0
  %483 = vmatpush1.msra.mxu0 %v478
  %484 = vmatprep.subr.mxu0 0.0
  %485 = vmatpush1.msra.mxu0 0.0
  %486 = vmatprep.subr.mxu0 0.0
  %487 = vmatpush1.msra.mxu0 0.0
  %488 = vmatprep.subr.mxu0 0.0
  %489 = vmatpush1.msra.mxu0 0.0
  %490 = vmatprep.subr.mxu0 0.0
  %491 = vmatpush1.msra.mxu0 0.0
  %492 = vmatprep.subr.mxu0 0.0
  %493 = vmatpush1.msra.mxu0 0.0
  %494 = vmatprep.subr.mxu0 0.0
  %495 = vmatpush1.msra.mxu0 0.0
  %496 = vmatprep.subr.mxu0 0.0
  %497 = vmatpush1.msra.mxu0 0.0
  %498 = vmatprep.subr.mxu0 0.0
  %499 = vmatpush1.msra.mxu0 0.0
  %500 = vmatprep.subr.mxu0 0.0
  %501 = vmatpush1.msra.mxu0 0.0
  %502 = vmatprep.subr.mxu0 0.0
  %503 = vmatpush1.msra.mxu0 0.0
  %504 = vmatprep.subr.mxu0 0.0
  %505 = vmatpush1.msra.mxu0 0.0
  %506 = vmatprep.subr.mxu0 0.0
  %507 = vmatpush1.msra.mxu0 0.0
  %508 = vmatprep.subr.mxu0 0.0
  %509 = vmatpush1.msra.mxu0 0.0
  %510 = vmatprep.subr.mxu0 0.0
  %511 = vmatpush1.msra.mxu0 0.0
  %512 = vmatprep.subr.mxu0 0.0
  %513 = vmatpush1.msra.mxu0 0.0
  %514 = vmatprep.subr.mxu0 0.0
  %515 = vmatpush1.msra.mxu0 0.0
  %516 = vmatprep.subr.mxu0 0.0
  %517 = vmatpush1.msra.mxu0 0.0
  %518 = vmatprep.subr.mxu0 0.0
  %519 = vmatpush1.msra.mxu0 0.0
  %520 = vmatprep.subr.mxu0 0.0
  %521 = vmatpush1.msra.mxu0 0.0
  %522 = vmatprep.subr.mxu0 0.0
  %523 = vmatpush1.msra.mxu0 0.0
  %524 = vmatprep.subr.mxu0 0.0
  %525 = vmatpush1.msra.mxu0 0.0
  %526 = vmatprep.subr.mxu0 0.0
  %527 = vmatpush1.msra.mxu0 0.0
  %528 = vmatprep.subr.mxu0 0.0
  %529 = vmatpush1.msra.mxu0 0.0
  %530 = vmatprep.subr.mxu0 0.0
  %531 = vmatpush1.msra.mxu0 0.0
  %532 = vmatprep.subr.mxu0 0.0
  %533 = vmatpush1.msra.mxu0 0.0
  %534 = vmatprep.subr.mxu0 0.0
  %535 = vmatpush1.msra.mxu0 0.0
  %536 = vmatprep.subr.mxu0 0.0
  %537 = vmatpush1.msra.mxu0 0.0
  %538 = vmatprep.subr.mxu0 0.0
  %539 = vmatpush1.msra.mxu0 0.0
  %540 = vmatprep.subr.mxu0 0.0
  %541 = vmatpush1.msra.mxu0 0.0
  %542 = vmatprep.subr.mxu0 0.0
  %543 = vmatpush1.msra.mxu0 0.0
  %544 = vmatprep.mubr.f32.mxu0 0.0
  %545 = vmatmul.mubr.f32.gmra.mrb[0].mxu0 %v468
  %v546 = vpop.f32.mrb[0].mxu0
  %v547 = vadd.f32 0.0, %v546
  %v548 = vpop.f32.mrb[0].mxu0
  %549 = vmatprep.mubr.f32.mxu0 0.0
  %550 = vmatmul.mubr.f32.gmra.mrb[0].mxu0 %v470
  %v551 = vpop.f32.mrb[0].mxu0
  %v552 = vadd.f32 0.0, %v551
  %v553 = vpop.f32.mrb[0].mxu0
  %554 = vmatprep.mubr.f32.mxu0 0.0
  %555 = vmatmul.mubr.f32.gmra.mrb[0].mxu0 %v472
  %v556 = vpop.f32.mrb[0].mxu0
  %v557 = vadd.f32 0.0, %v556
  %v558 = vpop.f32.mrb[0].mxu0
  %559 = vmatprep.mubr.f32.mxu0 0.0
  %560 = vmatmul.mubr.f32.gmra.mrb[0].mxu0 %v474
  %v561 = vpop.f32.mrb[0].mxu0
  %v562 = vadd.f32 0.0, %v561
  %v563 = vpop.f32.mrb[0].mxu0
  %564 = vdwg.mxu0
  %v566 = vsel %vm476, %v222, 0
  %568 = vmatprep.subr.mxu0 0.0
  %569 = vmatpush1.msra.mxu0 %v221
  %570 = vmatprep.subr.mxu0 0.0
  %571 = vmatpush1.msra.mxu0 %v566
  %572 = vmatprep.subr.mxu0 0.0
  %573 = vmatpush1.msra.mxu0 0.0
  %574 = vmatprep.subr.mxu0 0.0
  %575 = vmatpush1.msra.mxu0 0.0
  %576 = vmatprep.subr.mxu0 0.0
  %577 = vmatpush1.msra.mxu0 0.0
  %578 = vmatprep.subr.mxu0 0.0
  %579 = vmatpush1.msra.mxu0 0.0
  %580 = vmatprep.subr.mxu0 0.0
  %581 = vmatpush1.msra.mxu0 0.0
  %582 = vmatprep.subr.mxu0 0.0
  %583 = vmatpush1.msra.mxu0 0.0
  %584 = vmatprep.subr.mxu0 0.0
  %585 = vmatpush1.msra.mxu0 0.0
  %586 = vmatprep.subr.mxu0 0.0
  %587 = vmatpush1.msra.mxu0 0.0
  %588 = vmatprep.subr.mxu0 0.0
  %589 = vmatpush1.msra.mxu0 0.0
  %590 = vmatprep.subr.mxu0 0.0
  %591 = vmatpush1.msra.mxu0 0.0
  %592 = vmatprep.subr.mxu0 0.0
  %593 = vmatpush1.msra.mxu0 0.0
  %594 = vmatprep.subr.mxu0 0.0
  %595 = vmatpush1.msra.mxu0 0.0
  %596 = vmatprep.subr.mxu0 0.0
  %597 = vmatpush1.msra.mxu0 0.0
  %598 = vmatprep.subr.mxu0 0.0
  %599 = vmatpush1.msra.mxu0 0.0
  %600 = vmatprep.subr.mxu0 0.0
  %601 = vmatpush1.msra.mxu0 0.0
  %602 = vmatprep.subr.mxu0 0.0
  %603 = vmatpush1.msra.mxu0 0.0
  %604 = vmatprep.subr.mxu0 0.0
  %605 = vmatpush1.msra.mxu0 0.0
  %606 = vmatprep.subr.mxu0 0.0
  %607 = vmatpush1.msra.mxu0 0.0
  %608 = vmatprep.subr.mxu0 0.0
  %609 = vmatpush1.msra.mxu0 0.0
  %610 = vmatprep.subr.mxu0 0.0
  %611 = vmatpush1.msra.mxu0 0.0
  %612 = vmatprep.subr.mxu0 0.0
  %613 = vmatpush1.msra.mxu0 0.0
  %614 = vmatprep.subr.mxu0 0.0
  %615 = vmatpush1.msra.mxu0 0.0
  %616 = vmatprep.subr.mxu0 0.0
  %617 = vmatpush1.msra.mxu0 0.0
  %618 = vmatprep.subr.mxu0 0.0
  %619 = vmatpush1.msra.mxu0 0.0
  %620 = vmatprep.subr.mxu0 0.0
  %621 = vmatpush1.msra.mxu0 0.0
  %622 = vmatprep.subr.mxu0 0.0
  %623 = vmatpush1.msra.mxu0 0.0
  %624 = vmatprep.subr.mxu0 0.0
  %625 = vmatpush1.msra.mxu0 0.0
  %626 = vmatprep.subr.mxu0 0.0
  %627 = vmatpush1.msra.mxu0 0.0
  %628 = vmatprep.subr.mxu0 0.0
  %629 = vmatpush1.msra.mxu0 0.0
  %630 = vmatprep.subr.mxu0 0.0
  %631 = vmatpush1.msra.mxu0 0.0
  %632 = vmatprep.mubr.f32.mxu0 0.0
  %633 = vmatmul.mubr.f32.gmra.mrb[0].mxu0 %v468
  %v634 = vpop.f32.mrb[0].mxu0
  %v635 = vadd.f32 0.0, %v634
  %v636 = vpop.f32.mrb[0].mxu0
  %637 = vmatprep.mubr.f32.mxu0 0.0
  %638 = vmatmul.mubr.f32.gmra.mrb[0].mxu0 %v470
  %v639 = vpop.f32.mrb[0].mxu0
  %v640 = vadd.f32 0.0, %v639
  %v641 = vpop.f32.mrb[0].mxu0
  %642 = vmatprep.mubr.f32.mxu0 0.0
  %643 = vmatmul.mubr.f32.gmra.mrb[0].mxu0 %v472
  %v644 = vpop.f32.mrb[0].mxu0
  %v645 = vadd.f32 0.0, %v644
  %v646 = vpop.f32.mrb[0].mxu0
  %647 = vmatprep.mubr.f32.mxu0 0.0
  %648 = vmatmul.mubr.f32.gmra.mrb[0].mxu0 %v474
  %v649 = vpop.f32.mrb[0].mxu0
  %v650 = vadd.f32 0.0, %v649
  %v651 = vpop.f32.mrb[0].mxu0
  %652 = vdwg.mxu0
  %v653 = vmul.f32 %v547, %v635
  %v654 = vmul.f32 %v552, %v640
  %v655 = vmul.f32 %v557, %v645
  %v656 = vmul.f32 %v562, %v650
  %vm657 = vcmask 392192
  %v659 = vsel %vm657, %v653, 0
  %v662 = vsel %vm657, %v654, 0
  %v665 = vsel %vm657, %v655, 0
  %v668 = vsel %vm657, %v656, 0
  %670 = vmatprep.subr.mxu0 0.0
  %671 = vmatpush1.msra.mxu0 %v223
  %672 = vmatprep.subr.mxu0 0.0
  %673 = vmatpush1.msra.mxu0 %v224
  %674 = vmatprep.subr.mxu0 0.0
  %675 = vmatpush1.msra.mxu0 %v225
  %676 = vmatprep.subr.mxu0 0.0
  %677 = vmatpush1.msra.mxu0 %v226
  %678 = vmatprep.subr.mxu0 0.0
  %679 = vmatpush1.msra.mxu0 %v227
  %680 = vmatprep.subr.mxu0 0.0
  %681 = vmatpush1.msra.mxu0 %v228
  %682 = vmatprep.subr.mxu0 0.0
  %683 = vmatpush1.msra.mxu0 0.0
  %684 = vmatprep.subr.mxu0 0.0
  %685 = vmatpush1.msra.mxu0 0.0
  %686 = vmatprep.subr.mxu0 0.0
  %687 = vmatpush1.msra.mxu0 0.0
  %688 = vmatprep.subr.mxu0 0.0
  %689 = vmatpush1.msra.mxu0 0.0
  %690 = vmatprep.subr.mxu0 0.0
  %691 = vmatpush1.msra.mxu0 0.0
  %692 = vmatprep.subr.mxu0 0.0
  %693 = vmatpush1.msra.mxu0 0.0
  %694 = vmatprep.subr.mxu0 0.0
  %695 = vmatpush1.msra.mxu0 0.0
  %696 = vmatprep.subr.mxu0 0.0
  %697 = vmatpush1.msra.mxu0 0.0
  %698 = vmatprep.subr.mxu0 0.0
  %699 = vmatpush1.msra.mxu0 0.0
  %700 = vmatprep.subr.mxu0 0.0
  %701 = vmatpush1.msra.mxu0 0.0
  %702 = vmatprep.subr.mxu0 0.0
  %703 = vmatpush1.msra.mxu0 0.0
  %704 = vmatprep.subr.mxu0 0.0
  %705 = vmatpush1.msra.mxu0 0.0
  %706 = vmatprep.subr.mxu0 0.0
  %707 = vmatpush1.msra.mxu0 0.0
  %708 = vmatprep.subr.mxu0 0.0
  %709 = vmatpush1.msra.mxu0 0.0
  %710 = vmatprep.subr.mxu0 0.0
  %711 = vmatpush1.msra.mxu0 0.0
  %712 = vmatprep.subr.mxu0 0.0
  %713 = vmatpush1.msra.mxu0 0.0
  %714 = vmatprep.subr.mxu0 0.0
  %715 = vmatpush1.msra.mxu0 0.0
  %716 = vmatprep.subr.mxu0 0.0
  %717 = vmatpush1.msra.mxu0 0.0
  %718 = vmatprep.subr.mxu0 0.0
  %719 = vmatpush1.msra.mxu0 0.0
  %720 = vmatprep.subr.mxu0 0.0
  %721 = vmatpush1.msra.mxu0 0.0
  %722 = vmatprep.subr.mxu0 0.0
  %723 = vmatpush1.msra.mxu0 0.0
  %724 = vmatprep.subr.mxu0 0.0
  %725 = vmatpush1.msra.mxu0 0.0
  %726 = vmatprep.subr.mxu0 0.0
  %727 = vmatpush1.msra.mxu0 0.0
  %728 = vmatprep.subr.mxu0 0.0
  %729 = vmatpush1.msra.mxu0 0.0
  %730 = vmatprep.subr.mxu0 0.0
  %731 = vmatpush1.msra.mxu0 0.0
  %732 = vmatprep.subr.mxu0 0.0
  %733 = vmatpush1.msra.mxu0 0.0
  %734 = vmatprep.mubr.f32.mxu0 0.0
  %735 = vmatmul.mubr.f32.gmra.mrb[0].mxu0 %v659
  %v736 = vpop.f32.mrb[0].mxu0
  %v737 = vadd.f32 0.0, %v736
  %v738 = vpop.f32.mrb[0].mxu0
  %739 = vmatprep.mubr.f32.mxu0 0.0
  %740 = vmatmul.mubr.f32.gmra.mrb[0].mxu0 %v662
  %v741 = vpop.f32.mrb[0].mxu0
  %v742 = vadd.f32 0.0, %v741
  %v743 = vpop.f32.mrb[0].mxu0
  %744 = vmatprep.mubr.f32.mxu0 0.0
  %745 = vmatmul.mubr.f32.gmra.mrb[0].mxu0 %v665
  %v746 = vpop.f32.mrb[0].mxu0
  %v747 = vadd.f32 0.0, %v746
  %v748 = vpop.f32.mrb[0].mxu0
  %749 = vmatprep.mubr.f32.mxu0 0.0
  %750 = vmatmul.mubr.f32.gmra.mrb[0].mxu0 %v668
  %v751 = vpop.f32.mrb[0].mxu0
  %v752 = vadd.f32 0.0, %v751
  %v753 = vpop.f32.mrb[0].mxu0
  %754 = vdwg.mxu0
  %v755 = vmul.f32 %v737, %v737
  %v756 = vmul.f32 %v742, %v742
  %v757 = vmul.f32 %v747, %v747
  %v758 = vmul.f32 %v752, %v752
  %v759 = vsel %vm256, %v755, 0.0
  %v760 = vsel %vm256, %v756, 0.0
  %v761 = vadd.f32 %v759, %v760
  %v762 = vsel %vm256, %v757, 0.0
  %v763 = vadd.f32 %v761, %v762
  %v764 = vsel %vm256, %v758, 0.0
  %v765 = vadd.f32 %v763, %v764
  %v766 = vrot.slane %v765, 4
  %v767 = vadd.f32 %v765, %v766
  %v768 = vrot.slane %v767, 2
  %v769 = vadd.f32 %v767, %v768
  %v770 = vrot.slane %v769, 1
  %v771 = vadd.f32 %v769, %v770
  %v772 = vrsqrt.pop %v771
  %v773 = vmul.f32 %v771, %v772
  %vm774 = vcmp.eq.f32.partialorder %v771, inf
  %v775 = vsel %vm774, %v771, %v773
  %vm776 = vcmp.eq.f32.partialorder %v771, 0.0
  %v777 = vand.u32 %v771, 2147483648
  %v778 = vsel %vm776, %v777, %v775
  %v779 = vmax.f32 %v778, 1e-12
  %v780 = vrcp.pop %v779
  %v781 = vmul.f32 %v737, %v780
  %v782 = vmul.f32 %v742, %v780
  %v783 = vmul.f32 %v747, %v780
  %v784 = vmul.f32 %v752, %v780
  %789 = vrot.lane.b32.xlu0 %v433, 32
  %v790 = vpop.permute.xlu0 %789
  %791 = vrot.lane.b32.xlu0 %v438, 32
  %v792 = vpop.permute.xlu0 %791
  %793 = vrot.lane.b32.xlu0 %v443, 32
  %v794 = vpop.permute.xlu0 %793
  %795 = vrot.lane.b32.xlu0 %v448, 32
  %v796 = vpop.permute.xlu0 %795
  %805 = vrot.lane.b32.xlu0 %v781, 64
  %v806 = vpop.permute.xlu0 %805
  %807 = vrot.lane.b32.xlu0 %v782, 64
  %v808 = vpop.permute.xlu0 %807
  %809 = vrot.lane.b32.xlu0 %v783, 64
  %v810 = vpop.permute.xlu0 %809
  %811 = vrot.lane.b32.xlu0 %v784, 64
  %v812 = vpop.permute.xlu0 %811
  %v817 = vsel %vm237, %v336, %v790
  %v818 = vsel %vm237, %v341, %v792
  %v819 = vsel %vm237, %v346, %v794
  %v820 = vsel %vm237, %v351, %v796
  %vm821 = vcmask 523264
  %v822 = vsel %vm821, %v817, %v806
  %v823 = vsel %vm821, %v818, %v808
  %v824 = vsel %vm821, %v819, %v810
  %v825 = vsel %vm821, %v820, %v812
  %v826 = vld [vmem:[%s31] sm:$0xff]
  %v827 = vld [vmem:[%s31 + $0x8] sm:$0xff]
  %v828 = vld [vmem:[%s31 + $0x10] sm:$0xff]
  %v829 = vld [vmem:[%s31 + $0x18] sm:$0xff]
  %v830 = vld [vmem:[%s31 + $0x20] sm:$0xff]
  %v831 = vld [vmem:[%s31 + $0x28] sm:$0xff]
  %v832 = vld [vmem:[%s31 + $0x30] sm:$0xff]
  %v833 = vld [vmem:[%s31 + $0x38] sm:$0xff]
  %v834 = vld [vmem:[%s31 + $0x40] sm:$0xff]
  %v835 = vld [vmem:[%s31 + $0x48] sm:$0xff]
  %vm836 = vcmask 654336
  %v838 = vsel %vm836, %v822, 0
  %v841 = vsel %vm836, %v823, 0
  %v844 = vsel %vm836, %v824, 0
  %v847 = vsel %vm836, %v825, 0
  %849 = vmatprep.subr.mxu0 0.0
  %850 = vmatpush1.msra.mxu0 %v826
  %851 = vmatprep.subr.mxu0 0.0
  %852 = vmatpush1.msra.mxu0 %v827
  %853 = vmatprep.subr.mxu0 0.0
  %854 = vmatpush1.msra.mxu0 %v828
  %855 = vmatprep.subr.mxu0 0.0
  %856 = vmatpush1.msra.mxu0 %v829
  %857 = vmatprep.subr.mxu0 0.0
  %858 = vmatpush1.msra.mxu0 %v830
  %859 = vmatprep.subr.mxu0 0.0
  %860 = vmatpush1.msra.mxu0 %v831
  %861 = vmatprep.subr.mxu0 0.0
  %862 = vmatpush1.msra.mxu0 %v832
  %863 = vmatprep.subr.mxu0 0.0
  %864 = vmatpush1.msra.mxu0 %v833
  %865 = vmatprep.subr.mxu0 0.0
  %866 = vmatpush1.msra.mxu0 %v834
  %867 = vmatprep.subr.mxu0 0.0
  %868 = vmatpush1.msra.mxu0 %v835
  %869 = vmatprep.subr.mxu0 0.0
  %870 = vmatpush1.msra.mxu0 0.0
  %871 = vmatprep.subr.mxu0 0.0
  %872 = vmatpush1.msra.mxu0 0.0
  %873 = vmatprep.subr.mxu0 0.0
  %874 = vmatpush1.msra.mxu0 0.0
  %875 = vmatprep.subr.mxu0 0.0
  %876 = vmatpush1.msra.mxu0 0.0
  %877 = vmatprep.subr.mxu0 0.0
  %878 = vmatpush1.msra.mxu0 0.0
  %879 = vmatprep.subr.mxu0 0.0
  %880 = vmatpush1.msra.mxu0 0.0
  %881 = vmatprep.subr.mxu0 0.0
  %882 = vmatpush1.msra.mxu0 0.0
  %883 = vmatprep.subr.mxu0 0.0
  %884 = vmatpush1.msra.mxu0 0.0
  %885 = vmatprep.subr.mxu0 0.0
  %886 = vmatpush1.msra.mxu0 0.0
  %887 = vmatprep.subr.mxu0 0.0
  %888 = vmatpush1.msra.mxu0 0.0
  %889 = vmatprep.subr.mxu0 0.0
  %890 = vmatpush1.msra.mxu0 0.0
  %891 = vmatprep.subr.mxu0 0.0
  %892 = vmatpush1.msra.mxu0 0.0
  %893 = vmatprep.subr.mxu0 0.0
  %894 = vmatpush1.msra.mxu0 0.0
  %895 = vmatprep.subr.mxu0 0.0
  %896 = vmatpush1.msra.mxu0 0.0
  %897 = vmatprep.subr.mxu0 0.0
  %898 = vmatpush1.msra.mxu0 0.0
  %899 = vmatprep.subr.mxu0 0.0
  %900 = vmatpush1.msra.mxu0 0.0
  %901 = vmatprep.subr.mxu0 0.0
  %902 = vmatpush1.msra.mxu0 0.0
  %903 = vmatprep.subr.mxu0 0.0
  %904 = vmatpush1.msra.mxu0 0.0
  %905 = vmatprep.subr.mxu0 0.0
  %906 = vmatpush1.msra.mxu0 0.0
  %907 = vmatprep.subr.mxu0 0.0
  %908 = vmatpush1.msra.mxu0 0.0
  %909 = vmatprep.subr.mxu0 0.0
  %910 = vmatpush1.msra.mxu0 0.0
  %911 = vmatprep.subr.mxu0 0.0
  %912 = vmatpush1.msra.mxu0 0.0
  %913 = vmatprep.mubr.f32.mxu0 0.0
  %914 = vmatmul.mubr.f32.gmra.mrb[0].mxu0 %v838
  %v915 = vpop.f32.mrb[0].mxu0
  %v916 = vadd.f32 %v252, %v915
  %v917 = vpop.f32.mrb[0].mxu0
  %918 = vmatprep.mubr.f32.mxu0 0.0
  %919 = vmatmul.mubr.f32.gmra.mrb[0].mxu0 %v841
  %v920 = vpop.f32.mrb[0].mxu0
  %v921 = vadd.f32 %v253, %v920
  %v922 = vpop.f32.mrb[0].mxu0
  %923 = vmatprep.mubr.f32.mxu0 0.0
  %924 = vmatmul.mubr.f32.gmra.mrb[0].mxu0 %v844
  %v925 = vpop.f32.mrb[0].mxu0
  %v926 = vadd.f32 %v254, %v925
  %v927 = vpop.f32.mrb[0].mxu0
  %928 = vmatprep.mubr.f32.mxu0 0.0
  %929 = vmatmul.mubr.f32.gmra.mrb[0].mxu0 %v847
  %v930 = vpop.f32.mrb[0].mxu0
  %v931 = vadd.f32 %v255, %v930
  %v932 = vpop.f32.mrb[0].mxu0
  %933 = vdwg.mxu0
  %v934 = vxor.u32 %v916, 2147483648
  %v935 = vxor.u32 %v921, 2147483648
  %v936 = vxor.u32 %v926, 2147483648
  %v937 = vxor.u32 %v931, 2147483648
  %v938 = vmul.f32 %v934, 1.442695
  %v939 = vpow.pop %v938
  %v940 = vmul.f32 %v935, 1.442695
  %v941 = vpow.pop %v940
  %v942 = vmul.f32 %v936, 1.442695
  %v943 = vpow.pop %v942
  %v944 = vmul.f32 %v937, 1.442695
  %v945 = vpow.pop %v944
  %v946 = vadd.f32 %v939, 1.0
  %v947 = vadd.f32 %v941, 1.0
  %v948 = vadd.f32 %v943, 1.0
  %v949 = vadd.f32 %v945, 1.0
  %v950 = vrcp.pop %v946
  %v951 = vmul.f32 1.0, %v950
  %v952 = vrcp.pop %v947
  %v953 = vmul.f32 1.0, %v952
  %v954 = vrcp.pop %v948
  %v955 = vmul.f32 1.0, %v954
  %v956 = vrcp.pop %v949
  %v957 = vmul.f32 1.0, %v956
  %v958 = vmul.f32 %v916, %v951
  %v959 = vmul.f32 %v921, %v953
  %v960 = vmul.f32 %v926, %v955
  %v961 = vmul.f32 %v931, %v957
  %v962 = vld [vmem:[%s33] sm:$0xff]
  %v963 = vld [vmem:[%s33 + $0x8] sm:$0xff]
  %v964 = vld [vmem:[%s33 + $0x10] sm:$0xff]
  %v965 = vld [vmem:[%s33 + $0x18] sm:$0xff]
  %v966 = vld [vmem:[%s33 + $0x20] sm:$0xff]
  %v967 = vld [vmem:[%s33 + $0x28] sm:$0xff]
  %v968 = vld [vmem:[%s33 + $0x30] sm:$0xff]
  %v969 = vld [vmem:[%s33 + $0x38] sm:$0xff]
  %v970 = vld [vmem:[%s35] sm:$0x1]
  %v972 = vlaneseq
  %v973 = vshrl.u32 %v972, 7
  %v974 = vsub.s32 0, %v973
  %v975 = vrot.slane %v970, %v974
  %v978 = vsel %vm821, %v958, 0
  %v981 = vsel %vm821, %v959, 0
  %v984 = vsel %vm821, %v960, 0
  %v987 = vsel %vm821, %v961, 0
  %989 = vmatprep.subr.mxu0 0.0
  %990 = vmatpush1.msra.mxu0 %v962
  %991 = vmatprep.subr.mxu0 0.0
  %992 = vmatpush1.msra.mxu0 %v963
  %993 = vmatprep.subr.mxu0 0.0
  %994 = vmatpush1.msra.mxu0 %v964
  %995 = vmatprep.subr.mxu0 0.0
  %996 = vmatpush1.msra.mxu0 %v965
  %997 = vmatprep.subr.mxu0 0.0
  %998 = vmatpush1.msra.mxu0 %v966
  %999 = vmatprep.subr.mxu0 0.0
  %1000 = vmatpush1.msra.mxu0 %v967
  %1001 = vmatprep.subr.mxu0 0.0
  %1002 = vmatpush1.msra.mxu0 %v968
  %1003 = vmatprep.subr.mxu0 0.0
  %1004 = vmatpush1.msra.mxu0 %v969
  %1005 = vmatprep.subr.mxu0 0.0
  %1006 = vmatpush1.msra.mxu0 0.0
  %1007 = vmatprep.subr.mxu0 0.0
  %1008 = vmatpush1.msra.mxu0 0.0
  %1009 = vmatprep.subr.mxu0 0.0
  %1010 = vmatpush1.msra.mxu0 0.0
  %1011 = vmatprep.subr.mxu0 0.0
  %1012 = vmatpush1.msra.mxu0 0.0
  %1013 = vmatprep.subr.mxu0 0.0
  %1014 = vmatpush1.msra.mxu0 0.0
  %1015 = vmatprep.subr.mxu0 0.0
  %1016 = vmatpush1.msra.mxu0 0.0
  %1017 = vmatprep.subr.mxu0 0.0
  %1018 = vmatpush1.msra.mxu0 0.0
  %1019 = vmatprep.subr.mxu0 0.0
  %1020 = vmatpush1.msra.mxu0 0.0
  %1021 = vmatprep.subr.mxu0 0.0
  %1022 = vmatpush1.msra.mxu0 0.0
  %1023 = vmatprep.subr.mxu0 0.0
  %1024 = vmatpush1.msra.mxu0 0.0
  %1025 = vmatprep.subr.mxu0 0.0
  %1026 = vmatpush1.msra.mxu0 0.0
  %1027 = vmatprep.subr.mxu0 0.0
  %1028 = vmatpush1.msra.mxu0 0.0
  %1029 = vmatprep.subr.mxu0 0.0
  %1030 = vmatpush1.msra.mxu0 0.0
  %1031 = vmatprep.subr.mxu0 0.0
  %1032 = vmatpush1.msra.mxu0 0.0
  %1033 = vmatprep.subr.mxu0 0.0
  %1034 = vmatpush1.msra.mxu0 0.0
  %1035 = vmatprep.subr.mxu0 0.0
  %1036 = vmatpush1.msra.mxu0 0.0
  %1037 = vmatprep.subr.mxu0 0.0
  %1038 = vmatpush1.msra.mxu0 0.0
  %1039 = vmatprep.subr.mxu0 0.0
  %1040 = vmatpush1.msra.mxu0 0.0
  %1041 = vmatprep.subr.mxu0 0.0
  %1042 = vmatpush1.msra.mxu0 0.0
  %1043 = vmatprep.subr.mxu0 0.0
  %1044 = vmatpush1.msra.mxu0 0.0
  %1045 = vmatprep.subr.mxu0 0.0
  %1046 = vmatpush1.msra.mxu0 0.0
  %1047 = vmatprep.subr.mxu0 0.0
  %1048 = vmatpush1.msra.mxu0 0.0
  %1049 = vmatprep.subr.mxu0 0.0
  %1050 = vmatpush1.msra.mxu0 0.0
  %1051 = vmatprep.subr.mxu0 0.0
  %1052 = vmatpush1.msra.mxu0 0.0
  %1053 = vmatprep.mubr.f32.mxu0 0.0
  %1054 = vmatmul.mubr.f32.gmra.mrb[0].mxu0 %v978
  %v1055 = vpop.f32.mrb[0].mxu0
  %v1056 = vadd.f32 %v975, %v1055
  %v1057 = vpop.f32.mrb[0].mxu0
  %1058 = vmatprep.mubr.f32.mxu0 0.0
  %1059 = vmatmul.mubr.f32.gmra.mrb[0].mxu0 %v981
  %v1060 = vpop.f32.mrb[0].mxu0
  %v1061 = vadd.f32 %v975, %v1060
  %v1062 = vpop.f32.mrb[0].mxu0
  %1063 = vmatprep.mubr.f32.mxu0 0.0
  %1064 = vmatmul.mubr.f32.gmra.mrb[0].mxu0 %v984
  %v1065 = vpop.f32.mrb[0].mxu0
  %v1066 = vadd.f32 %v975, %v1065
  %v1067 = vpop.f32.mrb[0].mxu0
  %1068 = vmatprep.mubr.f32.mxu0 0.0
  %1069 = vmatmul.mubr.f32.gmra.mrb[0].mxu0 %v987
  %v1070 = vpop.f32.mrb[0].mxu0
  %v1071 = vadd.f32 %v975, %v1070
  %v1072 = vpop.f32.mrb[0].mxu0
  %1073 = vdwg.mxu0
  %v1074 = vxor.u32 %v1056, 2147483648
  %v1075 = vxor.u32 %v1061, 2147483648
  %v1076 = vxor.u32 %v1066, 2147483648
  %v1077 = vxor.u32 %v1071, 2147483648
  %v1078 = vmul.f32 %v1074, 1.442695
  %v1079 = vpow.pop %v1078
  %v1080 = vmul.f32 %v1075, 1.442695
  %v1081 = vpow.pop %v1080
  %v1082 = vmul.f32 %v1076, 1.442695
  %v1083 = vpow.pop %v1082
  %v1084 = vmul.f32 %v1077, 1.442695
  %v1085 = vpow.pop %v1084
  %v1086 = vadd.f32 %v1079, 1.0
  %v1087 = vadd.f32 %v1081, 1.0
  %v1088 = vadd.f32 %v1083, 1.0
  %v1089 = vadd.f32 %v1085, 1.0
  %v1090 = vrcp.pop %v1086
  %v1091 = vmul.f32 1.0, %v1090
  %v1092 = vrcp.pop %v1087
  %v1093 = vmul.f32 1.0, %v1092
  %v1094 = vrcp.pop %v1088
  %v1095 = vmul.f32 1.0, %v1094
  %v1096 = vrcp.pop %v1089
  %v1097 = vmul.f32 1.0, %v1096
  %v1098 = vmul.f32 %v433, %v1091
  %v1099 = vmul.f32 %v438, %v1093
  %v1100 = vmul.f32 %v443, %v1095
  %v1101 = vmul.f32 %v448, %v1097
  %1106 = vrot.lane.b32.xlu0 %v1091, 96
  %v1107 = vpop.permute.xlu0 %1106
  %1108 = vrot.lane.b32.xlu0 %v1093, 96
  %v1109 = vpop.permute.xlu0 %1108
  %1110 = vrot.lane.b32.xlu0 %v1095, 96
  %v1111 = vpop.permute.xlu0 %1110
  %1112 = vrot.lane.b32.xlu0 %v1097, 96
  %v1113 = vpop.permute.xlu0 %1112
  %v1118 = vmul.f32 %v336, %v1107
  %v1119 = vmul.f32 %v341, %v1109
  %v1120 = vmul.f32 %v346, %v1111
  %v1121 = vmul.f32 %v351, %v1113
  %v1122 = vadd.f32 %v1098, %v1118
  %v1123 = vadd.f32 %v1099, %v1119
  %v1124 = vadd.f32 %v1100, %v1120
  %v1125 = vadd.f32 %v1101, %v1121
  %v1126 = vld [vmem:[%s37] sm:$0xff]
  %v1127 = vld [vmem:[%s37 + $0x8] sm:$0xff]
  %v1128 = vld [vmem:[%s37 + $0x10] sm:$0xff]
  %v1129 = vld [vmem:[%s37 + $0x18] sm:$0xff]
  %v1130 = vld [vmem:[%s39] sm:$0x1]
  %v1132 = vlaneseq
  %v1133 = vshrl.u32 %v1132, 7
  %v1134 = vsub.s32 0, %v1133
  %v1135 = vrot.slane %v1130, %v1134
  %1137 = vrot.lane.b32.xlu0 %v958, 64
  %v1138 = vpop.permute.xlu0 %1137
  %1139 = vrot.lane.b32.xlu0 %v959, 64
  %v1140 = vpop.permute.xlu0 %1139
  %1141 = vrot.lane.b32.xlu0 %v960, 64
  %v1142 = vpop.permute.xlu0 %1141
  %1143 = vrot.lane.b32.xlu0 %v961, 64
  %v1144 = vpop.permute.xlu0 %1143
  %v1145 = vsel %vm237, %v1138, 0
  %v1147 = vsel %vm237, %v1140, 0
  %v1149 = vsel %vm237, %v1142, 0
  %v1151 = vsel %vm237, %v1144, 0
  %1153 = vmatprep.subr.mxu0 0.0
  %1154 = vmatpush1.msra.mxu0 %v1126
  %1155 = vmatprep.subr.mxu0 0.0
  %1156 = vmatpush1.msra.mxu0 %v1127
  %1157 = vmatprep.subr.mxu0 0.0
  %1158 = vmatpush1.msra.mxu0 %v1128
  %1159 = vmatprep.subr.mxu0 0.0
  %1160 = vmatpush1.msra.mxu0 %v1129
  %1161 = vmatprep.subr.mxu0 0.0
  %1162 = vmatpush1.msra.mxu0 0.0
  %1163 = vmatprep.subr.mxu0 0.0
  %1164 = vmatpush1.msra.mxu0 0.0
  %1165 = vmatprep.subr.mxu0 0.0
  %1166 = vmatpush1.msra.mxu0 0.0
  %1167 = vmatprep.subr.mxu0 0.0
  %1168 = vmatpush1.msra.mxu0 0.0
  %1169 = vmatprep.subr.mxu0 0.0
  %1170 = vmatpush1.msra.mxu0 0.0
  %1171 = vmatprep.subr.mxu0 0.0
  %1172 = vmatpush1.msra.mxu0 0.0
  %1173 = vmatprep.subr.mxu0 0.0
  %1174 = vmatpush1.msra.mxu0 0.0
  %1175 = vmatprep.subr.mxu0 0.0
  %1176 = vmatpush1.msra.mxu0 0.0
  %1177 = vmatprep.subr.mxu0 0.0
  %1178 = vmatpush1.msra.mxu0 0.0
  %1179 = vmatprep.subr.mxu0 0.0
  %1180 = vmatpush1.msra.mxu0 0.0
  %1181 = vmatprep.subr.mxu0 0.0
  %1182 = vmatpush1.msra.mxu0 0.0
  %1183 = vmatprep.subr.mxu0 0.0
  %1184 = vmatpush1.msra.mxu0 0.0
  %1185 = vmatprep.subr.mxu0 0.0
  %1186 = vmatpush1.msra.mxu0 0.0
  %1187 = vmatprep.subr.mxu0 0.0
  %1188 = vmatpush1.msra.mxu0 0.0
  %1189 = vmatprep.subr.mxu0 0.0
  %1190 = vmatpush1.msra.mxu0 0.0
  %1191 = vmatprep.subr.mxu0 0.0
  %1192 = vmatpush1.msra.mxu0 0.0
  %1193 = vmatprep.subr.mxu0 0.0
  %1194 = vmatpush1.msra.mxu0 0.0
  %1195 = vmatprep.subr.mxu0 0.0
  %1196 = vmatpush1.msra.mxu0 0.0
  %1197 = vmatprep.subr.mxu0 0.0
  %1198 = vmatpush1.msra.mxu0 0.0
  %1199 = vmatprep.subr.mxu0 0.0
  %1200 = vmatpush1.msra.mxu0 0.0
  %1201 = vmatprep.subr.mxu0 0.0
  %1202 = vmatpush1.msra.mxu0 0.0
  %1203 = vmatprep.subr.mxu0 0.0
  %1204 = vmatpush1.msra.mxu0 0.0
  %1205 = vmatprep.subr.mxu0 0.0
  %1206 = vmatpush1.msra.mxu0 0.0
  %1207 = vmatprep.subr.mxu0 0.0
  %1208 = vmatpush1.msra.mxu0 0.0
  %1209 = vmatprep.subr.mxu0 0.0
  %1210 = vmatpush1.msra.mxu0 0.0
  %1211 = vmatprep.subr.mxu0 0.0
  %1212 = vmatpush1.msra.mxu0 0.0
  %1213 = vmatprep.subr.mxu0 0.0
  %1214 = vmatpush1.msra.mxu0 0.0
  %1215 = vmatprep.subr.mxu0 0.0
  %1216 = vmatpush1.msra.mxu0 0.0
  %1217 = vmatprep.mubr.f32.mxu0 0.0
  %1218 = vmatmul.mubr.f32.gmra.mrb[0].mxu0 %v1145
  %v1219 = vpop.f32.mrb[0].mxu0
  %v1220 = vadd.f32 %v1135, %v1219
  %v1221 = vpop.f32.mrb[0].mxu0
  %1222 = vmatprep.mubr.f32.mxu0 0.0
  %1223 = vmatmul.mubr.f32.gmra.mrb[0].mxu0 %v1147
  %v1224 = vpop.f32.mrb[0].mxu0
  %v1225 = vadd.f32 %v1135, %v1224
  %v1226 = vpop.f32.mrb[0].mxu0
  %1227 = vmatprep.mubr.f32.mxu0 0.0
  %1228 = vmatmul.mubr.f32.gmra.mrb[0].mxu0 %v1149
  %v1229 = vpop.f32.mrb[0].mxu0
  %v1230 = vadd.f32 %v1135, %v1229
  %v1231 = vpop.f32.mrb[0].mxu0
  %1232 = vmatprep.mubr.f32.mxu0 0.0
  %1233 = vmatmul.mubr.f32.gmra.mrb[0].mxu0 %v1151
  %v1234 = vpop.f32.mrb[0].mxu0
  %v1235 = vadd.f32 %v1135, %v1234
  %v1236 = vpop.f32.mrb[0].mxu0
  %1237 = vdwg.mxu0
  %v1238 = vxor.u32 %v1220, 2147483648
  %v1239 = vxor.u32 %v1225, 2147483648
  %v1240 = vxor.u32 %v1230, 2147483648
  %v1241 = vxor.u32 %v1235, 2147483648
  %v1242 = vmul.f32 %v1238, 1.442695
  %v1243 = vpow.pop %v1242
  %v1244 = vmul.f32 %v1239, 1.442695
  %v1245 = vpow.pop %v1244
  %v1246 = vmul.f32 %v1240, 1.442695
  %v1247 = vpow.pop %v1246
  %v1248 = vmul.f32 %v1241, 1.442695
  %v1249 = vpow.pop %v1248
  %v1250 = vadd.f32 %v1243, 1.0
  %v1251 = vadd.f32 %v1245, 1.0
  %v1252 = vadd.f32 %v1247, 1.0
  %v1253 = vadd.f32 %v1249, 1.0
  %v1254 = vrcp.pop %v1250
  %v1255 = vmul.f32 1.0, %v1254
  %v1256 = vrcp.pop %v1251
  %v1257 = vmul.f32 1.0, %v1256
  %v1258 = vrcp.pop %v1252
  %v1259 = vmul.f32 1.0, %v1258
  %v1260 = vrcp.pop %v1253
  %v1261 = vmul.f32 1.0, %v1260
  %v1262 = vmul.f32 %v1220, %v1255
  %v1263 = vmul.f32 %v1225, %v1257
  %v1264 = vmul.f32 %v1230, %v1259
  %v1265 = vmul.f32 %v1235, %v1261
  %v1266 = vld [vmem:[%s41] sm:$0xff]
  %v1267 = vld [vmem:[%s41 + $0x8] sm:$0xff]
  %v1268 = vld [vmem:[%s41 + $0x10] sm:$0xff]
  %v1269 = vld [vmem:[%s41 + $0x18] sm:$0xff]
  %v1271 = vsel %vm237, %v1262, 0
  %v1274 = vsel %vm237, %v1263, 0
  %v1277 = vsel %vm237, %v1264, 0
  %v1280 = vsel %vm237, %v1265, 0
  %1282 = vmatprep.subr.mxu0 0.0
  %1283 = vmatpush1.msra.mxu0 %v1266
  %1284 = vmatprep.subr.mxu0 0.0
  %1285 = vmatpush1.msra.mxu0 %v1267
  %1286 = vmatprep.subr.mxu0 0.0
  %1287 = vmatpush1.msra.mxu0 %v1268
  %1288 = vmatprep.subr.mxu0 0.0
  %1289 = vmatpush1.msra.mxu0 %v1269
  %1290 = vmatprep.subr.mxu0 0.0
  %1291 = vmatpush1.msra.mxu0 0.0
  %1292 = vmatprep.subr.mxu0 0.0
  %1293 = vmatpush1.msra.mxu0 0.0
  %1294 = vmatprep.subr.mxu0 0.0
  %1295 = vmatpush1.msra.mxu0 0.0
  %1296 = vmatprep.subr.mxu0 0.0
  %1297 = vmatpush1.msra.mxu0 0.0
  %1298 = vmatprep.subr.mxu0 0.0
  %1299 = vmatpush1.msra.mxu0 0.0
  %1300 = vmatprep.subr.mxu0 0.0
  %1301 = vmatpush1.msra.mxu0 0.0
  %1302 = vmatprep.subr.mxu0 0.0
  %1303 = vmatpush1.msra.mxu0 0.0
  %1304 = vmatprep.subr.mxu0 0.0
  %1305 = vmatpush1.msra.mxu0 0.0
  %1306 = vmatprep.subr.mxu0 0.0
  %1307 = vmatpush1.msra.mxu0 0.0
  %1308 = vmatprep.subr.mxu0 0.0
  %1309 = vmatpush1.msra.mxu0 0.0
  %1310 = vmatprep.subr.mxu0 0.0
  %1311 = vmatpush1.msra.mxu0 0.0
  %1312 = vmatprep.subr.mxu0 0.0
  %1313 = vmatpush1.msra.mxu0 0.0
  %1314 = vmatprep.subr.mxu0 0.0
  %1315 = vmatpush1.msra.mxu0 0.0
  %1316 = vmatprep.subr.mxu0 0.0
  %1317 = vmatpush1.msra.mxu0 0.0
  %1318 = vmatprep.subr.mxu0 0.0
  %1319 = vmatpush1.msra.mxu0 0.0
  %1320 = vmatprep.subr.mxu0 0.0
  %1321 = vmatpush1.msra.mxu0 0.0
  %1322 = vmatprep.subr.mxu0 0.0
  %1323 = vmatpush1.msra.mxu0 0.0
  %1324 = vmatprep.subr.mxu0 0.0
  %1325 = vmatpush1.msra.mxu0 0.0
  %1326 = vmatprep.subr.mxu0 0.0
  %1327 = vmatpush1.msra.mxu0 0.0
  %1328 = vmatprep.subr.mxu0 0.0
  %1329 = vmatpush1.msra.mxu0 0.0
  %1330 = vmatprep.subr.mxu0 0.0
  %1331 = vmatpush1.msra.mxu0 0.0
  %1332 = vmatprep.subr.mxu0 0.0
  %1333 = vmatpush1.msra.mxu0 0.0
  %1334 = vmatprep.subr.mxu0 0.0
  %1335 = vmatpush1.msra.mxu0 0.0
  %1336 = vmatprep.subr.mxu0 0.0
  %1337 = vmatpush1.msra.mxu0 0.0
  %1338 = vmatprep.subr.mxu0 0.0
  %1339 = vmatpush1.msra.mxu0 0.0
  %1340 = vmatprep.subr.mxu0 0.0
  %1341 = vmatpush1.msra.mxu0 0.0
  %1342 = vmatprep.subr.mxu0 0.0
  %1343 = vmatpush1.msra.mxu0 0.0
  %1344 = vmatprep.subr.mxu0 0.0
  %1345 = vmatpush1.msra.mxu0 0.0
  %1346 = vmatprep.mubr.f32.mxu0 0.0
  %1347 = vmatmul.mubr.f32.gmra.mrb[0].mxu0 %v1271
  %v1348 = vpop.f32.mrb[0].mxu0
  %v1349 = vadd.f32 0.0, %v1348
  %v1350 = vpop.f32.mrb[0].mxu0
  %1351 = vmatprep.mubr.f32.mxu0 0.0
  %1352 = vmatmul.mubr.f32.gmra.mrb[0].mxu0 %v1274
  %v1353 = vpop.f32.mrb[0].mxu0
  %v1354 = vadd.f32 0.0, %v1353
  %v1355 = vpop.f32.mrb[0].mxu0
  %1356 = vmatprep.mubr.f32.mxu0 0.0
  %1357 = vmatmul.mubr.f32.gmra.mrb[0].mxu0 %v1277
  %v1358 = vpop.f32.mrb[0].mxu0
  %v1359 = vadd.f32 0.0, %v1358
  %v1360 = vpop.f32.mrb[0].mxu0
  %1361 = vmatprep.mubr.f32.mxu0 0.0
  %1362 = vmatmul.mubr.f32.gmra.mrb[0].mxu0 %v1280
  %v1363 = vpop.f32.mrb[0].mxu0
  %v1364 = vadd.f32 0.0, %v1363
  %v1365 = vpop.f32.mrb[0].mxu0
  %1366 = vdwg.mxu0
  %1371 = vrot.lane.b32.xlu0 %v1349, 32
  %v1372 = vpop.permute.xlu0 %1371
  %1373 = vrot.lane.b32.xlu0 %v1354, 32
  %v1374 = vpop.permute.xlu0 %1373
  %1375 = vrot.lane.b32.xlu0 %v1359, 32
  %v1376 = vpop.permute.xlu0 %1375
  %1377 = vrot.lane.b32.xlu0 %v1364, 32
  %v1378 = vpop.permute.xlu0 %1377
  %v1383 = vmul.f32 %v451, %v1372
  %v1384 = vmul.f32 %v452, %v1374
  %v1385 = vmul.f32 %v453, %v1376
  %v1386 = vmul.f32 %v454, %v1378
  %v1387 = vsel %vm237, %v1122, %v1383
  %v1388 = vsel %vm237, %v1123, %v1384
  %v1389 = vsel %vm237, %v1124, %v1385
  %v1390 = vsel %vm237, %v1125, %v1386
  %v1392 = vsel %vm237, %v248, 0
  %v1395 = vsel %vm237, %v249, 0
  %1397 = vmatprep.subr.mxu0 0.0
  %1398 = vmatpush1.msra.mxu0 %v1387
  %1399 = vmatprep.subr.mxu0 0.0
  %1400 = vmatpush1.msra.mxu0 %v1388
  %1401 = vmatprep.subr.mxu0 0.0
  %1402 = vmatpush1.msra.mxu0 %v1389
  %1403 = vmatprep.subr.mxu0 0.0
  %1404 = vmatpush1.msra.mxu0 %v1390
  %1405 = vmatprep.subr.mxu0 0.0
  %1406 = vmatpush1.msra.mxu0 0.0
  %1407 = vmatprep.subr.mxu0 0.0
  %1408 = vmatpush1.msra.mxu0 0.0
  %1409 = vmatprep.subr.mxu0 0.0
  %1410 = vmatpush1.msra.mxu0 0.0
  %1411 = vmatprep.subr.mxu0 0.0
  %1412 = vmatpush1.msra.mxu0 0.0
  %1413 = vmatprep.subr.mxu0 0.0
  %1414 = vmatpush1.msra.mxu0 0.0
  %1415 = vmatprep.subr.mxu0 0.0
  %1416 = vmatpush1.msra.mxu0 0.0
  %1417 = vmatprep.subr.mxu0 0.0
  %1418 = vmatpush1.msra.mxu0 0.0
  %1419 = vmatprep.subr.mxu0 0.0
  %1420 = vmatpush1.msra.mxu0 0.0
  %1421 = vmatprep.subr.mxu0 0.0
  %1422 = vmatpush1.msra.mxu0 0.0
  %1423 = vmatprep.subr.mxu0 0.0
  %1424 = vmatpush1.msra.mxu0 0.0
  %1425 = vmatprep.subr.mxu0 0.0
  %1426 = vmatpush1.msra.mxu0 0.0
  %1427 = vmatprep.subr.mxu0 0.0
  %1428 = vmatpush1.msra.mxu0 0.0
  %1429 = vmatprep.subr.mxu0 0.0
  %1430 = vmatpush1.msra.mxu0 0.0
  %1431 = vmatprep.subr.mxu0 0.0
  %1432 = vmatpush1.msra.mxu0 0.0
  %1433 = vmatprep.subr.mxu0 0.0
  %1434 = vmatpush1.msra.mxu0 0.0
  %1435 = vmatprep.subr.mxu0 0.0
  %1436 = vmatpush1.msra.mxu0 0.0
  %1437 = vmatprep.subr.mxu0 0.0
  %1438 = vmatpush1.msra.mxu0 0.0
  %1439 = vmatprep.subr.mxu0 0.0
  %1440 = vmatpush1.msra.mxu0 0.0
  %1441 = vmatprep.subr.mxu0 0.0
  %1442 = vmatpush1.msra.mxu0 0.0
  %1443 = vmatprep.subr.mxu0 0.0
  %1444 = vmatpush1.msra.mxu0 0.0
  %1445 = vmatprep.subr.mxu0 0.0
  %1446 = vmatpush1.msra.mxu0 0.0
  %1447 = vmatprep.subr.mxu0 0.0
  %1448 = vmatpush1.msra.mxu0 0.0
  %1449 = vmatprep.subr.mxu0 0.0
  %1450 = vmatpush1.msra.mxu0 0.0
  %1451 = vmatprep.subr.mxu0 0.0
  %1452 = vmatpush1.msra.mxu0 0.0
  %1453 = vmatprep.subr.mxu0 0.0
  %1454 = vmatpush1.msra.mxu0 0.0
  %1455 = vmatprep.subr.mxu0 0.0
  %1456 = vmatpush1.msra.mxu0 0.0
  %1457 = vmatprep.subr.mxu0 0.0
  %1458 = vmatpush1.msra.mxu0 0.0
  %1459 = vmatprep.subr.mxu0 0.0
  %1460 = vmatpush1.msra.mxu0 0.0
  %1461 = vmatprep.mubr.f32.mxu0 0.0
  %1462 = vmatmul.mubr.f32.gmra.mrb[0].mxu0 %v1392
  %v1463 = vpop.f32.mrb[0].mxu0
  %v1464 = vadd.f32 0.0, %v1463
  %v1465 = vpop.f32.mrb[0].mxu0
  %1466 = vmatprep.mubr.f32.mxu0 0.0
  %1467 = vmatmul.mubr.f32.gmra.mrb[0].mxu0 %v1395
  %v1468 = vpop.f32.mrb[0].mxu0
  %v1469 = vadd.f32 0.0, %v1468
  %v1470 = vpop.f32.mrb[0].mxu0
  %1471 = vdwg.mxu0
  %1473 = vset.pattern.permute.xlu0 0
  %1474 = vperm.xlu0 %1473, %v250
  %v1475 = vpop.permute.xlu0 %1474
  %1478 = vset.pattern.permute.xlu0 0
  %1479 = vperm.xlu0 %1478, %v251
  %v1480 = vpop.permute.xlu0 %1479
  %v1482 = vmul.f32 %v1464, %v1475
  %v1483 = vmul.f32 %v1469, %v1480
  %v1484 = vadd.f32 %v238, %v1482
  %v1485 = vadd.f32 %v239, %v1483
  %1488 = vrot.lane.b32.xlu0 %v1464, 32
  %v1489 = vpop.permute.xlu0 %1488
  %1490 = vrot.lane.b32.xlu0 %v1469, 32
  %v1491 = vpop.permute.xlu0 %1490
  %v1494 = vsel %vm237, %v238, %v1489
  %v1495 = vsel %vm237, %v239, %v1491
  %v1496 = vld [vmem:[%s43] sm:$0xff]
  %v1497 = vld [vmem:[%s43 + $0x8] sm:$0xff]
  %v1498 = vld [vmem:[%s43 + $0x10] sm:$0xff]
  %v1499 = vld [vmem:[%s43 + $0x18] sm:$0xff]
  %v1500 = vld [vmem:[%s43 + $0x20] sm:$0xff]
  %v1501 = vld [vmem:[%s43 + $0x28] sm:$0xff]
  %v1502 = vld [vmem:[%s43 + $0x30] sm:$0xff]
  %v1503 = vld [vmem:[%s43 + $0x38] sm:$0xff]
  %v1504 = vld [vmem:[%s45] sm:$0x1]
  %v1506 = vlaneseq
  %v1507 = vshrl.u32 %v1506, 7
  %v1508 = vsub.s32 0, %v1507
  %v1509 = vrot.slane %v1504, %v1508
  %v1512 = vsel %vm821, %v1494, 0
  %v1515 = vsel %vm821, %v1495, 0
  %1517 = vmatprep.subr.mxu0 0.0
  %1518 = vmatpush1.msra.mxu0 %v1496
  %1519 = vmatprep.subr.mxu0 0.0
  %1520 = vmatpush1.msra.mxu0 %v1497
  %1521 = vmatprep.subr.mxu0 0.0
  %1522 = vmatpush1.msra.mxu0 %v1498
  %1523 = vmatprep.subr.mxu0 0.0
  %1524 = vmatpush1.msra.mxu0 %v1499
  %1525 = vmatprep.subr.mxu0 0.0
  %1526 = vmatpush1.msra.mxu0 %v1500
  %1527 = vmatprep.subr.mxu0 0.0
  %1528 = vmatpush1.msra.mxu0 %v1501
  %1529 = vmatprep.subr.mxu0 0.0
  %1530 = vmatpush1.msra.mxu0 %v1502
  %1531 = vmatprep.subr.mxu0 0.0
  %1532 = vmatpush1.msra.mxu0 %v1503
  %1533 = vmatprep.subr.mxu0 0.0
  %1534 = vmatpush1.msra.mxu0 0.0
  %1535 = vmatprep.subr.mxu0 0.0
  %1536 = vmatpush1.msra.mxu0 0.0
  %1537 = vmatprep.subr.mxu0 0.0
  %1538 = vmatpush1.msra.mxu0 0.0
  %1539 = vmatprep.subr.mxu0 0.0
  %1540 = vmatpush1.msra.mxu0 0.0
  %1541 = vmatprep.subr.mxu0 0.0
  %1542 = vmatpush1.msra.mxu0 0.0
  %1543 = vmatprep.subr.mxu0 0.0
  %1544 = vmatpush1.msra.mxu0 0.0
  %1545 = vmatprep.subr.mxu0 0.0
  %1546 = vmatpush1.msra.mxu0 0.0
  %1547 = vmatprep.subr.mxu0 0.0
  %1548 = vmatpush1.msra.mxu0 0.0
  %1549 = vmatprep.subr.mxu0 0.0
  %1550 = vmatpush1.msra.mxu0 0.0
  %1551 = vmatprep.subr.mxu0 0.0
  %1552 = vmatpush1.msra.mxu0 0.0
  %1553 = vmatprep.subr.mxu0 0.0
  %1554 = vmatpush1.msra.mxu0 0.0
  %1555 = vmatprep.subr.mxu0 0.0
  %1556 = vmatpush1.msra.mxu0 0.0
  %1557 = vmatprep.subr.mxu0 0.0
  %1558 = vmatpush1.msra.mxu0 0.0
  %1559 = vmatprep.subr.mxu0 0.0
  %1560 = vmatpush1.msra.mxu0 0.0
  %1561 = vmatprep.subr.mxu0 0.0
  %1562 = vmatpush1.msra.mxu0 0.0
  %1563 = vmatprep.subr.mxu0 0.0
  %1564 = vmatpush1.msra.mxu0 0.0
  %1565 = vmatprep.subr.mxu0 0.0
  %1566 = vmatpush1.msra.mxu0 0.0
  %1567 = vmatprep.subr.mxu0 0.0
  %1568 = vmatpush1.msra.mxu0 0.0
  %1569 = vmatprep.subr.mxu0 0.0
  %1570 = vmatpush1.msra.mxu0 0.0
  %1571 = vmatprep.subr.mxu0 0.0
  %1572 = vmatpush1.msra.mxu0 0.0
  %1573 = vmatprep.subr.mxu0 0.0
  %1574 = vmatpush1.msra.mxu0 0.0
  %1575 = vmatprep.subr.mxu0 0.0
  %1576 = vmatpush1.msra.mxu0 0.0
  %1577 = vmatprep.subr.mxu0 0.0
  %1578 = vmatpush1.msra.mxu0 0.0
  %1579 = vmatprep.subr.mxu0 0.0
  %1580 = vmatpush1.msra.mxu0 0.0
  %1581 = vmatprep.mubr.f32.mxu0 0.0
  %1582 = vmatmul.mubr.f32.gmra.mrb[0].mxu0 %v1512
  %v1583 = vpop.f32.mrb[0].mxu0
  %v1584 = vadd.f32 %v1509, %v1583
  %v1585 = vpop.f32.mrb[0].mxu0
  %1586 = vmatprep.mubr.f32.mxu0 0.0
  %1587 = vmatmul.mubr.f32.gmra.mrb[0].mxu0 %v1515
  %v1588 = vpop.f32.mrb[0].mxu0
  %v1589 = vadd.f32 %v1509, %v1588
  %v1590 = vpop.f32.mrb[0].mxu0
  %1591 = vdwg.mxu0
  %v1592 = vxor.u32 %v1584, 2147483648
  %v1593 = vxor.u32 %v1589, 2147483648
  %v1594 = vmul.f32 %v1592, 1.442695
  %v1595 = vpow.pop %v1594
  %v1596 = vmul.f32 %v1593, 1.442695
  %v1597 = vpow.pop %v1596
  %v1598 = vadd.f32 %v1595, 1.0
  %v1599 = vadd.f32 %v1597, 1.0
  %v1600 = vrcp.pop %v1598
  %v1601 = vmul.f32 1.0, %v1600
  %v1602 = vrcp.pop %v1599
  %v1603 = vmul.f32 1.0, %v1602
  %v1604 = vmul.f32 %v1584, %v1601
  %v1605 = vmul.f32 %v1589, %v1603
  %v1606 = vld [vmem:[%s47] sm:$0xff]
  %v1607 = vld [vmem:[%s47 + $0x8] sm:$0xff]
  %v1608 = vld [vmem:[%s47 + $0x10] sm:$0xff]
  %v1609 = vld [vmem:[%s47 + $0x18] sm:$0xff]
  %v1611 = vsel %vm237, %v1604, 0
  %v1614 = vsel %vm237, %v1605, 0
  %1616 = vmatprep.subr.mxu0 0.0
  %1617 = vmatpush1.msra.mxu0 %v1606
  %1618 = vmatprep.subr.mxu0 0.0
  %1619 = vmatpush1.msra.mxu0 %v1607
  %1620 = vmatprep.subr.mxu0 0.0
  %1621 = vmatpush1.msra.mxu0 %v1608
  %1622 = vmatprep.subr.mxu0 0.0
  %1623 = vmatpush1.msra.mxu0 %v1609
  %1624 = vmatprep.subr.mxu0 0.0
  %1625 = vmatpush1.msra.mxu0 0.0
  %1626 = vmatprep.subr.mxu0 0.0
  %1627 = vmatpush1.msra.mxu0 0.0
  %1628 = vmatprep.subr.mxu0 0.0
  %1629 = vmatpush1.msra.mxu0 0.0
  %1630 = vmatprep.subr.mxu0 0.0
  %1631 = vmatpush1.msra.mxu0 0.0
  %1632 = vmatprep.subr.mxu0 0.0
  %1633 = vmatpush1.msra.mxu0 0.0
  %1634 = vmatprep.subr.mxu0 0.0
  %1635 = vmatpush1.msra.mxu0 0.0
  %1636 = vmatprep.subr.mxu0 0.0
  %1637 = vmatpush1.msra.mxu0 0.0
  %1638 = vmatprep.subr.mxu0 0.0
  %1639 = vmatpush1.msra.mxu0 0.0
  %1640 = vmatprep.subr.mxu0 0.0
  %1641 = vmatpush1.msra.mxu0 0.0
  %1642 = vmatprep.subr.mxu0 0.0
  %1643 = vmatpush1.msra.mxu0 0.0
  %1644 = vmatprep.subr.mxu0 0.0
  %1645 = vmatpush1.msra.mxu0 0.0
  %1646 = vmatprep.subr.mxu0 0.0
  %1647 = vmatpush1.msra.mxu0 0.0
  %1648 = vmatprep.subr.mxu0 0.0
  %1649 = vmatpush1.msra.mxu0 0.0
  %1650 = vmatprep.subr.mxu0 0.0
  %1651 = vmatpush1.msra.mxu0 0.0
  %1652 = vmatprep.subr.mxu0 0.0
  %1653 = vmatpush1.msra.mxu0 0.0
  %1654 = vmatprep.subr.mxu0 0.0
  %1655 = vmatpush1.msra.mxu0 0.0
  %1656 = vmatprep.subr.mxu0 0.0
  %1657 = vmatpush1.msra.mxu0 0.0
  %1658 = vmatprep.subr.mxu0 0.0
  %1659 = vmatpush1.msra.mxu0 0.0
  %1660 = vmatprep.subr.mxu0 0.0
  %1661 = vmatpush1.msra.mxu0 0.0
  %1662 = vmatprep.subr.mxu0 0.0
  %1663 = vmatpush1.msra.mxu0 0.0
  %1664 = vmatprep.subr.mxu0 0.0
  %1665 = vmatpush1.msra.mxu0 0.0
  %1666 = vmatprep.subr.mxu0 0.0
  %1667 = vmatpush1.msra.mxu0 0.0
  %1668 = vmatprep.subr.mxu0 0.0
  %1669 = vmatpush1.msra.mxu0 0.0
  %1670 = vmatprep.subr.mxu0 0.0
  %1671 = vmatpush1.msra.mxu0 0.0
  %1672 = vmatprep.subr.mxu0 0.0
  %1673 = vmatpush1.msra.mxu0 0.0
  %1674 = vmatprep.subr.mxu0 0.0
  %1675 = vmatpush1.msra.mxu0 0.0
  %1676 = vmatprep.subr.mxu0 0.0
  %1677 = vmatpush1.msra.mxu0 0.0
  %1678 = vmatprep.subr.mxu0 0.0
  %1679 = vmatpush1.msra.mxu0 0.0
  %1680 = vmatprep.mubr.f32.mxu0 0.0
  %1681 = vmatmul.mubr.f32.gmra.mrb[0].mxu0 %v1611
  %v1682 = vpop.f32.mrb[0].mxu0
  %v1683 = vadd.f32 0.0, %v1682
  %v1684 = vpop.f32.mrb[0].mxu0
  %1685 = vmatprep.mubr.f32.mxu0 0.0
  %1686 = vmatmul.mubr.f32.gmra.mrb[0].mxu0 %v1614
  %v1687 = vpop.f32.mrb[0].mxu0
  %v1688 = vadd.f32 0.0, %v1687
  %v1689 = vpop.f32.mrb[0].mxu0
  %1690 = vdwg.mxu0
  %v1691 = vadd.f32 %v238, %v1683
  %v1692 = vadd.f32 %v239, %v1688
  %v1693 = vld [vmem:[%s49] sm:$0x1]
  %v1695 = vlaneseq
  %v1696 = vshrl.u32 %v1695, 7
  %v1697 = vsub.s32 0, %v1696
  %v1698 = vrot.slane %v1693, %v1697
  %v1700 = vadd.f32 %v1691, %v1698
  %v1701 = vadd.f32 %v1692, %v1698
  %v1702 = vsel %vm237, %v1700, %v1484
  %v1703 = vsel %vm237, %v1701, %v1485
  %v1704 = vld [vmem:[%s23] sm:$0xff]
  %v1705 = vld [vmem:[%s23 + $0x8] sm:$0xff]
  %v1706 = vld [vmem:[%s23 + $0x10] sm:$0xff]
  %v1707 = vld [vmem:[%s25] sm:$0xff]
  %v1708 = vld [vmem:[%s25 + $0x8] sm:$0xff]
  %v1709 = vld [vmem:[%s25 + $0x10] sm:$0xff]
  %v1710 = vld [vmem:[%s27] sm:$0xff]
  %v1711 = vld [vmem:[%s27 + $0x8] sm:$0xff]
  %v1712 = vld [vmem:[%s29] sm:$0xff]
  %v1713 = vld [vmem:[%s29 + $0x8] sm:$0xff]
  %v1714 = vld [vmem:[%s53] sm:$0xff]
  %v1715 = vld [vmem:[%s53 + $0x8] sm:$0xff]
  %v1716 = vld [vmem:[%s53 + $0x10] sm:$0xff]
  %v1718 = vsel %vm256, %v1704, 0
  %v1721 = vsel %vm256, %v1705, 0
  %v1724 = vsel %vm256, %v1706, 0
  %1726 = vmatprep.subr.mxu0 0.0
  %1727 = vmatpush1.msra.mxu0 %v1702
  %1728 = vmatprep.subr.mxu0 0.0
  %1729 = vmatpush1.msra.mxu0 %v1703
  %1730 = vmatprep.subr.mxu0 0.0
  %1731 = vmatpush1.msra.mxu0 0.0
  %1732 = vmatprep.subr.mxu0 0.0
  %1733 = vmatpush1.msra.mxu0 0.0
  %1734 = vmatprep.subr.mxu0 0.0
  %1735 = vmatpush1.msra.mxu0 0.0
  %1736 = vmatprep.subr.mxu0 0.0
  %1737 = vmatpush1.msra.mxu0 0.0
  %1738 = vmatprep.subr.mxu0 0.0
  %1739 = vmatpush1.msra.mxu0 0.0
  %1740 = vmatprep.subr.mxu0 0.0
  %1741 = vmatpush1.msra.mxu0 0.0
  %1742 = vmatprep.subr.mxu0 0.0
  %1743 = vmatpush1.msra.mxu0 0.0
  %1744 = vmatprep.subr.mxu0 0.0
  %1745 = vmatpush1.msra.mxu0 0.0
  %1746 = vmatprep.subr.mxu0 0.0
  %1747 = vmatpush1.msra.mxu0 0.0
  %1748 = vmatprep.subr.mxu0 0.0
  %1749 = vmatpush1.msra.mxu0 0.0
  %1750 = vmatprep.subr.mxu0 0.0
  %1751 = vmatpush1.msra.mxu0 0.0
  %1752 = vmatprep.subr.mxu0 0.0
  %1753 = vmatpush1.msra.mxu0 0.0
  %1754 = vmatprep.subr.mxu0 0.0
  %1755 = vmatpush1.msra.mxu0 0.0
  %1756 = vmatprep.subr.mxu0 0.0
  %1757 = vmatpush1.msra.mxu0 0.0
  %1758 = vmatprep.subr.mxu0 0.0
  %1759 = vmatpush1.msra.mxu0 0.0
  %1760 = vmatprep.subr.mxu0 0.0
  %1761 = vmatpush1.msra.mxu0 0.0
  %1762 = vmatprep.subr.mxu0 0.0
  %1763 = vmatpush1.msra.mxu0 0.0
  %1764 = vmatprep.subr.mxu0 0.0
  %1765 = vmatpush1.msra.mxu0 0.0
  %1766 = vmatprep.subr.mxu0 0.0
  %1767 = vmatpush1.msra.mxu0 0.0
  %1768 = vmatprep.subr.mxu0 0.0
  %1769 = vmatpush1.msra.mxu0 0.0
  %1770 = vmatprep.subr.mxu0 0.0
  %1771 = vmatpush1.msra.mxu0 0.0
  %1772 = vmatprep.subr.mxu0 0.0
  %1773 = vmatpush1.msra.mxu0 0.0
  %1774 = vmatprep.subr.mxu0 0.0
  %1775 = vmatpush1.msra.mxu0 0.0
  %1776 = vmatprep.subr.mxu0 0.0
  %1777 = vmatpush1.msra.mxu0 0.0
  %1778 = vmatprep.subr.mxu0 0.0
  %1779 = vmatpush1.msra.mxu0 0.0
  %1780 = vmatprep.subr.mxu0 0.0
  %1781 = vmatpush1.msra.mxu0 0.0
  %1782 = vmatprep.subr.mxu0 0.0
  %1783 = vmatpush1.msra.mxu0 0.0
  %1784 = vmatprep.subr.mxu0 0.0
  %1785 = vmatpush1.msra.mxu0 0.0
  %1786 = vmatprep.subr.mxu0 0.0
  %1787 = vmatpush1.msra.mxu0 0.0
  %1788 = vmatprep.subr.mxu0 0.0
  %1789 = vmatpush1.msra.mxu0 0.0
  %1790 = vmatprep.mubr.f32.mxu0 0.0
  %1791 = vmatmul.mubr.f32.gmra.mrb[0].mxu0 %v1718
  %v1792 = vpop.f32.mrb[0].mxu0
  %v1793 = vadd.f32 0.0, %v1792
  %v1794 = vpop.f32.mrb[0].mxu0
  %1795 = vmatprep.mubr.f32.mxu0 0.0
  %1796 = vmatmul.mubr.f32.gmra.mrb[0].mxu0 %v1721
  %v1797 = vpop.f32.mrb[0].mxu0
  %v1798 = vadd.f32 0.0, %v1797
  %v1799 = vpop.f32.mrb[0].mxu0
  %1800 = vmatprep.mubr.f32.mxu0 0.0
  %1801 = vmatmul.mubr.f32.gmra.mrb[0].mxu0 %v1724
  %v1802 = vpop.f32.mrb[0].mxu0
  %v1803 = vadd.f32 0.0, %v1802
  %v1804 = vpop.f32.mrb[0].mxu0
  %1805 = vdwg.mxu0
  %v1807 = vsel %vm256, %v1707, 0
  %v1810 = vsel %vm256, %v1708, 0
  %v1813 = vsel %vm256, %v1709, 0
  %1815 = vmatprep.subr.mxu0 0.0
  %1816 = vmatpush1.msra.mxu0 %v1702
  %1817 = vmatprep.subr.mxu0 0.0
  %1818 = vmatpush1.msra.mxu0 %v1703
  %1819 = vmatprep.subr.mxu0 0.0
  %1820 = vmatpush1.msra.mxu0 0.0
  %1821 = vmatprep.subr.mxu0 0.0
  %1822 = vmatpush1.msra.mxu0 0.0
  %1823 = vmatprep.subr.mxu0 0.0
  %1824 = vmatpush1.msra.mxu0 0.0
  %1825 = vmatprep.subr.mxu0 0.0
  %1826 = vmatpush1.msra.mxu0 0.0
  %1827 = vmatprep.subr.mxu0 0.0
  %1828 = vmatpush1.msra.mxu0 0.0
  %1829 = vmatprep.subr.mxu0 0.0
  %1830 = vmatpush1.msra.mxu0 0.0
  %1831 = vmatprep.subr.mxu0 0.0
  %1832 = vmatpush1.msra.mxu0 0.0
  %1833 = vmatprep.subr.mxu0 0.0
  %1834 = vmatpush1.msra.mxu0 0.0
  %1835 = vmatprep.subr.mxu0 0.0
  %1836 = vmatpush1.msra.mxu0 0.0
  %1837 = vmatprep.subr.mxu0 0.0
  %1838 = vmatpush1.msra.mxu0 0.0
  %1839 = vmatprep.subr.mxu0 0.0
  %1840 = vmatpush1.msra.mxu0 0.0
  %1841 = vmatprep.subr.mxu0 0.0
  %1842 = vmatpush1.msra.mxu0 0.0
  %1843 = vmatprep.subr.mxu0 0.0
  %1844 = vmatpush1.msra.mxu0 0.0
  %1845 = vmatprep.subr.mxu0 0.0
  %1846 = vmatpush1.msra.mxu0 0.0
  %1847 = vmatprep.subr.mxu0 0.0
  %1848 = vmatpush1.msra.mxu0 0.0
  %1849 = vmatprep.subr.mxu0 0.0
  %1850 = vmatpush1.msra.mxu0 0.0
  %1851 = vmatprep.subr.mxu0 0.0
  %1852 = vmatpush1.msra.mxu0 0.0
  %1853 = vmatprep.subr.mxu0 0.0
  %1854 = vmatpush1.msra.mxu0 0.0
  %1855 = vmatprep.subr.mxu0 0.0
  %1856 = vmatpush1.msra.mxu0 0.0
  %1857 = vmatprep.subr.mxu0 0.0
  %1858 = vmatpush1.msra.mxu0 0.0
  %1859 = vmatprep.subr.mxu0 0.0
  %1860 = vmatpush1.msra.mxu0 0.0
  %1861 = vmatprep.subr.mxu0 0.0
  %1862 = vmatpush1.msra.mxu0 0.0
  %1863 = vmatprep.subr.mxu0 0.0
  %1864 = vmatpush1.msra.mxu0 0.0
  %1865 = vmatprep.subr.mxu0 0.0
  %1866 = vmatpush1.msra.mxu0 0.0
  %1867 = vmatprep.subr.mxu0 0.0
  %1868 = vmatpush1.msra.mxu0 0.0
  %1869 = vmatprep.subr.mxu0 0.0
  %1870 = vmatpush1.msra.mxu0 0.0
  %1871 = vmatprep.subr.mxu0 0.0
  %1872 = vmatpush1.msra.mxu0 0.0
  %1873 = vmatprep.subr.mxu0 0.0
  %1874 = vmatpush1.msra.mxu0 0.0
  %1875 = vmatprep.subr.mxu0 0.0
  %1876 = vmatpush1.msra.mxu0 0.0
  %1877 = vmatprep.subr.mxu0 0.0
  %1878 = vmatpush1.msra.mxu0 0.0
  %1879 = vmatprep.mubr.f32.mxu0 0.0
  %1880 = vmatmul.mubr.f32.gmra.mrb[0].mxu0 %v1807
  %v1881 = vpop.f32.mrb[0].mxu0
  %v1882 = vadd.f32 0.0, %v1881
  %v1883 = vpop.f32.mrb[0].mxu0
  %1884 = vmatprep.mubr.f32.mxu0 0.0
  %1885 = vmatmul.mubr.f32.gmra.mrb[0].mxu0 %v1810
  %v1886 = vpop.f32.mrb[0].mxu0
  %v1887 = vadd.f32 0.0, %v1886
  %v1888 = vpop.f32.mrb[0].mxu0
  %1889 = vmatprep.mubr.f32.mxu0 0.0
  %1890 = vmatmul.mubr.f32.gmra.mrb[0].mxu0 %v1813
  %v1891 = vpop.f32.mrb[0].mxu0
  %v1892 = vadd.f32 0.0, %v1891
  %v1893 = vpop.f32.mrb[0].mxu0
  %1894 = vdwg.mxu0
  %v1895 = vsub.f32 %v1793, %v1882
  %v1896 = vsub.f32 %v1798, %v1887
  %v1897 = vsub.f32 %v1803, %v1892
  %1901 = vrot.lane.b32.xlu0 %v1895, 96
  %v1902 = vpop.permute.xlu0 %1901
  %1903 = vrot.lane.b32.xlu0 %v1896, 96
  %v1904 = vpop.permute.xlu0 %1903
  %1905 = vrot.lane.b32.xlu0 %v1897, 96
  %v1906 = vpop.permute.xlu0 %1905
  %v1907 = vsel %vm467, %v1902, 0
  %v1909 = vsel %vm467, %v1904, 0
  %v1911 = vsel %vm467, %v1906, 0
  %1913 = vmatprep.subr.mxu0 0.0
  %1914 = vmatpush1.msra.mxu0 %v219
  %1915 = vmatprep.subr.mxu0 0.0
  %1916 = vmatpush1.msra.mxu0 %v478
  %1917 = vmatprep.subr.mxu0 0.0
  %1918 = vmatpush1.msra.mxu0 0.0
  %1919 = vmatprep.subr.mxu0 0.0
  %1920 = vmatpush1.msra.mxu0 0.0
  %1921 = vmatprep.subr.mxu0 0.0
  %1922 = vmatpush1.msra.mxu0 0.0
  %1923 = vmatprep.subr.mxu0 0.0
  %1924 = vmatpush1.msra.mxu0 0.0
  %1925 = vmatprep.subr.mxu0 0.0
  %1926 = vmatpush1.msra.mxu0 0.0
  %1927 = vmatprep.subr.mxu0 0.0
  %1928 = vmatpush1.msra.mxu0 0.0
  %1929 = vmatprep.subr.mxu0 0.0
  %1930 = vmatpush1.msra.mxu0 0.0
  %1931 = vmatprep.subr.mxu0 0.0
  %1932 = vmatpush1.msra.mxu0 0.0
  %1933 = vmatprep.subr.mxu0 0.0
  %1934 = vmatpush1.msra.mxu0 0.0
  %1935 = vmatprep.subr.mxu0 0.0
  %1936 = vmatpush1.msra.mxu0 0.0
  %1937 = vmatprep.subr.mxu0 0.0
  %1938 = vmatpush1.msra.mxu0 0.0
  %1939 = vmatprep.subr.mxu0 0.0
  %1940 = vmatpush1.msra.mxu0 0.0
  %1941 = vmatprep.subr.mxu0 0.0
  %1942 = vmatpush1.msra.mxu0 0.0
  %1943 = vmatprep.subr.mxu0 0.0
  %1944 = vmatpush1.msra.mxu0 0.0
  %1945 = vmatprep.subr.mxu0 0.0
  %1946 = vmatpush1.msra.mxu0 0.0
  %1947 = vmatprep.subr.mxu0 0.0
  %1948 = vmatpush1.msra.mxu0 0.0
  %1949 = vmatprep.subr.mxu0 0.0
  %1950 = vmatpush1.msra.mxu0 0.0
  %1951 = vmatprep.subr.mxu0 0.0
  %1952 = vmatpush1.msra.mxu0 0.0
  %1953 = vmatprep.subr.mxu0 0.0
  %1954 = vmatpush1.msra.mxu0 0.0
  %1955 = vmatprep.subr.mxu0 0.0
  %1956 = vmatpush1.msra.mxu0 0.0
  %1957 = vmatprep.subr.mxu0 0.0
  %1958 = vmatpush1.msra.mxu0 0.0
  %1959 = vmatprep.subr.mxu0 0.0
  %1960 = vmatpush1.msra.mxu0 0.0
  %1961 = vmatprep.subr.mxu0 0.0
  %1962 = vmatpush1.msra.mxu0 0.0
  %1963 = vmatprep.subr.mxu0 0.0
  %1964 = vmatpush1.msra.mxu0 0.0
  %1965 = vmatprep.subr.mxu0 0.0
  %1966 = vmatpush1.msra.mxu0 0.0
  %1967 = vmatprep.subr.mxu0 0.0
  %1968 = vmatpush1.msra.mxu0 0.0
  %1969 = vmatprep.subr.mxu0 0.0
  %1970 = vmatpush1.msra.mxu0 0.0
  %1971 = vmatprep.subr.mxu0 0.0
  %1972 = vmatpush1.msra.mxu0 0.0
  %1973 = vmatprep.subr.mxu0 0.0
  %1974 = vmatpush1.msra.mxu0 0.0
  %1975 = vmatprep.subr.mxu0 0.0
  %1976 = vmatpush1.msra.mxu0 0.0
  %1977 = vmatprep.mubr.f32.mxu0 0.0
  %1978 = vmatmul.mubr.f32.gmra.mrb[0].mxu0 %v1907
  %v1979 = vpop.f32.mrb[0].mxu0
  %v1980 = vadd.f32 0.0, %v1979
  %v1981 = vpop.f32.mrb[0].mxu0
  %1982 = vmatprep.mubr.f32.mxu0 0.0
  %1983 = vmatmul.mubr.f32.gmra.mrb[0].mxu0 %v1909
  %v1984 = vpop.f32.mrb[0].mxu0
  %v1985 = vadd.f32 0.0, %v1984
  %v1986 = vpop.f32.mrb[0].mxu0
  %1987 = vmatprep.mubr.f32.mxu0 0.0
  %1988 = vmatmul.mubr.f32.gmra.mrb[0].mxu0 %v1911
  %v1989 = vpop.f32.mrb[0].mxu0
  %v1990 = vadd.f32 0.0, %v1989
  %v1991 = vpop.f32.mrb[0].mxu0
  %1992 = vdwg.mxu0
  %1993 = vmatprep.subr.mxu0 0.0
  %1994 = vmatpush1.msra.mxu0 %v221
  %1995 = vmatprep.subr.mxu0 0.0
  %1996 = vmatpush1.msra.mxu0 %v566
  %1997 = vmatprep.subr.mxu0 0.0
  %1998 = vmatpush1.msra.mxu0 0.0
  %1999 = vmatprep.subr.mxu0 0.0
  %2000 = vmatpush1.msra.mxu0 0.0
  %2001 = vmatprep.subr.mxu0 0.0
  %2002 = vmatpush1.msra.mxu0 0.0
  %2003 = vmatprep.subr.mxu0 0.0
  %2004 = vmatpush1.msra.mxu0 0.0
  %2005 = vmatprep.subr.mxu0 0.0
  %2006 = vmatpush1.msra.mxu0 0.0
  %2007 = vmatprep.subr.mxu0 0.0
  %2008 = vmatpush1.msra.mxu0 0.0
  %2009 = vmatprep.subr.mxu0 0.0
  %2010 = vmatpush1.msra.mxu0 0.0
  %2011 = vmatprep.subr.mxu0 0.0
  %2012 = vmatpush1.msra.mxu0 0.0
  %2013 = vmatprep.subr.mxu0 0.0
  %2014 = vmatpush1.msra.mxu0 0.0
  %2015 = vmatprep.subr.mxu0 0.0
  %2016 = vmatpush1.msra.mxu0 0.0
  %2017 = vmatprep.subr.mxu0 0.0
  %2018 = vmatpush1.msra.mxu0 0.0
  %2019 = vmatprep.subr.mxu0 0.0
  %2020 = vmatpush1.msra.mxu0 0.0
  %2021 = vmatprep.subr.mxu0 0.0
  %2022 = vmatpush1.msra.mxu0 0.0
  %2023 = vmatprep.subr.mxu0 0.0
  %2024 = vmatpush1.msra.mxu0 0.0
  %2025 = vmatprep.subr.mxu0 0.0
  %2026 = vmatpush1.msra.mxu0 0.0
  %2027 = vmatprep.subr.mxu0 0.0
  %2028 = vmatpush1.msra.mxu0 0.0
  %2029 = vmatprep.subr.mxu0 0.0
  %2030 = vmatpush1.msra.mxu0 0.0
  %2031 = vmatprep.subr.mxu0 0.0
  %2032 = vmatpush1.msra.mxu0 0.0
  %2033 = vmatprep.subr.mxu0 0.0
  %2034 = vmatpush1.msra.mxu0 0.0
  %2035 = vmatprep.subr.mxu0 0.0
  %2036 = vmatpush1.msra.mxu0 0.0
  %2037 = vmatprep.subr.mxu0 0.0
  %2038 = vmatpush1.msra.mxu0 0.0
  %2039 = vmatprep.subr.mxu0 0.0
  %2040 = vmatpush1.msra.mxu0 0.0
  %2041 = vmatprep.subr.mxu0 0.0
  %2042 = vmatpush1.msra.mxu0 0.0
  %2043 = vmatprep.subr.mxu0 0.0
  %2044 = vmatpush1.msra.mxu0 0.0
  %2045 = vmatprep.subr.mxu0 0.0
  %2046 = vmatpush1.msra.mxu0 0.0
  %2047 = vmatprep.subr.mxu0 0.0
  %2048 = vmatpush1.msra.mxu0 0.0
  %2049 = vmatprep.subr.mxu0 0.0
  %2050 = vmatpush1.msra.mxu0 0.0
  %2051 = vmatprep.subr.mxu0 0.0
  %2052 = vmatpush1.msra.mxu0 0.0
  %2053 = vmatprep.subr.mxu0 0.0
  %2054 = vmatpush1.msra.mxu0 0.0
  %2055 = vmatprep.subr.mxu0 0.0
  %2056 = vmatpush1.msra.mxu0 0.0
  %2057 = vmatprep.mubr.f32.mxu0 0.0
  %2058 = vmatmul.mubr.f32.gmra.mrb[0].mxu0 %v1907
  %v2059 = vpop.f32.mrb[0].mxu0
  %v2060 = vadd.f32 0.0, %v2059
  %v2061 = vpop.f32.mrb[0].mxu0
  %2062 = vmatprep.mubr.f32.mxu0 0.0
  %2063 = vmatmul.mubr.f32.gmra.mrb[0].mxu0 %v1909
  %v2064 = vpop.f32.mrb[0].mxu0
  %v2065 = vadd.f32 0.0, %v2064
  %v2066 = vpop.f32.mrb[0].mxu0
  %2067 = vmatprep.mubr.f32.mxu0 0.0
  %2068 = vmatmul.mubr.f32.gmra.mrb[0].mxu0 %v1911
  %v2069 = vpop.f32.mrb[0].mxu0
  %v2070 = vadd.f32 0.0, %v2069
  %v2071 = vpop.f32.mrb[0].mxu0
  %2072 = vdwg.mxu0
  %v2073 = vmul.f32 %v1980, %v2060
  %v2074 = vmul.f32 %v1985, %v2065
  %v2075 = vmul.f32 %v1990, %v2070
  %v2077 = vsel %vm657, %v2073, 0
  %v2080 = vsel %vm657, %v2074, 0
  %v2083 = vsel %vm657, %v2075, 0
  %2085 = vmatprep.subr.mxu0 0.0
  %2086 = vmatpush1.msra.mxu0 %v223
  %2087 = vmatprep.subr.mxu0 0.0
  %2088 = vmatpush1.msra.mxu0 %v224
  %2089 = vmatprep.subr.mxu0 0.0
  %2090 = vmatpush1.msra.mxu0 %v225
  %2091 = vmatprep.subr.mxu0 0.0
  %2092 = vmatpush1.msra.mxu0 %v226
  %2093 = vmatprep.subr.mxu0 0.0
  %2094 = vmatpush1.msra.mxu0 %v227
  %2095 = vmatprep.subr.mxu0 0.0
  %2096 = vmatpush1.msra.mxu0 %v228
  %2097 = vmatprep.subr.mxu0 0.0
  %2098 = vmatpush1.msra.mxu0 0.0
  %2099 = vmatprep.subr.mxu0 0.0
  %2100 = vmatpush1.msra.mxu0 0.0
  %2101 = vmatprep.subr.mxu0 0.0
  %2102 = vmatpush1.msra.mxu0 0.0
  %2103 = vmatprep.subr.mxu0 0.0
  %2104 = vmatpush1.msra.mxu0 0.0
  %2105 = vmatprep.subr.mxu0 0.0
  %2106 = vmatpush1.msra.mxu0 0.0
  %2107 = vmatprep.subr.mxu0 0.0
  %2108 = vmatpush1.msra.mxu0 0.0
  %2109 = vmatprep.subr.mxu0 0.0
  %2110 = vmatpush1.msra.mxu0 0.0
  %2111 = vmatprep.subr.mxu0 0.0
  %2112 = vmatpush1.msra.mxu0 0.0
  %2113 = vmatprep.subr.mxu0 0.0
  %2114 = vmatpush1.msra.mxu0 0.0
  %2115 = vmatprep.subr.mxu0 0.0
  %2116 = vmatpush1.msra.mxu0 0.0
  %2117 = vmatprep.subr.mxu0 0.0
  %2118 = vmatpush1.msra.mxu0 0.0
  %2119 = vmatprep.subr.mxu0 0.0
  %2120 = vmatpush1.msra.mxu0 0.0
  %2121 = vmatprep.subr.mxu0 0.0
  %2122 = vmatpush1.msra.mxu0 0.0
  %2123 = vmatprep.subr.mxu0 0.0
  %2124 = vmatpush1.msra.mxu0 0.0
  %2125 = vmatprep.subr.mxu0 0.0
  %2126 = vmatpush1.msra.mxu0 0.0
  %2127 = vmatprep.subr.mxu0 0.0
  %2128 = vmatpush1.msra.mxu0 0.0
  %2129 = vmatprep.subr.mxu0 0.0
  %2130 = vmatpush1.msra.mxu0 0.0
  %2131 = vmatprep.subr.mxu0 0.0
  %2132 = vmatpush1.msra.mxu0 0.0
  %2133 = vmatprep.subr.mxu0 0.0
  %2134 = vmatpush1.msra.mxu0 0.0
  %2135 = vmatprep.subr.mxu0 0.0
  %2136 = vmatpush1.msra.mxu0 0.0
  %2137 = vmatprep.subr.mxu0 0.0
  %2138 = vmatpush1.msra.mxu0 0.0
  %2139 = vmatprep.subr.mxu0 0.0
  %2140 = vmatpush1.msra.mxu0 0.0
  %2141 = vmatprep.subr.mxu0 0.0
  %2142 = vmatpush1.msra.mxu0 0.0
  %2143 = vmatprep.subr.mxu0 0.0
  %2144 = vmatpush1.msra.mxu0 0.0
  %2145 = vmatprep.subr.mxu0 0.0
  %2146 = vmatpush1.msra.mxu0 0.0
  %2147 = vmatprep.subr.mxu0 0.0
  %2148 = vmatpush1.msra.mxu0 0.0
  %2149 = vmatprep.mubr.f32.mxu0 0.0
  %2150 = vmatmul.mubr.f32.gmra.mrb[0].mxu0 %v2077
  %v2151 = vpop.f32.mrb[0].mxu0
  %v2152 = vadd.f32 0.0, %v2151
  %v2153 = vpop.f32.mrb[0].mxu0
  %2154 = vmatprep.mubr.f32.mxu0 0.0
  %2155 = vmatmul.mubr.f32.gmra.mrb[0].mxu0 %v2080
  %v2156 = vpop.f32.mrb[0].mxu0
  %v2157 = vadd.f32 0.0, %v2156
  %v2158 = vpop.f32.mrb[0].mxu0
  %2159 = vmatprep.mubr.f32.mxu0 0.0
  %2160 = vmatmul.mubr.f32.gmra.mrb[0].mxu0 %v2083
  %v2161 = vpop.f32.mrb[0].mxu0
  %v2162 = vadd.f32 0.0, %v2161
  %v2163 = vpop.f32.mrb[0].mxu0
  %2164 = vdwg.mxu0
  %v2165 = vmul.f32 %v2152, %v2152
  %v2166 = vmul.f32 %v2157, %v2157
  %v2167 = vmul.f32 %v2162, %v2162
  %v2168 = vsel %vm256, %v2165, 0.0
  %v2169 = vsel %vm256, %v2166, 0.0
  %v2170 = vadd.f32 %v2168, %v2169
  %v2171 = vsel %vm256, %v2167, 0.0
  %v2172 = vadd.f32 %v2170, %v2171
  %v2173 = vrot.slane %v2172, 4
  %v2174 = vadd.f32 %v2172, %v2173
  %v2175 = vrot.slane %v2174, 2
  %v2176 = vadd.f32 %v2174, %v2175
  %v2177 = vrot.slane %v2176, 1
  %v2178 = vadd.f32 %v2176, %v2177
  %v2179 = vrsqrt.pop %v2178
  %v2180 = vmul.f32 %v2178, %v2179
  %vm2181 = vcmp.eq.f32.partialorder %v2178, inf
  %v2182 = vsel %vm2181, %v2178, %v2180
  %vm2183 = vcmp.eq.f32.partialorder %v2178, 0.0
  %v2184 = vand.u32 %v2178, 2147483648
  %v2185 = vsel %vm2183, %v2184, %v2182
  %v2186 = vmax.f32 %v2185, 1e-12
  %v2187 = vrcp.pop %v2186
  %v2188 = vmul.f32 %v2152, %v2187
  %v2189 = vmul.f32 %v2157, %v2187
  %v2190 = vmul.f32 %v2162, %v2187
  %2194 = vrot.lane.b32.xlu0 %v1882, 32
  %v2195 = vpop.permute.xlu0 %2194
  %2196 = vrot.lane.b32.xlu0 %v1887, 32
  %v2197 = vpop.permute.xlu0 %2196
  %2198 = vrot.lane.b32.xlu0 %v1892, 32
  %v2199 = vpop.permute.xlu0 %2198
  %2206 = vrot.lane.b32.xlu0 %v2188, 64
  %v2207 = vpop.permute.xlu0 %2206
  %2208 = vrot.lane.b32.xlu0 %v2189, 64
  %v2209 = vpop.permute.xlu0 %2208
  %2210 = vrot.lane.b32.xlu0 %v2190, 64
  %v2211 = vpop.permute.xlu0 %2210
  %v2215 = vsel %vm237, %v1793, %v2195
  %v2216 = vsel %vm237, %v1798, %v2197
  %v2217 = vsel %vm237, %v1803, %v2199
  %v2218 = vsel %vm821, %v2215, %v2207
  %v2219 = vsel %vm821, %v2216, %v2209
  %v2220 = vsel %vm821, %v2217, %v2211
  %s2221 = scalar_lea.vmem %s31, 80
  %v2222 = vld [vmem:[%s2221] sm:$0xff]
  %v2223 = vld [vmem:[%s2221 + $0x8] sm:$0xff]
  %v2224 = vld [vmem:[%s2221 + $0x10] sm:$0xff]
  %v2225 = vld [vmem:[%s2221 + $0x18] sm:$0xff]
  %v2226 = vld [vmem:[%s2221 + $0x20] sm:$0xff]
  %v2227 = vld [vmem:[%s2221 + $0x28] sm:$0xff]
  %v2228 = vld [vmem:[%s2221 + $0x30] sm:$0xff]
  %v2229 = vld [vmem:[%s2221 + $0x38] sm:$0xff]
  %v2230 = vld [vmem:[%s2221 + $0x40] sm:$0xff]
  %v2231 = vld [vmem:[%s2221 + $0x48] sm:$0xff]
  %v2233 = vsel %vm836, %v2218, 0
  %v2236 = vsel %vm836, %v2219, 0
  %v2239 = vsel %vm836, %v2220, 0
  %2241 = vmatprep.subr.mxu0 0.0
  %2242 = vmatpush1.msra.mxu0 %v2222
  %2243 = vmatprep.subr.mxu0 0.0
  %2244 = vmatpush1.msra.mxu0 %v2223
  %2245 = vmatprep.subr.mxu0 0.0
  %2246 = vmatpush1.msra.mxu0 %v2224
  %2247 = vmatprep.subr.mxu0 0.0
  %2248 = vmatpush1.msra.mxu0 %v2225
  %2249 = vmatprep.subr.mxu0 0.0
  %2250 = vmatpush1.msra.mxu0 %v2226
  %2251 = vmatprep.subr.mxu0 0.0
  %2252 = vmatpush1.msra.mxu0 %v2227
  %2253 = vmatprep.subr.mxu0 0.0
  %2254 = vmatpush1.msra.mxu0 %v2228
  %2255 = vmatprep.subr.mxu0 0.0
  %2256 = vmatpush1.msra.mxu0 %v2229
  %2257 = vmatprep.subr.mxu0 0.0
  %2258 = vmatpush1.msra.mxu0 %v2230
  %2259 = vmatprep.subr.mxu0 0.0
  %2260 = vmatpush1.msra.mxu0 %v2231
  %2261 = vmatprep.subr.mxu0 0.0
  %2262 = vmatpush1.msra.mxu0 0.0
  %2263 = vmatprep.subr.mxu0 0.0
  %2264 = vmatpush1.msra.mxu0 0.0
  %2265 = vmatprep.subr.mxu0 0.0
  %2266 = vmatpush1.msra.mxu0 0.0
  %2267 = vmatprep.subr.mxu0 0.0
  %2268 = vmatpush1.msra.mxu0 0.0
  %2269 = vmatprep.subr.mxu0 0.0
  %2270 = vmatpush1.msra.mxu0 0.0
  %2271 = vmatprep.subr.mxu0 0.0
  %2272 = vmatpush1.msra.mxu0 0.0
  %2273 = vmatprep.subr.mxu0 0.0
  %2274 = vmatpush1.msra.mxu0 0.0
  %2275 = vmatprep.subr.mxu0 0.0
  %2276 = vmatpush1.msra.mxu0 0.0
  %2277 = vmatprep.subr.mxu0 0.0
  %2278 = vmatpush1.msra.mxu0 0.0
  %2279 = vmatprep.subr.mxu0 0.0
  %2280 = vmatpush1.msra.mxu0 0.0
  %2281 = vmatprep.subr.mxu0 0.0
  %2282 = vmatpush1.msra.mxu0 0.0
  %2283 = vmatprep.subr.mxu0 0.0
  %2284 = vmatpush1.msra.mxu0 0.0
  %2285 = vmatprep.subr.mxu0 0.0
  %2286 = vmatpush1.msra.mxu0 0.0
  %2287 = vmatprep.subr.mxu0 0.0
  %2288 = vmatpush1.msra.mxu0 0.0
  %2289 = vmatprep.subr.mxu0 0.0
  %2290 = vmatpush1.msra.mxu0 0.0
  %2291 = vmatprep.subr.mxu0 0.0
  %2292 = vmatpush1.msra.mxu0 0.0
  %2293 = vmatprep.subr.mxu0 0.0
  %2294 = vmatpush1.msra.mxu0 0.0
  %2295 = vmatprep.subr.mxu0 0.0
  %2296 = vmatpush1.msra.mxu0 0.0
  %2297 = vmatprep.subr.mxu0 0.0
  %2298 = vmatpush1.msra.mxu0 0.0
  %2299 = vmatprep.subr.mxu0 0.0
  %2300 = vmatpush1.msra.mxu0 0.0
  %2301 = vmatprep.subr.mxu0 0.0
  %2302 = vmatpush1.msra.mxu0 0.0
  %2303 = vmatprep.subr.mxu0 0.0
  %2304 = vmatpush1.msra.mxu0 0.0
  %2305 = vmatprep.mubr.f32.mxu0 0.0
  %2306 = vmatmul.mubr.f32.gmra.mrb[0].mxu0 %v2233
  %v2307 = vpop.f32.mrb[0].mxu0
  %v2308 = vadd.f32 %v1714, %v2307
  %v2309 = vpop.f32.mrb[0].mxu0
  %2310 = vmatprep.mubr.f32.mxu0 0.0
  %2311 = vmatmul.mubr.f32.gmra.mrb[0].mxu0 %v2236
  %v2312 = vpop.f32.mrb[0].mxu0
  %v2313 = vadd.f32 %v1715, %v2312
  %v2314 = vpop.f32.mrb[0].mxu0
  %2315 = vmatprep.mubr.f32.mxu0 0.0
  %2316 = vmatmul.mubr.f32.gmra.mrb[0].mxu0 %v2239
  %v2317 = vpop.f32.mrb[0].mxu0
  %v2318 = vadd.f32 %v1716, %v2317
  %v2319 = vpop.f32.mrb[0].mxu0
  %2320 = vdwg.mxu0
  %v2321 = vxor.u32 %v2308, 2147483648
  %v2322 = vxor.u32 %v2313, 2147483648
  %v2323 = vxor.u32 %v2318, 2147483648
  %v2324 = vmul.f32 %v2321, 1.442695
  %v2325 = vpow.pop %v2324
  %v2326 = vmul.f32 %v2322, 1.442695
  %v2327 = vpow.pop %v2326
  %v2328 = vmul.f32 %v2323, 1.442695
  %v2329 = vpow.pop %v2328
  %v2330 = vadd.f32 %v2325, 1.0
  %v2331 = vadd.f32 %v2327, 1.0
  %v2332 = vadd.f32 %v2329, 1.0
  %v2333 = vrcp.pop %v2330
  %v2334 = vmul.f32 1.0, %v2333
  %v2335 = vrcp.pop %v2331
  %v2336 = vmul.f32 1.0, %v2335
  %v2337 = vrcp.pop %v2332
  %v2338 = vmul.f32 1.0, %v2337
  %v2339 = vmul.f32 %v2308, %v2334
  %v2340 = vmul.f32 %v2313, %v2336
  %v2341 = vmul.f32 %v2318, %v2338
  %s2342 = scalar_lea.vmem %s33, 64
  %v2343 = vld [vmem:[%s2342] sm:$0xff]
  %v2344 = vld [vmem:[%s2342 + $0x8] sm:$0xff]
  %v2345 = vld [vmem:[%s2342 + $0x10] sm:$0xff]
  %v2346 = vld [vmem:[%s2342 + $0x18] sm:$0xff]
  %v2347 = vld [vmem:[%s2342 + $0x20] sm:$0xff]
  %v2348 = vld [vmem:[%s2342 + $0x28] sm:$0xff]
  %v2349 = vld [vmem:[%s2342 + $0x30] sm:$0xff]
  %v2350 = vld [vmem:[%s2342 + $0x38] sm:$0xff]
  %s2351 = scalar_lea.vmem %s35, 1
  %v2352 = vld [vmem:[%s2351] sm:$0x1]
  %v2354 = vlaneseq
  %v2355 = vshrl.u32 %v2354, 7
  %v2356 = vsub.s32 0, %v2355
  %v2357 = vrot.slane %v2352, %v2356
  %v2360 = vsel %vm821, %v2339, 0
  %v2363 = vsel %vm821, %v2340, 0
  %v2366 = vsel %vm821, %v2341, 0
  %2368 = vmatprep.subr.mxu0 0.0
  %2369 = vmatpush1.msra.mxu0 %v2343
  %2370 = vmatprep.subr.mxu0 0.0
  %2371 = vmatpush1.msra.mxu0 %v2344
  %2372 = vmatprep.subr.mxu0 0.0
  %2373 = vmatpush1.msra.mxu0 %v2345
  %2374 = vmatprep.subr.mxu0 0.0
  %2375 = vmatpush1.msra.mxu0 %v2346
  %2376 = vmatprep.subr.mxu0 0.0
  %2377 = vmatpush1.msra.mxu0 %v2347
  %2378 = vmatprep.subr.mxu0 0.0
  %2379 = vmatpush1.msra.mxu0 %v2348
  %2380 = vmatprep.subr.mxu0 0.0
  %2381 = vmatpush1.msra.mxu0 %v2349
  %2382 = vmatprep.subr.mxu0 0.0
  %2383 = vmatpush1.msra.mxu0 %v2350
  %2384 = vmatprep.subr.mxu0 0.0
  %2385 = vmatpush1.msra.mxu0 0.0
  %2386 = vmatprep.subr.mxu0 0.0
  %2387 = vmatpush1.msra.mxu0 0.0
  %2388 = vmatprep.subr.mxu0 0.0
  %2389 = vmatpush1.msra.mxu0 0.0
  %2390 = vmatprep.subr.mxu0 0.0
  %2391 = vmatpush1.msra.mxu0 0.0
  %2392 = vmatprep.subr.mxu0 0.0
  %2393 = vmatpush1.msra.mxu0 0.0
  %2394 = vmatprep.subr.mxu0 0.0
  %2395 = vmatpush1.msra.mxu0 0.0
  %2396 = vmatprep.subr.mxu0 0.0
  %2397 = vmatpush1.msra.mxu0 0.0
  %2398 = vmatprep.subr.mxu0 0.0
  %2399 = vmatpush1.msra.mxu0 0.0
  %2400 = vmatprep.subr.mxu0 0.0
  %2401 = vmatpush1.msra.mxu0 0.0
  %2402 = vmatprep.subr.mxu0 0.0
  %2403 = vmatpush1.msra.mxu0 0.0
  %2404 = vmatprep.subr.mxu0 0.0
  %2405 = vmatpush1.msra.mxu0 0.0
  %2406 = vmatprep.subr.mxu0 0.0
  %2407 = vmatpush1.msra.mxu0 0.0
  %2408 = vmatprep.subr.mxu0 0.0
  %2409 = vmatpush1.msra.mxu0 0.0
  %2410 = vmatprep.subr.mxu0 0.0
  %2411 = vmatpush1.msra.mxu0 0.0
  %2412 = vmatprep.subr.mxu0 0.0
  %2413 = vmatpush1.msra.mxu0 0.0
  %2414 = vmatprep.subr.mxu0 0.0
  %2415 = vmatpush1.msra.mxu0 0.0
  %2416 = vmatprep.subr.mxu0 0.0
  %2417 = vmatpush1.msra.mxu0 0.0
  %2418 = vmatprep.subr.mxu0 0.0
  %2419 = vmatpush1.msra.mxu0 0.0
  %2420 = vmatprep.subr.mxu0 0.0
  %2421 = vmatpush1.msra.mxu0 0.0
  %2422 = vmatprep.subr.mxu0 0.0
  %2423 = vmatpush1.msra.mxu0 0.0
  %2424 = vmatprep.subr.mxu0 0.0
  %2425 = vmatpush1.msra.mxu0 0.0
  %2426 = vmatprep.subr.mxu0 0.0
  %2427 = vmatpush1.msra.mxu0 0.0
  %2428 = vmatprep.subr.mxu0 0.0
  %2429 = vmatpush1.msra.mxu0 0.0
  %2430 = vmatprep.subr.mxu0 0.0
  %2431 = vmatpush1.msra.mxu0 0.0
  %2432 = vmatprep.mubr.f32.mxu0 0.0
  %2433 = vmatmul.mubr.f32.gmra.mrb[0].mxu0 %v2360
  %v2434 = vpop.f32.mrb[0].mxu0
  %v2435 = vadd.f32 %v2357, %v2434
  %v2436 = vpop.f32.mrb[0].mxu0
  %2437 = vmatprep.mubr.f32.mxu0 0.0
  %2438 = vmatmul.mubr.f32.gmra.mrb[0].mxu0 %v2363
  %v2439 = vpop.f32.mrb[0].mxu0
  %v2440 = vadd.f32 %v2357, %v2439
  %v2441 = vpop.f32.mrb[0].mxu0
  %2442 = vmatprep.mubr.f32.mxu0 0.0
  %2443 = vmatmul.mubr.f32.gmra.mrb[0].mxu0 %v2366
  %v2444 = vpop.f32.mrb[0].mxu0
  %v2445 = vadd.f32 %v2357, %v2444
  %v2446 = vpop.f32.mrb[0].mxu0
  %2447 = vdwg.mxu0
  %v2448 = vxor.u32 %v2435, 2147483648
  %v2449 = vxor.u32 %v2440, 2147483648
  %v2450 = vxor.u32 %v2445, 2147483648
  %v2451 = vmul.f32 %v2448, 1.442695
  %v2452 = vpow.pop %v2451
  %v2453 = vmul.f32 %v2449, 1.442695
  %v2454 = vpow.pop %v2453
  %v2455 = vmul.f32 %v2450, 1.442695
  %v2456 = vpow.pop %v2455
  %v2457 = vadd.f32 %v2452, 1.0
  %v2458 = vadd.f32 %v2454, 1.0
  %v2459 = vadd.f32 %v2456, 1.0
  %v2460 = vrcp.pop %v2457
  %v2461 = vmul.f32 1.0, %v2460
  %v2462 = vrcp.pop %v2458
  %v2463 = vmul.f32 1.0, %v2462
  %v2464 = vrcp.pop %v2459
  %v2465 = vmul.f32 1.0, %v2464
  %v2466 = vmul.f32 %v1882, %v2461
  %v2467 = vmul.f32 %v1887, %v2463
  %v2468 = vmul.f32 %v1892, %v2465
  %2472 = vrot.lane.b32.xlu0 %v2461, 96
  %v2473 = vpop.permute.xlu0 %2472
  %2474 = vrot.lane.b32.xlu0 %v2463, 96
  %v2475 = vpop.permute.xlu0 %2474
  %2476 = vrot.lane.b32.xlu0 %v2465, 96
  %v2477 = vpop.permute.xlu0 %2476
  %v2481 = vmul.f32 %v1793, %v2473
  %v2482 = vmul.f32 %v1798, %v2475
  %v2483 = vmul.f32 %v1803, %v2477
  %v2484 = vadd.f32 %v2466, %v2481
  %v2485 = vadd.f32 %v2467, %v2482
  %v2486 = vadd.f32 %v2468, %v2483
  %s2487 = scalar_lea.vmem %s37, 32
  %v2488 = vld [vmem:[%s2487] sm:$0xff]
  %v2489 = vld [vmem:[%s2487 + $0x8] sm:$0xff]
  %v2490 = vld [vmem:[%s2487 + $0x10] sm:$0xff]
  %v2491 = vld [vmem:[%s2487 + $0x18] sm:$0xff]
  %s2492 = scalar_lea.vmem %s39, 1
  %v2493 = vld [vmem:[%s2492] sm:$0x1]
  %v2495 = vlaneseq
  %v2496 = vshrl.u32 %v2495, 7
  %v2497 = vsub.s32 0, %v2496
  %v2498 = vrot.slane %v2493, %v2497
  %2500 = vrot.lane.b32.xlu0 %v2339, 64
  %v2501 = vpop.permute.xlu0 %2500
  %2502 = vrot.lane.b32.xlu0 %v2340, 64
  %v2503 = vpop.permute.xlu0 %2502
  %2504 = vrot.lane.b32.xlu0 %v2341, 64
  %v2505 = vpop.permute.xlu0 %2504
  %v2506 = vsel %vm237, %v2501, 0
  %v2508 = vsel %vm237, %v2503, 0
  %v2510 = vsel %vm237, %v2505, 0
  %2512 = vmatprep.subr.mxu0 0.0
  %2513 = vmatpush1.msra.mxu0 %v2488
  %2514 = vmatprep.subr.mxu0 0.0
  %2515 = vmatpush1.msra.mxu0 %v2489
  %2516 = vmatprep.subr.mxu0 0.0
  %2517 = vmatpush1.msra.mxu0 %v2490
  %2518 = vmatprep.subr.mxu0 0.0
  %2519 = vmatpush1.msra.mxu0 %v2491
  %2520 = vmatprep.subr.mxu0 0.0
  %2521 = vmatpush1.msra.mxu0 0.0
  %2522 = vmatprep.subr.mxu0 0.0
  %2523 = vmatpush1.msra.mxu0 0.0
  %2524 = vmatprep.subr.mxu0 0.0
  %2525 = vmatpush1.msra.mxu0 0.0
  %2526 = vmatprep.subr.mxu0 0.0
  %2527 = vmatpush1.msra.mxu0 0.0
  %2528 = vmatprep.subr.mxu0 0.0
  %2529 = vmatpush1.msra.mxu0 0.0
  %2530 = vmatprep.subr.mxu0 0.0
  %2531 = vmatpush1.msra.mxu0 0.0
  %2532 = vmatprep.subr.mxu0 0.0
  %2533 = vmatpush1.msra.mxu0 0.0
  %2534 = vmatprep.subr.mxu0 0.0
  %2535 = vmatpush1.msra.mxu0 0.0
  %2536 = vmatprep.subr.mxu0 0.0
  %2537 = vmatpush1.msra.mxu0 0.0
  %2538 = vmatprep.subr.mxu0 0.0
  %2539 = vmatpush1.msra.mxu0 0.0
  %2540 = vmatprep.subr.mxu0 0.0
  %2541 = vmatpush1.msra.mxu0 0.0
  %2542 = vmatprep.subr.mxu0 0.0
  %2543 = vmatpush1.msra.mxu0 0.0
  %2544 = vmatprep.subr.mxu0 0.0
  %2545 = vmatpush1.msra.mxu0 0.0
  %2546 = vmatprep.subr.mxu0 0.0
  %2547 = vmatpush1.msra.mxu0 0.0
  %2548 = vmatprep.subr.mxu0 0.0
  %2549 = vmatpush1.msra.mxu0 0.0
  %2550 = vmatprep.subr.mxu0 0.0
  %2551 = vmatpush1.msra.mxu0 0.0
  %2552 = vmatprep.subr.mxu0 0.0
  %2553 = vmatpush1.msra.mxu0 0.0
  %2554 = vmatprep.subr.mxu0 0.0
  %2555 = vmatpush1.msra.mxu0 0.0
  %2556 = vmatprep.subr.mxu0 0.0
  %2557 = vmatpush1.msra.mxu0 0.0
  %2558 = vmatprep.subr.mxu0 0.0
  %2559 = vmatpush1.msra.mxu0 0.0
  %2560 = vmatprep.subr.mxu0 0.0
  %2561 = vmatpush1.msra.mxu0 0.0
  %2562 = vmatprep.subr.mxu0 0.0
  %2563 = vmatpush1.msra.mxu0 0.0
  %2564 = vmatprep.subr.mxu0 0.0
  %2565 = vmatpush1.msra.mxu0 0.0
  %2566 = vmatprep.subr.mxu0 0.0
  %2567 = vmatpush1.msra.mxu0 0.0
  %2568 = vmatprep.subr.mxu0 0.0
  %2569 = vmatpush1.msra.mxu0 0.0
  %2570 = vmatprep.subr.mxu0 0.0
  %2571 = vmatpush1.msra.mxu0 0.0
  %2572 = vmatprep.subr.mxu0 0.0
  %2573 = vmatpush1.msra.mxu0 0.0
  %2574 = vmatprep.subr.mxu0 0.0
  %2575 = vmatpush1.msra.mxu0 0.0
  %2576 = vmatprep.mubr.f32.mxu0 0.0
  %2577 = vmatmul.mubr.f32.gmra.mrb[0].mxu0 %v2506
  %v2578 = vpop.f32.mrb[0].mxu0
  %v2579 = vadd.f32 %v2498, %v2578
  %v2580 = vpop.f32.mrb[0].mxu0
  %2581 = vmatprep.mubr.f32.mxu0 0.0
  %2582 = vmatmul.mubr.f32.gmra.mrb[0].mxu0 %v2508
  %v2583 = vpop.f32.mrb[0].mxu0
  %v2584 = vadd.f32 %v2498, %v2583
  %v2585 = vpop.f32.mrb[0].mxu0
  %2586 = vmatprep.mubr.f32.mxu0 0.0
  %2587 = vmatmul.mubr.f32.gmra.mrb[0].mxu0 %v2510
  %v2588 = vpop.f32.mrb[0].mxu0
  %v2589 = vadd.f32 %v2498, %v2588
  %v2590 = vpop.f32.mrb[0].mxu0
  %2591 = vdwg.mxu0
  %v2592 = vxor.u32 %v2579, 2147483648
  %v2593 = vxor.u32 %v2584, 2147483648
  %v2594 = vxor.u32 %v2589, 2147483648
  %v2595 = vmul.f32 %v2592, 1.442695
  %v2596 = vpow.pop %v2595
  %v2597 = vmul.f32 %v2593, 1.442695
  %v2598 = vpow.pop %v2597
  %v2599 = vmul.f32 %v2594, 1.442695
  %v2600 = vpow.pop %v2599
  %v2601 = vadd.f32 %v2596, 1.0
  %v2602 = vadd.f32 %v2598, 1.0
  %v2603 = vadd.f32 %v2600, 1.0
  %v2604 = vrcp.pop %v2601
  %v2605 = vmul.f32 1.0, %v2604
  %v2606 = vrcp.pop %v2602
  %v2607 = vmul.f32 1.0, %v2606
  %v2608 = vrcp.pop %v2603
  %v2609 = vmul.f32 1.0, %v2608
  %v2610 = vmul.f32 %v2579, %v2605
  %v2611 = vmul.f32 %v2584, %v2607
  %v2612 = vmul.f32 %v2589, %v2609
  %s2613 = scalar_lea.vmem %s41, 32
  %v2614 = vld [vmem:[%s2613] sm:$0xff]
  %v2615 = vld [vmem:[%s2613 + $0x8] sm:$0xff]
  %v2616 = vld [vmem:[%s2613 + $0x10] sm:$0xff]
  %v2617 = vld [vmem:[%s2613 + $0x18] sm:$0xff]
  %v2619 = vsel %vm237, %v2610, 0
  %v2622 = vsel %vm237, %v2611, 0
  %v2625 = vsel %vm237, %v2612, 0
  %2627 = vmatprep.subr.mxu0 0.0
  %2628 = vmatpush1.msra.mxu0 %v2614
  %2629 = vmatprep.subr.mxu0 0.0
  %2630 = vmatpush1.msra.mxu0 %v2615
  %2631 = vmatprep.subr.mxu0 0.0
  %2632 = vmatpush1.msra.mxu0 %v2616
  %2633 = vmatprep.subr.mxu0 0.0
  %2634 = vmatpush1.msra.mxu0 %v2617
  %2635 = vmatprep.subr.mxu0 0.0
  %2636 = vmatpush1.msra.mxu0 0.0
  %2637 = vmatprep.subr.mxu0 0.0
  %2638 = vmatpush1.msra.mxu0 0.0
  %2639 = vmatprep.subr.mxu0 0.0
  %2640 = vmatpush1.msra.mxu0 0.0
  %2641 = vmatprep.subr.mxu0 0.0
  %2642 = vmatpush1.msra.mxu0 0.0
  %2643 = vmatprep.subr.mxu0 0.0
  %2644 = vmatpush1.msra.mxu0 0.0
  %2645 = vmatprep.subr.mxu0 0.0
  %2646 = vmatpush1.msra.mxu0 0.0
  %2647 = vmatprep.subr.mxu0 0.0
  %2648 = vmatpush1.msra.mxu0 0.0
  %2649 = vmatprep.subr.mxu0 0.0
  %2650 = vmatpush1.msra.mxu0 0.0
  %2651 = vmatprep.subr.mxu0 0.0
  %2652 = vmatpush1.msra.mxu0 0.0
  %2653 = vmatprep.subr.mxu0 0.0
  %2654 = vmatpush1.msra.mxu0 0.0
  %2655 = vmatprep.subr.mxu0 0.0
  %2656 = vmatpush1.msra.mxu0 0.0
  %2657 = vmatprep.subr.mxu0 0.0
  %2658 = vmatpush1.msra.mxu0 0.0
  %2659 = vmatprep.subr.mxu0 0.0
  %2660 = vmatpush1.msra.mxu0 0.0
  %2661 = vmatprep.subr.mxu0 0.0
  %2662 = vmatpush1.msra.mxu0 0.0
  %2663 = vmatprep.subr.mxu0 0.0
  %2664 = vmatpush1.msra.mxu0 0.0
  %2665 = vmatprep.subr.mxu0 0.0
  %2666 = vmatpush1.msra.mxu0 0.0
  %2667 = vmatprep.subr.mxu0 0.0
  %2668 = vmatpush1.msra.mxu0 0.0
  %2669 = vmatprep.subr.mxu0 0.0
  %2670 = vmatpush1.msra.mxu0 0.0
  %2671 = vmatprep.subr.mxu0 0.0
  %2672 = vmatpush1.msra.mxu0 0.0
  %2673 = vmatprep.subr.mxu0 0.0
  %2674 = vmatpush1.msra.mxu0 0.0
  %2675 = vmatprep.subr.mxu0 0.0
  %2676 = vmatpush1.msra.mxu0 0.0
  %2677 = vmatprep.subr.mxu0 0.0
  %2678 = vmatpush1.msra.mxu0 0.0
  %2679 = vmatprep.subr.mxu0 0.0
  %2680 = vmatpush1.msra.mxu0 0.0
  %2681 = vmatprep.subr.mxu0 0.0
  %2682 = vmatpush1.msra.mxu0 0.0
  %2683 = vmatprep.subr.mxu0 0.0
  %2684 = vmatpush1.msra.mxu0 0.0
  %2685 = vmatprep.subr.mxu0 0.0
  %2686 = vmatpush1.msra.mxu0 0.0
  %2687 = vmatprep.subr.mxu0 0.0
  %2688 = vmatpush1.msra.mxu0 0.0
  %2689 = vmatprep.subr.mxu0 0.0
  %2690 = vmatpush1.msra.mxu0 0.0
  %2691 = vmatprep.mubr.f32.mxu0 0.0
  %2692 = vmatmul.mubr.f32.gmra.mrb[0].mxu0 %v2619
  %v2693 = vpop.f32.mrb[0].mxu0
  %v2694 = vadd.f32 0.0, %v2693
  %v2695 = vpop.f32.mrb[0].mxu0
  %2696 = vmatprep.mubr.f32.mxu0 0.0
  %2697 = vmatmul.mubr.f32.gmra.mrb[0].mxu0 %v2622
  %v2698 = vpop.f32.mrb[0].mxu0
  %v2699 = vadd.f32 0.0, %v2698
  %v2700 = vpop.f32.mrb[0].mxu0
  %2701 = vmatprep.mubr.f32.mxu0 0.0
  %2702 = vmatmul.mubr.f32.gmra.mrb[0].mxu0 %v2625
  %v2703 = vpop.f32.mrb[0].mxu0
  %v2704 = vadd.f32 0.0, %v2703
  %v2705 = vpop.f32.mrb[0].mxu0
  %2706 = vdwg.mxu0
  %2710 = vrot.lane.b32.xlu0 %v2694, 32
  %v2711 = vpop.permute.xlu0 %2710
  %2712 = vrot.lane.b32.xlu0 %v2699, 32
  %v2713 = vpop.permute.xlu0 %2712
  %2714 = vrot.lane.b32.xlu0 %v2704, 32
  %v2715 = vpop.permute.xlu0 %2714
  %v2719 = vmul.f32 %v1895, %v2711
  %v2720 = vmul.f32 %v1896, %v2713
  %v2721 = vmul.f32 %v1897, %v2715
  %v2722 = vsel %vm237, %v2484, %v2719
  %v2723 = vsel %vm237, %v2485, %v2720
  %v2724 = vsel %vm237, %v2486, %v2721
  %vm2725 = vcmask 195584
  %v2727 = vsel %vm2725, %v1710, 0
  %v2730 = vsel %vm2725, %v1711, 0
  %2732 = vmatprep.subr.mxu0 0.0
  %2733 = vmatpush1.msra.mxu0 %v2722
  %2734 = vmatprep.subr.mxu0 0.0
  %2735 = vmatpush1.msra.mxu0 %v2723
  %2736 = vmatprep.subr.mxu0 0.0
  %2737 = vmatpush1.msra.mxu0 %v2724
  %2738 = vmatprep.subr.mxu0 0.0
  %2739 = vmatpush1.msra.mxu0 0.0
  %2740 = vmatprep.subr.mxu0 0.0
  %2741 = vmatpush1.msra.mxu0 0.0
  %2742 = vmatprep.subr.mxu0 0.0
  %2743 = vmatpush1.msra.mxu0 0.0
  %2744 = vmatprep.subr.mxu0 0.0
  %2745 = vmatpush1.msra.mxu0 0.0
  %2746 = vmatprep.subr.mxu0 0.0
  %2747 = vmatpush1.msra.mxu0 0.0
  %2748 = vmatprep.subr.mxu0 0.0
  %2749 = vmatpush1.msra.mxu0 0.0
  %2750 = vmatprep.subr.mxu0 0.0
  %2751 = vmatpush1.msra.mxu0 0.0
  %2752 = vmatprep.subr.mxu0 0.0
  %2753 = vmatpush1.msra.mxu0 0.0
  %2754 = vmatprep.subr.mxu0 0.0
  %2755 = vmatpush1.msra.mxu0 0.0
  %2756 = vmatprep.subr.mxu0 0.0
  %2757 = vmatpush1.msra.mxu0 0.0
  %2758 = vmatprep.subr.mxu0 0.0
  %2759 = vmatpush1.msra.mxu0 0.0
  %2760 = vmatprep.subr.mxu0 0.0
  %2761 = vmatpush1.msra.mxu0 0.0
  %2762 = vmatprep.subr.mxu0 0.0
  %2763 = vmatpush1.msra.mxu0 0.0
  %2764 = vmatprep.subr.mxu0 0.0
  %2765 = vmatpush1.msra.mxu0 0.0
  %2766 = vmatprep.subr.mxu0 0.0
  %2767 = vmatpush1.msra.mxu0 0.0
  %2768 = vmatprep.subr.mxu0 0.0
  %2769 = vmatpush1.msra.mxu0 0.0
  %2770 = vmatprep.subr.mxu0 0.0
  %2771 = vmatpush1.msra.mxu0 0.0
  %2772 = vmatprep.subr.mxu0 0.0
  %2773 = vmatpush1.msra.mxu0 0.0
  %2774 = vmatprep.subr.mxu0 0.0
  %2775 = vmatpush1.msra.mxu0 0.0
  %2776 = vmatprep.subr.mxu0 0.0
  %2777 = vmatpush1.msra.mxu0 0.0
  %2778 = vmatprep.subr.mxu0 0.0
  %2779 = vmatpush1.msra.mxu0 0.0
  %2780 = vmatprep.subr.mxu0 0.0
  %2781 = vmatpush1.msra.mxu0 0.0
  %2782 = vmatprep.subr.mxu0 0.0
  %2783 = vmatpush1.msra.mxu0 0.0
  %2784 = vmatprep.subr.mxu0 0.0
  %2785 = vmatpush1.msra.mxu0 0.0
  %2786 = vmatprep.subr.mxu0 0.0
  %2787 = vmatpush1.msra.mxu0 0.0
  %2788 = vmatprep.subr.mxu0 0.0
  %2789 = vmatpush1.msra.mxu0 0.0
  %2790 = vmatprep.subr.mxu0 0.0
  %2791 = vmatpush1.msra.mxu0 0.0
  %2792 = vmatprep.subr.mxu0 0.0
  %2793 = vmatpush1.msra.mxu0 0.0
  %2794 = vmatprep.subr.mxu0 0.0
  %2795 = vmatpush1.msra.mxu0 0.0
  %2796 = vmatprep.mubr.f32.mxu0 0.0
  %2797 = vmatmul.mubr.f32.gmra.mrb[0].mxu0 %v2727
  %v2798 = vpop.f32.mrb[0].mxu0
  %v2799 = vadd.f32 0.0, %v2798
  %v2800 = vpop.f32.mrb[0].mxu0
  %2801 = vmatprep.mubr.f32.mxu0 0.0
  %2802 = vmatmul.mubr.f32.gmra.mrb[0].mxu0 %v2730
  %v2803 = vpop.f32.mrb[0].mxu0
  %v2804 = vadd.f32 0.0, %v2803
  %v2805 = vpop.f32.mrb[0].mxu0
  %2806 = vdwg.mxu0
  %2808 = vset.pattern.permute.xlu0 0
  %2809 = vperm.xlu0 %2808, %v1712
  %v2810 = vpop.permute.xlu0 %2809
  %2813 = vset.pattern.permute.xlu0 0
  %2814 = vperm.xlu0 %2813, %v1713
  %v2815 = vpop.permute.xlu0 %2814
  %v2817 = vmul.f32 %v2799, %v2810
  %v2818 = vmul.f32 %v2804, %v2815
  %v2819 = vadd.f32 %v1702, %v2817
  %v2820 = vadd.f32 %v1703, %v2818
  %2823 = vrot.lane.b32.xlu0 %v2799, 32
  %v2824 = vpop.permute.xlu0 %2823
  %2825 = vrot.lane.b32.xlu0 %v2804, 32
  %v2826 = vpop.permute.xlu0 %2825
  %v2829 = vsel %vm237, %v1702, %v2824
  %v2830 = vsel %vm237, %v1703, %v2826
  %s2831 = scalar_lea.vmem %s43, 64
  %v2832 = vld [vmem:[%s2831] sm:$0xff]
  %v2833 = vld [vmem:[%s2831 + $0x8] sm:$0xff]
  %v2834 = vld [vmem:[%s2831 + $0x10] sm:$0xff]
  %v2835 = vld [vmem:[%s2831 + $0x18] sm:$0xff]
  %v2836 = vld [vmem:[%s2831 + $0x20] sm:$0xff]
  %v2837 = vld [vmem:[%s2831 + $0x28] sm:$0xff]
  %v2838 = vld [vmem:[%s2831 + $0x30] sm:$0xff]
  %v2839 = vld [vmem:[%s2831 + $0x38] sm:$0xff]
  %s2840 = scalar_lea.vmem %s45, 1
  %v2841 = vld [vmem:[%s2840] sm:$0x1]
  %v2843 = vlaneseq
  %v2844 = vshrl.u32 %v2843, 7
  %v2845 = vsub.s32 0, %v2844
  %v2846 = vrot.slane %v2841, %v2845
  %v2849 = vsel %vm821, %v2829, 0
  %v2852 = vsel %vm821, %v2830, 0
  %2854 = vmatprep.subr.mxu0 0.0
  %2855 = vmatpush1.msra.mxu0 %v2832
  %2856 = vmatprep.subr.mxu0 0.0
  %2857 = vmatpush1.msra.mxu0 %v2833
  %2858 = vmatprep.subr.mxu0 0.0
  %2859 = vmatpush1.msra.mxu0 %v2834
  %2860 = vmatprep.subr.mxu0 0.0
  %2861 = vmatpush1.msra.mxu0 %v2835
  %2862 = vmatprep.subr.mxu0 0.0
  %2863 = vmatpush1.msra.mxu0 %v2836
  %2864 = vmatprep.subr.mxu0 0.0
  %2865 = vmatpush1.msra.mxu0 %v2837
  %2866 = vmatprep.subr.mxu0 0.0
  %2867 = vmatpush1.msra.mxu0 %v2838
  %2868 = vmatprep.subr.mxu0 0.0
  %2869 = vmatpush1.msra.mxu0 %v2839
  %2870 = vmatprep.subr.mxu0 0.0
  %2871 = vmatpush1.msra.mxu0 0.0
  %2872 = vmatprep.subr.mxu0 0.0
  %2873 = vmatpush1.msra.mxu0 0.0
  %2874 = vmatprep.subr.mxu0 0.0
  %2875 = vmatpush1.msra.mxu0 0.0
  %2876 = vmatprep.subr.mxu0 0.0
  %2877 = vmatpush1.msra.mxu0 0.0
  %2878 = vmatprep.subr.mxu0 0.0
  %2879 = vmatpush1.msra.mxu0 0.0
  %2880 = vmatprep.subr.mxu0 0.0
  %2881 = vmatpush1.msra.mxu0 0.0
  %2882 = vmatprep.subr.mxu0 0.0
  %2883 = vmatpush1.msra.mxu0 0.0
  %2884 = vmatprep.subr.mxu0 0.0
  %2885 = vmatpush1.msra.mxu0 0.0
  %2886 = vmatprep.subr.mxu0 0.0
  %2887 = vmatpush1.msra.mxu0 0.0
  %2888 = vmatprep.subr.mxu0 0.0
  %2889 = vmatpush1.msra.mxu0 0.0
  %2890 = vmatprep.subr.mxu0 0.0
  %2891 = vmatpush1.msra.mxu0 0.0
  %2892 = vmatprep.subr.mxu0 0.0
  %2893 = vmatpush1.msra.mxu0 0.0
  %2894 = vmatprep.subr.mxu0 0.0
  %2895 = vmatpush1.msra.mxu0 0.0
  %2896 = vmatprep.subr.mxu0 0.0
  %2897 = vmatpush1.msra.mxu0 0.0
  %2898 = vmatprep.subr.mxu0 0.0
  %2899 = vmatpush1.msra.mxu0 0.0
  %2900 = vmatprep.subr.mxu0 0.0
  %2901 = vmatpush1.msra.mxu0 0.0
  %2902 = vmatprep.subr.mxu0 0.0
  %2903 = vmatpush1.msra.mxu0 0.0
  %2904 = vmatprep.subr.mxu0 0.0
  %2905 = vmatpush1.msra.mxu0 0.0
  %2906 = vmatprep.subr.mxu0 0.0
  %2907 = vmatpush1.msra.mxu0 0.0
  %2908 = vmatprep.subr.mxu0 0.0
  %2909 = vmatpush1.msra.mxu0 0.0
  %2910 = vmatprep.subr.mxu0 0.0
  %2911 = vmatpush1.msra.mxu0 0.0
  %2912 = vmatprep.subr.mxu0 0.0
  %2913 = vmatpush1.msra.mxu0 0.0
  %2914 = vmatprep.subr.mxu0 0.0
  %2915 = vmatpush1.msra.mxu0 0.0
  %2916 = vmatprep.subr.mxu0 0.0
  %2917 = vmatpush1.msra.mxu0 0.0
  %2918 = vmatprep.mubr.f32.mxu0 0.0
  %2919 = vmatmul.mubr.f32.gmra.mrb[0].mxu0 %v2849
  %v2920 = vpop.f32.mrb[0].mxu0
  %v2921 = vadd.f32 %v2846, %v2920
  %v2922 = vpop.f32.mrb[0].mxu0
  %2923 = vmatprep.mubr.f32.mxu0 0.0
  %2924 = vmatmul.mubr.f32.gmra.mrb[0].mxu0 %v2852
  %v2925 = vpop.f32.mrb[0].mxu0
  %v2926 = vadd.f32 %v2846, %v2925
  %v2927 = vpop.f32.mrb[0].mxu0
  %2928 = vdwg.mxu0
  %v2929 = vxor.u32 %v2921, 2147483648
  %v2930 = vxor.u32 %v2926, 2147483648
  %v2931 = vmul.f32 %v2929, 1.442695
  %v2932 = vpow.pop %v2931
  %v2933 = vmul.f32 %v2930, 1.442695
  %v2934 = vpow.pop %v2933
  %v2935 = vadd.f32 %v2932, 1.0
  %v2936 = vadd.f32 %v2934, 1.0
  %v2937 = vrcp.pop %v2935
  %v2938 = vmul.f32 1.0, %v2937
  %v2939 = vrcp.pop %v2936
  %v2940 = vmul.f32 1.0, %v2939
  %v2941 = vmul.f32 %v2921, %v2938
  %v2942 = vmul.f32 %v2926, %v2940
  %s2943 = scalar_lea.vmem %s47, 32
  %v2944 = vld [vmem:[%s2943] sm:$0xff]
  %v2945 = vld [vmem:[%s2943 + $0x8] sm:$0xff]
  %v2946 = vld [vmem:[%s2943 + $0x10] sm:$0xff]
  %v2947 = vld [vmem:[%s2943 + $0x18] sm:$0xff]
  %v2949 = vsel %vm237, %v2941, 0
  %v2952 = vsel %vm237, %v2942, 0
  %2954 = vmatprep.subr.mxu0 0.0
  %2955 = vmatpush1.msra.mxu0 %v2944
  %2956 = vmatprep.subr.mxu0 0.0
  %2957 = vmatpush1.msra.mxu0 %v2945
  %2958 = vmatprep.subr.mxu0 0.0
  %2959 = vmatpush1.msra.mxu0 %v2946
  %2960 = vmatprep.subr.mxu0 0.0
  %2961 = vmatpush1.msra.mxu0 %v2947
  %2962 = vmatprep.subr.mxu0 0.0
  %2963 = vmatpush1.msra.mxu0 0.0
  %2964 = vmatprep.subr.mxu0 0.0
  %2965 = vmatpush1.msra.mxu0 0.0
  %2966 = vmatprep.subr.mxu0 0.0
  %2967 = vmatpush1.msra.mxu0 0.0
  %2968 = vmatprep.subr.mxu0 0.0
  %2969 = vmatpush1.msra.mxu0 0.0
  %2970 = vmatprep.subr.mxu0 0.0
  %2971 = vmatpush1.msra.mxu0 0.0
  %2972 = vmatprep.subr.mxu0 0.0
  %2973 = vmatpush1.msra.mxu0 0.0
  %2974 = vmatprep.subr.mxu0 0.0
  %2975 = vmatpush1.msra.mxu0 0.0
  %2976 = vmatprep.subr.mxu0 0.0
  %2977 = vmatpush1.msra.mxu0 0.0
  %2978 = vmatprep.subr.mxu0 0.0
  %2979 = vmatpush1.msra.mxu0 0.0
  %2980 = vmatprep.subr.mxu0 0.0
  %2981 = vmatpush1.msra.mxu0 0.0
  %2982 = vmatprep.subr.mxu0 0.0
  %2983 = vmatpush1.msra.mxu0 0.0
  %2984 = vmatprep.subr.mxu0 0.0
  %2985 = vmatpush1.msra.mxu0 0.0
  %2986 = vmatprep.subr.mxu0 0.0
  %2987 = vmatpush1.msra.mxu0 0.0
  %2988 = vmatprep.subr.mxu0 0.0
  %2989 = vmatpush1.msra.mxu0 0.0
  %2990 = vmatprep.subr.mxu0 0.0
  %2991 = vmatpush1.msra.mxu0 0.0
  %2992 = vmatprep.subr.mxu0 0.0
  %2993 = vmatpush1.msra.mxu0 0.0
  %2994 = vmatprep.subr.mxu0 0.0
  %2995 = vmatpush1.msra.mxu0 0.0
  %2996 = vmatprep.subr.mxu0 0.0
  %2997 = vmatpush1.msra.mxu0 0.0
  %2998 = vmatprep.subr.mxu0 0.0
  %2999 = vmatpush1.msra.mxu0 0.0
  %3000 = vmatprep.subr.mxu0 0.0
  %3001 = vmatpush1.msra.mxu0 0.0
  %3002 = vmatprep.subr.mxu0 0.0
  %3003 = vmatpush1.msra.mxu0 0.0
  %3004 = vmatprep.subr.mxu0 0.0
  %3005 = vmatpush1.msra.mxu0 0.0
  %3006 = vmatprep.subr.mxu0 0.0
  %3007 = vmatpush1.msra.mxu0 0.0
  %3008 = vmatprep.subr.mxu0 0.0
  %3009 = vmatpush1.msra.mxu0 0.0
  %3010 = vmatprep.subr.mxu0 0.0
  %3011 = vmatpush1.msra.mxu0 0.0
  %3012 = vmatprep.subr.mxu0 0.0
  %3013 = vmatpush1.msra.mxu0 0.0
  %3014 = vmatprep.subr.mxu0 0.0
  %3015 = vmatpush1.msra.mxu0 0.0
  %3016 = vmatprep.subr.mxu0 0.0
  %3017 = vmatpush1.msra.mxu0 0.0
  %3018 = vmatprep.mubr.f32.mxu0 0.0
  %3019 = vmatmul.mubr.f32.gmra.mrb[0].mxu0 %v2949
  %v3020 = vpop.f32.mrb[0].mxu0
  %v3021 = vadd.f32 0.0, %v3020
  %v3022 = vpop.f32.mrb[0].mxu0
  %3023 = vmatprep.mubr.f32.mxu0 0.0
  %3024 = vmatmul.mubr.f32.gmra.mrb[0].mxu0 %v2952
  %v3025 = vpop.f32.mrb[0].mxu0
  %v3026 = vadd.f32 0.0, %v3025
  %v3027 = vpop.f32.mrb[0].mxu0
  %3028 = vdwg.mxu0
  %v3029 = vadd.f32 %v1702, %v3021
  %v3030 = vadd.f32 %v1703, %v3026
  %s3031 = scalar_lea.vmem %s49, 1
  %v3032 = vld [vmem:[%s3031] sm:$0x1]
  %v3034 = vlaneseq
  %v3035 = vshrl.u32 %v3034, 7
  %v3036 = vsub.s32 0, %v3035
  %v3037 = vrot.slane %v3032, %v3036
  %v3039 = vadd.f32 %v3029, %v3037
  %v3040 = vadd.f32 %v3030, %v3037
  %v3041 = vsel %vm237, %v3039, %v2819
  %v3042 = vsel %vm237, %v3040, %v2820
  %s3043 = scalar_lea.vmem %s51, 32
  %v3044 = vld [vmem:[%s3043] sm:$0xff]
  %v3045 = vld [vmem:[%s3043 + $0x8] sm:$0xff]
  %v3046 = vld [vmem:[%s3043 + $0x10] sm:$0xff]
  %v3047 = vld [vmem:[%s3043 + $0x18] sm:$0xff]
  %3048 = vmatprep.subr.mxu0 0.0
  %3049 = vmatpush1.msra.mxu0 %v3041
  %3050 = vmatprep.subr.mxu0 0.0
  %3051 = vmatpush1.msra.mxu0 %v3042
  %3052 = vmatprep.subr.mxu0 0.0
  %3053 = vmatpush1.msra.mxu0 0.0
  %3054 = vmatprep.subr.mxu0 0.0
  %3055 = vmatpush1.msra.mxu0 0.0
  %3056 = vmatprep.subr.mxu0 0.0
  %3057 = vmatpush1.msra.mxu0 0.0
  %3058 = vmatprep.subr.mxu0 0.0
  %3059 = vmatpush1.msra.mxu0 0.0
  %3060 = vmatprep.subr.mxu0 0.0
  %3061 = vmatpush1.msra.mxu0 0.0
  %3062 = vmatprep.subr.mxu0 0.0
  %3063 = vmatpush1.msra.mxu0 0.0
  %3064 = vmatprep.subr.mxu0 0.0
  %3065 = vmatpush1.msra.mxu0 0.0
  %3066 = vmatprep.subr.mxu0 0.0
  %3067 = vmatpush1.msra.mxu0 0.0
  %3068 = vmatprep.subr.mxu0 0.0
  %3069 = vmatpush1.msra.mxu0 0.0
  %3070 = vmatprep.subr.mxu0 0.0
  %3071 = vmatpush1.msra.mxu0 0.0
  %3072 = vmatprep.subr.mxu0 0.0
  %3073 = vmatpush1.msra.mxu0 0.0
  %3074 = vmatprep.subr.mxu0 0.0
  %3075 = vmatpush1.msra.mxu0 0.0
  %3076 = vmatprep.subr.mxu0 0.0
  %3077 = vmatpush1.msra.mxu0 0.0
  %3078 = vmatprep.subr.mxu0 0.0
  %3079 = vmatpush1.msra.mxu0 0.0
  %3080 = vmatprep.subr.mxu0 0.0
  %3081 = vmatpush1.msra.mxu0 0.0
  %3082 = vmatprep.subr.mxu0 0.0
  %3083 = vmatpush1.msra.mxu0 0.0
  %3084 = vmatprep.subr.mxu0 0.0
  %3085 = vmatpush1.msra.mxu0 0.0
  %3086 = vmatprep.subr.mxu0 0.0
  %3087 = vmatpush1.msra.mxu0 0.0
  %3088 = vmatprep.subr.mxu0 0.0
  %3089 = vmatpush1.msra.mxu0 0.0
  %3090 = vmatprep.subr.mxu0 0.0
  %3091 = vmatpush1.msra.mxu0 0.0
  %3092 = vmatprep.subr.mxu0 0.0
  %3093 = vmatpush1.msra.mxu0 0.0
  %3094 = vmatprep.subr.mxu0 0.0
  %3095 = vmatpush1.msra.mxu0 0.0
  %3096 = vmatprep.subr.mxu0 0.0
  %3097 = vmatpush1.msra.mxu0 0.0
  %3098 = vmatprep.subr.mxu0 0.0
  %3099 = vmatpush1.msra.mxu0 0.0
  %3100 = vmatprep.subr.mxu0 0.0
  %3101 = vmatpush1.msra.mxu0 0.0
  %3102 = vmatprep.subr.mxu0 0.0
  %3103 = vmatpush1.msra.mxu0 0.0
  %3104 = vmatprep.subr.mxu0 0.0
  %3105 = vmatpush1.msra.mxu0 0.0
  %3106 = vmatprep.subr.mxu0 0.0
  %3107 = vmatpush1.msra.mxu0 0.0
  %3108 = vmatprep.subr.mxu0 0.0
  %3109 = vmatpush1.msra.mxu0 0.0
  %3110 = vmatprep.subr.mxu0 0.0
  %3111 = vmatpush1.msra.mxu0 0.0
  %3112 = vmatprep.mubr.f32.mxu0 0.0
  %3113 = vmatmul.mubr.f32.gmra.mrb[0].mxu0 %v258
  %v3114 = vpop.f32.mrb[0].mxu0
  %v3115 = vadd.f32 0.0, %v3114
  %v3116 = vpop.f32.mrb[0].mxu0
  %3117 = vmatprep.mubr.f32.mxu0 0.0
  %3118 = vmatmul.mubr.f32.gmra.mrb[0].mxu0 %v261
  %v3119 = vpop.f32.mrb[0].mxu0
  %v3120 = vadd.f32 0.0, %v3119
  %v3121 = vpop.f32.mrb[0].mxu0
  %3122 = vmatprep.mubr.f32.mxu0 0.0
  %3123 = vmatmul.mubr.f32.gmra.mrb[0].mxu0 %v264
  %v3124 = vpop.f32.mrb[0].mxu0
  %v3125 = vadd.f32 0.0, %v3124
  %v3126 = vpop.f32.mrb[0].mxu0
  %3127 = vmatprep.mubr.f32.mxu0 0.0
  %3128 = vmatmul.mubr.f32.gmra.mrb[0].mxu0 %v267
  %v3129 = vpop.f32.mrb[0].mxu0
  %v3130 = vadd.f32 0.0, %v3129
  %v3131 = vpop.f32.mrb[0].mxu0
  %3132 = vdwg.mxu0
  %3133 = vmatprep.subr.mxu0 0.0
  %3134 = vmatpush1.msra.mxu0 %v3041
  %3135 = vmatprep.subr.mxu0 0.0
  %3136 = vmatpush1.msra.mxu0 %v3042
  %3137 = vmatprep.subr.mxu0 0.0
  %3138 = vmatpush1.msra.mxu0 0.0
  %3139 = vmatprep.subr.mxu0 0.0
  %3140 = vmatpush1.msra.mxu0 0.0
  %3141 = vmatprep.subr.mxu0 0.0
  %3142 = vmatpush1.msra.mxu0 0.0
  %3143 = vmatprep.subr.mxu0 0.0
  %3144 = vmatpush1.msra.mxu0 0.0
  %3145 = vmatprep.subr.mxu0 0.0
  %3146 = vmatpush1.msra.mxu0 0.0
  %3147 = vmatprep.subr.mxu0 0.0
  %3148 = vmatpush1.msra.mxu0 0.0
  %3149 = vmatprep.subr.mxu0 0.0
  %3150 = vmatpush1.msra.mxu0 0.0
  %3151 = vmatprep.subr.mxu0 0.0
  %3152 = vmatpush1.msra.mxu0 0.0
  %3153 = vmatprep.subr.mxu0 0.0
  %3154 = vmatpush1.msra.mxu0 0.0
  %3155 = vmatprep.subr.mxu0 0.0
  %3156 = vmatpush1.msra.mxu0 0.0
  %3157 = vmatprep.subr.mxu0 0.0
  %3158 = vmatpush1.msra.mxu0 0.0
  %3159 = vmatprep.subr.mxu0 0.0
  %3160 = vmatpush1.msra.mxu0 0.0
  %3161 = vmatprep.subr.mxu0 0.0
  %3162 = vmatpush1.msra.mxu0 0.0
  %3163 = vmatprep.subr.mxu0 0.0
  %3164 = vmatpush1.msra.mxu0 0.0
  %3165 = vmatprep.subr.mxu0 0.0
  %3166 = vmatpush1.msra.mxu0 0.0
  %3167 = vmatprep.subr.mxu0 0.0
  %3168 = vmatpush1.msra.mxu0 0.0
  %3169 = vmatprep.subr.mxu0 0.0
  %3170 = vmatpush1.msra.mxu0 0.0
  %3171 = vmatprep.subr.mxu0 0.0
  %3172 = vmatpush1.msra.mxu0 0.0
  %3173 = vmatprep.subr.mxu0 0.0
  %3174 = vmatpush1.msra.mxu0 0.0
  %3175 = vmatprep.subr.mxu0 0.0
  %3176 = vmatpush1.msra.mxu0 0.0
  %3177 = vmatprep.subr.mxu0 0.0
  %3178 = vmatpush1.msra.mxu0 0.0
  %3179 = vmatprep.subr.mxu0 0.0
  %3180 = vmatpush1.msra.mxu0 0.0
  %3181 = vmatprep.subr.mxu0 0.0
  %3182 = vmatpush1.msra.mxu0 0.0
  %3183 = vmatprep.subr.mxu0 0.0
  %3184 = vmatpush1.msra.mxu0 0.0
  %3185 = vmatprep.subr.mxu0 0.0
  %3186 = vmatpush1.msra.mxu0 0.0
  %3187 = vmatprep.subr.mxu0 0.0
  %3188 = vmatpush1.msra.mxu0 0.0
  %3189 = vmatprep.subr.mxu0 0.0
  %3190 = vmatpush1.msra.mxu0 0.0
  %3191 = vmatprep.subr.mxu0 0.0
  %3192 = vmatpush1.msra.mxu0 0.0
  %3193 = vmatprep.subr.mxu0 0.0
  %3194 = vmatpush1.msra.mxu0 0.0
  %3195 = vmatprep.subr.mxu0 0.0
  %3196 = vmatpush1.msra.mxu0 0.0
  %3197 = vmatprep.mubr.f32.mxu0 0.0
  %3198 = vmatmul.mubr.f32.gmra.mrb[0].mxu0 %v355
  %v3199 = vpop.f32.mrb[0].mxu0
  %v3200 = vadd.f32 0.0, %v3199
  %v3201 = vpop.f32.mrb[0].mxu0
  %3202 = vmatprep.mubr.f32.mxu0 0.0
  %3203 = vmatmul.mubr.f32.gmra.mrb[0].mxu0 %v358
  %v3204 = vpop.f32.mrb[0].mxu0
  %v3205 = vadd.f32 0.0, %v3204
  %v3206 = vpop.f32.mrb[0].mxu0
  %3207 = vmatprep.mubr.f32.mxu0 0.0
  %3208 = vmatmul.mubr.f32.gmra.mrb[0].mxu0 %v361
  %v3209 = vpop.f32.mrb[0].mxu0
  %v3210 = vadd.f32 0.0, %v3209
  %v3211 = vpop.f32.mrb[0].mxu0
  %3212 = vmatprep.mubr.f32.mxu0 0.0
  %3213 = vmatmul.mubr.f32.gmra.mrb[0].mxu0 %v364
  %v3214 = vpop.f32.mrb[0].mxu0
  %v3215 = vadd.f32 0.0, %v3214
  %v3216 = vpop.f32.mrb[0].mxu0
  %3217 = vdwg.mxu0
  %v3218 = vsub.f32 %v3115, %v3200
  %v3219 = vsub.f32 %v3120, %v3205
  %v3220 = vsub.f32 %v3125, %v3210
  %v3221 = vsub.f32 %v3130, %v3215
  %3226 = vrot.lane.b32.xlu0 %v3218, 96
  %v3227 = vpop.permute.xlu0 %3226
  %3228 = vrot.lane.b32.xlu0 %v3219, 96
  %v3229 = vpop.permute.xlu0 %3228
  %3230 = vrot.lane.b32.xlu0 %v3220, 96
  %v3231 = vpop.permute.xlu0 %3230
  %3232 = vrot.lane.b32.xlu0 %v3221, 96
  %v3233 = vpop.permute.xlu0 %3232
  %v3234 = vsel %vm467, %v3227, 0
  %v3236 = vsel %vm467, %v3229, 0
  %v3238 = vsel %vm467, %v3231, 0
  %v3240 = vsel %vm467, %v3233, 0
  %3242 = vmatprep.subr.mxu0 0.0
  %3243 = vmatpush1.msra.mxu0 %v219
  %3244 = vmatprep.subr.mxu0 0.0
  %3245 = vmatpush1.msra.mxu0 %v478
  %3246 = vmatprep.subr.mxu0 0.0
  %3247 = vmatpush1.msra.mxu0 0.0
  %3248 = vmatprep.subr.mxu0 0.0
  %3249 = vmatpush1.msra.mxu0 0.0
  %3250 = vmatprep.subr.mxu0 0.0
  %3251 = vmatpush1.msra.mxu0 0.0
  %3252 = vmatprep.subr.mxu0 0.0
  %3253 = vmatpush1.msra.mxu0 0.0
  %3254 = vmatprep.subr.mxu0 0.0
  %3255 = vmatpush1.msra.mxu0 0.0
  %3256 = vmatprep.subr.mxu0 0.0
  %3257 = vmatpush1.msra.mxu0 0.0
  %3258 = vmatprep.subr.mxu0 0.0
  %3259 = vmatpush1.msra.mxu0 0.0
  %3260 = vmatprep.subr.mxu0 0.0
  %3261 = vmatpush1.msra.mxu0 0.0
  %3262 = vmatprep.subr.mxu0 0.0
  %3263 = vmatpush1.msra.mxu0 0.0
  %3264 = vmatprep.subr.mxu0 0.0
  %3265 = vmatpush1.msra.mxu0 0.0
  %3266 = vmatprep.subr.mxu0 0.0
  %3267 = vmatpush1.msra.mxu0 0.0
  %3268 = vmatprep.subr.mxu0 0.0
  %3269 = vmatpush1.msra.mxu0 0.0
  %3270 = vmatprep.subr.mxu0 0.0
  %3271 = vmatpush1.msra.mxu0 0.0
  %3272 = vmatprep.subr.mxu0 0.0
  %3273 = vmatpush1.msra.mxu0 0.0
  %3274 = vmatprep.subr.mxu0 0.0
  %3275 = vmatpush1.msra.mxu0 0.0
  %3276 = vmatprep.subr.mxu0 0.0
  %3277 = vmatpush1.msra.mxu0 0.0
  %3278 = vmatprep.subr.mxu0 0.0
  %3279 = vmatpush1.msra.mxu0 0.0
  %3280 = vmatprep.subr.mxu0 0.0
  %3281 = vmatpush1.msra.mxu0 0.0
  %3282 = vmatprep.subr.mxu0 0.0
  %3283 = vmatpush1.msra.mxu0 0.0
  %3284 = vmatprep.subr.mxu0 0.0
  %3285 = vmatpush1.msra.mxu0 0.0
  %3286 = vmatprep.subr.mxu0 0.0
  %3287 = vmatpush1.msra.mxu0 0.0
  %3288 = vmatprep.subr.mxu0 0.0
  %3289 = vmatpush1.msra.mxu0 0.0
  %3290 = vmatprep.subr.mxu0 0.0
  %3291 = vmatpush1.msra.mxu0 0.0
  %3292 = vmatprep.subr.mxu0 0.0
  %3293 = vmatpush1.msra.mxu0 0.0
  %3294 = vmatprep.subr.mxu0 0.0
  %3295 = vmatpush1.msra.mxu0 0.0
  %3296 = vmatprep.subr.mxu0 0.0
  %3297 = vmatpush1.msra.mxu0 0.0
  %3298 = vmatprep.subr.mxu0 0.0
  %3299 = vmatpush1.msra.mxu0 0.0
  %3300 = vmatprep.subr.mxu0 0.0
  %3301 = vmatpush1.msra.mxu0 0.0
  %3302 = vmatprep.subr.mxu0 0.0
  %3303 = vmatpush1.msra.mxu0 0.0
  %3304 = vmatprep.subr.mxu0 0.0
  %3305 = vmatpush1.msra.mxu0 0.0
  %3306 = vmatprep.mubr.f32.mxu0 0.0
  %3307 = vmatmul.mubr.f32.gmra.mrb[0].mxu0 %v3234
  %v3308 = vpop.f32.mrb[0].mxu0
  %v3309 = vadd.f32 0.0, %v3308
  %v3310 = vpop.f32.mrb[0].mxu0
  %3311 = vmatprep.mubr.f32.mxu0 0.0
  %3312 = vmatmul.mubr.f32.gmra.mrb[0].mxu0 %v3236
  %v3313 = vpop.f32.mrb[0].mxu0
  %v3314 = vadd.f32 0.0, %v3313
  %v3315 = vpop.f32.mrb[0].mxu0
  %3316 = vmatprep.mubr.f32.mxu0 0.0
  %3317 = vmatmul.mubr.f32.gmra.mrb[0].mxu0 %v3238
  %v3318 = vpop.f32.mrb[0].mxu0
  %v3319 = vadd.f32 0.0, %v3318
  %v3320 = vpop.f32.mrb[0].mxu0
  %3321 = vmatprep.mubr.f32.mxu0 0.0
  %3322 = vmatmul.mubr.f32.gmra.mrb[0].mxu0 %v3240
  %v3323 = vpop.f32.mrb[0].mxu0
  %v3324 = vadd.f32 0.0, %v3323
  %v3325 = vpop.f32.mrb[0].mxu0
  %3326 = vdwg.mxu0
  %3327 = vmatprep.subr.mxu0 0.0
  %3328 = vmatpush1.msra.mxu0 %v221
  %3329 = vmatprep.subr.mxu0 0.0
  %3330 = vmatpush1.msra.mxu0 %v566
  %3331 = vmatprep.subr.mxu0 0.0
  %3332 = vmatpush1.msra.mxu0 0.0
  %3333 = vmatprep.subr.mxu0 0.0
  %3334 = vmatpush1.msra.mxu0 0.0
  %3335 = vmatprep.subr.mxu0 0.0
  %3336 = vmatpush1.msra.mxu0 0.0
  %3337 = vmatprep.subr.mxu0 0.0
  %3338 = vmatpush1.msra.mxu0 0.0
  %3339 = vmatprep.subr.mxu0 0.0
  %3340 = vmatpush1.msra.mxu0 0.0
  %3341 = vmatprep.subr.mxu0 0.0
  %3342 = vmatpush1.msra.mxu0 0.0
  %3343 = vmatprep.subr.mxu0 0.0
  %3344 = vmatpush1.msra.mxu0 0.0
  %3345 = vmatprep.subr.mxu0 0.0
  %3346 = vmatpush1.msra.mxu0 0.0
  %3347 = vmatprep.subr.mxu0 0.0
  %3348 = vmatpush1.msra.mxu0 0.0
  %3349 = vmatprep.subr.mxu0 0.0
  %3350 = vmatpush1.msra.mxu0 0.0
  %3351 = vmatprep.subr.mxu0 0.0
  %3352 = vmatpush1.msra.mxu0 0.0
  %3353 = vmatprep.subr.mxu0 0.0
  %3354 = vmatpush1.msra.mxu0 0.0
  %3355 = vmatprep.subr.mxu0 0.0
  %3356 = vmatpush1.msra.mxu0 0.0
  %3357 = vmatprep.subr.mxu0 0.0
  %3358 = vmatpush1.msra.mxu0 0.0
  %3359 = vmatprep.subr.mxu0 0.0
  %3360 = vmatpush1.msra.mxu0 0.0
  %3361 = vmatprep.subr.mxu0 0.0
  %3362 = vmatpush1.msra.mxu0 0.0
  %3363 = vmatprep.subr.mxu0 0.0
  %3364 = vmatpush1.msra.mxu0 0.0
  %3365 = vmatprep.subr.mxu0 0.0
  %3366 = vmatpush1.msra.mxu0 0.0
  %3367 = vmatprep.subr.mxu0 0.0
  %3368 = vmatpush1.msra.mxu0 0.0
  %3369 = vmatprep.subr.mxu0 0.0
  %3370 = vmatpush1.msra.mxu0 0.0
  %3371 = vmatprep.subr.mxu0 0.0
  %3372 = vmatpush1.msra.mxu0 0.0
  %3373 = vmatprep.subr.mxu0 0.0
  %3374 = vmatpush1.msra.mxu0 0.0
  %3375 = vmatprep.subr.mxu0 0.0
  %3376 = vmatpush1.msra.mxu0 0.0
  %3377 = vmatprep.subr.mxu0 0.0
  %3378 = vmatpush1.msra.mxu0 0.0
  %3379 = vmatprep.subr.mxu0 0.0
  %3380 = vmatpush1.msra.mxu0 0.0
  %3381 = vmatprep.subr.mxu0 0.0
  %3382 = vmatpush1.msra.mxu0 0.0
  %3383 = vmatprep.subr.mxu0 0.0
  %3384 = vmatpush1.msra.mxu0 0.0
  %3385 = vmatprep.subr.mxu0 0.0
  %3386 = vmatpush1.msra.mxu0 0.0
  %3387 = vmatprep.subr.mxu0 0.0
  %3388 = vmatpush1.msra.mxu0 0.0
  %3389 = vmatprep.subr.mxu0 0.0
  %3390 = vmatpush1.msra.mxu0 0.0
  %3391 = vmatprep.mubr.f32.mxu0 0.0
  %3392 = vmatmul.mubr.f32.gmra.mrb[0].mxu0 %v3234
  %v3393 = vpop.f32.mrb[0].mxu0
  %v3394 = vadd.f32 0.0, %v3393
  %v3395 = vpop.f32.mrb[0].mxu0
  %3396 = vmatprep.mubr.f32.mxu0 0.0
  %3397 = vmatmul.mubr.f32.gmra.mrb[0].mxu0 %v3236
  %v3398 = vpop.f32.mrb[0].mxu0
  %v3399 = vadd.f32 0.0, %v3398
  %v3400 = vpop.f32.mrb[0].mxu0
  %3401 = vmatprep.mubr.f32.mxu0 0.0
  %3402 = vmatmul.mubr.f32.gmra.mrb[0].mxu0 %v3238
  %v3403 = vpop.f32.mrb[0].mxu0
  %v3404 = vadd.f32 0.0, %v3403
  %v3405 = vpop.f32.mrb[0].mxu0
  %3406 = vmatprep.mubr.f32.mxu0 0.0
  %3407 = vmatmul.mubr.f32.gmra.mrb[0].mxu0 %v3240
  %v3408 = vpop.f32.mrb[0].mxu0
  %v3409 = vadd.f32 0.0, %v3408
  %v3410 = vpop.f32.mrb[0].mxu0
  %3411 = vdwg.mxu0
  %v3412 = vmul.f32 %v3309, %v3394
  %v3413 = vmul.f32 %v3314, %v3399
  %v3414 = vmul.f32 %v3319, %v3404
  %v3415 = vmul.f32 %v3324, %v3409
  %v3417 = vsel %vm657, %v3412, 0
  %v3420 = vsel %vm657, %v3413, 0
  %v3423 = vsel %vm657, %v3414, 0
  %v3426 = vsel %vm657, %v3415, 0
  %3428 = vmatprep.subr.mxu0 0.0
  %3429 = vmatpush1.msra.mxu0 %v223
  %3430 = vmatprep.subr.mxu0 0.0
  %3431 = vmatpush1.msra.mxu0 %v224
  %3432 = vmatprep.subr.mxu0 0.0
  %3433 = vmatpush1.msra.mxu0 %v225
  %3434 = vmatprep.subr.mxu0 0.0
  %3435 = vmatpush1.msra.mxu0 %v226
  %3436 = vmatprep.subr.mxu0 0.0
  %3437 = vmatpush1.msra.mxu0 %v227
  %3438 = vmatprep.subr.mxu0 0.0
  %3439 = vmatpush1.msra.mxu0 %v228
  %3440 = vmatprep.subr.mxu0 0.0
  %3441 = vmatpush1.msra.mxu0 0.0
  %3442 = vmatprep.subr.mxu0 0.0
  %3443 = vmatpush1.msra.mxu0 0.0
  %3444 = vmatprep.subr.mxu0 0.0
  %3445 = vmatpush1.msra.mxu0 0.0
  %3446 = vmatprep.subr.mxu0 0.0
  %3447 = vmatpush1.msra.mxu0 0.0
  %3448 = vmatprep.subr.mxu0 0.0
  %3449 = vmatpush1.msra.mxu0 0.0
  %3450 = vmatprep.subr.mxu0 0.0
  %3451 = vmatpush1.msra.mxu0 0.0
  %3452 = vmatprep.subr.mxu0 0.0
  %3453 = vmatpush1.msra.mxu0 0.0
  %3454 = vmatprep.subr.mxu0 0.0
  %3455 = vmatpush1.msra.mxu0 0.0
  %3456 = vmatprep.subr.mxu0 0.0
  %3457 = vmatpush1.msra.mxu0 0.0
  %3458 = vmatprep.subr.mxu0 0.0
  %3459 = vmatpush1.msra.mxu0 0.0
  %3460 = vmatprep.subr.mxu0 0.0
  %3461 = vmatpush1.msra.mxu0 0.0
  %3462 = vmatprep.subr.mxu0 0.0
  %3463 = vmatpush1.msra.mxu0 0.0
  %3464 = vmatprep.subr.mxu0 0.0
  %3465 = vmatpush1.msra.mxu0 0.0
  %3466 = vmatprep.subr.mxu0 0.0
  %3467 = vmatpush1.msra.mxu0 0.0
  %3468 = vmatprep.subr.mxu0 0.0
  %3469 = vmatpush1.msra.mxu0 0.0
  %3470 = vmatprep.subr.mxu0 0.0
  %3471 = vmatpush1.msra.mxu0 0.0
  %3472 = vmatprep.subr.mxu0 0.0
  %3473 = vmatpush1.msra.mxu0 0.0
  %3474 = vmatprep.subr.mxu0 0.0
  %3475 = vmatpush1.msra.mxu0 0.0
  %3476 = vmatprep.subr.mxu0 0.0
  %3477 = vmatpush1.msra.mxu0 0.0
  %3478 = vmatprep.subr.mxu0 0.0
  %3479 = vmatpush1.msra.mxu0 0.0
  %3480 = vmatprep.subr.mxu0 0.0
  %3481 = vmatpush1.msra.mxu0 0.0
  %3482 = vmatprep.subr.mxu0 0.0
  %3483 = vmatpush1.msra.mxu0 0.0
  %3484 = vmatprep.subr.mxu0 0.0
  %3485 = vmatpush1.msra.mxu0 0.0
  %3486 = vmatprep.subr.mxu0 0.0
  %3487 = vmatpush1.msra.mxu0 0.0
  %3488 = vmatprep.subr.mxu0 0.0
  %3489 = vmatpush1.msra.mxu0 0.0
  %3490 = vmatprep.subr.mxu0 0.0
  %3491 = vmatpush1.msra.mxu0 0.0
  %3492 = vmatprep.mubr.f32.mxu0 0.0
  %3493 = vmatmul.mubr.f32.gmra.mrb[0].mxu0 %v3417
  %v3494 = vpop.f32.mrb[0].mxu0
  %v3495 = vadd.f32 0.0, %v3494
  %v3496 = vpop.f32.mrb[0].mxu0
  %3497 = vmatprep.mubr.f32.mxu0 0.0
  %3498 = vmatmul.mubr.f32.gmra.mrb[0].mxu0 %v3420
  %v3499 = vpop.f32.mrb[0].mxu0
  %v3500 = vadd.f32 0.0, %v3499
  %v3501 = vpop.f32.mrb[0].mxu0
  %3502 = vmatprep.mubr.f32.mxu0 0.0
  %3503 = vmatmul.mubr.f32.gmra.mrb[0].mxu0 %v3423
  %v3504 = vpop.f32.mrb[0].mxu0
  %v3505 = vadd.f32 0.0, %v3504
  %v3506 = vpop.f32.mrb[0].mxu0
  %3507 = vmatprep.mubr.f32.mxu0 0.0
  %3508 = vmatmul.mubr.f32.gmra.mrb[0].mxu0 %v3426
  %v3509 = vpop.f32.mrb[0].mxu0
  %v3510 = vadd.f32 0.0, %v3509
  %v3511 = vpop.f32.mrb[0].mxu0
  %3512 = vdwg.mxu0
  %v3513 = vmul.f32 %v3495, %v3495
  %v3514 = vmul.f32 %v3500, %v3500
  %v3515 = vmul.f32 %v3505, %v3505
  %v3516 = vmul.f32 %v3510, %v3510
  %v3517 = vsel %vm256, %v3513, 0.0
  %v3518 = vsel %vm256, %v3514, 0.0
  %v3519 = vadd.f32 %v3517, %v3518
  %v3520 = vsel %vm256, %v3515, 0.0
  %v3521 = vadd.f32 %v3519, %v3520
  %v3522 = vsel %vm256, %v3516, 0.0
  %v3523 = vadd.f32 %v3521, %v3522
  %v3524 = vrot.slane %v3523, 4
  %v3525 = vadd.f32 %v3523, %v3524
  %v3526 = vrot.slane %v3525, 2
  %v3527 = vadd.f32 %v3525, %v3526
  %v3528 = vrot.slane %v3527, 1
  %v3529 = vadd.f32 %v3527, %v3528
  %v3530 = vrsqrt.pop %v3529
  %v3531 = vmul.f32 %v3529, %v3530
  %vm3532 = vcmp.eq.f32.partialorder %v3529, inf
  %v3533 = vsel %vm3532, %v3529, %v3531
  %vm3534 = vcmp.eq.f32.partialorder %v3529, 0.0
  %v3535 = vand.u32 %v3529, 2147483648
  %v3536 = vsel %vm3534, %v3535, %v3533
  %v3537 = vmax.f32 %v3536, 1e-12
  %v3538 = vrcp.pop %v3537
  %v3539 = vmul.f32 %v3495, %v3538
  %v3540 = vmul.f32 %v3500, %v3538
  %v3541 = vmul.f32 %v3505, %v3538
  %v3542 = vmul.f32 %v3510, %v3538
  %3547 = vrot.lane.b32.xlu0 %v3200, 32
  %v3548 = vpop.permute.xlu0 %3547
  %3549 = vrot.lane.b32.xlu0 %v3205, 32
  %v3550 = vpop.permute.xlu0 %3549
  %3551 = vrot.lane.b32.xlu0 %v3210, 32
  %v3552 = vpop.permute.xlu0 %3551
  %3553 = vrot.lane.b32.xlu0 %v3215, 32
  %v3554 = vpop.permute.xlu0 %3553
  %3563 = vrot.lane.b32.xlu0 %v3539, 64
  %v3564 = vpop.permute.xlu0 %3563
  %3565 = vrot.lane.b32.xlu0 %v3540, 64
  %v3566 = vpop.permute.xlu0 %3565
  %3567 = vrot.lane.b32.xlu0 %v3541, 64
  %v3568 = vpop.permute.xlu0 %3567
  %3569 = vrot.lane.b32.xlu0 %v3542, 64
  %v3570 = vpop.permute.xlu0 %3569
  %v3575 = vsel %vm237, %v3115, %v3548
  %v3576 = vsel %vm237, %v3120, %v3550
  %v3577 = vsel %vm237, %v3125, %v3552
  %v3578 = vsel %vm237, %v3130, %v3554
  %v3579 = vsel %vm821, %v3575, %v3564
  %v3580 = vsel %vm821, %v3576, %v3566
  %v3581 = vsel %vm821, %v3577, %v3568
  %v3582 = vsel %vm821, %v3578, %v3570
  %s3583 = scalar_lea.vmem %s31, 160
  %v3584 = vld [vmem:[%s3583] sm:$0xff]
  %v3585 = vld [vmem:[%s3583 + $0x8] sm:$0xff]
  %v3586 = vld [vmem:[%s3583 + $0x10] sm:$0xff]
  %v3587 = vld [vmem:[%s3583 + $0x18] sm:$0xff]
  %v3588 = vld [vmem:[%s3583 + $0x20] sm:$0xff]
  %v3589 = vld [vmem:[%s3583 + $0x28] sm:$0xff]
  %v3590 = vld [vmem:[%s3583 + $0x30] sm:$0xff]
  %v3591 = vld [vmem:[%s3583 + $0x38] sm:$0xff]
  %v3592 = vld [vmem:[%s3583 + $0x40] sm:$0xff]
  %v3593 = vld [vmem:[%s3583 + $0x48] sm:$0xff]
  %v3595 = vsel %vm836, %v3579, 0
  %v3598 = vsel %vm836, %v3580, 0
  %v3601 = vsel %vm836, %v3581, 0
  %v3604 = vsel %vm836, %v3582, 0
  %3606 = vmatprep.subr.mxu0 0.0
  %3607 = vmatpush1.msra.mxu0 %v3584
  %3608 = vmatprep.subr.mxu0 0.0
  %3609 = vmatpush1.msra.mxu0 %v3585
  %3610 = vmatprep.subr.mxu0 0.0
  %3611 = vmatpush1.msra.mxu0 %v3586
  %3612 = vmatprep.subr.mxu0 0.0
  %3613 = vmatpush1.msra.mxu0 %v3587
  %3614 = vmatprep.subr.mxu0 0.0
  %3615 = vmatpush1.msra.mxu0 %v3588
  %3616 = vmatprep.subr.mxu0 0.0
  %3617 = vmatpush1.msra.mxu0 %v3589
  %3618 = vmatprep.subr.mxu0 0.0
  %3619 = vmatpush1.msra.mxu0 %v3590
  %3620 = vmatprep.subr.mxu0 0.0
  %3621 = vmatpush1.msra.mxu0 %v3591
  %3622 = vmatprep.subr.mxu0 0.0
  %3623 = vmatpush1.msra.mxu0 %v3592
  %3624 = vmatprep.subr.mxu0 0.0
  %3625 = vmatpush1.msra.mxu0 %v3593
  %3626 = vmatprep.subr.mxu0 0.0
  %3627 = vmatpush1.msra.mxu0 0.0
  %3628 = vmatprep.subr.mxu0 0.0
  %3629 = vmatpush1.msra.mxu0 0.0
  %3630 = vmatprep.subr.mxu0 0.0
  %3631 = vmatpush1.msra.mxu0 0.0
  %3632 = vmatprep.subr.mxu0 0.0
  %3633 = vmatpush1.msra.mxu0 0.0
  %3634 = vmatprep.subr.mxu0 0.0
  %3635 = vmatpush1.msra.mxu0 0.0
  %3636 = vmatprep.subr.mxu0 0.0
  %3637 = vmatpush1.msra.mxu0 0.0
  %3638 = vmatprep.subr.mxu0 0.0
  %3639 = vmatpush1.msra.mxu0 0.0
  %3640 = vmatprep.subr.mxu0 0.0
  %3641 = vmatpush1.msra.mxu0 0.0
  %3642 = vmatprep.subr.mxu0 0.0
  %3643 = vmatpush1.msra.mxu0 0.0
  %3644 = vmatprep.subr.mxu0 0.0
  %3645 = vmatpush1.msra.mxu0 0.0
  %3646 = vmatprep.subr.mxu0 0.0
  %3647 = vmatpush1.msra.mxu0 0.0
  %3648 = vmatprep.subr.mxu0 0.0
  %3649 = vmatpush1.msra.mxu0 0.0
  %3650 = vmatprep.subr.mxu0 0.0
  %3651 = vmatpush1.msra.mxu0 0.0
  %3652 = vmatprep.subr.mxu0 0.0
  %3653 = vmatpush1.msra.mxu0 0.0
  %3654 = vmatprep.subr.mxu0 0.0
  %3655 = vmatpush1.msra.mxu0 0.0
  %3656 = vmatprep.subr.mxu0 0.0
  %3657 = vmatpush1.msra.mxu0 0.0
  %3658 = vmatprep.subr.mxu0 0.0
  %3659 = vmatpush1.msra.mxu0 0.0
  %3660 = vmatprep.subr.mxu0 0.0
  %3661 = vmatpush1.msra.mxu0 0.0
  %3662 = vmatprep.subr.mxu0 0.0
  %3663 = vmatpush1.msra.mxu0 0.0
  %3664 = vmatprep.subr.mxu0 0.0
  %3665 = vmatpush1.msra.mxu0 0.0
  %3666 = vmatprep.subr.mxu0 0.0
  %3667 = vmatpush1.msra.mxu0 0.0
  %3668 = vmatprep.subr.mxu0 0.0
  %3669 = vmatpush1.msra.mxu0 0.0
  %3670 = vmatprep.mubr.f32.mxu0 0.0
  %3671 = vmatmul.mubr.f32.gmra.mrb[0].mxu0 %v3595
  %v3672 = vpop.f32.mrb[0].mxu0
  %v3673 = vadd.f32 %v3044, %v3672
  %v3674 = vpop.f32.mrb[0].mxu0
  %3675 = vmatprep.mubr.f32.mxu0 0.0
  %3676 = vmatmul.mubr.f32.gmra.mrb[0].mxu0 %v3598
  %v3677 = vpop.f32.mrb[0].mxu0
  %v3678 = vadd.f32 %v3045, %v3677
  %v3679 = vpop.f32.mrb[0].mxu0
  %3680 = vmatprep.mubr.f32.mxu0 0.0
  %3681 = vmatmul.mubr.f32.gmra.mrb[0].mxu0 %v3601
  %v3682 = vpop.f32.mrb[0].mxu0
  %v3683 = vadd.f32 %v3046, %v3682
  %v3684 = vpop.f32.mrb[0].mxu0
  %3685 = vmatprep.mubr.f32.mxu0 0.0
  %3686 = vmatmul.mubr.f32.gmra.mrb[0].mxu0 %v3604
  %v3687 = vpop.f32.mrb[0].mxu0
  %v3688 = vadd.f32 %v3047, %v3687
  %v3689 = vpop.f32.mrb[0].mxu0
  %3690 = vdwg.mxu0
  %v3691 = vxor.u32 %v3673, 2147483648
  %v3692 = vxor.u32 %v3678, 2147483648
  %v3693 = vxor.u32 %v3683, 2147483648
  %v3694 = vxor.u32 %v3688, 2147483648
  %v3695 = vmul.f32 %v3691, 1.442695
  %v3696 = vpow.pop %v3695
  %v3697 = vmul.f32 %v3692, 1.442695
  %v3698 = vpow.pop %v3697
  %v3699 = vmul.f32 %v3693, 1.442695
  %v3700 = vpow.pop %v3699
  %v3701 = vmul.f32 %v3694, 1.442695
  %v3702 = vpow.pop %v3701
  %v3703 = vadd.f32 %v3696, 1.0
  %v3704 = vadd.f32 %v3698, 1.0
  %v3705 = vadd.f32 %v3700, 1.0
  %v3706 = vadd.f32 %v3702, 1.0
  %v3707 = vrcp.pop %v3703
  %v3708 = vmul.f32 1.0, %v3707
  %v3709 = vrcp.pop %v3704
  %v3710 = vmul.f32 1.0, %v3709
  %v3711 = vrcp.pop %v3705
  %v3712 = vmul.f32 1.0, %v3711
  %v3713 = vrcp.pop %v3706
  %v3714 = vmul.f32 1.0, %v3713
  %v3715 = vmul.f32 %v3673, %v3708
  %v3716 = vmul.f32 %v3678, %v3710
  %v3717 = vmul.f32 %v3683, %v3712
  %v3718 = vmul.f32 %v3688, %v3714
  %s3719 = scalar_lea.vmem %s33, 128
  %v3720 = vld [vmem:[%s3719] sm:$0xff]
  %v3721 = vld [vmem:[%s3719 + $0x8] sm:$0xff]
  %v3722 = vld [vmem:[%s3719 + $0x10] sm:$0xff]
  %v3723 = vld [vmem:[%s3719 + $0x18] sm:$0xff]
  %v3724 = vld [vmem:[%s3719 + $0x20] sm:$0xff]
  %v3725 = vld [vmem:[%s3719 + $0x28] sm:$0xff]
  %v3726 = vld [vmem:[%s3719 + $0x30] sm:$0xff]
  %v3727 = vld [vmem:[%s3719 + $0x38] sm:$0xff]
  %s3728 = scalar_lea.vmem %s35, 2
  %v3729 = vld [vmem:[%s3728] sm:$0x1]
  %v3731 = vlaneseq
  %v3732 = vshrl.u32 %v3731, 7
  %v3733 = vsub.s32 0, %v3732
  %v3734 = vrot.slane %v3729, %v3733
  %v3737 = vsel %vm821, %v3715, 0
  %v3740 = vsel %vm821, %v3716, 0
  %v3743 = vsel %vm821, %v3717, 0
  %v3746 = vsel %vm821, %v3718, 0
  %3748 = vmatprep.subr.mxu0 0.0
  %3749 = vmatpush1.msra.mxu0 %v3720
  %3750 = vmatprep.subr.mxu0 0.0
  %3751 = vmatpush1.msra.mxu0 %v3721
  %3752 = vmatprep.subr.mxu0 0.0
  %3753 = vmatpush1.msra.mxu0 %v3722
  %3754 = vmatprep.subr.mxu0 0.0
  %3755 = vmatpush1.msra.mxu0 %v3723
  %3756 = vmatprep.subr.mxu0 0.0
  %3757 = vmatpush1.msra.mxu0 %v3724
  %3758 = vmatprep.subr.mxu0 0.0
  %3759 = vmatpush1.msra.mxu0 %v3725
  %3760 = vmatprep.subr.mxu0 0.0
  %3761 = vmatpush1.msra.mxu0 %v3726
  %3762 = vmatprep.subr.mxu0 0.0
  %3763 = vmatpush1.msra.mxu0 %v3727
  %3764 = vmatprep.subr.mxu0 0.0
  %3765 = vmatpush1.msra.mxu0 0.0
  %3766 = vmatprep.subr.mxu0 0.0
  %3767 = vmatpush1.msra.mxu0 0.0
  %3768 = vmatprep.subr.mxu0 0.0
  %3769 = vmatpush1.msra.mxu0 0.0
  %3770 = vmatprep.subr.mxu0 0.0
  %3771 = vmatpush1.msra.mxu0 0.0
  %3772 = vmatprep.subr.mxu0 0.0
  %3773 = vmatpush1.msra.mxu0 0.0
  %3774 = vmatprep.subr.mxu0 0.0
  %3775 = vmatpush1.msra.mxu0 0.0
  %3776 = vmatprep.subr.mxu0 0.0
  %3777 = vmatpush1.msra.mxu0 0.0
  %3778 = vmatprep.subr.mxu0 0.0
  %3779 = vmatpush1.msra.mxu0 0.0
  %3780 = vmatprep.subr.mxu0 0.0
  %3781 = vmatpush1.msra.mxu0 0.0
  %3782 = vmatprep.subr.mxu0 0.0
  %3783 = vmatpush1.msra.mxu0 0.0
  %3784 = vmatprep.subr.mxu0 0.0
  %3785 = vmatpush1.msra.mxu0 0.0
  %3786 = vmatprep.subr.mxu0 0.0
  %3787 = vmatpush1.msra.mxu0 0.0
  %3788 = vmatprep.subr.mxu0 0.0
  %3789 = vmatpush1.msra.mxu0 0.0
  %3790 = vmatprep.subr.mxu0 0.0
  %3791 = vmatpush1.msra.mxu0 0.0
  %3792 = vmatprep.subr.mxu0 0.0
  %3793 = vmatpush1.msra.mxu0 0.0
  %3794 = vmatprep.subr.mxu0 0.0
  %3795 = vmatpush1.msra.mxu0 0.0
  %3796 = vmatprep.subr.mxu0 0.0
  %3797 = vmatpush1.msra.mxu0 0.0
  %3798 = vmatprep.subr.mxu0 0.0
  %3799 = vmatpush1.msra.mxu0 0.0
  %3800 = vmatprep.subr.mxu0 0.0
  %3801 = vmatpush1.msra.mxu0 0.0
  %3802 = vmatprep.subr.mxu0 0.0
  %3803 = vmatpush1.msra.mxu0 0.0
  %3804 = vmatprep.subr.mxu0 0.0
  %3805 = vmatpush1.msra.mxu0 0.0
  %3806 = vmatprep.subr.mxu0 0.0
  %3807 = vmatpush1.msra.mxu0 0.0
  %3808 = vmatprep.subr.mxu0 0.0
  %3809 = vmatpush1.msra.mxu0 0.0
  %3810 = vmatprep.subr.mxu0 0.0
  %3811 = vmatpush1.msra.mxu0 0.0
  %3812 = vmatprep.mubr.f32.mxu0 0.0
  %3813 = vmatmul.mubr.f32.gmra.mrb[0].mxu0 %v3737
  %v3814 = vpop.f32.mrb[0].mxu0
  %v3815 = vadd.f32 %v3734, %v3814
  %v3816 = vpop.f32.mrb[0].mxu0
  %3817 = vmatprep.mubr.f32.mxu0 0.0
  %3818 = vmatmul.mubr.f32.gmra.mrb[0].mxu0 %v3740
  %v3819 = vpop.f32.mrb[0].mxu0
  %v3820 = vadd.f32 %v3734, %v3819
  %v3821 = vpop.f32.mrb[0].mxu0
  %3822 = vmatprep.mubr.f32.mxu0 0.0
  %3823 = vmatmul.mubr.f32.gmra.mrb[0].mxu0 %v3743
  %v3824 = vpop.f32.mrb[0].mxu0
  %v3825 = vadd.f32 %v3734, %v3824
  %v3826 = vpop.f32.mrb[0].mxu0
  %3827 = vmatprep.mubr.f32.mxu0 0.0
  %3828 = vmatmul.mubr.f32.gmra.mrb[0].mxu0 %v3746
  %v3829 = vpop.f32.mrb[0].mxu0
  %v3830 = vadd.f32 %v3734, %v3829
  %v3831 = vpop.f32.mrb[0].mxu0
  %3832 = vdwg.mxu0
  %v3833 = vxor.u32 %v3815, 2147483648
  %v3834 = vxor.u32 %v3820, 2147483648
  %v3835 = vxor.u32 %v3825, 2147483648
  %v3836 = vxor.u32 %v3830, 2147483648
  %v3837 = vmul.f32 %v3833, 1.442695
  %v3838 = vpow.pop %v3837
  %v3839 = vmul.f32 %v3834, 1.442695
  %v3840 = vpow.pop %v3839
  %v3841 = vmul.f32 %v3835, 1.442695
  %v3842 = vpow.pop %v3841
  %v3843 = vmul.f32 %v3836, 1.442695
  %v3844 = vpow.pop %v3843
  %v3845 = vadd.f32 %v3838, 1.0
  %v3846 = vadd.f32 %v3840, 1.0
  %v3847 = vadd.f32 %v3842, 1.0
  %v3848 = vadd.f32 %v3844, 1.0
  %v3849 = vrcp.pop %v3845
  %v3850 = vmul.f32 1.0, %v3849
  %v3851 = vrcp.pop %v3846
  %v3852 = vmul.f32 1.0, %v3851
  %v3853 = vrcp.pop %v3847
  %v3854 = vmul.f32 1.0, %v3853
  %v3855 = vrcp.pop %v3848
  %v3856 = vmul.f32 1.0, %v3855
  %v3857 = vmul.f32 %v3200, %v3850
  %v3858 = vmul.f32 %v3205, %v3852
  %v3859 = vmul.f32 %v3210, %v3854
  %v3860 = vmul.f32 %v3215, %v3856
  %3865 = vrot.lane.b32.xlu0 %v3850, 96
  %v3866 = vpop.permute.xlu0 %3865
  %3867 = vrot.lane.b32.xlu0 %v3852, 96
  %v3868 = vpop.permute.xlu0 %3867
  %3869 = vrot.lane.b32.xlu0 %v3854, 96
  %v3870 = vpop.permute.xlu0 %3869
  %3871 = vrot.lane.b32.xlu0 %v3856, 96
  %v3872 = vpop.permute.xlu0 %3871
  %v3877 = vmul.f32 %v3115, %v3866
  %v3878 = vmul.f32 %v3120, %v3868
  %v3879 = vmul.f32 %v3125, %v3870
  %v3880 = vmul.f32 %v3130, %v3872
  %v3881 = vadd.f32 %v3857, %v3877
  %v3882 = vadd.f32 %v3858, %v3878
  %v3883 = vadd.f32 %v3859, %v3879
  %v3884 = vadd.f32 %v3860, %v3880
  %s3885 = scalar_lea.vmem %s37, 64
  %v3886 = vld [vmem:[%s3885] sm:$0xff]
  %v3887 = vld [vmem:[%s3885 + $0x8] sm:$0xff]
  %v3888 = vld [vmem:[%s3885 + $0x10] sm:$0xff]
  %v3889 = vld [vmem:[%s3885 + $0x18] sm:$0xff]
  %s3890 = scalar_lea.vmem %s39, 2
  %v3891 = vld [vmem:[%s3890] sm:$0x1]
  %v3893 = vlaneseq
  %v3894 = vshrl.u32 %v3893, 7
  %v3895 = vsub.s32 0, %v3894
  %v3896 = vrot.slane %v3891, %v3895
  %3898 = vrot.lane.b32.xlu0 %v3715, 64
  %v3899 = vpop.permute.xlu0 %3898
  %3900 = vrot.lane.b32.xlu0 %v3716, 64
  %v3901 = vpop.permute.xlu0 %3900
  %3902 = vrot.lane.b32.xlu0 %v3717, 64
  %v3903 = vpop.permute.xlu0 %3902
  %3904 = vrot.lane.b32.xlu0 %v3718, 64
  %v3905 = vpop.permute.xlu0 %3904
  %v3906 = vsel %vm237, %v3899, 0
  %v3908 = vsel %vm237, %v3901, 0
  %v3910 = vsel %vm237, %v3903, 0
  %v3912 = vsel %vm237, %v3905, 0
  %3914 = vmatprep.subr.mxu0 0.0
  %3915 = vmatpush1.msra.mxu0 %v3886
  %3916 = vmatprep.subr.mxu0 0.0
  %3917 = vmatpush1.msra.mxu0 %v3887
  %3918 = vmatprep.subr.mxu0 0.0
  %3919 = vmatpush1.msra.mxu0 %v3888
  %3920 = vmatprep.subr.mxu0 0.0
  %3921 = vmatpush1.msra.mxu0 %v3889
  %3922 = vmatprep.subr.mxu0 0.0
  %3923 = vmatpush1.msra.mxu0 0.0
  %3924 = vmatprep.subr.mxu0 0.0
  %3925 = vmatpush1.msra.mxu0 0.0
  %3926 = vmatprep.subr.mxu0 0.0
  %3927 = vmatpush1.msra.mxu0 0.0
  %3928 = vmatprep.subr.mxu0 0.0
  %3929 = vmatpush1.msra.mxu0 0.0
  %3930 = vmatprep.subr.mxu0 0.0
  %3931 = vmatpush1.msra.mxu0 0.0
  %3932 = vmatprep.subr.mxu0 0.0
  %3933 = vmatpush1.msra.mxu0 0.0
  %3934 = vmatprep.subr.mxu0 0.0
  %3935 = vmatpush1.msra.mxu0 0.0
  %3936 = vmatprep.subr.mxu0 0.0
  %3937 = vmatpush1.msra.mxu0 0.0
  %3938 = vmatprep.subr.mxu0 0.0
  %3939 = vmatpush1.msra.mxu0 0.0
  %3940 = vmatprep.subr.mxu0 0.0
  %3941 = vmatpush1.msra.mxu0 0.0
  %3942 = vmatprep.subr.mxu0 0.0
  %3943 = vmatpush1.msra.mxu0 0.0
  %3944 = vmatprep.subr.mxu0 0.0
  %3945 = vmatpush1.msra.mxu0 0.0
  %3946 = vmatprep.subr.mxu0 0.0
  %3947 = vmatpush1.msra.mxu0 0.0
  %3948 = vmatprep.subr.mxu0 0.0
  %3949 = vmatpush1.msra.mxu0 0.0
  %3950 = vmatprep.subr.mxu0 0.0
  %3951 = vmatpush1.msra.mxu0 0.0
  %3952 = vmatprep.subr.mxu0 0.0
  %3953 = vmatpush1.msra.mxu0 0.0
  %3954 = vmatprep.subr.mxu0 0.0
  %3955 = vmatpush1.msra.mxu0 0.0
  %3956 = vmatprep.subr.mxu0 0.0
  %3957 = vmatpush1.msra.mxu0 0.0
  %3958 = vmatprep.subr.mxu0 0.0
  %3959 = vmatpush1.msra.mxu0 0.0
  %3960 = vmatprep.subr.mxu0 0.0
  %3961 = vmatpush1.msra.mxu0 0.0
  %3962 = vmatprep.subr.mxu0 0.0
  %3963 = vmatpush1.msra.mxu0 0.0
  %3964 = vmatprep.subr.mxu0 0.0
  %3965 = vmatpush1.msra.mxu0 0.0
  %3966 = vmatprep.subr.mxu0 0.0
  %3967 = vmatpush1.msra.mxu0 0.0
  %3968 = vmatprep.subr.mxu0 0.0
  %3969 = vmatpush1.msra.mxu0 0.0
  %3970 = vmatprep.subr.mxu0 0.0
  %3971 = vmatpush1.msra.mxu0 0.0
  %3972 = vmatprep.subr.mxu0 0.0
  %3973 = vmatpush1.msra.mxu0 0.0
  %3974 = vmatprep.subr.mxu0 0.0
  %3975 = vmatpush1.msra.mxu0 0.0
  %3976 = vmatprep.subr.mxu0 0.0
  %3977 = vmatpush1.msra.mxu0 0.0
  %3978 = vmatprep.mubr.f32.mxu0 0.0
  %3979 = vmatmul.mubr.f32.gmra.mrb[0].mxu0 %v3906
  %v3980 = vpop.f32.mrb[0].mxu0
  %v3981 = vadd.f32 %v3896, %v3980
  %v3982 = vpop.f32.mrb[0].mxu0
  %3983 = vmatprep.mubr.f32.mxu0 0.0
  %3984 = vmatmul.mubr.f32.gmra.mrb[0].mxu0 %v3908
  %v3985 = vpop.f32.mrb[0].mxu0
  %v3986 = vadd.f32 %v3896, %v3985
  %v3987 = vpop.f32.mrb[0].mxu0
  %3988 = vmatprep.mubr.f32.mxu0 0.0
  %3989 = vmatmul.mubr.f32.gmra.mrb[0].mxu0 %v3910
  %v3990 = vpop.f32.mrb[0].mxu0
  %v3991 = vadd.f32 %v3896, %v3990
  %v3992 = vpop.f32.mrb[0].mxu0
  %3993 = vmatprep.mubr.f32.mxu0 0.0
  %3994 = vmatmul.mubr.f32.gmra.mrb[0].mxu0 %v3912
  %v3995 = vpop.f32.mrb[0].mxu0
  %v3996 = vadd.f32 %v3896, %v3995
  %v3997 = vpop.f32.mrb[0].mxu0
  %3998 = vdwg.mxu0
  %v3999 = vxor.u32 %v3981, 2147483648
  %v4000 = vxor.u32 %v3986, 2147483648
  %v4001 = vxor.u32 %v3991, 2147483648
  %v4002 = vxor.u32 %v3996, 2147483648
  %v4003 = vmul.f32 %v3999, 1.442695
  %v4004 = vpow.pop %v4003
  %v4005 = vmul.f32 %v4000, 1.442695
  %v4006 = vpow.pop %v4005
  %v4007 = vmul.f32 %v4001, 1.442695
  %v4008 = vpow.pop %v4007
  %v4009 = vmul.f32 %v4002, 1.442695
  %v4010 = vpow.pop %v4009
  %v4011 = vadd.f32 %v4004, 1.0
  %v4012 = vadd.f32 %v4006, 1.0
  %v4013 = vadd.f32 %v4008, 1.0
  %v4014 = vadd.f32 %v4010, 1.0
  %v4015 = vrcp.pop %v4011
  %v4016 = vmul.f32 1.0, %v4015
  %v4017 = vrcp.pop %v4012
  %v4018 = vmul.f32 1.0, %v4017
  %v4019 = vrcp.pop %v4013
  %v4020 = vmul.f32 1.0, %v4019
  %v4021 = vrcp.pop %v4014
  %v4022 = vmul.f32 1.0, %v4021
  %v4023 = vmul.f32 %v3981, %v4016
  %v4024 = vmul.f32 %v3986, %v4018
  %v4025 = vmul.f32 %v3991, %v4020
  %v4026 = vmul.f32 %v3996, %v4022
  %s4027 = scalar_lea.vmem %s41, 64
  %v4028 = vld [vmem:[%s4027] sm:$0xff]
  %v4029 = vld [vmem:[%s4027 + $0x8] sm:$0xff]
  %v4030 = vld [vmem:[%s4027 + $0x10] sm:$0xff]
  %v4031 = vld [vmem:[%s4027 + $0x18] sm:$0xff]
  %v4033 = vsel %vm237, %v4023, 0
  %v4036 = vsel %vm237, %v4024, 0
  %v4039 = vsel %vm237, %v4025, 0
  %v4042 = vsel %vm237, %v4026, 0
  %4044 = vmatprep.subr.mxu0 0.0
  %4045 = vmatpush1.msra.mxu0 %v4028
  %4046 = vmatprep.subr.mxu0 0.0
  %4047 = vmatpush1.msra.mxu0 %v4029
  %4048 = vmatprep.subr.mxu0 0.0
  %4049 = vmatpush1.msra.mxu0 %v4030
  %4050 = vmatprep.subr.mxu0 0.0
  %4051 = vmatpush1.msra.mxu0 %v4031
  %4052 = vmatprep.subr.mxu0 0.0
  %4053 = vmatpush1.msra.mxu0 0.0
  %4054 = vmatprep.subr.mxu0 0.0
  %4055 = vmatpush1.msra.mxu0 0.0
  %4056 = vmatprep.subr.mxu0 0.0
  %4057 = vmatpush1.msra.mxu0 0.0
  %4058 = vmatprep.subr.mxu0 0.0
  %4059 = vmatpush1.msra.mxu0 0.0
  %4060 = vmatprep.subr.mxu0 0.0
  %4061 = vmatpush1.msra.mxu0 0.0
  %4062 = vmatprep.subr.mxu0 0.0
  %4063 = vmatpush1.msra.mxu0 0.0
  %4064 = vmatprep.subr.mxu0 0.0
  %4065 = vmatpush1.msra.mxu0 0.0
  %4066 = vmatprep.subr.mxu0 0.0
  %4067 = vmatpush1.msra.mxu0 0.0
  %4068 = vmatprep.subr.mxu0 0.0
  %4069 = vmatpush1.msra.mxu0 0.0
  %4070 = vmatprep.subr.mxu0 0.0
  %4071 = vmatpush1.msra.mxu0 0.0
  %4072 = vmatprep.subr.mxu0 0.0
  %4073 = vmatpush1.msra.mxu0 0.0
  %4074 = vmatprep.subr.mxu0 0.0
  %4075 = vmatpush1.msra.mxu0 0.0
  %4076 = vmatprep.subr.mxu0 0.0
  %4077 = vmatpush1.msra.mxu0 0.0
  %4078 = vmatprep.subr.mxu0 0.0
  %4079 = vmatpush1.msra.mxu0 0.0
  %4080 = vmatprep.subr.mxu0 0.0
  %4081 = vmatpush1.msra.mxu0 0.0
  %4082 = vmatprep.subr.mxu0 0.0
  %4083 = vmatpush1.msra.mxu0 0.0
  %4084 = vmatprep.subr.mxu0 0.0
  %4085 = vmatpush1.msra.mxu0 0.0
  %4086 = vmatprep.subr.mxu0 0.0
  %4087 = vmatpush1.msra.mxu0 0.0
  %4088 = vmatprep.subr.mxu0 0.0
  %4089 = vmatpush1.msra.mxu0 0.0
  %4090 = vmatprep.subr.mxu0 0.0
  %4091 = vmatpush1.msra.mxu0 0.0
  %4092 = vmatprep.subr.mxu0 0.0
  %4093 = vmatpush1.msra.mxu0 0.0
  %4094 = vmatprep.subr.mxu0 0.0
  %4095 = vmatpush1.msra.mxu0 0.0
  %4096 = vmatprep.subr.mxu0 0.0
  %4097 = vmatpush1.msra.mxu0 0.0
  %4098 = vmatprep.subr.mxu0 0.0
  %4099 = vmatpush1.msra.mxu0 0.0
  %4100 = vmatprep.subr.mxu0 0.0
  %4101 = vmatpush1.msra.mxu0 0.0
  %4102 = vmatprep.subr.mxu0 0.0
  %4103 = vmatpush1.msra.mxu0 0.0
  %4104 = vmatprep.subr.mxu0 0.0
  %4105 = vmatpush1.msra.mxu0 0.0
  %4106 = vmatprep.subr.mxu0 0.0
  %4107 = vmatpush1.msra.mxu0 0.0
  %4108 = vmatprep.mubr.f32.mxu0 0.0
  %4109 = vmatmul.mubr.f32.gmra.mrb[0].mxu0 %v4033
  %v4110 = vpop.f32.mrb[0].mxu0
  %v4111 = vadd.f32 0.0, %v4110
  %v4112 = vpop.f32.mrb[0].mxu0
  %4113 = vmatprep.mubr.f32.mxu0 0.0
  %4114 = vmatmul.mubr.f32.gmra.mrb[0].mxu0 %v4036
  %v4115 = vpop.f32.mrb[0].mxu0
  %v4116 = vadd.f32 0.0, %v4115
  %v4117 = vpop.f32.mrb[0].mxu0
  %4118 = vmatprep.mubr.f32.mxu0 0.0
  %4119 = vmatmul.mubr.f32.gmra.mrb[0].mxu0 %v4039
  %v4120 = vpop.f32.mrb[0].mxu0
  %v4121 = vadd.f32 0.0, %v4120
  %v4122 = vpop.f32.mrb[0].mxu0
  %4123 = vmatprep.mubr.f32.mxu0 0.0
  %4124 = vmatmul.mubr.f32.gmra.mrb[0].mxu0 %v4042
  %v4125 = vpop.f32.mrb[0].mxu0
  %v4126 = vadd.f32 0.0, %v4125
  %v4127 = vpop.f32.mrb[0].mxu0
  %4128 = vdwg.mxu0
  %4133 = vrot.lane.b32.xlu0 %v4111, 32
  %v4134 = vpop.permute.xlu0 %4133
  %4135 = vrot.lane.b32.xlu0 %v4116, 32
  %v4136 = vpop.permute.xlu0 %4135
  %4137 = vrot.lane.b32.xlu0 %v4121, 32
  %v4138 = vpop.permute.xlu0 %4137
  %4139 = vrot.lane.b32.xlu0 %v4126, 32
  %v4140 = vpop.permute.xlu0 %4139
  %v4145 = vmul.f32 %v3218, %v4134
  %v4146 = vmul.f32 %v3219, %v4136
  %v4147 = vmul.f32 %v3220, %v4138
  %v4148 = vmul.f32 %v3221, %v4140
  %v4149 = vsel %vm237, %v3881, %v4145
  %v4150 = vsel %vm237, %v3882, %v4146
  %v4151 = vsel %vm237, %v3883, %v4147
  %v4152 = vsel %vm237, %v3884, %v4148
  %4153 = vmatprep.subr.mxu0 0.0
  %4154 = vmatpush1.msra.mxu0 %v4149
  %4155 = vmatprep.subr.mxu0 0.0
  %4156 = vmatpush1.msra.mxu0 %v4150
  %4157 = vmatprep.subr.mxu0 0.0
  %4158 = vmatpush1.msra.mxu0 %v4151
  %4159 = vmatprep.subr.mxu0 0.0
  %4160 = vmatpush1.msra.mxu0 %v4152
  %4161 = vmatprep.subr.mxu0 0.0
  %4162 = vmatpush1.msra.mxu0 0.0
  %4163 = vmatprep.subr.mxu0 0.0
  %4164 = vmatpush1.msra.mxu0 0.0
  %4165 = vmatprep.subr.mxu0 0.0
  %4166 = vmatpush1.msra.mxu0 0.0
  %4167 = vmatprep.subr.mxu0 0.0
  %4168 = vmatpush1.msra.mxu0 0.0
  %4169 = vmatprep.subr.mxu0 0.0
  %4170 = vmatpush1.msra.mxu0 0.0
  %4171 = vmatprep.subr.mxu0 0.0
  %4172 = vmatpush1.msra.mxu0 0.0
  %4173 = vmatprep.subr.mxu0 0.0
  %4174 = vmatpush1.msra.mxu0 0.0
  %4175 = vmatprep.subr.mxu0 0.0
  %4176 = vmatpush1.msra.mxu0 0.0
  %4177 = vmatprep.subr.mxu0 0.0
  %4178 = vmatpush1.msra.mxu0 0.0
  %4179 = vmatprep.subr.mxu0 0.0
  %4180 = vmatpush1.msra.mxu0 0.0
  %4181 = vmatprep.subr.mxu0 0.0
  %4182 = vmatpush1.msra.mxu0 0.0
  %4183 = vmatprep.subr.mxu0 0.0
  %4184 = vmatpush1.msra.mxu0 0.0
  %4185 = vmatprep.subr.mxu0 0.0
  %4186 = vmatpush1.msra.mxu0 0.0
  %4187 = vmatprep.subr.mxu0 0.0
  %4188 = vmatpush1.msra.mxu0 0.0
  %4189 = vmatprep.subr.mxu0 0.0
  %4190 = vmatpush1.msra.mxu0 0.0
  %4191 = vmatprep.subr.mxu0 0.0
  %4192 = vmatpush1.msra.mxu0 0.0
  %4193 = vmatprep.subr.mxu0 0.0
  %4194 = vmatpush1.msra.mxu0 0.0
  %4195 = vmatprep.subr.mxu0 0.0
  %4196 = vmatpush1.msra.mxu0 0.0
  %4197 = vmatprep.subr.mxu0 0.0
  %4198 = vmatpush1.msra.mxu0 0.0
  %4199 = vmatprep.subr.mxu0 0.0
  %4200 = vmatpush1.msra.mxu0 0.0
  %4201 = vmatprep.subr.mxu0 0.0
  %4202 = vmatpush1.msra.mxu0 0.0
  %4203 = vmatprep.subr.mxu0 0.0
  %4204 = vmatpush1.msra.mxu0 0.0
  %4205 = vmatprep.subr.mxu0 0.0
  %4206 = vmatpush1.msra.mxu0 0.0
  %4207 = vmatprep.subr.mxu0 0.0
  %4208 = vmatpush1.msra.mxu0 0.0
  %4209 = vmatprep.subr.mxu0 0.0
  %4210 = vmatpush1.msra.mxu0 0.0
  %4211 = vmatprep.subr.mxu0 0.0
  %4212 = vmatpush1.msra.mxu0 0.0
  %4213 = vmatprep.subr.mxu0 0.0
  %4214 = vmatpush1.msra.mxu0 0.0
  %4215 = vmatprep.subr.mxu0 0.0
  %4216 = vmatpush1.msra.mxu0 0.0
  %4217 = vmatprep.mubr.f32.mxu0 0.0
  %4218 = vmatmul.mubr.f32.gmra.mrb[0].mxu0 %v1392
  %v4219 = vpop.f32.mrb[0].mxu0
  %v4220 = vadd.f32 0.0, %v4219
  %v4221 = vpop.f32.mrb[0].mxu0
  %4222 = vmatprep.mubr.f32.mxu0 0.0
  %4223 = vmatmul.mubr.f32.gmra.mrb[0].mxu0 %v1395
  %v4224 = vpop.f32.mrb[0].mxu0
  %v4225 = vadd.f32 0.0, %v4224
  %v4226 = vpop.f32.mrb[0].mxu0
  %4227 = vdwg.mxu0
  %v4228 = vmul.f32 %v4220, %v1475
  %v4229 = vmul.f32 %v4225, %v1480
  %v4230 = vadd.f32 %v3041, %v4228
  %v4231 = vadd.f32 %v3042, %v4229
  %4234 = vrot.lane.b32.xlu0 %v4220, 32
  %v4235 = vpop.permute.xlu0 %4234
  %4236 = vrot.lane.b32.xlu0 %v4225, 32
  %v4237 = vpop.permute.xlu0 %4236
  %v4240 = vsel %vm237, %v3041, %v4235
  %v4241 = vsel %vm237, %v3042, %v4237
  %s4242 = scalar_lea.vmem %s43, 128
  %v4243 = vld [vmem:[%s4242] sm:$0xff]
  %v4244 = vld [vmem:[%s4242 + $0x8] sm:$0xff]
  %v4245 = vld [vmem:[%s4242 + $0x10] sm:$0xff]
  %v4246 = vld [vmem:[%s4242 + $0x18] sm:$0xff]
  %v4247 = vld [vmem:[%s4242 + $0x20] sm:$0xff]
  %v4248 = vld [vmem:[%s4242 + $0x28] sm:$0xff]
  %v4249 = vld [vmem:[%s4242 + $0x30] sm:$0xff]
  %v4250 = vld [vmem:[%s4242 + $0x38] sm:$0xff]
  %s4251 = scalar_lea.vmem %s45, 2
  %v4252 = vld [vmem:[%s4251] sm:$0x1]
  %v4254 = vlaneseq
  %v4255 = vshrl.u32 %v4254, 7
  %v4256 = vsub.s32 0, %v4255
  %v4257 = vrot.slane %v4252, %v4256
  %v4260 = vsel %vm821, %v4240, 0
  %v4263 = vsel %vm821, %v4241, 0
  %4265 = vmatprep.subr.mxu0 0.0
  %4266 = vmatpush1.msra.mxu0 %v4243
  %4267 = vmatprep.subr.mxu0 0.0
  %4268 = vmatpush1.msra.mxu0 %v4244
  %4269 = vmatprep.subr.mxu0 0.0
  %4270 = vmatpush1.msra.mxu0 %v4245
  %4271 = vmatprep.subr.mxu0 0.0
  %4272 = vmatpush1.msra.mxu0 %v4246
  %4273 = vmatprep.subr.mxu0 0.0
  %4274 = vmatpush1.msra.mxu0 %v4247
  %4275 = vmatprep.subr.mxu0 0.0
  %4276 = vmatpush1.msra.mxu0 %v4248
  %4277 = vmatprep.subr.mxu0 0.0
  %4278 = vmatpush1.msra.mxu0 %v4249
  %4279 = vmatprep.subr.mxu0 0.0
  %4280 = vmatpush1.msra.mxu0 %v4250
  %4281 = vmatprep.subr.mxu0 0.0
  %4282 = vmatpush1.msra.mxu0 0.0
  %4283 = vmatprep.subr.mxu0 0.0
  %4284 = vmatpush1.msra.mxu0 0.0
  %4285 = vmatprep.subr.mxu0 0.0
  %4286 = vmatpush1.msra.mxu0 0.0
  %4287 = vmatprep.subr.mxu0 0.0
  %4288 = vmatpush1.msra.mxu0 0.0
  %4289 = vmatprep.subr.mxu0 0.0
  %4290 = vmatpush1.msra.mxu0 0.0
  %4291 = vmatprep.subr.mxu0 0.0
  %4292 = vmatpush1.msra.mxu0 0.0
  %4293 = vmatprep.subr.mxu0 0.0
  %4294 = vmatpush1.msra.mxu0 0.0
  %4295 = vmatprep.subr.mxu0 0.0
  %4296 = vmatpush1.msra.mxu0 0.0
  %4297 = vmatprep.subr.mxu0 0.0
  %4298 = vmatpush1.msra.mxu0 0.0
  %4299 = vmatprep.subr.mxu0 0.0
  %4300 = vmatpush1.msra.mxu0 0.0
  %4301 = vmatprep.subr.mxu0 0.0
  %4302 = vmatpush1.msra.mxu0 0.0
  %4303 = vmatprep.subr.mxu0 0.0
  %4304 = vmatpush1.msra.mxu0 0.0
  %4305 = vmatprep.subr.mxu0 0.0
  %4306 = vmatpush1.msra.mxu0 0.0
  %4307 = vmatprep.subr.mxu0 0.0
  %4308 = vmatpush1.msra.mxu0 0.0
  %4309 = vmatprep.subr.mxu0 0.0
  %4310 = vmatpush1.msra.mxu0 0.0
  %4311 = vmatprep.subr.mxu0 0.0
  %4312 = vmatpush1.msra.mxu0 0.0
  %4313 = vmatprep.subr.mxu0 0.0
  %4314 = vmatpush1.msra.mxu0 0.0
  %4315 = vmatprep.subr.mxu0 0.0
  %4316 = vmatpush1.msra.mxu0 0.0
  %4317 = vmatprep.subr.mxu0 0.0
  %4318 = vmatpush1.msra.mxu0 0.0
  %4319 = vmatprep.subr.mxu0 0.0
  %4320 = vmatpush1.msra.mxu0 0.0
  %4321 = vmatprep.subr.mxu0 0.0
  %4322 = vmatpush1.msra.mxu0 0.0
  %4323 = vmatprep.subr.mxu0 0.0
  %4324 = vmatpush1.msra.mxu0 0.0
  %4325 = vmatprep.subr.mxu0 0.0
  %4326 = vmatpush1.msra.mxu0 0.0
  %4327 = vmatprep.subr.mxu0 0.0
  %4328 = vmatpush1.msra.mxu0 0.0
  %4329 = vmatprep.mubr.f32.mxu0 0.0
  %4330 = vmatmul.mubr.f32.gmra.mrb[0].mxu0 %v4260
  %v4331 = vpop.f32.mrb[0].mxu0
  %v4332 = vadd.f32 %v4257, %v4331
  %v4333 = vpop.f32.mrb[0].mxu0
  %4334 = vmatprep.mubr.f32.mxu0 0.0
  %4335 = vmatmul.mubr.f32.gmra.mrb[0].mxu0 %v4263
  %v4336 = vpop.f32.mrb[0].mxu0
  %v4337 = vadd.f32 %v4257, %v4336
  %v4338 = vpop.f32.mrb[0].mxu0
  %4339 = vdwg.mxu0
  %v4340 = vxor.u32 %v4332, 2147483648
  %v4341 = vxor.u32 %v4337, 2147483648
  %v4342 = vmul.f32 %v4340, 1.442695
  %v4343 = vpow.pop %v4342
  %v4344 = vmul.f32 %v4341, 1.442695
  %v4345 = vpow.pop %v4344
  %v4346 = vadd.f32 %v4343, 1.0
  %v4347 = vadd.f32 %v4345, 1.0
  %v4348 = vrcp.pop %v4346
  %v4349 = vmul.f32 1.0, %v4348
  %v4350 = vrcp.pop %v4347
  %v4351 = vmul.f32 1.0, %v4350
  %v4352 = vmul.f32 %v4332, %v4349
  %v4353 = vmul.f32 %v4337, %v4351
  %s4354 = scalar_lea.vmem %s47, 64
  %v4355 = vld [vmem:[%s4354] sm:$0xff]
  %v4356 = vld [vmem:[%s4354 + $0x8] sm:$0xff]
  %v4357 = vld [vmem:[%s4354 + $0x10] sm:$0xff]
  %v4358 = vld [vmem:[%s4354 + $0x18] sm:$0xff]
  %v4360 = vsel %vm237, %v4352, 0
  %v4363 = vsel %vm237, %v4353, 0
  %4365 = vmatprep.subr.mxu0 0.0
  %4366 = vmatpush1.msra.mxu0 %v4355
  %4367 = vmatprep.subr.mxu0 0.0
  %4368 = vmatpush1.msra.mxu0 %v4356
  %4369 = vmatprep.subr.mxu0 0.0
  %4370 = vmatpush1.msra.mxu0 %v4357
  %4371 = vmatprep.subr.mxu0 0.0
  %4372 = vmatpush1.msra.mxu0 %v4358
  %4373 = vmatprep.subr.mxu0 0.0
  %4374 = vmatpush1.msra.mxu0 0.0
  %4375 = vmatprep.subr.mxu0 0.0
  %4376 = vmatpush1.msra.mxu0 0.0
  %4377 = vmatprep.subr.mxu0 0.0
  %4378 = vmatpush1.msra.mxu0 0.0
  %4379 = vmatprep.subr.mxu0 0.0
  %4380 = vmatpush1.msra.mxu0 0.0
  %4381 = vmatprep.subr.mxu0 0.0
  %4382 = vmatpush1.msra.mxu0 0.0
  %4383 = vmatprep.subr.mxu0 0.0
  %4384 = vmatpush1.msra.mxu0 0.0
  %4385 = vmatprep.subr.mxu0 0.0
  %4386 = vmatpush1.msra.mxu0 0.0
  %4387 = vmatprep.subr.mxu0 0.0
  %4388 = vmatpush1.msra.mxu0 0.0
  %4389 = vmatprep.subr.mxu0 0.0
  %4390 = vmatpush1.msra.mxu0 0.0
  %4391 = vmatprep.subr.mxu0 0.0
  %4392 = vmatpush1.msra.mxu0 0.0
  %4393 = vmatprep.subr.mxu0 0.0
  %4394 = vmatpush1.msra.mxu0 0.0
  %4395 = vmatprep.subr.mxu0 0.0
  %4396 = vmatpush1.msra.mxu0 0.0
  %4397 = vmatprep.subr.mxu0 0.0
  %4398 = vmatpush1.msra.mxu0 0.0
  %4399 = vmatprep.subr.mxu0 0.0
  %4400 = vmatpush1.msra.mxu0 0.0
  %4401 = vmatprep.subr.mxu0 0.0
  %4402 = vmatpush1.msra.mxu0 0.0
  %4403 = vmatprep.subr.mxu0 0.0
  %4404 = vmatpush1.msra.mxu0 0.0
  %4405 = vmatprep.subr.mxu0 0.0
  %4406 = vmatpush1.msra.mxu0 0.0
  %4407 = vmatprep.subr.mxu0 0.0
  %4408 = vmatpush1.msra.mxu0 0.0
  %4409 = vmatprep.subr.mxu0 0.0
  %4410 = vmatpush1.msra.mxu0 0.0
  %4411 = vmatprep.subr.mxu0 0.0
  %4412 = vmatpush1.msra.mxu0 0.0
  %4413 = vmatprep.subr.mxu0 0.0
  %4414 = vmatpush1.msra.mxu0 0.0
  %4415 = vmatprep.subr.mxu0 0.0
  %4416 = vmatpush1.msra.mxu0 0.0
  %4417 = vmatprep.subr.mxu0 0.0
  %4418 = vmatpush1.msra.mxu0 0.0
  %4419 = vmatprep.subr.mxu0 0.0
  %4420 = vmatpush1.msra.mxu0 0.0
  %4421 = vmatprep.subr.mxu0 0.0
  %4422 = vmatpush1.msra.mxu0 0.0
  %4423 = vmatprep.subr.mxu0 0.0
  %4424 = vmatpush1.msra.mxu0 0.0
  %4425 = vmatprep.subr.mxu0 0.0
  %4426 = vmatpush1.msra.mxu0 0.0
  %4427 = vmatprep.subr.mxu0 0.0
  %4428 = vmatpush1.msra.mxu0 0.0
  %4429 = vmatprep.mubr.f32.mxu0 0.0
  %4430 = vmatmul.mubr.f32.gmra.mrb[0].mxu0 %v4360
  %v4431 = vpop.f32.mrb[0].mxu0
  %v4432 = vadd.f32 0.0, %v4431
  %v4433 = vpop.f32.mrb[0].mxu0
  %4434 = vmatprep.mubr.f32.mxu0 0.0
  %4435 = vmatmul.mubr.f32.gmra.mrb[0].mxu0 %v4363
  %v4436 = vpop.f32.mrb[0].mxu0
  %v4437 = vadd.f32 0.0, %v4436
  %v4438 = vpop.f32.mrb[0].mxu0
  %4439 = vdwg.mxu0
  %v4440 = vadd.f32 %v3041, %v4432
  %v4441 = vadd.f32 %v3042, %v4437
  %s4442 = scalar_lea.vmem %s49, 2
  %v4443 = vld [vmem:[%s4442] sm:$0x1]
  %v4445 = vlaneseq
  %v4446 = vshrl.u32 %v4445, 7
  %v4447 = vsub.s32 0, %v4446
  %v4448 = vrot.slane %v4443, %v4447
  %v4450 = vadd.f32 %v4440, %v4448
  %v4451 = vadd.f32 %v4441, %v4448
  %v4452 = vsel %vm237, %v4450, %v4230
  %v4453 = vsel %vm237, %v4451, %v4231
  %s4454 = scalar_lea.vmem %s53, 24
  %v4455 = vld [vmem:[%s4454] sm:$0xff]
  %v4456 = vld [vmem:[%s4454 + $0x8] sm:$0xff]
  %v4457 = vld [vmem:[%s4454 + $0x10] sm:$0xff]
  %4458 = vmatprep.subr.mxu0 0.0
  %4459 = vmatpush1.msra.mxu0 %v4452
  %4460 = vmatprep.subr.mxu0 0.0
  %4461 = vmatpush1.msra.mxu0 %v4453
  %4462 = vmatprep.subr.mxu0 0.0
  %4463 = vmatpush1.msra.mxu0 0.0
  %4464 = vmatprep.subr.mxu0 0.0
  %4465 = vmatpush1.msra.mxu0 0.0
  %4466 = vmatprep.subr.mxu0 0.0
  %4467 = vmatpush1.msra.mxu0 0.0
  %4468 = vmatprep.subr.mxu0 0.0
  %4469 = vmatpush1.msra.mxu0 0.0
  %4470 = vmatprep.subr.mxu0 0.0
  %4471 = vmatpush1.msra.mxu0 0.0
  %4472 = vmatprep.subr.mxu0 0.0
  %4473 = vmatpush1.msra.mxu0 0.0
  %4474 = vmatprep.subr.mxu0 0.0
  %4475 = vmatpush1.msra.mxu0 0.0
  %4476 = vmatprep.subr.mxu0 0.0
  %4477 = vmatpush1.msra.mxu0 0.0
  %4478 = vmatprep.subr.mxu0 0.0
  %4479 = vmatpush1.msra.mxu0 0.0
  %4480 = vmatprep.subr.mxu0 0.0
  %4481 = vmatpush1.msra.mxu0 0.0
  %4482 = vmatprep.subr.mxu0 0.0
  %4483 = vmatpush1.msra.mxu0 0.0
  %4484 = vmatprep.subr.mxu0 0.0
  %4485 = vmatpush1.msra.mxu0 0.0
  %4486 = vmatprep.subr.mxu0 0.0
  %4487 = vmatpush1.msra.mxu0 0.0
  %4488 = vmatprep.subr.mxu0 0.0
  %4489 = vmatpush1.msra.mxu0 0.0
  %4490 = vmatprep.subr.mxu0 0.0
  %4491 = vmatpush1.msra.mxu0 0.0
  %4492 = vmatprep.subr.mxu0 0.0
  %4493 = vmatpush1.msra.mxu0 0.0
  %4494 = vmatprep.subr.mxu0 0.0
  %4495 = vmatpush1.msra.mxu0 0.0
  %4496 = vmatprep.subr.mxu0 0.0
  %4497 = vmatpush1.msra.mxu0 0.0
  %4498 = vmatprep.subr.mxu0 0.0
  %4499 = vmatpush1.msra.mxu0 0.0
  %4500 = vmatprep.subr.mxu0 0.0
  %4501 = vmatpush1.msra.mxu0 0.0
  %4502 = vmatprep.subr.mxu0 0.0
  %4503 = vmatpush1.msra.mxu0 0.0
  %4504 = vmatprep.subr.mxu0 0.0
  %4505 = vmatpush1.msra.mxu0 0.0
  %4506 = vmatprep.subr.mxu0 0.0
  %4507 = vmatpush1.msra.mxu0 0.0
  %4508 = vmatprep.subr.mxu0 0.0
  %4509 = vmatpush1.msra.mxu0 0.0
  %4510 = vmatprep.subr.mxu0 0.0
  %4511 = vmatpush1.msra.mxu0 0.0
  %4512 = vmatprep.subr.mxu0 0.0
  %4513 = vmatpush1.msra.mxu0 0.0
  %4514 = vmatprep.subr.mxu0 0.0
  %4515 = vmatpush1.msra.mxu0 0.0
  %4516 = vmatprep.subr.mxu0 0.0
  %4517 = vmatpush1.msra.mxu0 0.0
  %4518 = vmatprep.subr.mxu0 0.0
  %4519 = vmatpush1.msra.mxu0 0.0
  %4520 = vmatprep.subr.mxu0 0.0
  %4521 = vmatpush1.msra.mxu0 0.0
  %4522 = vmatprep.mubr.f32.mxu0 0.0
  %4523 = vmatmul.mubr.f32.gmra.mrb[0].mxu0 %v1718
  %v4524 = vpop.f32.mrb[0].mxu0
  %v4525 = vadd.f32 0.0, %v4524
  %v4526 = vpop.f32.mrb[0].mxu0
  %4527 = vmatprep.mubr.f32.mxu0 0.0
  %4528 = vmatmul.mubr.f32.gmra.mrb[0].mxu0 %v1721
  %v4529 = vpop.f32.mrb[0].mxu0
  %v4530 = vadd.f32 0.0, %v4529
  %v4531 = vpop.f32.mrb[0].mxu0
  %4532 = vmatprep.mubr.f32.mxu0 0.0
  %4533 = vmatmul.mubr.f32.gmra.mrb[0].mxu0 %v1724
  %v4534 = vpop.f32.mrb[0].mxu0
  %v4535 = vadd.f32 0.0, %v4534
  %v4536 = vpop.f32.mrb[0].mxu0
  %4537 = vdwg.mxu0
  %4538 = vmatprep.subr.mxu0 0.0
  %4539 = vmatpush1.msra.mxu0 %v4452
  %4540 = vmatprep.subr.mxu0 0.0
  %4541 = vmatpush1.msra.mxu0 %v4453
  %4542 = vmatprep.subr.mxu0 0.0
  %4543 = vmatpush1.msra.mxu0 0.0
  %4544 = vmatprep.subr.mxu0 0.0
  %4545 = vmatpush1.msra.mxu0 0.0
  %4546 = vmatprep.subr.mxu0 0.0
  %4547 = vmatpush1.msra.mxu0 0.0
  %4548 = vmatprep.subr.mxu0 0.0
  %4549 = vmatpush1.msra.mxu0 0.0
  %4550 = vmatprep.subr.mxu0 0.0
  %4551 = vmatpush1.msra.mxu0 0.0
  %4552 = vmatprep.subr.mxu0 0.0
  %4553 = vmatpush1.msra.mxu0 0.0
  %4554 = vmatprep.subr.mxu0 0.0
  %4555 = vmatpush1.msra.mxu0 0.0
  %4556 = vmatprep.subr.mxu0 0.0
  %4557 = vmatpush1.msra.mxu0 0.0
  %4558 = vmatprep.subr.mxu0 0.0
  %4559 = vmatpush1.msra.mxu0 0.0
  %4560 = vmatprep.subr.mxu0 0.0
  %4561 = vmatpush1.msra.mxu0 0.0
  %4562 = vmatprep.subr.mxu0 0.0
  %4563 = vmatpush1.msra.mxu0 0.0
  %4564 = vmatprep.subr.mxu0 0.0
  %4565 = vmatpush1.msra.mxu0 0.0
  %4566 = vmatprep.subr.mxu0 0.0
  %4567 = vmatpush1.msra.mxu0 0.0
  %4568 = vmatprep.subr.mxu0 0.0
  %4569 = vmatpush1.msra.mxu0 0.0
  %4570 = vmatprep.subr.mxu0 0.0
  %4571 = vmatpush1.msra.mxu0 0.0
  %4572 = vmatprep.subr.mxu0 0.0
  %4573 = vmatpush1.msra.mxu0 0.0
  %4574 = vmatprep.subr.mxu0 0.0
  %4575 = vmatpush1.msra.mxu0 0.0
  %4576 = vmatprep.subr.mxu0 0.0
  %4577 = vmatpush1.msra.mxu0 0.0
  %4578 = vmatprep.subr.mxu0 0.0
  %4579 = vmatpush1.msra.mxu0 0.0
  %4580 = vmatprep.subr.mxu0 0.0
  %4581 = vmatpush1.msra.mxu0 0.0
  %4582 = vmatprep.subr.mxu0 0.0
  %4583 = vmatpush1.msra.mxu0 0.0
  %4584 = vmatprep.subr.mxu0 0.0
  %4585 = vmatpush1.msra.mxu0 0.0
  %4586 = vmatprep.subr.mxu0 0.0
  %4587 = vmatpush1.msra.mxu0 0.0
  %4588 = vmatprep.subr.mxu0 0.0
  %4589 = vmatpush1.msra.mxu0 0.0
  %4590 = vmatprep.subr.mxu0 0.0
  %4591 = vmatpush1.msra.mxu0 0.0
  %4592 = vmatprep.subr.mxu0 0.0
  %4593 = vmatpush1.msra.mxu0 0.0
  %4594 = vmatprep.subr.mxu0 0.0
  %4595 = vmatpush1.msra.mxu0 0.0
  %4596 = vmatprep.subr.mxu0 0.0
  %4597 = vmatpush1.msra.mxu0 0.0
  %4598 = vmatprep.subr.mxu0 0.0
  %4599 = vmatpush1.msra.mxu0 0.0
  %4600 = vmatprep.subr.mxu0 0.0
  %4601 = vmatpush1.msra.mxu0 0.0
  %4602 = vmatprep.mubr.f32.mxu0 0.0
  %4603 = vmatmul.mubr.f32.gmra.mrb[0].mxu0 %v1807
  %v4604 = vpop.f32.mrb[0].mxu0
  %v4605 = vadd.f32 0.0, %v4604
  %v4606 = vpop.f32.mrb[0].mxu0
  %4607 = vmatprep.mubr.f32.mxu0 0.0
  %4608 = vmatmul.mubr.f32.gmra.mrb[0].mxu0 %v1810
  %v4609 = vpop.f32.mrb[0].mxu0
  %v4610 = vadd.f32 0.0, %v4609
  %v4611 = vpop.f32.mrb[0].mxu0
  %4612 = vmatprep.mubr.f32.mxu0 0.0
  %4613 = vmatmul.mubr.f32.gmra.mrb[0].mxu0 %v1813
  %v4614 = vpop.f32.mrb[0].mxu0
  %v4615 = vadd.f32 0.0, %v4614
  %v4616 = vpop.f32.mrb[0].mxu0
  %4617 = vdwg.mxu0
  %v4618 = vsub.f32 %v4525, %v4605
  %v4619 = vsub.f32 %v4530, %v4610
  %v4620 = vsub.f32 %v4535, %v4615
  %4624 = vrot.lane.b32.xlu0 %v4618, 96
  %v4625 = vpop.permute.xlu0 %4624
  %4626 = vrot.lane.b32.xlu0 %v4619, 96
  %v4627 = vpop.permute.xlu0 %4626
  %4628 = vrot.lane.b32.xlu0 %v4620, 96
  %v4629 = vpop.permute.xlu0 %4628
  %v4630 = vsel %vm467, %v4625, 0
  %v4632 = vsel %vm467, %v4627, 0
  %v4634 = vsel %vm467, %v4629, 0
  %4636 = vmatprep.subr.mxu0 0.0
  %4637 = vmatpush1.msra.mxu0 %v219
  %4638 = vmatprep.subr.mxu0 0.0
  %4639 = vmatpush1.msra.mxu0 %v478
  %4640 = vmatprep.subr.mxu0 0.0
  %4641 = vmatpush1.msra.mxu0 0.0
  %4642 = vmatprep.subr.mxu0 0.0
  %4643 = vmatpush1.msra.mxu0 0.0
  %4644 = vmatprep.subr.mxu0 0.0
  %4645 = vmatpush1.msra.mxu0 0.0
  %4646 = vmatprep.subr.mxu0 0.0
  %4647 = vmatpush1.msra.mxu0 0.0
  %4648 = vmatprep.subr.mxu0 0.0
  %4649 = vmatpush1.msra.mxu0 0.0
  %4650 = vmatprep.subr.mxu0 0.0
  %4651 = vmatpush1.msra.mxu0 0.0
  %4652 = vmatprep.subr.mxu0 0.0
  %4653 = vmatpush1.msra.mxu0 0.0
  %4654 = vmatprep.subr.mxu0 0.0
  %4655 = vmatpush1.msra.mxu0 0.0
  %4656 = vmatprep.subr.mxu0 0.0
  %4657 = vmatpush1.msra.mxu0 0.0
  %4658 = vmatprep.subr.mxu0 0.0
  %4659 = vmatpush1.msra.mxu0 0.0
  %4660 = vmatprep.subr.mxu0 0.0
  %4661 = vmatpush1.msra.mxu0 0.0
  %4662 = vmatprep.subr.mxu0 0.0
  %4663 = vmatpush1.msra.mxu0 0.0
  %4664 = vmatprep.subr.mxu0 0.0
  %4665 = vmatpush1.msra.mxu0 0.0
  %4666 = vmatprep.subr.mxu0 0.0
  %4667 = vmatpush1.msra.mxu0 0.0
  %4668 = vmatprep.subr.mxu0 0.0
  %4669 = vmatpush1.msra.mxu0 0.0
  %4670 = vmatprep.subr.mxu0 0.0
  %4671 = vmatpush1.msra.mxu0 0.0
  %4672 = vmatprep.subr.mxu0 0.0
  %4673 = vmatpush1.msra.mxu0 0.0
  %4674 = vmatprep.subr.mxu0 0.0
  %4675 = vmatpush1.msra.mxu0 0.0
  %4676 = vmatprep.subr.mxu0 0.0
  %4677 = vmatpush1.msra.mxu0 0.0
  %4678 = vmatprep.subr.mxu0 0.0
  %4679 = vmatpush1.msra.mxu0 0.0
  %4680 = vmatprep.subr.mxu0 0.0
  %4681 = vmatpush1.msra.mxu0 0.0
  %4682 = vmatprep.subr.mxu0 0.0
  %4683 = vmatpush1.msra.mxu0 0.0
  %4684 = vmatprep.subr.mxu0 0.0
  %4685 = vmatpush1.msra.mxu0 0.0
  %4686 = vmatprep.subr.mxu0 0.0
  %4687 = vmatpush1.msra.mxu0 0.0
  %4688 = vmatprep.subr.mxu0 0.0
  %4689 = vmatpush1.msra.mxu0 0.0
  %4690 = vmatprep.subr.mxu0 0.0
  %4691 = vmatpush1.msra.mxu0 0.0
  %4692 = vmatprep.subr.mxu0 0.0
  %4693 = vmatpush1.msra.mxu0 0.0
  %4694 = vmatprep.subr.mxu0 0.0
  %4695 = vmatpush1.msra.mxu0 0.0
  %4696 = vmatprep.subr.mxu0 0.0
  %4697 = vmatpush1.msra.mxu0 0.0
  %4698 = vmatprep.subr.mxu0 0.0
  %4699 = vmatpush1.msra.mxu0 0.0
  %4700 = vmatprep.mubr.f32.mxu0 0.0
  %4701 = vmatmul.mubr.f32.gmra.mrb[0].mxu0 %v4630
  %v4702 = vpop.f32.mrb[0].mxu0
  %v4703 = vadd.f32 0.0, %v4702
  %v4704 = vpop.f32.mrb[0].mxu0
  %4705 = vmatprep.mubr.f32.mxu0 0.0
  %4706 = vmatmul.mubr.f32.gmra.mrb[0].mxu0 %v4632
  %v4707 = vpop.f32.mrb[0].mxu0
  %v4708 = vadd.f32 0.0, %v4707
  %v4709 = vpop.f32.mrb[0].mxu0
  %4710 = vmatprep.mubr.f32.mxu0 0.0
  %4711 = vmatmul.mubr.f32.gmra.mrb[0].mxu0 %v4634
  %v4712 = vpop.f32.mrb[0].mxu0
  %v4713 = vadd.f32 0.0, %v4712
  %v4714 = vpop.f32.mrb[0].mxu0
  %4715 = vdwg.mxu0
  %4716 = vmatprep.subr.mxu0 0.0
  %4717 = vmatpush1.msra.mxu0 %v221
  %4718 = vmatprep.subr.mxu0 0.0
  %4719 = vmatpush1.msra.mxu0 %v566
  %4720 = vmatprep.subr.mxu0 0.0
  %4721 = vmatpush1.msra.mxu0 0.0
  %4722 = vmatprep.subr.mxu0 0.0
  %4723 = vmatpush1.msra.mxu0 0.0
  %4724 = vmatprep.subr.mxu0 0.0
  %4725 = vmatpush1.msra.mxu0 0.0
  %4726 = vmatprep.subr.mxu0 0.0
  %4727 = vmatpush1.msra.mxu0 0.0
  %4728 = vmatprep.subr.mxu0 0.0
  %4729 = vmatpush1.msra.mxu0 0.0
  %4730 = vmatprep.subr.mxu0 0.0
  %4731 = vmatpush1.msra.mxu0 0.0
  %4732 = vmatprep.subr.mxu0 0.0
  %4733 = vmatpush1.msra.mxu0 0.0
  %4734 = vmatprep.subr.mxu0 0.0
  %4735 = vmatpush1.msra.mxu0 0.0
  %4736 = vmatprep.subr.mxu0 0.0
  %4737 = vmatpush1.msra.mxu0 0.0
  %4738 = vmatprep.subr.mxu0 0.0
  %4739 = vmatpush1.msra.mxu0 0.0
  %4740 = vmatprep.subr.mxu0 0.0
  %4741 = vmatpush1.msra.mxu0 0.0
  %4742 = vmatprep.subr.mxu0 0.0
  %4743 = vmatpush1.msra.mxu0 0.0
  %4744 = vmatprep.subr.mxu0 0.0
  %4745 = vmatpush1.msra.mxu0 0.0
  %4746 = vmatprep.subr.mxu0 0.0
  %4747 = vmatpush1.msra.mxu0 0.0
  %4748 = vmatprep.subr.mxu0 0.0
  %4749 = vmatpush1.msra.mxu0 0.0
  %4750 = vmatprep.subr.mxu0 0.0
  %4751 = vmatpush1.msra.mxu0 0.0
  %4752 = vmatprep.subr.mxu0 0.0
  %4753 = vmatpush1.msra.mxu0 0.0
  %4754 = vmatprep.subr.mxu0 0.0
  %4755 = vmatpush1.msra.mxu0 0.0
  %4756 = vmatprep.subr.mxu0 0.0
  %4757 = vmatpush1.msra.mxu0 0.0
  %4758 = vmatprep.subr.mxu0 0.0
  %4759 = vmatpush1.msra.mxu0 0.0
  %4760 = vmatprep.subr.mxu0 0.0
  %4761 = vmatpush1.msra.mxu0 0.0
  %4762 = vmatprep.subr.mxu0 0.0
  %4763 = vmatpush1.msra.mxu0 0.0
  %4764 = vmatprep.subr.mxu0 0.0
  %4765 = vmatpush1.msra.mxu0 0.0
  %4766 = vmatprep.subr.mxu0 0.0
  %4767 = vmatpush1.msra.mxu0 0.0
  %4768 = vmatprep.subr.mxu0 0.0
  %4769 = vmatpush1.msra.mxu0 0.0
  %4770 = vmatprep.subr.mxu0 0.0
  %4771 = vmatpush1.msra.mxu0 0.0
  %4772 = vmatprep.subr.mxu0 0.0
  %4773 = vmatpush1.msra.mxu0 0.0
  %4774 = vmatprep.subr.mxu0 0.0
  %4775 = vmatpush1.msra.mxu0 0.0
  %4776 = vmatprep.subr.mxu0 0.0
  %4777 = vmatpush1.msra.mxu0 0.0
  %4778 = vmatprep.subr.mxu0 0.0
  %4779 = vmatpush1.msra.mxu0 0.0
  %4780 = vmatprep.mubr.f32.mxu0 0.0
  %4781 = vmatmul.mubr.f32.gmra.mrb[0].mxu0 %v4630
  %v4782 = vpop.f32.mrb[0].mxu0
  %v4783 = vadd.f32 0.0, %v4782
  %v4784 = vpop.f32.mrb[0].mxu0
  %4785 = vmatprep.mubr.f32.mxu0 0.0
  %4786 = vmatmul.mubr.f32.gmra.mrb[0].mxu0 %v4632
  %v4787 = vpop.f32.mrb[0].mxu0
  %v4788 = vadd.f32 0.0, %v4787
  %v4789 = vpop.f32.mrb[0].mxu0
  %4790 = vmatprep.mubr.f32.mxu0 0.0
  %4791 = vmatmul.mubr.f32.gmra.mrb[0].mxu0 %v4634
  %v4792 = vpop.f32.mrb[0].mxu0
  %v4793 = vadd.f32 0.0, %v4792
  %v4794 = vpop.f32.mrb[0].mxu0
  %4795 = vdwg.mxu0
  %v4796 = vmul.f32 %v4703, %v4783
  %v4797 = vmul.f32 %v4708, %v4788
  %v4798 = vmul.f32 %v4713, %v4793
  %v4800 = vsel %vm657, %v4796, 0
  %v4803 = vsel %vm657, %v4797, 0
  %v4806 = vsel %vm657, %v4798, 0
  %4808 = vmatprep.subr.mxu0 0.0
  %4809 = vmatpush1.msra.mxu0 %v223
  %4810 = vmatprep.subr.mxu0 0.0
  %4811 = vmatpush1.msra.mxu0 %v224
  %4812 = vmatprep.subr.mxu0 0.0
  %4813 = vmatpush1.msra.mxu0 %v225
  %4814 = vmatprep.subr.mxu0 0.0
  %4815 = vmatpush1.msra.mxu0 %v226
  %4816 = vmatprep.subr.mxu0 0.0
  %4817 = vmatpush1.msra.mxu0 %v227
  %4818 = vmatprep.subr.mxu0 0.0
  %4819 = vmatpush1.msra.mxu0 %v228
  %4820 = vmatprep.subr.mxu0 0.0
  %4821 = vmatpush1.msra.mxu0 0.0
  %4822 = vmatprep.subr.mxu0 0.0
  %4823 = vmatpush1.msra.mxu0 0.0
  %4824 = vmatprep.subr.mxu0 0.0
  %4825 = vmatpush1.msra.mxu0 0.0
  %4826 = vmatprep.subr.mxu0 0.0
  %4827 = vmatpush1.msra.mxu0 0.0
  %4828 = vmatprep.subr.mxu0 0.0
  %4829 = vmatpush1.msra.mxu0 0.0
  %4830 = vmatprep.subr.mxu0 0.0
  %4831 = vmatpush1.msra.mxu0 0.0
  %4832 = vmatprep.subr.mxu0 0.0
  %4833 = vmatpush1.msra.mxu0 0.0
  %4834 = vmatprep.subr.mxu0 0.0
  %4835 = vmatpush1.msra.mxu0 0.0
  %4836 = vmatprep.subr.mxu0 0.0
  %4837 = vmatpush1.msra.mxu0 0.0
  %4838 = vmatprep.subr.mxu0 0.0
  %4839 = vmatpush1.msra.mxu0 0.0
  %4840 = vmatprep.subr.mxu0 0.0
  %4841 = vmatpush1.msra.mxu0 0.0
  %4842 = vmatprep.subr.mxu0 0.0
  %4843 = vmatpush1.msra.mxu0 0.0
  %4844 = vmatprep.subr.mxu0 0.0
  %4845 = vmatpush1.msra.mxu0 0.0
  %4846 = vmatprep.subr.mxu0 0.0
  %4847 = vmatpush1.msra.mxu0 0.0
  %4848 = vmatprep.subr.mxu0 0.0
  %4849 = vmatpush1.msra.mxu0 0.0
  %4850 = vmatprep.subr.mxu0 0.0
  %4851 = vmatpush1.msra.mxu0 0.0
  %4852 = vmatprep.subr.mxu0 0.0
  %4853 = vmatpush1.msra.mxu0 0.0
  %4854 = vmatprep.subr.mxu0 0.0
  %4855 = vmatpush1.msra.mxu0 0.0
  %4856 = vmatprep.subr.mxu0 0.0
  %4857 = vmatpush1.msra.mxu0 0.0
  %4858 = vmatprep.subr.mxu0 0.0
  %4859 = vmatpush1.msra.mxu0 0.0
  %4860 = vmatprep.subr.mxu0 0.0
  %4861 = vmatpush1.msra.mxu0 0.0
  %4862 = vmatprep.subr.mxu0 0.0
  %4863 = vmatpush1.msra.mxu0 0.0
  %4864 = vmatprep.subr.mxu0 0.0
  %4865 = vmatpush1.msra.mxu0 0.0
  %4866 = vmatprep.subr.mxu0 0.0
  %4867 = vmatpush1.msra.mxu0 0.0
  %4868 = vmatprep.subr.mxu0 0.0
  %4869 = vmatpush1.msra.mxu0 0.0
  %4870 = vmatprep.subr.mxu0 0.0
  %4871 = vmatpush1.msra.mxu0 0.0
  %4872 = vmatprep.mubr.f32.mxu0 0.0
  %4873 = vmatmul.mubr.f32.gmra.mrb[0].mxu0 %v4800
  %v4874 = vpop.f32.mrb[0].mxu0
  %v4875 = vadd.f32 0.0, %v4874
  %v4876 = vpop.f32.mrb[0].mxu0
  %4877 = vmatprep.mubr.f32.mxu0 0.0
  %4878 = vmatmul.mubr.f32.gmra.mrb[0].mxu0 %v4803
  %v4879 = vpop.f32.mrb[0].mxu0
  %v4880 = vadd.f32 0.0, %v4879
  %v4881 = vpop.f32.mrb[0].mxu0
  %4882 = vmatprep.mubr.f32.mxu0 0.0
  %4883 = vmatmul.mubr.f32.gmra.mrb[0].mxu0 %v4806
  %v4884 = vpop.f32.mrb[0].mxu0
  %v4885 = vadd.f32 0.0, %v4884
  %v4886 = vpop.f32.mrb[0].mxu0
  %4887 = vdwg.mxu0
  %v4888 = vmul.f32 %v4875, %v4875
  %v4889 = vmul.f32 %v4880, %v4880
  %v4890 = vmul.f32 %v4885, %v4885
  %v4891 = vsel %vm256, %v4888, 0.0
  %v4892 = vsel %vm256, %v4889, 0.0
  %v4893 = vadd.f32 %v4891, %v4892
  %v4894 = vsel %vm256, %v4890, 0.0
  %v4895 = vadd.f32 %v4893, %v4894
  %v4896 = vrot.slane %v4895, 4
  %v4897 = vadd.f32 %v4895, %v4896
  %v4898 = vrot.slane %v4897, 2
  %v4899 = vadd.f32 %v4897, %v4898
  %v4900 = vrot.slane %v4899, 1
  %v4901 = vadd.f32 %v4899, %v4900
  %v4902 = vrsqrt.pop %v4901
  %v4903 = vmul.f32 %v4901, %v4902
  %vm4904 = vcmp.eq.f32.partialorder %v4901, inf
  %v4905 = vsel %vm4904, %v4901, %v4903
  %vm4906 = vcmp.eq.f32.partialorder %v4901, 0.0
  %v4907 = vand.u32 %v4901, 2147483648
  %v4908 = vsel %vm4906, %v4907, %v4905
  %v4909 = vmax.f32 %v4908, 1e-12
  %v4910 = vrcp.pop %v4909
  %v4911 = vmul.f32 %v4875, %v4910
  %v4912 = vmul.f32 %v4880, %v4910
  %v4913 = vmul.f32 %v4885, %v4910
  %4917 = vrot.lane.b32.xlu0 %v4605, 32
  %v4918 = vpop.permute.xlu0 %4917
  %4919 = vrot.lane.b32.xlu0 %v4610, 32
  %v4920 = vpop.permute.xlu0 %4919
  %4921 = vrot.lane.b32.xlu0 %v4615, 32
  %v4922 = vpop.permute.xlu0 %4921
  %4929 = vrot.lane.b32.xlu0 %v4911, 64
  %v4930 = vpop.permute.xlu0 %4929
  %4931 = vrot.lane.b32.xlu0 %v4912, 64
  %v4932 = vpop.permute.xlu0 %4931
  %4933 = vrot.lane.b32.xlu0 %v4913, 64
  %v4934 = vpop.permute.xlu0 %4933
  %v4938 = vsel %vm237, %v4525, %v4918
  %v4939 = vsel %vm237, %v4530, %v4920
  %v4940 = vsel %vm237, %v4535, %v4922
  %v4941 = vsel %vm821, %v4938, %v4930
  %v4942 = vsel %vm821, %v4939, %v4932
  %v4943 = vsel %vm821, %v4940, %v4934
  %s4944 = scalar_lea.vmem %s31, 240
  %v4945 = vld [vmem:[%s4944] sm:$0xff]
  %v4946 = vld [vmem:[%s4944 + $0x8] sm:$0xff]
  %v4947 = vld [vmem:[%s4944 + $0x10] sm:$0xff]
  %v4948 = vld [vmem:[%s4944 + $0x18] sm:$0xff]
  %v4949 = vld [vmem:[%s4944 + $0x20] sm:$0xff]
  %v4950 = vld [vmem:[%s4944 + $0x28] sm:$0xff]
  %v4951 = vld [vmem:[%s4944 + $0x30] sm:$0xff]
  %v4952 = vld [vmem:[%s4944 + $0x38] sm:$0xff]
  %v4953 = vld [vmem:[%s4944 + $0x40] sm:$0xff]
  %v4954 = vld [vmem:[%s4944 + $0x48] sm:$0xff]
  %v4956 = vsel %vm836, %v4941, 0
  %v4959 = vsel %vm836, %v4942, 0
  %v4962 = vsel %vm836, %v4943, 0
  %4964 = vmatprep.subr.mxu0 0.0
  %4965 = vmatpush1.msra.mxu0 %v4945
  %4966 = vmatprep.subr.mxu0 0.0
  %4967 = vmatpush1.msra.mxu0 %v4946
  %4968 = vmatprep.subr.mxu0 0.0
  %4969 = vmatpush1.msra.mxu0 %v4947
  %4970 = vmatprep.subr.mxu0 0.0
  %4971 = vmatpush1.msra.mxu0 %v4948
  %4972 = vmatprep.subr.mxu0 0.0
  %4973 = vmatpush1.msra.mxu0 %v4949
  %4974 = vmatprep.subr.mxu0 0.0
  %4975 = vmatpush1.msra.mxu0 %v4950
  %4976 = vmatprep.subr.mxu0 0.0
  %4977 = vmatpush1.msra.mxu0 %v4951
  %4978 = vmatprep.subr.mxu0 0.0
  %4979 = vmatpush1.msra.mxu0 %v4952
  %4980 = vmatprep.subr.mxu0 0.0
  %4981 = vmatpush1.msra.mxu0 %v4953
  %4982 = vmatprep.subr.mxu0 0.0
  %4983 = vmatpush1.msra.mxu0 %v4954
  %4984 = vmatprep.subr.mxu0 0.0
  %4985 = vmatpush1.msra.mxu0 0.0
  %4986 = vmatprep.subr.mxu0 0.0
  %4987 = vmatpush1.msra.mxu0 0.0
  %4988 = vmatprep.subr.mxu0 0.0
  %4989 = vmatpush1.msra.mxu0 0.0
  %4990 = vmatprep.subr.mxu0 0.0
  %4991 = vmatpush1.msra.mxu0 0.0
  %4992 = vmatprep.subr.mxu0 0.0
  %4993 = vmatpush1.msra.mxu0 0.0
  %4994 = vmatprep.subr.mxu0 0.0
  %4995 = vmatpush1.msra.mxu0 0.0
  %4996 = vmatprep.subr.mxu0 0.0
  %4997 = vmatpush1.msra.mxu0 0.0
  %4998 = vmatprep.subr.mxu0 0.0
  %4999 = vmatpush1.msra.mxu0 0.0
  %5000 = vmatprep.subr.mxu0 0.0
  %5001 = vmatpush1.msra.mxu0 0.0
  %5002 = vmatprep.subr.mxu0 0.0
  %5003 = vmatpush1.msra.mxu0 0.0
  %5004 = vmatprep.subr.mxu0 0.0
  %5005 = vmatpush1.msra.mxu0 0.0
  %5006 = vmatprep.subr.mxu0 0.0
  %5007 = vmatpush1.msra.mxu0 0.0
  %5008 = vmatprep.subr.mxu0 0.0
  %5009 = vmatpush1.msra.mxu0 0.0
  %5010 = vmatprep.subr.mxu0 0.0
  %5011 = vmatpush1.msra.mxu0 0.0
  %5012 = vmatprep.subr.mxu0 0.0
  %5013 = vmatpush1.msra.mxu0 0.0
  %5014 = vmatprep.subr.mxu0 0.0
  %5015 = vmatpush1.msra.mxu0 0.0
  %5016 = vmatprep.subr.mxu0 0.0
  %5017 = vmatpush1.msra.mxu0 0.0
  %5018 = vmatprep.subr.mxu0 0.0
  %5019 = vmatpush1.msra.mxu0 0.0
  %5020 = vmatprep.subr.mxu0 0.0
  %5021 = vmatpush1.msra.mxu0 0.0
  %5022 = vmatprep.subr.mxu0 0.0
  %5023 = vmatpush1.msra.mxu0 0.0
  %5024 = vmatprep.subr.mxu0 0.0
  %5025 = vmatpush1.msra.mxu0 0.0
  %5026 = vmatprep.subr.mxu0 0.0
  %5027 = vmatpush1.msra.mxu0 0.0
  %5028 = vmatprep.mubr.f32.mxu0 0.0
  %5029 = vmatmul.mubr.f32.gmra.mrb[0].mxu0 %v4956
  %v5030 = vpop.f32.mrb[0].mxu0
  %v5031 = vadd.f32 %v4455, %v5030
  %v5032 = vpop.f32.mrb[0].mxu0
  %5033 = vmatprep.mubr.f32.mxu0 0.0
  %5034 = vmatmul.mubr.f32.gmra.mrb[0].mxu0 %v4959
  %v5035 = vpop.f32.mrb[0].mxu0
  %v5036 = vadd.f32 %v4456, %v5035
  %v5037 = vpop.f32.mrb[0].mxu0
  %5038 = vmatprep.mubr.f32.mxu0 0.0
  %5039 = vmatmul.mubr.f32.gmra.mrb[0].mxu0 %v4962
  %v5040 = vpop.f32.mrb[0].mxu0
  %v5041 = vadd.f32 %v4457, %v5040
  %v5042 = vpop.f32.mrb[0].mxu0
  %5043 = vdwg.mxu0
  %v5044 = vxor.u32 %v5031, 2147483648
  %v5045 = vxor.u32 %v5036, 2147483648
  %v5046 = vxor.u32 %v5041, 2147483648
  %v5047 = vmul.f32 %v5044, 1.442695
  %v5048 = vpow.pop %v5047
  %v5049 = vmul.f32 %v5045, 1.442695
  %v5050 = vpow.pop %v5049
  %v5051 = vmul.f32 %v5046, 1.442695
  %v5052 = vpow.pop %v5051
  %v5053 = vadd.f32 %v5048, 1.0
  %v5054 = vadd.f32 %v5050, 1.0
  %v5055 = vadd.f32 %v5052, 1.0
  %v5056 = vrcp.pop %v5053
  %v5057 = vmul.f32 1.0, %v5056
  %v5058 = vrcp.pop %v5054
  %v5059 = vmul.f32 1.0, %v5058
  %v5060 = vrcp.pop %v5055
  %v5061 = vmul.f32 1.0, %v5060
  %v5062 = vmul.f32 %v5031, %v5057
  %v5063 = vmul.f32 %v5036, %v5059
  %v5064 = vmul.f32 %v5041, %v5061
  %s5065 = scalar_lea.vmem %s33, 192
  %v5066 = vld [vmem:[%s5065] sm:$0xff]
  %v5067 = vld [vmem:[%s5065 + $0x8] sm:$0xff]
  %v5068 = vld [vmem:[%s5065 + $0x10] sm:$0xff]
  %v5069 = vld [vmem:[%s5065 + $0x18] sm:$0xff]
  %v5070 = vld [vmem:[%s5065 + $0x20] sm:$0xff]
  %v5071 = vld [vmem:[%s5065 + $0x28] sm:$0xff]
  %v5072 = vld [vmem:[%s5065 + $0x30] sm:$0xff]
  %v5073 = vld [vmem:[%s5065 + $0x38] sm:$0xff]
  %s5074 = scalar_lea.vmem %s35, 3
  %v5075 = vld [vmem:[%s5074] sm:$0x1]
  %v5077 = vlaneseq
  %v5078 = vshrl.u32 %v5077, 7
  %v5079 = vsub.s32 0, %v5078
  %v5080 = vrot.slane %v5075, %v5079
  %v5083 = vsel %vm821, %v5062, 0
  %v5086 = vsel %vm821, %v5063, 0
  %v5089 = vsel %vm821, %v5064, 0
  %5091 = vmatprep.subr.mxu0 0.0
  %5092 = vmatpush1.msra.mxu0 %v5066
  %5093 = vmatprep.subr.mxu0 0.0
  %5094 = vmatpush1.msra.mxu0 %v5067
  %5095 = vmatprep.subr.mxu0 0.0
  %5096 = vmatpush1.msra.mxu0 %v5068
  %5097 = vmatprep.subr.mxu0 0.0
  %5098 = vmatpush1.msra.mxu0 %v5069
  %5099 = vmatprep.subr.mxu0 0.0
  %5100 = vmatpush1.msra.mxu0 %v5070
  %5101 = vmatprep.subr.mxu0 0.0
  %5102 = vmatpush1.msra.mxu0 %v5071
  %5103 = vmatprep.subr.mxu0 0.0
  %5104 = vmatpush1.msra.mxu0 %v5072
  %5105 = vmatprep.subr.mxu0 0.0
  %5106 = vmatpush1.msra.mxu0 %v5073
  %5107 = vmatprep.subr.mxu0 0.0
  %5108 = vmatpush1.msra.mxu0 0.0
  %5109 = vmatprep.subr.mxu0 0.0
  %5110 = vmatpush1.msra.mxu0 0.0
  %5111 = vmatprep.subr.mxu0 0.0
  %5112 = vmatpush1.msra.mxu0 0.0
  %5113 = vmatprep.subr.mxu0 0.0
  %5114 = vmatpush1.msra.mxu0 0.0
  %5115 = vmatprep.subr.mxu0 0.0
  %5116 = vmatpush1.msra.mxu0 0.0
  %5117 = vmatprep.subr.mxu0 0.0
  %5118 = vmatpush1.msra.mxu0 0.0
  %5119 = vmatprep.subr.mxu0 0.0
  %5120 = vmatpush1.msra.mxu0 0.0
  %5121 = vmatprep.subr.mxu0 0.0
  %5122 = vmatpush1.msra.mxu0 0.0
  %5123 = vmatprep.subr.mxu0 0.0
  %5124 = vmatpush1.msra.mxu0 0.0
  %5125 = vmatprep.subr.mxu0 0.0
  %5126 = vmatpush1.msra.mxu0 0.0
  %5127 = vmatprep.subr.mxu0 0.0
  %5128 = vmatpush1.msra.mxu0 0.0
  %5129 = vmatprep.subr.mxu0 0.0
  %5130 = vmatpush1.msra.mxu0 0.0
  %5131 = vmatprep.subr.mxu0 0.0
  %5132 = vmatpush1.msra.mxu0 0.0
  %5133 = vmatprep.subr.mxu0 0.0
  %5134 = vmatpush1.msra.mxu0 0.0
  %5135 = vmatprep.subr.mxu0 0.0
  %5136 = vmatpush1.msra.mxu0 0.0
  %5137 = vmatprep.subr.mxu0 0.0
  %5138 = vmatpush1.msra.mxu0 0.0
  %5139 = vmatprep.subr.mxu0 0.0
  %5140 = vmatpush1.msra.mxu0 0.0
  %5141 = vmatprep.subr.mxu0 0.0
  %5142 = vmatpush1.msra.mxu0 0.0
  %5143 = vmatprep.subr.mxu0 0.0
  %5144 = vmatpush1.msra.mxu0 0.0
  %5145 = vmatprep.subr.mxu0 0.0
  %5146 = vmatpush1.msra.mxu0 0.0
  %5147 = vmatprep.subr.mxu0 0.0
  %5148 = vmatpush1.msra.mxu0 0.0
  %5149 = vmatprep.subr.mxu0 0.0
  %5150 = vmatpush1.msra.mxu0 0.0
  %5151 = vmatprep.subr.mxu0 0.0
  %5152 = vmatpush1.msra.mxu0 0.0
  %5153 = vmatprep.subr.mxu0 0.0
  %5154 = vmatpush1.msra.mxu0 0.0
  %5155 = vmatprep.mubr.f32.mxu0 0.0
  %5156 = vmatmul.mubr.f32.gmra.mrb[0].mxu0 %v5083
  %v5157 = vpop.f32.mrb[0].mxu0
  %v5158 = vadd.f32 %v5080, %v5157
  %v5159 = vpop.f32.mrb[0].mxu0
  %5160 = vmatprep.mubr.f32.mxu0 0.0
  %5161 = vmatmul.mubr.f32.gmra.mrb[0].mxu0 %v5086
  %v5162 = vpop.f32.mrb[0].mxu0
  %v5163 = vadd.f32 %v5080, %v5162
  %v5164 = vpop.f32.mrb[0].mxu0
  %5165 = vmatprep.mubr.f32.mxu0 0.0
  %5166 = vmatmul.mubr.f32.gmra.mrb[0].mxu0 %v5089
  %v5167 = vpop.f32.mrb[0].mxu0
  %v5168 = vadd.f32 %v5080, %v5167
  %v5169 = vpop.f32.mrb[0].mxu0
  %5170 = vdwg.mxu0
  %v5171 = vxor.u32 %v5158, 2147483648
  %v5172 = vxor.u32 %v5163, 2147483648
  %v5173 = vxor.u32 %v5168, 2147483648
  %v5174 = vmul.f32 %v5171, 1.442695
  %v5175 = vpow.pop %v5174
  %v5176 = vmul.f32 %v5172, 1.442695
  %v5177 = vpow.pop %v5176
  %v5178 = vmul.f32 %v5173, 1.442695
  %v5179 = vpow.pop %v5178
  %v5180 = vadd.f32 %v5175, 1.0
  %v5181 = vadd.f32 %v5177, 1.0
  %v5182 = vadd.f32 %v5179, 1.0
  %v5183 = vrcp.pop %v5180
  %v5184 = vmul.f32 1.0, %v5183
  %v5185 = vrcp.pop %v5181
  %v5186 = vmul.f32 1.0, %v5185
  %v5187 = vrcp.pop %v5182
  %v5188 = vmul.f32 1.0, %v5187
  %v5189 = vmul.f32 %v4605, %v5184
  %v5190 = vmul.f32 %v4610, %v5186
  %v5191 = vmul.f32 %v4615, %v5188
  %5195 = vrot.lane.b32.xlu0 %v5184, 96
  %v5196 = vpop.permute.xlu0 %5195
  %5197 = vrot.lane.b32.xlu0 %v5186, 96
  %v5198 = vpop.permute.xlu0 %5197
  %5199 = vrot.lane.b32.xlu0 %v5188, 96
  %v5200 = vpop.permute.xlu0 %5199
  %v5204 = vmul.f32 %v4525, %v5196
  %v5205 = vmul.f32 %v4530, %v5198
  %v5206 = vmul.f32 %v4535, %v5200
  %v5207 = vadd.f32 %v5189, %v5204
  %v5208 = vadd.f32 %v5190, %v5205
  %v5209 = vadd.f32 %v5191, %v5206
  %s5210 = scalar_lea.vmem %s37, 96
  %v5211 = vld [vmem:[%s5210] sm:$0xff]
  %v5212 = vld [vmem:[%s5210 + $0x8] sm:$0xff]
  %v5213 = vld [vmem:[%s5210 + $0x10] sm:$0xff]
  %v5214 = vld [vmem:[%s5210 + $0x18] sm:$0xff]
  %s5215 = scalar_lea.vmem %s39, 3
  %v5216 = vld [vmem:[%s5215] sm:$0x1]
  %v5218 = vlaneseq
  %v5219 = vshrl.u32 %v5218, 7
  %v5220 = vsub.s32 0, %v5219
  %v5221 = vrot.slane %v5216, %v5220
  %5223 = vrot.lane.b32.xlu0 %v5062, 64
  %v5224 = vpop.permute.xlu0 %5223
  %5225 = vrot.lane.b32.xlu0 %v5063, 64
  %v5226 = vpop.permute.xlu0 %5225
  %5227 = vrot.lane.b32.xlu0 %v5064, 64
  %v5228 = vpop.permute.xlu0 %5227
  %v5229 = vsel %vm237, %v5224, 0
  %v5231 = vsel %vm237, %v5226, 0
  %v5233 = vsel %vm237, %v5228, 0
  %5235 = vmatprep.subr.mxu0 0.0
  %5236 = vmatpush1.msra.mxu0 %v5211
  %5237 = vmatprep.subr.mxu0 0.0
  %5238 = vmatpush1.msra.mxu0 %v5212
  %5239 = vmatprep.subr.mxu0 0.0
  %5240 = vmatpush1.msra.mxu0 %v5213
  %5241 = vmatprep.subr.mxu0 0.0
  %5242 = vmatpush1.msra.mxu0 %v5214
  %5243 = vmatprep.subr.mxu0 0.0
  %5244 = vmatpush1.msra.mxu0 0.0
  %5245 = vmatprep.subr.mxu0 0.0
  %5246 = vmatpush1.msra.mxu0 0.0
  %5247 = vmatprep.subr.mxu0 0.0
  %5248 = vmatpush1.msra.mxu0 0.0
  %5249 = vmatprep.subr.mxu0 0.0
  %5250 = vmatpush1.msra.mxu0 0.0
  %5251 = vmatprep.subr.mxu0 0.0
  %5252 = vmatpush1.msra.mxu0 0.0
  %5253 = vmatprep.subr.mxu0 0.0
  %5254 = vmatpush1.msra.mxu0 0.0
  %5255 = vmatprep.subr.mxu0 0.0
  %5256 = vmatpush1.msra.mxu0 0.0
  %5257 = vmatprep.subr.mxu0 0.0
  %5258 = vmatpush1.msra.mxu0 0.0
  %5259 = vmatprep.subr.mxu0 0.0
  %5260 = vmatpush1.msra.mxu0 0.0
  %5261 = vmatprep.subr.mxu0 0.0
  %5262 = vmatpush1.msra.mxu0 0.0
  %5263 = vmatprep.subr.mxu0 0.0
  %5264 = vmatpush1.msra.mxu0 0.0
  %5265 = vmatprep.subr.mxu0 0.0
  %5266 = vmatpush1.msra.mxu0 0.0
  %5267 = vmatprep.subr.mxu0 0.0
  %5268 = vmatpush1.msra.mxu0 0.0
  %5269 = vmatprep.subr.mxu0 0.0
  %5270 = vmatpush1.msra.mxu0 0.0
  %5271 = vmatprep.subr.mxu0 0.0
  %5272 = vmatpush1.msra.mxu0 0.0
  %5273 = vmatprep.subr.mxu0 0.0
  %5274 = vmatpush1.msra.mxu0 0.0
  %5275 = vmatprep.subr.mxu0 0.0
  %5276 = vmatpush1.msra.mxu0 0.0
  %5277 = vmatprep.subr.mxu0 0.0
  %5278 = vmatpush1.msra.mxu0 0.0
  %5279 = vmatprep.subr.mxu0 0.0
  %5280 = vmatpush1.msra.mxu0 0.0
  %5281 = vmatprep.subr.mxu0 0.0
  %5282 = vmatpush1.msra.mxu0 0.0
  %5283 = vmatprep.subr.mxu0 0.0
  %5284 = vmatpush1.msra.mxu0 0.0
  %5285 = vmatprep.subr.mxu0 0.0
  %5286 = vmatpush1.msra.mxu0 0.0
  %5287 = vmatprep.subr.mxu0 0.0
  %5288 = vmatpush1.msra.mxu0 0.0
  %5289 = vmatprep.subr.mxu0 0.0
  %5290 = vmatpush1.msra.mxu0 0.0
  %5291 = vmatprep.subr.mxu0 0.0
  %5292 = vmatpush1.msra.mxu0 0.0
  %5293 = vmatprep.subr.mxu0 0.0
  %5294 = vmatpush1.msra.mxu0 0.0
  %5295 = vmatprep.subr.mxu0 0.0
  %5296 = vmatpush1.msra.mxu0 0.0
  %5297 = vmatprep.subr.mxu0 0.0
  %5298 = vmatpush1.msra.mxu0 0.0
  %5299 = vmatprep.mubr.f32.mxu0 0.0
  %5300 = vmatmul.mubr.f32.gmra.mrb[0].mxu0 %v5229
  %v5301 = vpop.f32.mrb[0].mxu0
  %v5302 = vadd.f32 %v5221, %v5301
  %v5303 = vpop.f32.mrb[0].mxu0
  %5304 = vmatprep.mubr.f32.mxu0 0.0
  %5305 = vmatmul.mubr.f32.gmra.mrb[0].mxu0 %v5231
  %v5306 = vpop.f32.mrb[0].mxu0
  %v5307 = vadd.f32 %v5221, %v5306
  %v5308 = vpop.f32.mrb[0].mxu0
  %5309 = vmatprep.mubr.f32.mxu0 0.0
  %5310 = vmatmul.mubr.f32.gmra.mrb[0].mxu0 %v5233
  %v5311 = vpop.f32.mrb[0].mxu0
  %v5312 = vadd.f32 %v5221, %v5311
  %v5313 = vpop.f32.mrb[0].mxu0
  %5314 = vdwg.mxu0
  %v5315 = vxor.u32 %v5302, 2147483648
  %v5316 = vxor.u32 %v5307, 2147483648
  %v5317 = vxor.u32 %v5312, 2147483648
  %v5318 = vmul.f32 %v5315, 1.442695
  %v5319 = vpow.pop %v5318
  %v5320 = vmul.f32 %v5316, 1.442695
  %v5321 = vpow.pop %v5320
  %v5322 = vmul.f32 %v5317, 1.442695
  %v5323 = vpow.pop %v5322
  %v5324 = vadd.f32 %v5319, 1.0
  %v5325 = vadd.f32 %v5321, 1.0
  %v5326 = vadd.f32 %v5323, 1.0
  %v5327 = vrcp.pop %v5324
  %v5328 = vmul.f32 1.0, %v5327
  %v5329 = vrcp.pop %v5325
  %v5330 = vmul.f32 1.0, %v5329
  %v5331 = vrcp.pop %v5326
  %v5332 = vmul.f32 1.0, %v5331
  %v5333 = vmul.f32 %v5302, %v5328
  %v5334 = vmul.f32 %v5307, %v5330
  %v5335 = vmul.f32 %v5312, %v5332
  %s5336 = scalar_lea.vmem %s41, 96
  %v5337 = vld [vmem:[%s5336] sm:$0xff]
  %v5338 = vld [vmem:[%s5336 + $0x8] sm:$0xff]
  %v5339 = vld [vmem:[%s5336 + $0x10] sm:$0xff]
  %v5340 = vld [vmem:[%s5336 + $0x18] sm:$0xff]
  %v5342 = vsel %vm237, %v5333, 0
  %v5345 = vsel %vm237, %v5334, 0
  %v5348 = vsel %vm237, %v5335, 0
  %5350 = vmatprep.subr.mxu0 0.0
  %5351 = vmatpush1.msra.mxu0 %v5337
  %5352 = vmatprep.subr.mxu0 0.0
  %5353 = vmatpush1.msra.mxu0 %v5338
  %5354 = vmatprep.subr.mxu0 0.0
  %5355 = vmatpush1.msra.mxu0 %v5339
  %5356 = vmatprep.subr.mxu0 0.0
  %5357 = vmatpush1.msra.mxu0 %v5340
  %5358 = vmatprep.subr.mxu0 0.0
  %5359 = vmatpush1.msra.mxu0 0.0
  %5360 = vmatprep.subr.mxu0 0.0
  %5361 = vmatpush1.msra.mxu0 0.0
  %5362 = vmatprep.subr.mxu0 0.0
  %5363 = vmatpush1.msra.mxu0 0.0
  %5364 = vmatprep.subr.mxu0 0.0
  %5365 = vmatpush1.msra.mxu0 0.0
  %5366 = vmatprep.subr.mxu0 0.0
  %5367 = vmatpush1.msra.mxu0 0.0
  %5368 = vmatprep.subr.mxu0 0.0
  %5369 = vmatpush1.msra.mxu0 0.0
  %5370 = vmatprep.subr.mxu0 0.0
  %5371 = vmatpush1.msra.mxu0 0.0
  %5372 = vmatprep.subr.mxu0 0.0
  %5373 = vmatpush1.msra.mxu0 0.0
  %5374 = vmatprep.subr.mxu0 0.0
  %5375 = vmatpush1.msra.mxu0 0.0
  %5376 = vmatprep.subr.mxu0 0.0
  %5377 = vmatpush1.msra.mxu0 0.0
  %5378 = vmatprep.subr.mxu0 0.0
  %5379 = vmatpush1.msra.mxu0 0.0
  %5380 = vmatprep.subr.mxu0 0.0
  %5381 = vmatpush1.msra.mxu0 0.0
  %5382 = vmatprep.subr.mxu0 0.0
  %5383 = vmatpush1.msra.mxu0 0.0
  %5384 = vmatprep.subr.mxu0 0.0
  %5385 = vmatpush1.msra.mxu0 0.0
  %5386 = vmatprep.subr.mxu0 0.0
  %5387 = vmatpush1.msra.mxu0 0.0
  %5388 = vmatprep.subr.mxu0 0.0
  %5389 = vmatpush1.msra.mxu0 0.0
  %5390 = vmatprep.subr.mxu0 0.0
  %5391 = vmatpush1.msra.mxu0 0.0
  %5392 = vmatprep.subr.mxu0 0.0
  %5393 = vmatpush1.msra.mxu0 0.0
  %5394 = vmatprep.subr.mxu0 0.0
  %5395 = vmatpush1.msra.mxu0 0.0
  %5396 = vmatprep.subr.mxu0 0.0
  %5397 = vmatpush1.msra.mxu0 0.0
  %5398 = vmatprep.subr.mxu0 0.0
  %5399 = vmatpush1.msra.mxu0 0.0
  %5400 = vmatprep.subr.mxu0 0.0
  %5401 = vmatpush1.msra.mxu0 0.0
  %5402 = vmatprep.subr.mxu0 0.0
  %5403 = vmatpush1.msra.mxu0 0.0
  %5404 = vmatprep.subr.mxu0 0.0
  %5405 = vmatpush1.msra.mxu0 0.0
  %5406 = vmatprep.subr.mxu0 0.0
  %5407 = vmatpush1.msra.mxu0 0.0
  %5408 = vmatprep.subr.mxu0 0.0
  %5409 = vmatpush1.msra.mxu0 0.0
  %5410 = vmatprep.subr.mxu0 0.0
  %5411 = vmatpush1.msra.mxu0 0.0
  %5412 = vmatprep.subr.mxu0 0.0
  %5413 = vmatpush1.msra.mxu0 0.0
  %5414 = vmatprep.mubr.f32.mxu0 0.0
  %5415 = vmatmul.mubr.f32.gmra.mrb[0].mxu0 %v5342
  %v5416 = vpop.f32.mrb[0].mxu0
  %v5417 = vadd.f32 0.0, %v5416
  %v5418 = vpop.f32.mrb[0].mxu0
  %5419 = vmatprep.mubr.f32.mxu0 0.0
  %5420 = vmatmul.mubr.f32.gmra.mrb[0].mxu0 %v5345
  %v5421 = vpop.f32.mrb[0].mxu0
  %v5422 = vadd.f32 0.0, %v5421
  %v5423 = vpop.f32.mrb[0].mxu0
  %5424 = vmatprep.mubr.f32.mxu0 0.0
  %5425 = vmatmul.mubr.f32.gmra.mrb[0].mxu0 %v5348
  %v5426 = vpop.f32.mrb[0].mxu0
  %v5427 = vadd.f32 0.0, %v5426
  %v5428 = vpop.f32.mrb[0].mxu0
  %5429 = vdwg.mxu0
  %5433 = vrot.lane.b32.xlu0 %v5417, 32
  %v5434 = vpop.permute.xlu0 %5433
  %5435 = vrot.lane.b32.xlu0 %v5422, 32
  %v5436 = vpop.permute.xlu0 %5435
  %5437 = vrot.lane.b32.xlu0 %v5427, 32
  %v5438 = vpop.permute.xlu0 %5437
  %v5442 = vmul.f32 %v4618, %v5434
  %v5443 = vmul.f32 %v4619, %v5436
  %v5444 = vmul.f32 %v4620, %v5438
  %v5445 = vsel %vm237, %v5207, %v5442
  %v5446 = vsel %vm237, %v5208, %v5443
  %v5447 = vsel %vm237, %v5209, %v5444
  %5448 = vmatprep.subr.mxu0 0.0
  %5449 = vmatpush1.msra.mxu0 %v5445
  %5450 = vmatprep.subr.mxu0 0.0
  %5451 = vmatpush1.msra.mxu0 %v5446
  %5452 = vmatprep.subr.mxu0 0.0
  %5453 = vmatpush1.msra.mxu0 %v5447
  %5454 = vmatprep.subr.mxu0 0.0
  %5455 = vmatpush1.msra.mxu0 0.0
  %5456 = vmatprep.subr.mxu0 0.0
  %5457 = vmatpush1.msra.mxu0 0.0
  %5458 = vmatprep.subr.mxu0 0.0
  %5459 = vmatpush1.msra.mxu0 0.0
  %5460 = vmatprep.subr.mxu0 0.0
  %5461 = vmatpush1.msra.mxu0 0.0
  %5462 = vmatprep.subr.mxu0 0.0
  %5463 = vmatpush1.msra.mxu0 0.0
  %5464 = vmatprep.subr.mxu0 0.0
  %5465 = vmatpush1.msra.mxu0 0.0
  %5466 = vmatprep.subr.mxu0 0.0
  %5467 = vmatpush1.msra.mxu0 0.0
  %5468 = vmatprep.subr.mxu0 0.0
  %5469 = vmatpush1.msra.mxu0 0.0
  %5470 = vmatprep.subr.mxu0 0.0
  %5471 = vmatpush1.msra.mxu0 0.0
  %5472 = vmatprep.subr.mxu0 0.0
  %5473 = vmatpush1.msra.mxu0 0.0
  %5474 = vmatprep.subr.mxu0 0.0
  %5475 = vmatpush1.msra.mxu0 0.0
  %5476 = vmatprep.subr.mxu0 0.0
  %5477 = vmatpush1.msra.mxu0 0.0
  %5478 = vmatprep.subr.mxu0 0.0
  %5479 = vmatpush1.msra.mxu0 0.0
  %5480 = vmatprep.subr.mxu0 0.0
  %5481 = vmatpush1.msra.mxu0 0.0
  %5482 = vmatprep.subr.mxu0 0.0
  %5483 = vmatpush1.msra.mxu0 0.0
  %5484 = vmatprep.subr.mxu0 0.0
  %5485 = vmatpush1.msra.mxu0 0.0
  %5486 = vmatprep.subr.mxu0 0.0
  %5487 = vmatpush1.msra.mxu0 0.0
  %5488 = vmatprep.subr.mxu0 0.0
  %5489 = vmatpush1.msra.mxu0 0.0
  %5490 = vmatprep.subr.mxu0 0.0
  %5491 = vmatpush1.msra.mxu0 0.0
  %5492 = vmatprep.subr.mxu0 0.0
  %5493 = vmatpush1.msra.mxu0 0.0
  %5494 = vmatprep.subr.mxu0 0.0
  %5495 = vmatpush1.msra.mxu0 0.0
  %5496 = vmatprep.subr.mxu0 0.0
  %5497 = vmatpush1.msra.mxu0 0.0
  %5498 = vmatprep.subr.mxu0 0.0
  %5499 = vmatpush1.msra.mxu0 0.0
  %5500 = vmatprep.subr.mxu0 0.0
  %5501 = vmatpush1.msra.mxu0 0.0
  %5502 = vmatprep.subr.mxu0 0.0
  %5503 = vmatpush1.msra.mxu0 0.0
  %5504 = vmatprep.subr.mxu0 0.0
  %5505 = vmatpush1.msra.mxu0 0.0
  %5506 = vmatprep.subr.mxu0 0.0
  %5507 = vmatpush1.msra.mxu0 0.0
  %5508 = vmatprep.subr.mxu0 0.0
  %5509 = vmatpush1.msra.mxu0 0.0
  %5510 = vmatprep.subr.mxu0 0.0
  %5511 = vmatpush1.msra.mxu0 0.0
  %5512 = vmatprep.mubr.f32.mxu0 0.0
  %5513 = vmatmul.mubr.f32.gmra.mrb[0].mxu0 %v2727
  %v5514 = vpop.f32.mrb[0].mxu0
  %v5515 = vadd.f32 0.0, %v5514
  %v5516 = vpop.f32.mrb[0].mxu0
  %5517 = vmatprep.mubr.f32.mxu0 0.0
  %5518 = vmatmul.mubr.f32.gmra.mrb[0].mxu0 %v2730
  %v5519 = vpop.f32.mrb[0].mxu0
  %v5520 = vadd.f32 0.0, %v5519
  %v5521 = vpop.f32.mrb[0].mxu0
  %5522 = vdwg.mxu0
  %v5523 = vmul.f32 %v5515, %v2810
  %v5524 = vmul.f32 %v5520, %v2815
  %v5525 = vadd.f32 %v4452, %v5523
  %v5526 = vadd.f32 %v4453, %v5524
  %5529 = vrot.lane.b32.xlu0 %v5515, 32
  %v5530 = vpop.permute.xlu0 %5529
  %5531 = vrot.lane.b32.xlu0 %v5520, 32
  %v5532 = vpop.permute.xlu0 %5531
  %v5535 = vsel %vm237, %v4452, %v5530
  %v5536 = vsel %vm237, %v4453, %v5532
  %s5537 = scalar_lea.vmem %s43, 192
  %v5538 = vld [vmem:[%s5537] sm:$0xff]
  %v5539 = vld [vmem:[%s5537 + $0x8] sm:$0xff]
  %v5540 = vld [vmem:[%s5537 + $0x10] sm:$0xff]
  %v5541 = vld [vmem:[%s5537 + $0x18] sm:$0xff]
  %v5542 = vld [vmem:[%s5537 + $0x20] sm:$0xff]
  %v5543 = vld [vmem:[%s5537 + $0x28] sm:$0xff]
  %v5544 = vld [vmem:[%s5537 + $0x30] sm:$0xff]
  %v5545 = vld [vmem:[%s5537 + $0x38] sm:$0xff]
  %s5546 = scalar_lea.vmem %s45, 3
  %v5547 = vld [vmem:[%s5546] sm:$0x1]
  %v5549 = vlaneseq
  %v5550 = vshrl.u32 %v5549, 7
  %v5551 = vsub.s32 0, %v5550
  %v5552 = vrot.slane %v5547, %v5551
  %v5555 = vsel %vm821, %v5535, 0
  %v5558 = vsel %vm821, %v5536, 0
  %5560 = vmatprep.subr.mxu0 0.0
  %5561 = vmatpush1.msra.mxu0 %v5538
  %5562 = vmatprep.subr.mxu0 0.0
  %5563 = vmatpush1.msra.mxu0 %v5539
  %5564 = vmatprep.subr.mxu0 0.0
  %5565 = vmatpush1.msra.mxu0 %v5540
  %5566 = vmatprep.subr.mxu0 0.0
  %5567 = vmatpush1.msra.mxu0 %v5541
  %5568 = vmatprep.subr.mxu0 0.0
  %5569 = vmatpush1.msra.mxu0 %v5542
  %5570 = vmatprep.subr.mxu0 0.0
  %5571 = vmatpush1.msra.mxu0 %v5543
  %5572 = vmatprep.subr.mxu0 0.0
  %5573 = vmatpush1.msra.mxu0 %v5544
  %5574 = vmatprep.subr.mxu0 0.0
  %5575 = vmatpush1.msra.mxu0 %v5545
  %5576 = vmatprep.subr.mxu0 0.0
  %5577 = vmatpush1.msra.mxu0 0.0
  %5578 = vmatprep.subr.mxu0 0.0
  %5579 = vmatpush1.msra.mxu0 0.0
  %5580 = vmatprep.subr.mxu0 0.0
  %5581 = vmatpush1.msra.mxu0 0.0
  %5582 = vmatprep.subr.mxu0 0.0
  %5583 = vmatpush1.msra.mxu0 0.0
  %5584 = vmatprep.subr.mxu0 0.0
  %5585 = vmatpush1.msra.mxu0 0.0
  %5586 = vmatprep.subr.mxu0 0.0
  %5587 = vmatpush1.msra.mxu0 0.0
  %5588 = vmatprep.subr.mxu0 0.0
  %5589 = vmatpush1.msra.mxu0 0.0
  %5590 = vmatprep.subr.mxu0 0.0
  %5591 = vmatpush1.msra.mxu0 0.0
  %5592 = vmatprep.subr.mxu0 0.0
  %5593 = vmatpush1.msra.mxu0 0.0
  %5594 = vmatprep.subr.mxu0 0.0
  %5595 = vmatpush1.msra.mxu0 0.0
  %5596 = vmatprep.subr.mxu0 0.0
  %5597 = vmatpush1.msra.mxu0 0.0
  %5598 = vmatprep.subr.mxu0 0.0
  %5599 = vmatpush1.msra.mxu0 0.0
  %5600 = vmatprep.subr.mxu0 0.0
  %5601 = vmatpush1.msra.mxu0 0.0
  %5602 = vmatprep.subr.mxu0 0.0
  %5603 = vmatpush1.msra.mxu0 0.0
  %5604 = vmatprep.subr.mxu0 0.0
  %5605 = vmatpush1.msra.mxu0 0.0
  %5606 = vmatprep.subr.mxu0 0.0
  %5607 = vmatpush1.msra.mxu0 0.0
  %5608 = vmatprep.subr.mxu0 0.0
  %5609 = vmatpush1.msra.mxu0 0.0
  %5610 = vmatprep.subr.mxu0 0.0
  %5611 = vmatpush1.msra.mxu0 0.0
  %5612 = vmatprep.subr.mxu0 0.0
  %5613 = vmatpush1.msra.mxu0 0.0
  %5614 = vmatprep.subr.mxu0 0.0
  %5615 = vmatpush1.msra.mxu0 0.0
  %5616 = vmatprep.subr.mxu0 0.0
  %5617 = vmatpush1.msra.mxu0 0.0
  %5618 = vmatprep.subr.mxu0 0.0
  %5619 = vmatpush1.msra.mxu0 0.0
  %5620 = vmatprep.subr.mxu0 0.0
  %5621 = vmatpush1.msra.mxu0 0.0
  %5622 = vmatprep.subr.mxu0 0.0
  %5623 = vmatpush1.msra.mxu0 0.0
  %5624 = vmatprep.mubr.f32.mxu0 0.0
  %5625 = vmatmul.mubr.f32.gmra.mrb[0].mxu0 %v5555
  %v5626 = vpop.f32.mrb[0].mxu0
  %v5627 = vadd.f32 %v5552, %v5626
  %v5628 = vpop.f32.mrb[0].mxu0
  %5629 = vmatprep.mubr.f32.mxu0 0.0
  %5630 = vmatmul.mubr.f32.gmra.mrb[0].mxu0 %v5558
  %v5631 = vpop.f32.mrb[0].mxu0
  %v5632 = vadd.f32 %v5552, %v5631
  %v5633 = vpop.f32.mrb[0].mxu0
  %5634 = vdwg.mxu0
  %v5635 = vxor.u32 %v5627, 2147483648
  %v5636 = vxor.u32 %v5632, 2147483648
  %v5637 = vmul.f32 %v5635, 1.442695
  %v5638 = vpow.pop %v5637
  %v5639 = vmul.f32 %v5636, 1.442695
  %v5640 = vpow.pop %v5639
  %v5641 = vadd.f32 %v5638, 1.0
  %v5642 = vadd.f32 %v5640, 1.0
  %v5643 = vrcp.pop %v5641
  %v5644 = vmul.f32 1.0, %v5643
  %v5645 = vrcp.pop %v5642
  %v5646 = vmul.f32 1.0, %v5645
  %v5647 = vmul.f32 %v5627, %v5644
  %v5648 = vmul.f32 %v5632, %v5646
  %s5649 = scalar_lea.vmem %s47, 96
  %v5650 = vld [vmem:[%s5649] sm:$0xff]
  %v5651 = vld [vmem:[%s5649 + $0x8] sm:$0xff]
  %v5652 = vld [vmem:[%s5649 + $0x10] sm:$0xff]
  %v5653 = vld [vmem:[%s5649 + $0x18] sm:$0xff]
  %v5655 = vsel %vm237, %v5647, 0
  %v5658 = vsel %vm237, %v5648, 0
  %5660 = vmatprep.subr.mxu0 0.0
  %5661 = vmatpush1.msra.mxu0 %v5650
  %5662 = vmatprep.subr.mxu0 0.0
  %5663 = vmatpush1.msra.mxu0 %v5651
  %5664 = vmatprep.subr.mxu0 0.0
  %5665 = vmatpush1.msra.mxu0 %v5652
  %5666 = vmatprep.subr.mxu0 0.0
  %5667 = vmatpush1.msra.mxu0 %v5653
  %5668 = vmatprep.subr.mxu0 0.0
  %5669 = vmatpush1.msra.mxu0 0.0
  %5670 = vmatprep.subr.mxu0 0.0
  %5671 = vmatpush1.msra.mxu0 0.0
  %5672 = vmatprep.subr.mxu0 0.0
  %5673 = vmatpush1.msra.mxu0 0.0
  %5674 = vmatprep.subr.mxu0 0.0
  %5675 = vmatpush1.msra.mxu0 0.0
  %5676 = vmatprep.subr.mxu0 0.0
  %5677 = vmatpush1.msra.mxu0 0.0
  %5678 = vmatprep.subr.mxu0 0.0
  %5679 = vmatpush1.msra.mxu0 0.0
  %5680 = vmatprep.subr.mxu0 0.0
  %5681 = vmatpush1.msra.mxu0 0.0
  %5682 = vmatprep.subr.mxu0 0.0
  %5683 = vmatpush1.msra.mxu0 0.0
  %5684 = vmatprep.subr.mxu0 0.0
  %5685 = vmatpush1.msra.mxu0 0.0
  %5686 = vmatprep.subr.mxu0 0.0
  %5687 = vmatpush1.msra.mxu0 0.0
  %5688 = vmatprep.subr.mxu0 0.0
  %5689 = vmatpush1.msra.mxu0 0.0
  %5690 = vmatprep.subr.mxu0 0.0
  %5691 = vmatpush1.msra.mxu0 0.0
  %5692 = vmatprep.subr.mxu0 0.0
  %5693 = vmatpush1.msra.mxu0 0.0
  %5694 = vmatprep.subr.mxu0 0.0
  %5695 = vmatpush1.msra.mxu0 0.0
  %5696 = vmatprep.subr.mxu0 0.0
  %5697 = vmatpush1.msra.mxu0 0.0
  %5698 = vmatprep.subr.mxu0 0.0
  %5699 = vmatpush1.msra.mxu0 0.0
  %5700 = vmatprep.subr.mxu0 0.0
  %5701 = vmatpush1.msra.mxu0 0.0
  %5702 = vmatprep.subr.mxu0 0.0
  %5703 = vmatpush1.msra.mxu0 0.0
  %5704 = vmatprep.subr.mxu0 0.0
  %5705 = vmatpush1.msra.mxu0 0.0
  %5706 = vmatprep.subr.mxu0 0.0
  %5707 = vmatpush1.msra.mxu0 0.0
  %5708 = vmatprep.subr.mxu0 0.0
  %5709 = vmatpush1.msra.mxu0 0.0
  %5710 = vmatprep.subr.mxu0 0.0
  %5711 = vmatpush1.msra.mxu0 0.0
  %5712 = vmatprep.subr.mxu0 0.0
  %5713 = vmatpush1.msra.mxu0 0.0
  %5714 = vmatprep.subr.mxu0 0.0
  %5715 = vmatpush1.msra.mxu0 0.0
  %5716 = vmatprep.subr.mxu0 0.0
  %5717 = vmatpush1.msra.mxu0 0.0
  %5718 = vmatprep.subr.mxu0 0.0
  %5719 = vmatpush1.msra.mxu0 0.0
  %5720 = vmatprep.subr.mxu0 0.0
  %5721 = vmatpush1.msra.mxu0 0.0
  %5722 = vmatprep.subr.mxu0 0.0
  %5723 = vmatpush1.msra.mxu0 0.0
  %5724 = vmatprep.mubr.f32.mxu0 0.0
  %5725 = vmatmul.mubr.f32.gmra.mrb[0].mxu0 %v5655
  %v5726 = vpop.f32.mrb[0].mxu0
  %v5727 = vadd.f32 0.0, %v5726
  %v5728 = vpop.f32.mrb[0].mxu0
  %5729 = vmatprep.mubr.f32.mxu0 0.0
  %5730 = vmatmul.mubr.f32.gmra.mrb[0].mxu0 %v5658
  %v5731 = vpop.f32.mrb[0].mxu0
  %v5732 = vadd.f32 0.0, %v5731
  %v5733 = vpop.f32.mrb[0].mxu0
  %5734 = vdwg.mxu0
  %v5735 = vadd.f32 %v4452, %v5727
  %v5736 = vadd.f32 %v4453, %v5732
  %s5737 = scalar_lea.vmem %s49, 3
  %v5738 = vld [vmem:[%s5737] sm:$0x1]
  %v5740 = vlaneseq
  %v5741 = vshrl.u32 %v5740, 7
  %v5742 = vsub.s32 0, %v5741
  %v5743 = vrot.slane %v5738, %v5742
  %v5745 = vadd.f32 %v5735, %v5743
  %v5746 = vadd.f32 %v5736, %v5743
  %v5747 = vsel %vm237, %v5745, %v5525
  %v5748 = vsel %vm237, %v5746, %v5526
  %v5749 = vld [vmem:[%s55] sm:$0xff]
  %v5750 = vld [vmem:[%s55 + $0x8] sm:$0xff]
  %v5751 = vld [vmem:[%s55 + $0x10] sm:$0xff]
  %v5752 = vld [vmem:[%s55 + $0x18] sm:$0xff]
  %v5753 = vld [vmem:[%s57] sm:$0x1]
  %v5755 = vlaneseq
  %v5756 = vshrl.u32 %v5755, 7
  %v5757 = vsub.s32 0, %v5756
  %v5758 = vrot.slane %v5753, %v5757
  %v5761 = vsel %vm237, %v5747, 0
  %v5764 = vsel %vm237, %v5748, 0
  %5766 = vmatprep.subr.mxu0 0.0
  %5767 = vmatpush1.msra.mxu0 %v5749
  %5768 = vmatprep.subr.mxu0 0.0
  %5769 = vmatpush1.msra.mxu0 %v5750
  %5770 = vmatprep.subr.mxu0 0.0
  %5771 = vmatpush1.msra.mxu0 %v5751
  %5772 = vmatprep.subr.mxu0 0.0
  %5773 = vmatpush1.msra.mxu0 %v5752
  %5774 = vmatprep.subr.mxu0 0.0
  %5775 = vmatpush1.msra.mxu0 0.0
  %5776 = vmatprep.subr.mxu0 0.0
  %5777 = vmatpush1.msra.mxu0 0.0
  %5778 = vmatprep.subr.mxu0 0.0
  %5779 = vmatpush1.msra.mxu0 0.0
  %5780 = vmatprep.subr.mxu0 0.0
  %5781 = vmatpush1.msra.mxu0 0.0
  %5782 = vmatprep.subr.mxu0 0.0
  %5783 = vmatpush1.msra.mxu0 0.0
  %5784 = vmatprep.subr.mxu0 0.0
  %5785 = vmatpush1.msra.mxu0 0.0
  %5786 = vmatprep.subr.mxu0 0.0
  %5787 = vmatpush1.msra.mxu0 0.0
  %5788 = vmatprep.subr.mxu0 0.0
  %5789 = vmatpush1.msra.mxu0 0.0
  %5790 = vmatprep.subr.mxu0 0.0
  %5791 = vmatpush1.msra.mxu0 0.0
  %5792 = vmatprep.subr.mxu0 0.0
  %5793 = vmatpush1.msra.mxu0 0.0
  %5794 = vmatprep.subr.mxu0 0.0
  %5795 = vmatpush1.msra.mxu0 0.0
  %5796 = vmatprep.subr.mxu0 0.0
  %5797 = vmatpush1.msra.mxu0 0.0
  %5798 = vmatprep.subr.mxu0 0.0
  %5799 = vmatpush1.msra.mxu0 0.0
  %5800 = vmatprep.subr.mxu0 0.0
  %5801 = vmatpush1.msra.mxu0 0.0
  %5802 = vmatprep.subr.mxu0 0.0
  %5803 = vmatpush1.msra.mxu0 0.0
  %5804 = vmatprep.subr.mxu0 0.0
  %5805 = vmatpush1.msra.mxu0 0.0
  %5806 = vmatprep.subr.mxu0 0.0
  %5807 = vmatpush1.msra.mxu0 0.0
  %5808 = vmatprep.subr.mxu0 0.0
  %5809 = vmatpush1.msra.mxu0 0.0
  %5810 = vmatprep.subr.mxu0 0.0
  %5811 = vmatpush1.msra.mxu0 0.0
  %5812 = vmatprep.subr.mxu0 0.0
  %5813 = vmatpush1.msra.mxu0 0.0
  %5814 = vmatprep.subr.mxu0 0.0
  %5815 = vmatpush1.msra.mxu0 0.0
  %5816 = vmatprep.subr.mxu0 0.0
  %5817 = vmatpush1.msra.mxu0 0.0
  %5818 = vmatprep.subr.mxu0 0.0
  %5819 = vmatpush1.msra.mxu0 0.0
  %5820 = vmatprep.subr.mxu0 0.0
  %5821 = vmatpush1.msra.mxu0 0.0
  %5822 = vmatprep.subr.mxu0 0.0
  %5823 = vmatpush1.msra.mxu0 0.0
  %5824 = vmatprep.subr.mxu0 0.0
  %5825 = vmatpush1.msra.mxu0 0.0
  %5826 = vmatprep.subr.mxu0 0.0
  %5827 = vmatpush1.msra.mxu0 0.0
  %5828 = vmatprep.subr.mxu0 0.0
  %5829 = vmatpush1.msra.mxu0 0.0
  %5830 = vmatprep.mubr.f32.mxu0 0.0
  %5831 = vmatmul.mubr.f32.gmra.mrb[0].mxu0 %v5761
  %v5832 = vpop.f32.mrb[0].mxu0
  %v5833 = vadd.f32 %v5758, %v5832
  %v5834 = vpop.f32.mrb[0].mxu0
  %5835 = vmatprep.mubr.f32.mxu0 0.0
  %5836 = vmatmul.mubr.f32.gmra.mrb[0].mxu0 %v5764
  %v5837 = vpop.f32.mrb[0].mxu0
  %v5838 = vadd.f32 %v5758, %v5837
  %v5839 = vpop.f32.mrb[0].mxu0
  %5840 = vdwg.mxu0
  %5841 = vst.msk [vmem:[%s59] sm:$0xff] %vm135, %v5833
  %5842 = vst.msk [vmem:[%s59 + $0x8] sm:$0xff] %vm135, %v5838
  %5843 = vrot.lane.b32.xlu0 %v5747, 96
  %v5844 = vpop.permute.xlu0 %5843
  %5845 = vrot.lane.b32.xlu0 %v5748, 96
  %v5846 = vpop.permute.xlu0 %5845
  %5849 = vst.msk [vmem:[%s61] sm:$0xff] %vm467, %v5844
  %5850 = vst.msk [vmem:[%s61 + $0x8] sm:$0xff] %vm467, %v5846
  // Predicated region
  $region118: #{model_forward.1} parent=0 // pred_check
    _
  $region119: #{model_forward.1} parent=0 // pred_check_branch
    %5852 = sbr.rel (0) target = $region121
  $region120: #{model_forward.1} parent=0 // pred_region
    _
  $region121: #{model_forward.1} parent=0 // pred_fallthru
    _
  // Predicated region
  $region122: #{model_forward.1} parent=0 // pred_check
    _
  $region123: #{model_forward.1} parent=0 // pred_check_branch
    %5854 = sbr.rel (0) target = $region125
  $region124: #{model_forward.1} parent=0 // pred_region
    _
  $region125: #{model_forward.1} parent=0 // pred_fallthru
    _
  // Predicated region
  $region126: #{model_forward.1} parent=0 // pred_check
    _
  $region127: #{model_forward.1} parent=0 // pred_check_branch
    %5856 = sbr.rel (0) target = $region129
  $region128: #{model_forward.1} parent=0 // pred_region
    _
  $region129: #{model_forward.1} parent=0 // pred_fallthru
    _
  // Predicated region
  $region130: #{model_forward.1} parent=0 // pred_check
    _
  $region131: #{model_forward.1} parent=0 // pred_check_branch
    %5858 = sbr.rel (0) target = $region133
  $region132: #{model_forward.1} parent=0 // pred_region
    _
  $region133: #{model_forward.1} parent=0 // pred_fallthru
    _

</llo_original>
